<compile_context>
chip_gen: v5e
topology: v5e:2x2
jax: 0.10.0
libtpu: 0.0.40
codegen_flags: <defaults>
</compile_context>

<pallas_src>
import jax
import jax.numpy as jnp
from jax.experimental import pallas as pl
from jax.experimental.pallas import tpu as pltpu

EPS = 1e-5
LANES = 128          # all channel / feature dims zero-padded to this (lane-dense)
NEG_INF = -1e30      # softmax mask for padded output classes

# ---- model config -----------------------------------------------------------
IN_SIZE = (3, 16, 16)        # (C, H, W)
FILTERS = [4, 8]
POOL_EVERY = 1
HIDDEN_DIMS = [32]
OUT_CLASSES = 10

C_IN, H0, W0 = IN_SIZE
H1, W1 = H0 // 2, W0 // 2    # spatial size after pool 1  (8, 8)
H2, W2 = H1 // 2, W1 // 2    # spatial size after pool 2  (4, 4)
NUM_FEATURES = FILTERS[-1] * H2 * W2   # PyTorch flatten(1) of NCHW -> 128

assert POOL_EVERY == 1 and len(FILTERS) == 2 and len(HIDDEN_DIMS) == 1, (
    "fused kernel is specialized to the (filters=[4,8], pool_every=1, hidden_dims=[32]) config")


# ---------------------------------------------------------------------------
# Fused Pallas kernel
# ---------------------------------------------------------------------------
def _maxpool2x2(y, h, w):
    """2x2 / stride-2 max pool of a (h*w, LANES) row-major activation -> (h//2, w//2, LANES)."""
    y = y.reshape(h * w // 2, 2, LANES)
    y = jnp.max(y, axis=1)                        # pool along W
    y = y.reshape(h // 2, 2, w // 2, LANES)
    y = jnp.max(y, axis=1)                        # pool along H
    return y


def _yourcodenet_kernel(x_ref, cw1_ref, cb1_ref, cw2_ref, cb2_ref,
                        fw1_ref, fb1_ref, fw2_ref, fb2_ref,
                        o_ref, pad_ref, acc_ref):
    """Entire forward pass for one sample; all intermediates stay in VMEM / vregs."""
    # ---- conv1 (3x3, pad=1) + folded BN + ReLU: 9 shifted-slice MXU matmuls (in-kernel im2col)
    acc_ref[...] = jnp.zeros_like(acc_ref)
    for kh in range(3):
        for kw in range(3):
            sl = x_ref[0, kh:kh + H0, kw:kw + W0, :].astype(jnp.bfloat16)
            acc_ref[...] += jnp.dot(sl.reshape(H0 * W0, LANES), cw1_ref[kh * 3 + kw],
                                    preferred_element_type=jnp.float32)
    y = jnp.maximum(acc_ref[...] + cb1_ref[...], 0.0)            # (256, 128) f32

    # ---- fused 2x2 max-pool; write zero-padded tile for conv2's halo ----
    pad_ref[...] = jnp.zeros_like(pad_ref)
    pad_ref[1:1 + H1, 1:1 + W1, :] = _maxpool2x2(y, H0, W0)      # (8, 8, 128) interior

    # ---- conv2 (3x3, pad=1) + folded BN + ReLU ----
    n2 = H1 * W1
    acc_ref[0:n2, :] = jnp.zeros((n2, LANES), jnp.float32)
    for kh in range(3):
        for kw in range(3):
            sl = pad_ref[kh:kh + H1, kw:kw + W1, :].astype(jnp.bfloat16)
            acc_ref[0:n2, :] += jnp.dot(sl.reshape(n2, LANES), cw2_ref[kh * 3 + kw],
                                        preferred_element_type=jnp.float32)
    y2 = jnp.maximum(acc_ref[0:n2, :] + cb2_ref[...], 0.0)       # (64, 128)

    # ---- fused 2x2 max-pool -> (4, 4, 128) -> (16, 128) feature rows ----
    feat = _maxpool2x2(y2, H1, W1).reshape(H2 * W2, LANES)

    # ---- fc1 + folded BN1d + ReLU:
    # hidden[o] = sum_{s,c} feat[s, c] * fw1[s, c, o]   (weights pre-permuted to NCHW flatten order)
    hid = fb1_ref[...]                                           # (1, 128) f32 (start from bias)
    for s in range(H2 * W2):
        hid = hid + jnp.dot(feat[s:s + 1, :].astype(jnp.bfloat16), fw1_ref[s],
                            preferred_element_type=jnp.float32)
    hid = jnp.maximum(hid, 0.0)

    # ---- output linear + softmax (padded class lanes masked via -inf bias) ----
    logits = jnp.dot(hid.astype(jnp.bfloat16), fw2_ref[...],
                     preferred_element_type=jnp.float32) + fb2_ref[...]
    m = jnp.max(logits, axis=-1, keepdims=True)
    e = jnp.exp(logits - m)
    denom = jnp.sum(e, axis=-1, keepdims=True)
    r = pl.reciprocal(denom, approx=True)
    r = r * (2.0 - denom * r)            # one Newton step: full precision, reciprocal stays on EUP
    o_ref[...] = (e * r).reshape(1, 1, LANES).astype(o_ref.dtype)


# ---------------------------------------------------------------------------
# Parameter init (PyTorch-style), BN folding + padding prep, forward wrapper
# ---------------------------------------------------------------------------
def init_params(key):
    """PyTorch-style parameters. BN layers carry (gamma, beta, running_mean, running_var)."""
    params = {"conv": [], "fc_hidden": [], "fc_out": None}
    keys = iter(jax.random.split(key, 2 * (len(FILTERS) + len(HIDDEN_DIMS) + 1)))

    cin = C_IN
    for cout in FILTERS:
        w = 0.05 * jax.random.normal(next(keys), (cout, cin, 3, 3), jnp.float32)
        b = 0.01 * jax.random.normal(next(keys), (cout,), jnp.float32)
        params["conv"].append((w, b,
                               jnp.ones((cout,), jnp.float32), jnp.zeros((cout,), jnp.float32),
                               jnp.zeros((cout,), jnp.float32), jnp.ones((cout,), jnp.float32)))
        cin = cout

    fin = NUM_FEATURES
    for fout in HIDDEN_DIMS:
        w = 0.05 * jax.random.normal(next(keys), (fout, fin), jnp.float32)   # PyTorch (out, in)
        b = 0.01 * jax.random.normal(next(keys), (fout,), jnp.float32)
        params["fc_hidden"].append((w, b,
                                    jnp.ones((fout,), jnp.float32), jnp.zeros((fout,), jnp.float32),
                                    jnp.zeros((fout,), jnp.float32), jnp.ones((fout,), jnp.float32)))
        fin = fout

    w = 0.05 * jax.random.normal(next(keys), (OUT_CLASSES, fin), jnp.float32)
    b = 0.01 * jax.random.normal(next(keys), (OUT_CLASSES,), jnp.float32)
    params["fc_out"] = (w, b)
    return params


def _bn_fold(b, gamma, beta, mean, var):
    scale = gamma / jnp.sqrt(var + EPS)
    shift = (b - mean) * scale + beta
    return scale, shift


def prepare_params(params):
    """Fold BN into weights/biases, pad every channel/feature dim to LANES, cast weights to bf16."""
    conv_w, conv_b = [], []
    for (w, b, gamma, beta, mean, var) in params["conv"]:
        cout, cin = w.shape[0], w.shape[1]
        scale, shift = _bn_fold(b, gamma, beta, mean, var)
        wk = jnp.transpose(w, (2, 3, 1, 0)).reshape(9, cin, cout)         # (kh*3+kw, cin, cout)
        wk = wk * scale[None, None, :]                                    # BN scale folded in
        wk = jnp.pad(wk, ((0, 0), (0, LANES - cin), (0, LANES - cout)))
        conv_w.append(wk.astype(jnp.bfloat16))
        conv_b.append(jnp.pad(shift, (0, LANES - cout)).reshape(1, LANES))

    # fc1: re-index PyTorch flatten(1)-of-NCHW features (f = c*H2*W2 + h*W2 + w) into
    # per-spatial-position (s = h*W2 + w) weight blocks so the kernel never has to transpose.
    (w, b, gamma, beta, mean, var) = params["fc_hidden"][0]
    fout, c_last = w.shape[0], FILTERS[-1]
    scale, shift = _bn_fold(b, gamma, beta, mean, var)
    wr = w.reshape(fout, c_last, H2, W2)                                  # (o, c, h, w)
    wr = jnp.transpose(wr, (2, 3, 1, 0)).reshape(H2 * W2, c_last, fout)   # (s, c, o)
    wr = wr * scale[None, None, :]
    fw1 = jnp.pad(wr, ((0, 0), (0, LANES - c_last), (0, LANES - fout))).astype(jnp.bfloat16)
    fb1 = jnp.pad(shift, (0, LANES - fout)).reshape(1, LANES)

    # output linear; padded class lanes get a -inf bias so they vanish under softmax.
    w, b = params["fc_out"]
    nclass, fin = w.shape
    fw2 = jnp.pad(w.T, ((0, LANES - fin), (0, LANES - nclass))).astype(jnp.bfloat16)
    fb2 = jnp.pad(b, (0, LANES - nclass), constant_values=NEG_INF).reshape(1, LANES)

    return (conv_w[0], conv_b[0], conv_w[1], conv_b[1], fw1, fb1, fw2, fb2)


@jax.jit
def yourcodenet_forward(x_nchw, cw1, cb1, cw2, cb2, fw1, fb1, fw2, fb2):
    n = x_nchw.shape[0]
    # NCHW -> NHWC, zero-pad spatially (3x3 halo) and channels up to LANES (lane-dense tile).
    x = jnp.transpose(x_nchw, (0, 2, 3, 1)).astype(jnp.float32)
    x = jnp.pad(x, ((0, 0), (1, 1), (1, 1), (0, LANES - C_IN)))

    c3 = lambda b: (0, 0, 0)
    c2 = lambda b: (0, 0)
    out = pl.pallas_call(
        _yourcodenet_kernel,
        grid=(n,),                                     # one sample per grid step
        in_specs=[
            pl.BlockSpec((1, H0 + 2, W0 + 2, LANES), lambda b: (b, 0, 0, 0)),
            pl.BlockSpec((9, LANES, LANES), c3),       # weights: constant index maps ->
            pl.BlockSpec((1, LANES), c2),              # fetched once, stay resident in VMEM
            pl.BlockSpec((9, LANES, LANES), c3),
            pl.BlockSpec((1, LANES), c2),
            pl.BlockSpec((H2 * W2, LANES, LANES), c3),
            pl.BlockSpec((1, LANES), c2),
            pl.BlockSpec((LANES, LANES), c2),
            pl.BlockSpec((1, LANES), c2),
        ],
        out_specs=pl.BlockSpec((1, 1, LANES), lambda b: (b, 0, 0)),
        out_shape=jax.ShapeDtypeStruct((n, 1, LANES), jnp.float32),
        scratch_shapes=[
            pltpu.VMEM((H1 + 2, W1 + 2, LANES), jnp.float32),   # zero-padded pool1 output
            pltpu.VMEM((H0 * W0, LANES), jnp.float32),          # f32 matmul accumulator
        ],
        compiler_params=pltpu.CompilerParams(dimension_semantics=("parallel",)),
    )(x, cw1, cb1, cw2, cb2, fw1, fb1, fw2, fb2)
    return out.reshape(n, LANES)[:, :OUT_CLASSES]


# ---------------------------------------------------------------------------
# Pure-JAX reference (inference-mode BN), for correctness checking only
# ---------------------------------------------------------------------------
def reference_forward(x_nchw, params):
    x = x_nchw.astype(jnp.float32)
    for (w, b, gamma, beta, mean, var) in params["conv"]:
        x = jax.lax.conv_general_dilated(x, w, (1, 1), ((1, 1), (1, 1)),
                                         dimension_numbers=("NCHW", "OIHW", "NCHW"))
        x = x + b[None, :, None, None]
        scale = (gamma / jnp.sqrt(var + EPS))[None, :, None, None]
        x = (x - mean[None, :, None, None]) * scale + beta[None, :, None, None]
        x = jnp.maximum(x, 0.0)
        x = jax.lax.reduce_window(x, -jnp.inf, jax.lax.max,
                                  (1, 1, 2, 2), (1, 1, 2, 2), "VALID")    # pool_every == 1
    h = x.reshape(x.shape[0], -1)
    for (w, b, gamma, beta, mean, var) in params["fc_hidden"]:
        h = h @ w.T + b
        h = (h - mean) * (gamma / jnp.sqrt(var + EPS)) + beta
        h = jnp.maximum(h, 0.0)
    w, b = params["fc_out"]
    return jax.nn.softmax(h @ w.T + b, axis=-1)


# ---------------------------------------------------------------------------
if __name__ == "__main__":
    key = jax.random.PRNGKey(0)
    k_x, k_p = jax.random.split(key)
    x = jax.random.normal(k_x, (2, *IN_SIZE), jnp.float32)      # NCHW, batch=2

    params = init_params(k_p)
    prepped = prepare_params(params)

    out = yourcodenet_forward(x, *prepped)
    out = jax.block_until_ready(out)

    assert out.shape == (2, OUT_CLASSES), out.shape
    assert bool(jnp.all(jnp.isfinite(out)))
    assert bool(jnp.allclose(jnp.sum(out, axis=-1), 1.0, atol=1e-4))

    # cross-check against the pure-JAX reference (loose tolerance: bf16 MXU inputs)
    ref = reference_forward(x, params)
    assert bool(jnp.allclose(out, ref, rtol=0.05, atol=5e-3)), float(jnp.max(jnp.abs(out - ref)))

    print("KERNEL_OK")
</pallas_src>

<mosaic_0001>
module attributes {stable_mosaic.version = 11 : i64} {
  func.func @_yourcodenet_kernel(%arg0: i32, %arg1: memref<1x18x18x128xf32, #tpu.memory_space<vmem>>, %arg2: memref<9x128x128xbf16, #tpu.memory_space<vmem>>, %arg3: memref<1x128xf32, #tpu.memory_space<vmem>>, %arg4: memref<9x128x128xbf16, #tpu.memory_space<vmem>>, %arg5: memref<1x128xf32, #tpu.memory_space<vmem>>, %arg6: memref<16x128x128xbf16, #tpu.memory_space<vmem>>, %arg7: memref<1x128xf32, #tpu.memory_space<vmem>>, %arg8: memref<128x128xbf16, #tpu.memory_space<vmem>>, %arg9: memref<1x128xf32, #tpu.memory_space<vmem>>, %arg10: memref<1x1x128xf32, #tpu.memory_space<vmem>>, %arg11: memref<10x10x128xf32, #tpu.memory_space<vmem>>, %arg12: memref<256x128xf32, #tpu.memory_space<vmem>>) attributes {dimension_semantics = [#tpu.dimension_semantics<parallel>], iteration_bounds = array<i64: 2>, scalar_prefetch = 0 : i64, scratch_operands = 2 : i64, tpu.core_type = #tpu.core_type<tc>, window_params = [{transform_indices = @transform_0, window_bounds = array<i64: 1, 18, 18, 128>}, {pipeline_mode = #tpu.pipeline_mode<synchronous>, transform_indices = @transform_1, window_bounds = array<i64: 9, 128, 128>}, {pipeline_mode = #tpu.pipeline_mode<synchronous>, transform_indices = @transform_2, window_bounds = array<i64: 1, 128>}, {pipeline_mode = #tpu.pipeline_mode<synchronous>, transform_indices = @transform_3, window_bounds = array<i64: 9, 128, 128>}, {pipeline_mode = #tpu.pipeline_mode<synchronous>, transform_indices = @transform_4, window_bounds = array<i64: 1, 128>}, {pipeline_mode = #tpu.pipeline_mode<synchronous>, transform_indices = @transform_5, window_bounds = array<i64: 16, 128, 128>}, {pipeline_mode = #tpu.pipeline_mode<synchronous>, transform_indices = @transform_6, window_bounds = array<i64: 1, 128>}, {pipeline_mode = #tpu.pipeline_mode<synchronous>, transform_indices = @transform_7, window_bounds = array<i64: 128, 128>}, {pipeline_mode = #tpu.pipeline_mode<synchronous>, transform_indices = @transform_8, window_bounds = array<i64: 1, 128>}, {transform_indices = @transform_9, window_bounds = array<i64: 1, 1, 128>}]} {
    %cst = arith.constant 0.000000e+00 : f32
    %0 = vector.broadcast %cst : f32 to vector<256x128xf32>
    %c0 = arith.constant 0 : index
    %c0_0 = arith.constant 0 : index
    %1 = vector.load %arg12[%c0, %c0_0] : memref<256x128xf32, #tpu.memory_space<vmem>>, vector<256x128xf32>
    tpu.vector_store %arg12[%c0, %c0_0], %0 {strides = array<i32>} : memref<256x128xf32, #tpu.memory_space<vmem>>, vector<256x128xf32>,
    %c0_1 = arith.constant 0 : index
    %c0_2 = arith.constant 0 : index
    %c0_3 = arith.constant 0 : index
    %c0_4 = arith.constant 0 : index
    %2 = vector.load %arg1[%c0_1, %c0_2, %c0_3, %c0_4] : memref<1x18x18x128xf32, #tpu.memory_space<vmem>>, vector<1x16x16x128xf32>
    %3 = vector.shape_cast %2 : vector<1x16x16x128xf32> to vector<16x16x128xf32>
    %4 = arith.truncf %3 : vector<16x16x128xf32> to vector<16x16x128xbf16>
    %c0_5 = arith.constant 0 : index
    %c0_6 = arith.constant 0 : index
    %5 = vector.load %arg12[%c0_5, %c0_6] : memref<256x128xf32, #tpu.memory_space<vmem>>, vector<256x128xf32>
    %6 = vector.shape_cast %4 : vector<16x16x128xbf16> to vector<256x128xbf16>
    %c0_7 = arith.constant 0 : index
    %c0_8 = arith.constant 0 : index
    %c0_9 = arith.constant 0 : index
    %7 = vector.load %arg2[%c0_7, %c0_8, %c0_9] : memref<9x128x128xbf16, #tpu.memory_space<vmem>>, vector<1x128x128xbf16>
    %8 = vector.shape_cast %7 : vector<1x128x128xbf16> to vector<128x128xbf16>
    %cst_10 = arith.constant dense<0.000000e+00> : vector<256x128xf32>
    %9 = tpu.matmul %6, %8, %cst_10 {dimension_numbers = #tpu.dot_dimension_numbers<[1], [0], [0], [1], [0, 0, 1, 1], [], []>} : vector<256x128xbf16>, vector<128x128xbf16>, vector<256x128xf32> -> vector<256x128xf32>
    %10 = arith.addf %5, %9 : vector<256x128xf32>
    %c0_11 = arith.constant 0 : index
    %c0_12 = arith.constant 0 : index
    %11 = vector.load %arg12[%c0_11, %c0_12] : memref<256x128xf32, #tpu.memory_space<vmem>>, vector<256x128xf32>
    tpu.vector_store %arg12[%c0_11, %c0_12], %10 {strides = array<i32>} : memref<256x128xf32, #tpu.memory_space<vmem>>, vector<256x128xf32>,
    %c0_13 = arith.constant 0 : index
    %c0_14 = arith.constant 0 : index
    %c1 = arith.constant 1 : index
    %c0_15 = arith.constant 0 : index
    %12 = vector.load %arg1[%c0_13, %c0_14, %c1, %c0_15] : memref<1x18x18x128xf32, #tpu.memory_space<vmem>>, vector<1x16x16x128xf32>
    %13 = vector.shape_cast %12 : vector<1x16x16x128xf32> to vector<16x16x128xf32>
    %14 = arith.truncf %13 : vector<16x16x128xf32> to vector<16x16x128xbf16>
    %c0_16 = arith.constant 0 : index
    %c0_17 = arith.constant 0 : index
    %15 = vector.load %arg12[%c0_16, %c0_17] : memref<256x128xf32, #tpu.memory_space<vmem>>, vector<256x128xf32>
    %16 = vector.shape_cast %14 : vector<16x16x128xbf16> to vector<256x128xbf16>
    %c1_18 = arith.constant 1 : index
    %c0_19 = arith.constant 0 : index
    %c0_20 = arith.constant 0 : index
    %17 = vector.load %arg2[%c1_18, %c0_19, %c0_20] : memref<9x128x128xbf16, #tpu.memory_space<vmem>>, vector<1x128x128xbf16>
    %18 = vector.shape_cast %17 : vector<1x128x128xbf16> to vector<128x128xbf16>
    %cst_21 = arith.constant dense<0.000000e+00> : vector<256x128xf32>
    %19 = tpu.matmul %16, %18, %cst_21 {dimension_numbers = #tpu.dot_dimension_numbers<[1], [0], [0], [1], [0, 0, 1, 1], [], []>} : vector<256x128xbf16>, vector<128x128xbf16>, vector<256x128xf32> -> vector<256x128xf32>
    %20 = arith.addf %15, %19 : vector<256x128xf32>
    %c0_22 = arith.constant 0 : index
    %c0_23 = arith.constant 0 : index
    %21 = vector.load %arg12[%c0_22, %c0_23] : memref<256x128xf32, #tpu.memory_space<vmem>>, vector<256x128xf32>
    tpu.vector_store %arg12[%c0_22, %c0_23], %20 {strides = array<i32>} : memref<256x128xf32, #tpu.memory_space<vmem>>, vector<256x128xf32>,
    %c0_24 = arith.constant 0 : index
    %c0_25 = arith.constant 0 : index
    %c2 = arith.constant 2 : index
    %c0_26 = arith.constant 0 : index
    %22 = vector.load %arg1[%c0_24, %c0_25, %c2, %c0_26] : memref<1x18x18x128xf32, #tpu.memory_space<vmem>>, vector<1x16x16x128xf32>
    %23 = vector.shape_cast %22 : vector<1x16x16x128xf32> to vector<16x16x128xf32>
    %24 = arith.truncf %23 : vector<16x16x128xf32> to vector<16x16x128xbf16>
    %c0_27 = arith.constant 0 : index
    %c0_28 = arith.constant 0 : index
    %25 = vector.load %arg12[%c0_27, %c0_28] : memref<256x128xf32, #tpu.memory_space<vmem>>, vector<256x128xf32>
    %26 = vector.shape_cast %24 : vector<16x16x128xbf16> to vector<256x128xbf16>
    %c2_29 = arith.constant 2 : index
    %c0_30 = arith.constant 0 : index
    %c0_31 = arith.constant 0 : index
    %27 = vector.load %arg2[%c2_29, %c0_30, %c0_31] : memref<9x128x128xbf16, #tpu.memory_space<vmem>>, vector<1x128x128xbf16>
    %28 = vector.shape_cast %27 : vector<1x128x128xbf16> to vector<128x128xbf16>
    %cst_32 = arith.constant dense<0.000000e+00> : vector<256x128xf32>
    %29 = tpu.matmul %26, %28, %cst_32 {dimension_numbers = #tpu.dot_dimension_numbers<[1], [0], [0], [1], [0, 0, 1, 1], [], []>} : vector<256x128xbf16>, vector<128x128xbf16>, vector<256x128xf32> -> vector<256x128xf32>
    %30 = arith.addf %25, %29 : vector<256x128xf32>
    %c0_33 = arith.constant 0 : index
    %c0_34 = arith.constant 0 : index
    %31 = vector.load %arg12[%c0_33, %c0_34] : memref<256x128xf32, #tpu.memory_space<vmem>>, vector<256x128xf32>
    tpu.vector_store %arg12[%c0_33, %c0_34], %30 {strides = array<i32>} : memref<256x128xf32, #tpu.memory_space<vmem>>, vector<256x128xf32>,
    %c0_35 = arith.constant 0 : index
    %c1_36 = arith.constant 1 : index
    %c0_37 = arith.constant 0 : index
    %c0_38 = arith.constant 0 : index
    %32 = vector.load %arg1[%c0_35, %c1_36, %c0_37, %c0_38] : memref<1x18x18x128xf32, #tpu.memory_space<vmem>>, vector<1x16x16x128xf32>
    %33 = vector.shape_cast %32 : vector<1x16x16x128xf32> to vector<16x16x128xf32>
    %34 = arith.truncf %33 : vector<16x16x128xf32> to vector<16x16x128xbf16>
    %c0_39 = arith.constant 0 : index
    %c0_40 = arith.constant 0 : index
    %35 = vector.load %arg12[%c0_39, %c0_40] : memref<256x128xf32, #tpu.memory_space<vmem>>, vector<256x128xf32>
    %36 = vector.shape_cast %34 : vector<16x16x128xbf16> to vector<256x128xbf16>
    %c3 = arith.constant 3 : index
    %c0_41 = arith.constant 0 : index
    %c0_42 = arith.constant 0 : index
    %37 = vector.load %arg2[%c3, %c0_41, %c0_42] : memref<9x128x128xbf16, #tpu.memory_space<vmem>>, vector<1x128x128xbf16>
    %38 = vector.shape_cast %37 : vector<1x128x128xbf16> to vector<128x128xbf16>
    %cst_43 = arith.constant dense<0.000000e+00> : vector<256x128xf32>
    %39 = tpu.matmul %36, %38, %cst_43 {dimension_numbers = #tpu.dot_dimension_numbers<[1], [0], [0], [1], [0, 0, 1, 1], [], []>} : vector<256x128xbf16>, vector<128x128xbf16>, vector<256x128xf32> -> vector<256x128xf32>
    %40 = arith.addf %35, %39 : vector<256x128xf32>
    %c0_44 = arith.constant 0 : index
    %c0_45 = arith.constant 0 : index
    %41 = vector.load %arg12[%c0_44, %c0_45] : memref<256x128xf32, #tpu.memory_space<vmem>>, vector<256x128xf32>
    tpu.vector_store %arg12[%c0_44, %c0_45], %40 {strides = array<i32>} : memref<256x128xf32, #tpu.memory_space<vmem>>, vector<256x128xf32>,
    %c0_46 = arith.constant 0 : index
    %c1_47 = arith.constant 1 : index
    %c1_48 = arith.constant 1 : index
    %c0_49 = arith.constant 0 : index
    %42 = vector.load %arg1[%c0_46, %c1_47, %c1_48, %c0_49] : memref<1x18x18x128xf32, #tpu.memory_space<vmem>>, vector<1x16x16x128xf32>
    %43 = vector.shape_cast %42 : vector<1x16x16x128xf32> to vector<16x16x128xf32>
    %44 = arith.truncf %43 : vector<16x16x128xf32> to vector<16x16x128xbf16>
    %c0_50 = arith.constant 0 : index
    %c0_51 = arith.constant 0 : index
    %45 = vector.load %arg12[%c0_50, %c0_51] : memref<256x128xf32, #tpu.memory_space<vmem>>, vector<256x128xf32>
    %46 = vector.shape_cast %44 : vector<16x16x128xbf16> to vector<256x128xbf16>
    %c4 = arith.constant 4 : index
    %c0_52 = arith.constant 0 : index
    %c0_53 = arith.constant 0 : index
    %47 = vector.load %arg2[%c4, %c0_52, %c0_53] : memref<9x128x128xbf16, #tpu.memory_space<vmem>>, vector<1x128x128xbf16>
    %48 = vector.shape_cast %47 : vector<1x128x128xbf16> to vector<128x128xbf16>
    %cst_54 = arith.constant dense<0.000000e+00> : vector<256x128xf32>
    %49 = tpu.matmul %46, %48, %cst_54 {dimension_numbers = #tpu.dot_dimension_numbers<[1], [0], [0], [1], [0, 0, 1, 1], [], []>} : vector<256x128xbf16>, vector<128x128xbf16>, vector<256x128xf32> -> vector<256x128xf32>
    %50 = arith.addf %45, %49 : vector<256x128xf32>
    %c0_55 = arith.constant 0 : index
    %c0_56 = arith.constant 0 : index
    %51 = vector.load %arg12[%c0_55, %c0_56] : memref<256x128xf32, #tpu.memory_space<vmem>>, vector<256x128xf32>
    tpu.vector_store %arg12[%c0_55, %c0_56], %50 {strides = array<i32>} : memref<256x128xf32, #tpu.memory_space<vmem>>, vector<256x128xf32>,
    %c0_57 = arith.constant 0 : index
    %c1_58 = arith.constant 1 : index
    %c2_59 = arith.constant 2 : index
    %c0_60 = arith.constant 0 : index
    %52 = vector.load %arg1[%c0_57, %c1_58, %c2_59, %c0_60] : memref<1x18x18x128xf32, #tpu.memory_space<vmem>>, vector<1x16x16x128xf32>
    %53 = vector.shape_cast %52 : vector<1x16x16x128xf32> to vector<16x16x128xf32>
    %54 = arith.truncf %53 : vector<16x16x128xf32> to vector<16x16x128xbf16>
    %c0_61 = arith.constant 0 : index
    %c0_62 = arith.constant 0 : index
    %55 = vector.load %arg12[%c0_61, %c0_62] : memref<256x128xf32, #tpu.memory_space<vmem>>, vector<256x128xf32>
    %56 = vector.shape_cast %54 : vector<16x16x128xbf16> to vector<256x128xbf16>
    %c5 = arith.constant 5 : index
    %c0_63 = arith.constant 0 : index
    %c0_64 = arith.constant 0 : index
    %57 = vector.load %arg2[%c5, %c0_63, %c0_64] : memref<9x128x128xbf16, #tpu.memory_space<vmem>>, vector<1x128x128xbf16>
    %58 = vector.shape_cast %57 : vector<1x128x128xbf16> to vector<128x128xbf16>
    %cst_65 = arith.constant dense<0.000000e+00> : vector<256x128xf32>
    %59 = tpu.matmul %56, %58, %cst_65 {dimension_numbers = #tpu.dot_dimension_numbers<[1], [0], [0], [1], [0, 0, 1, 1], [], []>} : vector<256x128xbf16>, vector<128x128xbf16>, vector<256x128xf32> -> vector<256x128xf32>
    %60 = arith.addf %55, %59 : vector<256x128xf32>
    %c0_66 = arith.constant 0 : index
    %c0_67 = arith.constant 0 : index
    %61 = vector.load %arg12[%c0_66, %c0_67] : memref<256x128xf32, #tpu.memory_space<vmem>>, vector<256x128xf32>
    tpu.vector_store %arg12[%c0_66, %c0_67], %60 {strides = array<i32>} : memref<256x128xf32, #tpu.memory_space<vmem>>, vector<256x128xf32>,
    %c0_68 = arith.constant 0 : index
    %c2_69 = arith.constant 2 : index
    %c0_70 = arith.constant 0 : index
    %c0_71 = arith.constant 0 : index
    %62 = vector.load %arg1[%c0_68, %c2_69, %c0_70, %c0_71] : memref<1x18x18x128xf32, #tpu.memory_space<vmem>>, vector<1x16x16x128xf32>
    %63 = vector.shape_cast %62 : vector<1x16x16x128xf32> to vector<16x16x128xf32>
    %64 = arith.truncf %63 : vector<16x16x128xf32> to vector<16x16x128xbf16>
    %c0_72 = arith.constant 0 : index
    %c0_73 = arith.constant 0 : index
    %65 = vector.load %arg12[%c0_72, %c0_73] : memref<256x128xf32, #tpu.memory_space<vmem>>, vector<256x128xf32>
    %66 = vector.shape_cast %64 : vector<16x16x128xbf16> to vector<256x128xbf16>
    %c6 = arith.constant 6 : index
    %c0_74 = arith.constant 0 : index
    %c0_75 = arith.constant 0 : index
    %67 = vector.load %arg2[%c6, %c0_74, %c0_75] : memref<9x128x128xbf16, #tpu.memory_space<vmem>>, vector<1x128x128xbf16>
    %68 = vector.shape_cast %67 : vector<1x128x128xbf16> to vector<128x128xbf16>
    %cst_76 = arith.constant dense<0.000000e+00> : vector<256x128xf32>
    %69 = tpu.matmul %66, %68, %cst_76 {dimension_numbers = #tpu.dot_dimension_numbers<[1], [0], [0], [1], [0, 0, 1, 1], [], []>} : vector<256x128xbf16>, vector<128x128xbf16>, vector<256x128xf32> -> vector<256x128xf32>
    %70 = arith.addf %65, %69 : vector<256x128xf32>
    %c0_77 = arith.constant 0 : index
    %c0_78 = arith.constant 0 : index
    %71 = vector.load %arg12[%c0_77, %c0_78] : memref<256x128xf32, #tpu.memory_space<vmem>>, vector<256x128xf32>
    tpu.vector_store %arg12[%c0_77, %c0_78], %70 {strides = array<i32>} : memref<256x128xf32, #tpu.memory_space<vmem>>, vector<256x128xf32>,
    %c0_79 = arith.constant 0 : index
    %c2_80 = arith.constant 2 : index
    %c1_81 = arith.constant 1 : index
    %c0_82 = arith.constant 0 : index
    %72 = vector.load %arg1[%c0_79, %c2_80, %c1_81, %c0_82] : memref<1x18x18x128xf32, #tpu.memory_space<vmem>>, vector<1x16x16x128xf32>
    %73 = vector.shape_cast %72 : vector<1x16x16x128xf32> to vector<16x16x128xf32>
    %74 = arith.truncf %73 : vector<16x16x128xf32> to vector<16x16x128xbf16>
    %c0_83 = arith.constant 0 : index
    %c0_84 = arith.constant 0 : index
    %75 = vector.load %arg12[%c0_83, %c0_84] : memref<256x128xf32, #tpu.memory_space<vmem>>, vector<256x128xf32>
    %76 = vector.shape_cast %74 : vector<16x16x128xbf16> to vector<256x128xbf16>
    %c7 = arith.constant 7 : index
    %c0_85 = arith.constant 0 : index
    %c0_86 = arith.constant 0 : index
    %77 = vector.load %arg2[%c7, %c0_85, %c0_86] : memref<9x128x128xbf16, #tpu.memory_space<vmem>>, vector<1x128x128xbf16>
    %78 = vector.shape_cast %77 : vector<1x128x128xbf16> to vector<128x128xbf16>
    %cst_87 = arith.constant dense<0.000000e+00> : vector<256x128xf32>
    %79 = tpu.matmul %76, %78, %cst_87 {dimension_numbers = #tpu.dot_dimension_numbers<[1], [0], [0], [1], [0, 0, 1, 1], [], []>} : vector<256x128xbf16>, vector<128x128xbf16>, vector<256x128xf32> -> vector<256x128xf32>
    %80 = arith.addf %75, %79 : vector<256x128xf32>
    %c0_88 = arith.constant 0 : index
    %c0_89 = arith.constant 0 : index
    %81 = vector.load %arg12[%c0_88, %c0_89] : memref<256x128xf32, #tpu.memory_space<vmem>>, vector<256x128xf32>
    tpu.vector_store %arg12[%c0_88, %c0_89], %80 {strides = array<i32>} : memref<256x128xf32, #tpu.memory_space<vmem>>, vector<256x128xf32>,
    %c0_90 = arith.constant 0 : index
    %c2_91 = arith.constant 2 : index
    %c2_92 = arith.constant 2 : index
    %c0_93 = arith.constant 0 : index
    %82 = vector.load %arg1[%c0_90, %c2_91, %c2_92, %c0_93] : memref<1x18x18x128xf32, #tpu.memory_space<vmem>>, vector<1x16x16x128xf32>
    %83 = vector.shape_cast %82 : vector<1x16x16x128xf32> to vector<16x16x128xf32>
    %84 = arith.truncf %83 : vector<16x16x128xf32> to vector<16x16x128xbf16>
    %c0_94 = arith.constant 0 : index
    %c0_95 = arith.constant 0 : index
    %85 = vector.load %arg12[%c0_94, %c0_95] : memref<256x128xf32, #tpu.memory_space<vmem>>, vector<256x128xf32>
    %86 = vector.shape_cast %84 : vector<16x16x128xbf16> to vector<256x128xbf16>
    %c8 = arith.constant 8 : index
    %c0_96 = arith.constant 0 : index
    %c0_97 = arith.constant 0 : index
    %87 = vector.load %arg2[%c8, %c0_96, %c0_97] : memref<9x128x128xbf16, #tpu.memory_space<vmem>>, vector<1x128x128xbf16>
    %88 = vector.shape_cast %87 : vector<1x128x128xbf16> to vector<128x128xbf16>
    %cst_98 = arith.constant dense<0.000000e+00> : vector<256x128xf32>
    %89 = tpu.matmul %86, %88, %cst_98 {dimension_numbers = #tpu.dot_dimension_numbers<[1], [0], [0], [1], [0, 0, 1, 1], [], []>} : vector<256x128xbf16>, vector<128x128xbf16>, vector<256x128xf32> -> vector<256x128xf32>
    %90 = arith.addf %85, %89 : vector<256x128xf32>
    %c0_99 = arith.constant 0 : index
    %c0_100 = arith.constant 0 : index
    %91 = vector.load %arg12[%c0_99, %c0_100] : memref<256x128xf32, #tpu.memory_space<vmem>>, vector<256x128xf32>
    tpu.vector_store %arg12[%c0_99, %c0_100], %90 {strides = array<i32>} : memref<256x128xf32, #tpu.memory_space<vmem>>, vector<256x128xf32>,
    %c0_101 = arith.constant 0 : index
    %c0_102 = arith.constant 0 : index
    %92 = vector.load %arg12[%c0_101, %c0_102] : memref<256x128xf32, #tpu.memory_space<vmem>>, vector<256x128xf32>
    %c0_103 = arith.constant 0 : index
    %c0_104 = arith.constant 0 : index
    %93 = vector.load %arg3[%c0_103, %c0_104] : memref<1x128xf32, #tpu.memory_space<vmem>>, vector<1x128xf32>
    %94 = vector.broadcast %93 : vector<1x128xf32> to vector<256x128xf32>
    %95 = arith.addf %92, %94 : vector<256x128xf32>
    %cst_105 = arith.constant 0.000000e+00 : f32
    %96 = vector.broadcast %cst_105 : f32 to vector<256x128xf32>
    %97 = arith.maximumf %95, %96 : vector<256x128xf32>
    %cst_106 = arith.constant 0.000000e+00 : f32
    %98 = vector.broadcast %cst_106 : f32 to vector<10x10x128xf32>
    %c0_107 = arith.constant 0 : index
    %c0_108 = arith.constant 0 : index
    %c0_109 = arith.constant 0 : index
    %99 = vector.load %arg11[%c0_107, %c0_108, %c0_109] : memref<10x10x128xf32, #tpu.memory_space<vmem>>, vector<10x10x128xf32>
    tpu.vector_store %arg11[%c0_107, %c0_108, %c0_109], %98 {strides = array<i32>} : memref<10x10x128xf32, #tpu.memory_space<vmem>>, vector<10x10x128xf32>,
    %100 = vector.shape_cast %97 : vector<256x128xf32> to vector<128x2x128xf32>
    %cst_110 = arith.constant dense<0xFF800000> : vector<128x128xf32>
    %101 = vector.multi_reduction <maximumf>, %100, %cst_110 [1] : vector<128x2x128xf32> to vector<128x128xf32>
    %102 = vector.shape_cast %101 : vector<128x128xf32> to vector<8x2x8x128xf32>
    %cst_111 = arith.constant dense<0xFF800000> : vector<8x8x128xf32>
    %103 = vector.multi_reduction <maximumf>, %102, %cst_111 [1] : vector<8x2x8x128xf32> to vector<8x8x128xf32>
    %c1_112 = arith.constant 1 : index
    %c1_113 = arith.constant 1 : index
    %c0_114 = arith.constant 0 : index
    %104 = vector.load %arg11[%c1_112, %c1_113, %c0_114] : memref<10x10x128xf32, #tpu.memory_space<vmem>>, vector<8x8x128xf32>
    tpu.vector_store %arg11[%c1_112, %c1_113, %c0_114], %103 {strides = array<i32>} : memref<10x10x128xf32, #tpu.memory_space<vmem>>, vector<8x8x128xf32>,
    %cst_115 = arith.constant 0.000000e+00 : f32
    %105 = vector.broadcast %cst_115 : f32 to vector<64x128xf32>
    %c0_116 = arith.constant 0 : index
    %c0_117 = arith.constant 0 : index
    %106 = vector.load %arg12[%c0_116, %c0_117] : memref<256x128xf32, #tpu.memory_space<vmem>>, vector<64x128xf32>
    tpu.vector_store %arg12[%c0_116, %c0_117], %105 {strides = array<i32>} : memref<256x128xf32, #tpu.memory_space<vmem>>, vector<64x128xf32>,
    %c0_118 = arith.constant 0 : index
    %c0_119 = arith.constant 0 : index
    %c0_120 = arith.constant 0 : index
    %107 = vector.load %arg11[%c0_118, %c0_119, %c0_120] : memref<10x10x128xf32, #tpu.memory_space<vmem>>, vector<8x8x128xf32>
    %108 = arith.truncf %107 : vector<8x8x128xf32> to vector<8x8x128xbf16>
    %c0_121 = arith.constant 0 : index
    %c0_122 = arith.constant 0 : index
    %109 = vector.load %arg12[%c0_121, %c0_122] : memref<256x128xf32, #tpu.memory_space<vmem>>, vector<64x128xf32>
    %110 = vector.shape_cast %108 : vector<8x8x128xbf16> to vector<64x128xbf16>
    %c0_123 = arith.constant 0 : index
    %c0_124 = arith.constant 0 : index
    %c0_125 = arith.constant 0 : index
    %111 = vector.load %arg4[%c0_123, %c0_124, %c0_125] : memref<9x128x128xbf16, #tpu.memory_space<vmem>>, vector<1x128x128xbf16>
    %112 = vector.shape_cast %111 : vector<1x128x128xbf16> to vector<128x128xbf16>
    %cst_126 = arith.constant dense<0.000000e+00> : vector<64x128xf32>
    %113 = tpu.matmul %110, %112, %cst_126 {dimension_numbers = #tpu.dot_dimension_numbers<[1], [0], [0], [1], [0, 0, 1, 1], [], []>} : vector<64x128xbf16>, vector<128x128xbf16>, vector<64x128xf32> -> vector<64x128xf32>
    %114 = arith.addf %109, %113 : vector<64x128xf32>
    %c0_127 = arith.constant 0 : index
    %c0_128 = arith.constant 0 : index
    %115 = vector.load %arg12[%c0_127, %c0_128] : memref<256x128xf32, #tpu.memory_space<vmem>>, vector<64x128xf32>
    tpu.vector_store %arg12[%c0_127, %c0_128], %114 {strides = array<i32>} : memref<256x128xf32, #tpu.memory_space<vmem>>, vector<64x128xf32>,
    %c0_129 = arith.constant 0 : index
    %c1_130 = arith.constant 1 : index
    %c0_131 = arith.constant 0 : index
    %116 = vector.load %arg11[%c0_129, %c1_130, %c0_131] : memref<10x10x128xf32, #tpu.memory_space<vmem>>, vector<8x8x128xf32>
    %117 = arith.truncf %116 : vector<8x8x128xf32> to vector<8x8x128xbf16>
    %c0_132 = arith.constant 0 : index
    %c0_133 = arith.constant 0 : index
    %118 = vector.load %arg12[%c0_132, %c0_133] : memref<256x128xf32, #tpu.memory_space<vmem>>, vector<64x128xf32>
    %119 = vector.shape_cast %117 : vector<8x8x128xbf16> to vector<64x128xbf16>
    %c1_134 = arith.constant 1 : index
    %c0_135 = arith.constant 0 : index
    %c0_136 = arith.constant 0 : index
    %120 = vector.load %arg4[%c1_134, %c0_135, %c0_136] : memref<9x128x128xbf16, #tpu.memory_space<vmem>>, vector<1x128x128xbf16>
    %121 = vector.shape_cast %120 : vector<1x128x128xbf16> to vector<128x128xbf16>
    %cst_137 = arith.constant dense<0.000000e+00> : vector<64x128xf32>
    %122 = tpu.matmul %119, %121, %cst_137 {dimension_numbers = #tpu.dot_dimension_numbers<[1], [0], [0], [1], [0, 0, 1, 1], [], []>} : vector<64x128xbf16>, vector<128x128xbf16>, vector<64x128xf32> -> vector<64x128xf32>
    %123 = arith.addf %118, %122 : vector<64x128xf32>
    %c0_138 = arith.constant 0 : index
    %c0_139 = arith.constant 0 : index
    %124 = vector.load %arg12[%c0_138, %c0_139] : memref<256x128xf32, #tpu.memory_space<vmem>>, vector<64x128xf32>
    tpu.vector_store %arg12[%c0_138, %c0_139], %123 {strides = array<i32>} : memref<256x128xf32, #tpu.memory_space<vmem>>, vector<64x128xf32>,
    %c0_140 = arith.constant 0 : index
    %c2_141 = arith.constant 2 : index
    %c0_142 = arith.constant 0 : index
    %125 = vector.load %arg11[%c0_140, %c2_141, %c0_142] : memref<10x10x128xf32, #tpu.memory_space<vmem>>, vector<8x8x128xf32>
    %126 = arith.truncf %125 : vector<8x8x128xf32> to vector<8x8x128xbf16>
    %c0_143 = arith.constant 0 : index
    %c0_144 = arith.constant 0 : index
    %127 = vector.load %arg12[%c0_143, %c0_144] : memref<256x128xf32, #tpu.memory_space<vmem>>, vector<64x128xf32>
    %128 = vector.shape_cast %126 : vector<8x8x128xbf16> to vector<64x128xbf16>
    %c2_145 = arith.constant 2 : index
    %c0_146 = arith.constant 0 : index
    %c0_147 = arith.constant 0 : index
    %129 = vector.load %arg4[%c2_145, %c0_146, %c0_147] : memref<9x128x128xbf16, #tpu.memory_space<vmem>>, vector<1x128x128xbf16>
    %130 = vector.shape_cast %129 : vector<1x128x128xbf16> to vector<128x128xbf16>
    %cst_148 = arith.constant dense<0.000000e+00> : vector<64x128xf32>
    %131 = tpu.matmul %128, %130, %cst_148 {dimension_numbers = #tpu.dot_dimension_numbers<[1], [0], [0], [1], [0, 0, 1, 1], [], []>} : vector<64x128xbf16>, vector<128x128xbf16>, vector<64x128xf32> -> vector<64x128xf32>
    %132 = arith.addf %127, %131 : vector<64x128xf32>
    %c0_149 = arith.constant 0 : index
    %c0_150 = arith.constant 0 : index
    %133 = vector.load %arg12[%c0_149, %c0_150] : memref<256x128xf32, #tpu.memory_space<vmem>>, vector<64x128xf32>
    tpu.vector_store %arg12[%c0_149, %c0_150], %132 {strides = array<i32>} : memref<256x128xf32, #tpu.memory_space<vmem>>, vector<64x128xf32>,
    %c1_151 = arith.constant 1 : index
    %c0_152 = arith.constant 0 : index
    %c0_153 = arith.constant 0 : index
    %134 = vector.load %arg11[%c1_151, %c0_152, %c0_153] : memref<10x10x128xf32, #tpu.memory_space<vmem>>, vector<8x8x128xf32>
    %135 = arith.truncf %134 : vector<8x8x128xf32> to vector<8x8x128xbf16>
    %c0_154 = arith.constant 0 : index
    %c0_155 = arith.constant 0 : index
    %136 = vector.load %arg12[%c0_154, %c0_155] : memref<256x128xf32, #tpu.memory_space<vmem>>, vector<64x128xf32>
    %137 = vector.shape_cast %135 : vector<8x8x128xbf16> to vector<64x128xbf16>
    %c3_156 = arith.constant 3 : index
    %c0_157 = arith.constant 0 : index
    %c0_158 = arith.constant 0 : index
    %138 = vector.load %arg4[%c3_156, %c0_157, %c0_158] : memref<9x128x128xbf16, #tpu.memory_space<vmem>>, vector<1x128x128xbf16>
    %139 = vector.shape_cast %138 : vector<1x128x128xbf16> to vector<128x128xbf16>
    %cst_159 = arith.constant dense<0.000000e+00> : vector<64x128xf32>
    %140 = tpu.matmul %137, %139, %cst_159 {dimension_numbers = #tpu.dot_dimension_numbers<[1], [0], [0], [1], [0, 0, 1, 1], [], []>} : vector<64x128xbf16>, vector<128x128xbf16>, vector<64x128xf32> -> vector<64x128xf32>
    %141 = arith.addf %136, %140 : vector<64x128xf32>
    %c0_160 = arith.constant 0 : index
    %c0_161 = arith.constant 0 : index
    %142 = vector.load %arg12[%c0_160, %c0_161] : memref<256x128xf32, #tpu.memory_space<vmem>>, vector<64x128xf32>
    tpu.vector_store %arg12[%c0_160, %c0_161], %141 {strides = array<i32>} : memref<256x128xf32, #tpu.memory_space<vmem>>, vector<64x128xf32>,
    %c1_162 = arith.constant 1 : index
    %c1_163 = arith.constant 1 : index
    %c0_164 = arith.constant 0 : index
    %143 = vector.load %arg11[%c1_162, %c1_163, %c0_164] : memref<10x10x128xf32, #tpu.memory_space<vmem>>, vector<8x8x128xf32>
    %144 = arith.truncf %143 : vector<8x8x128xf32> to vector<8x8x128xbf16>
    %c0_165 = arith.constant 0 : index
    %c0_166 = arith.constant 0 : index
    %145 = vector.load %arg12[%c0_165, %c0_166] : memref<256x128xf32, #tpu.memory_space<vmem>>, vector<64x128xf32>
    %146 = vector.shape_cast %144 : vector<8x8x128xbf16> to vector<64x128xbf16>
    %c4_167 = arith.constant 4 : index
    %c0_168 = arith.constant 0 : index
    %c0_169 = arith.constant 0 : index
    %147 = vector.load %arg4[%c4_167, %c0_168, %c0_169] : memref<9x128x128xbf16, #tpu.memory_space<vmem>>, vector<1x128x128xbf16>
    %148 = vector.shape_cast %147 : vector<1x128x128xbf16> to vector<128x128xbf16>
    %cst_170 = arith.constant dense<0.000000e+00> : vector<64x128xf32>
    %149 = tpu.matmul %146, %148, %cst_170 {dimension_numbers = #tpu.dot_dimension_numbers<[1], [0], [0], [1], [0, 0, 1, 1], [], []>} : vector<64x128xbf16>, vector<128x128xbf16>, vector<64x128xf32> -> vector<64x128xf32>
    %150 = arith.addf %145, %149 : vector<64x128xf32>
    %c0_171 = arith.constant 0 : index
    %c0_172 = arith.constant 0 : index
    %151 = vector.load %arg12[%c0_171, %c0_172] : memref<256x128xf32, #tpu.memory_space<vmem>>, vector<64x128xf32>
    tpu.vector_store %arg12[%c0_171, %c0_172], %150 {strides = array<i32>} : memref<256x128xf32, #tpu.memory_space<vmem>>, vector<64x128xf32>,
    %c1_173 = arith.constant 1 : index
    %c2_174 = arith.constant 2 : index
    %c0_175 = arith.constant 0 : index
    %152 = vector.load %arg11[%c1_173, %c2_174, %c0_175] : memref<10x10x128xf32, #tpu.memory_space<vmem>>, vector<8x8x128xf32>
    %153 = arith.truncf %152 : vector<8x8x128xf32> to vector<8x8x128xbf16>
    %c0_176 = arith.constant 0 : index
    %c0_177 = arith.constant 0 : index
    %154 = vector.load %arg12[%c0_176, %c0_177] : memref<256x128xf32, #tpu.memory_space<vmem>>, vector<64x128xf32>
    %155 = vector.shape_cast %153 : vector<8x8x128xbf16> to vector<64x128xbf16>
    %c5_178 = arith.constant 5 : index
    %c0_179 = arith.constant 0 : index
    %c0_180 = arith.constant 0 : index
    %156 = vector.load %arg4[%c5_178, %c0_179, %c0_180] : memref<9x128x128xbf16, #tpu.memory_space<vmem>>, vector<1x128x128xbf16>
    %157 = vector.shape_cast %156 : vector<1x128x128xbf16> to vector<128x128xbf16>
    %cst_181 = arith.constant dense<0.000000e+00> : vector<64x128xf32>
    %158 = tpu.matmul %155, %157, %cst_181 {dimension_numbers = #tpu.dot_dimension_numbers<[1], [0], [0], [1], [0, 0, 1, 1], [], []>} : vector<64x128xbf16>, vector<128x128xbf16>, vector<64x128xf32> -> vector<64x128xf32>
    %159 = arith.addf %154, %158 : vector<64x128xf32>
    %c0_182 = arith.constant 0 : index
    %c0_183 = arith.constant 0 : index
    %160 = vector.load %arg12[%c0_182, %c0_183] : memref<256x128xf32, #tpu.memory_space<vmem>>, vector<64x128xf32>
    tpu.vector_store %arg12[%c0_182, %c0_183], %159 {strides = array<i32>} : memref<256x128xf32, #tpu.memory_space<vmem>>, vector<64x128xf32>,
    %c2_184 = arith.constant 2 : index
    %c0_185 = arith.constant 0 : index
    %c0_186 = arith.constant 0 : index
    %161 = vector.load %arg11[%c2_184, %c0_185, %c0_186] : memref<10x10x128xf32, #tpu.memory_space<vmem>>, vector<8x8x128xf32>
    %162 = arith.truncf %161 : vector<8x8x128xf32> to vector<8x8x128xbf16>
    %c0_187 = arith.constant 0 : index
    %c0_188 = arith.constant 0 : index
    %163 = vector.load %arg12[%c0_187, %c0_188] : memref<256x128xf32, #tpu.memory_space<vmem>>, vector<64x128xf32>
    %164 = vector.shape_cast %162 : vector<8x8x128xbf16> to vector<64x128xbf16>
    %c6_189 = arith.constant 6 : index
    %c0_190 = arith.constant 0 : index
    %c0_191 = arith.constant 0 : index
    %165 = vector.load %arg4[%c6_189, %c0_190, %c0_191] : memref<9x128x128xbf16, #tpu.memory_space<vmem>>, vector<1x128x128xbf16>
    %166 = vector.shape_cast %165 : vector<1x128x128xbf16> to vector<128x128xbf16>
    %cst_192 = arith.constant dense<0.000000e+00> : vector<64x128xf32>
    %167 = tpu.matmul %164, %166, %cst_192 {dimension_numbers = #tpu.dot_dimension_numbers<[1], [0], [0], [1], [0, 0, 1, 1], [], []>} : vector<64x128xbf16>, vector<128x128xbf16>, vector<64x128xf32> -> vector<64x128xf32>
    %168 = arith.addf %163, %167 : vector<64x128xf32>
    %c0_193 = arith.constant 0 : index
    %c0_194 = arith.constant 0 : index
    %169 = vector.load %arg12[%c0_193, %c0_194] : memref<256x128xf32, #tpu.memory_space<vmem>>, vector<64x128xf32>
    tpu.vector_store %arg12[%c0_193, %c0_194], %168 {strides = array<i32>} : memref<256x128xf32, #tpu.memory_space<vmem>>, vector<64x128xf32>,
    %c2_195 = arith.constant 2 : index
    %c1_196 = arith.constant 1 : index
    %c0_197 = arith.constant 0 : index
    %170 = vector.load %arg11[%c2_195, %c1_196, %c0_197] : memref<10x10x128xf32, #tpu.memory_space<vmem>>, vector<8x8x128xf32>
    %171 = arith.truncf %170 : vector<8x8x128xf32> to vector<8x8x128xbf16>
    %c0_198 = arith.constant 0 : index
    %c0_199 = arith.constant 0 : index
    %172 = vector.load %arg12[%c0_198, %c0_199] : memref<256x128xf32, #tpu.memory_space<vmem>>, vector<64x128xf32>
    %173 = vector.shape_cast %171 : vector<8x8x128xbf16> to vector<64x128xbf16>
    %c7_200 = arith.constant 7 : index
    %c0_201 = arith.constant 0 : index
    %c0_202 = arith.constant 0 : index
    %174 = vector.load %arg4[%c7_200, %c0_201, %c0_202] : memref<9x128x128xbf16, #tpu.memory_space<vmem>>, vector<1x128x128xbf16>
    %175 = vector.shape_cast %174 : vector<1x128x128xbf16> to vector<128x128xbf16>
    %cst_203 = arith.constant dense<0.000000e+00> : vector<64x128xf32>
    %176 = tpu.matmul %173, %175, %cst_203 {dimension_numbers = #tpu.dot_dimension_numbers<[1], [0], [0], [1], [0, 0, 1, 1], [], []>} : vector<64x128xbf16>, vector<128x128xbf16>, vector<64x128xf32> -> vector<64x128xf32>
    %177 = arith.addf %172, %176 : vector<64x128xf32>
    %c0_204 = arith.constant 0 : index
    %c0_205 = arith.constant 0 : index
    %178 = vector.load %arg12[%c0_204, %c0_205] : memref<256x128xf32, #tpu.memory_space<vmem>>, vector<64x128xf32>
    tpu.vector_store %arg12[%c0_204, %c0_205], %177 {strides = array<i32>} : memref<256x128xf32, #tpu.memory_space<vmem>>, vector<64x128xf32>,
    %c2_206 = arith.constant 2 : index
    %c2_207 = arith.constant 2 : index
    %c0_208 = arith.constant 0 : index
    %179 = vector.load %arg11[%c2_206, %c2_207, %c0_208] : memref<10x10x128xf32, #tpu.memory_space<vmem>>, vector<8x8x128xf32>
    %180 = arith.truncf %179 : vector<8x8x128xf32> to vector<8x8x128xbf16>
    %c0_209 = arith.constant 0 : index
    %c0_210 = arith.constant 0 : index
    %181 = vector.load %arg12[%c0_209, %c0_210] : memref<256x128xf32, #tpu.memory_space<vmem>>, vector<64x128xf32>
    %182 = vector.shape_cast %180 : vector<8x8x128xbf16> to vector<64x128xbf16>
    %c8_211 = arith.constant 8 : index
    %c0_212 = arith.constant 0 : index
    %c0_213 = arith.constant 0 : index
    %183 = vector.load %arg4[%c8_211, %c0_212, %c0_213] : memref<9x128x128xbf16, #tpu.memory_space<vmem>>, vector<1x128x128xbf16>
    %184 = vector.shape_cast %183 : vector<1x128x128xbf16> to vector<128x128xbf16>
    %cst_214 = arith.constant dense<0.000000e+00> : vector<64x128xf32>
    %185 = tpu.matmul %182, %184, %cst_214 {dimension_numbers = #tpu.dot_dimension_numbers<[1], [0], [0], [1], [0, 0, 1, 1], [], []>} : vector<64x128xbf16>, vector<128x128xbf16>, vector<64x128xf32> -> vector<64x128xf32>
    %186 = arith.addf %181, %185 : vector<64x128xf32>
    %c0_215 = arith.constant 0 : index
    %c0_216 = arith.constant 0 : index
    %187 = vector.load %arg12[%c0_215, %c0_216] : memref<256x128xf32, #tpu.memory_space<vmem>>, vector<64x128xf32>
    tpu.vector_store %arg12[%c0_215, %c0_216], %186 {strides = array<i32>} : memref<256x128xf32, #tpu.memory_space<vmem>>, vector<64x128xf32>,
    %c0_217 = arith.constant 0 : index
    %c0_218 = arith.constant 0 : index
    %188 = vector.load %arg12[%c0_217, %c0_218] : memref<256x128xf32, #tpu.memory_space<vmem>>, vector<64x128xf32>
    %c0_219 = arith.constant 0 : index
    %c0_220 = arith.constant 0 : index
    %189 = vector.load %arg5[%c0_219, %c0_220] : memref<1x128xf32, #tpu.memory_space<vmem>>, vector<1x128xf32>
    %190 = vector.broadcast %189 : vector<1x128xf32> to vector<64x128xf32>
    %191 = arith.addf %188, %190 : vector<64x128xf32>
    %cst_221 = arith.constant 0.000000e+00 : f32
    %192 = vector.broadcast %cst_221 : f32 to vector<64x128xf32>
    %193 = arith.maximumf %191, %192 : vector<64x128xf32>
    %194 = vector.shape_cast %193 : vector<64x128xf32> to vector<32x2x128xf32>
    %cst_222 = arith.constant dense<0xFF800000> : vector<32x128xf32>
    %195 = vector.multi_reduction <maximumf>, %194, %cst_222 [1] : vector<32x2x128xf32> to vector<32x128xf32>
    %196 = vector.shape_cast %195 : vector<32x128xf32> to vector<4x2x4x128xf32>
    %cst_223 = arith.constant dense<0xFF800000> : vector<4x4x128xf32>
    %197 = vector.multi_reduction <maximumf>, %196, %cst_223 [1] : vector<4x2x4x128xf32> to vector<4x4x128xf32>
    %198 = vector.shape_cast %197 : vector<4x4x128xf32> to vector<16x128xf32>
    %c0_224 = arith.constant 0 : index
    %c0_225 = arith.constant 0 : index
    %199 = vector.load %arg7[%c0_224, %c0_225] : memref<1x128xf32, #tpu.memory_space<vmem>>, vector<1x128xf32>
    %200 = vector.extract_strided_slice %198 {offsets = [0, 0], sizes = [1, 128], strides = [1, 1]} : vector<16x128xf32> to vector<1x128xf32>
    %201 = arith.truncf %200 : vector<1x128xf32> to vector<1x128xbf16>
    %c0_226 = arith.constant 0 : index
    %c0_227 = arith.constant 0 : index
    %c0_228 = arith.constant 0 : index
    %202 = vector.load %arg6[%c0_226, %c0_227, %c0_228] : memref<16x128x128xbf16, #tpu.memory_space<vmem>>, vector<1x128x128xbf16>
    %203 = vector.shape_cast %202 : vector<1x128x128xbf16> to vector<128x128xbf16>
    %cst_229 = arith.constant dense<0.000000e+00> : vector<1x128xf32>
    %204 = tpu.matmul %201, %203, %cst_229 {dimension_numbers = #tpu.dot_dimension_numbers<[1], [0], [0], [1], [0, 0, 1, 1], [], []>} : vector<1x128xbf16>, vector<128x128xbf16>, vector<1x128xf32> -> vector<1x128xf32>
    %205 = arith.addf %199, %204 : vector<1x128xf32>
    %206 = vector.extract_strided_slice %198 {offsets = [1, 0], sizes = [1, 128], strides = [1, 1]} : vector<16x128xf32> to vector<1x128xf32>
    %207 = arith.truncf %206 : vector<1x128xf32> to vector<1x128xbf16>
    %c1_230 = arith.constant 1 : index
    %c0_231 = arith.constant 0 : index
    %c0_232 = arith.constant 0 : index
    %208 = vector.load %arg6[%c1_230, %c0_231, %c0_232] : memref<16x128x128xbf16, #tpu.memory_space<vmem>>, vector<1x128x128xbf16>
    %209 = vector.shape_cast %208 : vector<1x128x128xbf16> to vector<128x128xbf16>
    %cst_233 = arith.constant dense<0.000000e+00> : vector<1x128xf32>
    %210 = tpu.matmul %207, %209, %cst_233 {dimension_numbers = #tpu.dot_dimension_numbers<[1], [0], [0], [1], [0, 0, 1, 1], [], []>} : vector<1x128xbf16>, vector<128x128xbf16>, vector<1x128xf32> -> vector<1x128xf32>
    %211 = arith.addf %205, %210 : vector<1x128xf32>
    %212 = vector.extract_strided_slice %198 {offsets = [2, 0], sizes = [1, 128], strides = [1, 1]} : vector<16x128xf32> to vector<1x128xf32>
    %213 = arith.truncf %212 : vector<1x128xf32> to vector<1x128xbf16>
    %c2_234 = arith.constant 2 : index
    %c0_235 = arith.constant 0 : index
    %c0_236 = arith.constant 0 : index
    %214 = vector.load %arg6[%c2_234, %c0_235, %c0_236] : memref<16x128x128xbf16, #tpu.memory_space<vmem>>, vector<1x128x128xbf16>
    %215 = vector.shape_cast %214 : vector<1x128x128xbf16> to vector<128x128xbf16>
    %cst_237 = arith.constant dense<0.000000e+00> : vector<1x128xf32>
    %216 = tpu.matmul %213, %215, %cst_237 {dimension_numbers = #tpu.dot_dimension_numbers<[1], [0], [0], [1], [0, 0, 1, 1], [], []>} : vector<1x128xbf16>, vector<128x128xbf16>, vector<1x128xf32> -> vector<1x128xf32>
    %217 = arith.addf %211, %216 : vector<1x128xf32>
    %218 = vector.extract_strided_slice %198 {offsets = [3, 0], sizes = [1, 128], strides = [1, 1]} : vector<16x128xf32> to vector<1x128xf32>
    %219 = arith.truncf %218 : vector<1x128xf32> to vector<1x128xbf16>
    %c3_238 = arith.constant 3 : index
    %c0_239 = arith.constant 0 : index
    %c0_240 = arith.constant 0 : index
    %220 = vector.load %arg6[%c3_238, %c0_239, %c0_240] : memref<16x128x128xbf16, #tpu.memory_space<vmem>>, vector<1x128x128xbf16>
    %221 = vector.shape_cast %220 : vector<1x128x128xbf16> to vector<128x128xbf16>
    %cst_241 = arith.constant dense<0.000000e+00> : vector<1x128xf32>
    %222 = tpu.matmul %219, %221, %cst_241 {dimension_numbers = #tpu.dot_dimension_numbers<[1], [0], [0], [1], [0, 0, 1, 1], [], []>} : vector<1x128xbf16>, vector<128x128xbf16>, vector<1x128xf32> -> vector<1x128xf32>
    %223 = arith.addf %217, %222 : vector<1x128xf32>
    %224 = vector.extract_strided_slice %198 {offsets = [4, 0], sizes = [1, 128], strides = [1, 1]} : vector<16x128xf32> to vector<1x128xf32>
    %225 = arith.truncf %224 : vector<1x128xf32> to vector<1x128xbf16>
    %c4_242 = arith.constant 4 : index
    %c0_243 = arith.constant 0 : index
    %c0_244 = arith.constant 0 : index
    %226 = vector.load %arg6[%c4_242, %c0_243, %c0_244] : memref<16x128x128xbf16, #tpu.memory_space<vmem>>, vector<1x128x128xbf16>
    %227 = vector.shape_cast %226 : vector<1x128x128xbf16> to vector<128x128xbf16>
    %cst_245 = arith.constant dense<0.000000e+00> : vector<1x128xf32>
    %228 = tpu.matmul %225, %227, %cst_245 {dimension_numbers = #tpu.dot_dimension_numbers<[1], [0], [0], [1], [0, 0, 1, 1], [], []>} : vector<1x128xbf16>, vector<128x128xbf16>, vector<1x128xf32> -> vector<1x128xf32>
    %229 = arith.addf %223, %228 : vector<1x128xf32>
    %230 = vector.extract_strided_slice %198 {offsets = [5, 0], sizes = [1, 128], strides = [1, 1]} : vector<16x128xf32> to vector<1x128xf32>
    %231 = arith.truncf %230 : vector<1x128xf32> to vector<1x128xbf16>
    %c5_246 = arith.constant 5 : index
    %c0_247 = arith.constant 0 : index
    %c0_248 = arith.constant 0 : index
    %232 = vector.load %arg6[%c5_246, %c0_247, %c0_248] : memref<16x128x128xbf16, #tpu.memory_space<vmem>>, vector<1x128x128xbf16>
    %233 = vector.shape_cast %232 : vector<1x128x128xbf16> to vector<128x128xbf16>
    %cst_249 = arith.constant dense<0.000000e+00> : vector<1x128xf32>
    %234 = tpu.matmul %231, %233, %cst_249 {dimension_numbers = #tpu.dot_dimension_numbers<[1], [0], [0], [1], [0, 0, 1, 1], [], []>} : vector<1x128xbf16>, vector<128x128xbf16>, vector<1x128xf32> -> vector<1x128xf32>
    %235 = arith.addf %229, %234 : vector<1x128xf32>
    %236 = vector.extract_strided_slice %198 {offsets = [6, 0], sizes = [1, 128], strides = [1, 1]} : vector<16x128xf32> to vector<1x128xf32>
    %237 = arith.truncf %236 : vector<1x128xf32> to vector<1x128xbf16>
    %c6_250 = arith.constant 6 : index
    %c0_251 = arith.constant 0 : index
    %c0_252 = arith.constant 0 : index
    %238 = vector.load %arg6[%c6_250, %c0_251, %c0_252] : memref<16x128x128xbf16, #tpu.memory_space<vmem>>, vector<1x128x128xbf16>
    %239 = vector.shape_cast %238 : vector<1x128x128xbf16> to vector<128x128xbf16>
    %cst_253 = arith.constant dense<0.000000e+00> : vector<1x128xf32>
    %240 = tpu.matmul %237, %239, %cst_253 {dimension_numbers = #tpu.dot_dimension_numbers<[1], [0], [0], [1], [0, 0, 1, 1], [], []>} : vector<1x128xbf16>, vector<128x128xbf16>, vector<1x128xf32> -> vector<1x128xf32>
    %241 = arith.addf %235, %240 : vector<1x128xf32>
    %242 = vector.extract_strided_slice %198 {offsets = [7, 0], sizes = [1, 128], strides = [1, 1]} : vector<16x128xf32> to vector<1x128xf32>
    %243 = arith.truncf %242 : vector<1x128xf32> to vector<1x128xbf16>
    %c7_254 = arith.constant 7 : index
    %c0_255 = arith.constant 0 : index
    %c0_256 = arith.constant 0 : index
    %244 = vector.load %arg6[%c7_254, %c0_255, %c0_256] : memref<16x128x128xbf16, #tpu.memory_space<vmem>>, vector<1x128x128xbf16>
    %245 = vector.shape_cast %244 : vector<1x128x128xbf16> to vector<128x128xbf16>
    %cst_257 = arith.constant dense<0.000000e+00> : vector<1x128xf32>
    %246 = tpu.matmul %243, %245, %cst_257 {dimension_numbers = #tpu.dot_dimension_numbers<[1], [0], [0], [1], [0, 0, 1, 1], [], []>} : vector<1x128xbf16>, vector<128x128xbf16>, vector<1x128xf32> -> vector<1x128xf32>
    %247 = arith.addf %241, %246 : vector<1x128xf32>
    %248 = vector.extract_strided_slice %198 {offsets = [8, 0], sizes = [1, 128], strides = [1, 1]} : vector<16x128xf32> to vector<1x128xf32>
    %249 = arith.truncf %248 : vector<1x128xf32> to vector<1x128xbf16>
    %c8_258 = arith.constant 8 : index
    %c0_259 = arith.constant 0 : index
    %c0_260 = arith.constant 0 : index
    %250 = vector.load %arg6[%c8_258, %c0_259, %c0_260] : memref<16x128x128xbf16, #tpu.memory_space<vmem>>, vector<1x128x128xbf16>
    %251 = vector.shape_cast %250 : vector<1x128x128xbf16> to vector<128x128xbf16>
    %cst_261 = arith.constant dense<0.000000e+00> : vector<1x128xf32>
    %252 = tpu.matmul %249, %251, %cst_261 {dimension_numbers = #tpu.dot_dimension_numbers<[1], [0], [0], [1], [0, 0, 1, 1], [], []>} : vector<1x128xbf16>, vector<128x128xbf16>, vector<1x128xf32> -> vector<1x128xf32>
    %253 = arith.addf %247, %252 : vector<1x128xf32>
    %254 = vector.extract_strided_slice %198 {offsets = [9, 0], sizes = [1, 128], strides = [1, 1]} : vector<16x128xf32> to vector<1x128xf32>
    %255 = arith.truncf %254 : vector<1x128xf32> to vector<1x128xbf16>
    %c9 = arith.constant 9 : index
    %c0_262 = arith.constant 0 : index
    %c0_263 = arith.constant 0 : index
    %256 = vector.load %arg6[%c9, %c0_262, %c0_263] : memref<16x128x128xbf16, #tpu.memory_space<vmem>>, vector<1x128x128xbf16>
    %257 = vector.shape_cast %256 : vector<1x128x128xbf16> to vector<128x128xbf16>
    %cst_264 = arith.constant dense<0.000000e+00> : vector<1x128xf32>
    %258 = tpu.matmul %255, %257, %cst_264 {dimension_numbers = #tpu.dot_dimension_numbers<[1], [0], [0], [1], [0, 0, 1, 1], [], []>} : vector<1x128xbf16>, vector<128x128xbf16>, vector<1x128xf32> -> vector<1x128xf32>
    %259 = arith.addf %253, %258 : vector<1x128xf32>
    %260 = vector.extract_strided_slice %198 {offsets = [10, 0], sizes = [1, 128], strides = [1, 1]} : vector<16x128xf32> to vector<1x128xf32>
    %261 = arith.truncf %260 : vector<1x128xf32> to vector<1x128xbf16>
    %c10 = arith.constant 10 : index
    %c0_265 = arith.constant 0 : index
    %c0_266 = arith.constant 0 : index
    %262 = vector.load %arg6[%c10, %c0_265, %c0_266] : memref<16x128x128xbf16, #tpu.memory_space<vmem>>, vector<1x128x128xbf16>
    %263 = vector.shape_cast %262 : vector<1x128x128xbf16> to vector<128x128xbf16>
    %cst_267 = arith.constant dense<0.000000e+00> : vector<1x128xf32>
    %264 = tpu.matmul %261, %263, %cst_267 {dimension_numbers = #tpu.dot_dimension_numbers<[1], [0], [0], [1], [0, 0, 1, 1], [], []>} : vector<1x128xbf16>, vector<128x128xbf16>, vector<1x128xf32> -> vector<1x128xf32>
    %265 = arith.addf %259, %264 : vector<1x128xf32>
    %266 = vector.extract_strided_slice %198 {offsets = [11, 0], sizes = [1, 128], strides = [1, 1]} : vector<16x128xf32> to vector<1x128xf32>
    %267 = arith.truncf %266 : vector<1x128xf32> to vector<1x128xbf16>
    %c11 = arith.constant 11 : index
    %c0_268 = arith.constant 0 : index
    %c0_269 = arith.constant 0 : index
    %268 = vector.load %arg6[%c11, %c0_268, %c0_269] : memref<16x128x128xbf16, #tpu.memory_space<vmem>>, vector<1x128x128xbf16>
    %269 = vector.shape_cast %268 : vector<1x128x128xbf16> to vector<128x128xbf16>
    %cst_270 = arith.constant dense<0.000000e+00> : vector<1x128xf32>
    %270 = tpu.matmul %267, %269, %cst_270 {dimension_numbers = #tpu.dot_dimension_numbers<[1], [0], [0], [1], [0, 0, 1, 1], [], []>} : vector<1x128xbf16>, vector<128x128xbf16>, vector<1x128xf32> -> vector<1x128xf32>
    %271 = arith.addf %265, %270 : vector<1x128xf32>
    %272 = vector.extract_strided_slice %198 {offsets = [12, 0], sizes = [1, 128], strides = [1, 1]} : vector<16x128xf32> to vector<1x128xf32>
    %273 = arith.truncf %272 : vector<1x128xf32> to vector<1x128xbf16>
    %c12 = arith.constant 12 : index
    %c0_271 = arith.constant 0 : index
    %c0_272 = arith.constant 0 : index
    %274 = vector.load %arg6[%c12, %c0_271, %c0_272] : memref<16x128x128xbf16, #tpu.memory_space<vmem>>, vector<1x128x128xbf16>
    %275 = vector.shape_cast %274 : vector<1x128x128xbf16> to vector<128x128xbf16>
    %cst_273 = arith.constant dense<0.000000e+00> : vector<1x128xf32>
    %276 = tpu.matmul %273, %275, %cst_273 {dimension_numbers = #tpu.dot_dimension_numbers<[1], [0], [0], [1], [0, 0, 1, 1], [], []>} : vector<1x128xbf16>, vector<128x128xbf16>, vector<1x128xf32> -> vector<1x128xf32>
    %277 = arith.addf %271, %276 : vector<1x128xf32>
    %278 = vector.extract_strided_slice %198 {offsets = [13, 0], sizes = [1, 128], strides = [1, 1]} : vector<16x128xf32> to vector<1x128xf32>
    %279 = arith.truncf %278 : vector<1x128xf32> to vector<1x128xbf16>
    %c13 = arith.constant 13 : index
    %c0_274 = arith.constant 0 : index
    %c0_275 = arith.constant 0 : index
    %280 = vector.load %arg6[%c13, %c0_274, %c0_275] : memref<16x128x128xbf16, #tpu.memory_space<vmem>>, vector<1x128x128xbf16>
    %281 = vector.shape_cast %280 : vector<1x128x128xbf16> to vector<128x128xbf16>
    %cst_276 = arith.constant dense<0.000000e+00> : vector<1x128xf32>
    %282 = tpu.matmul %279, %281, %cst_276 {dimension_numbers = #tpu.dot_dimension_numbers<[1], [0], [0], [1], [0, 0, 1, 1], [], []>} : vector<1x128xbf16>, vector<128x128xbf16>, vector<1x128xf32> -> vector<1x128xf32>
    %283 = arith.addf %277, %282 : vector<1x128xf32>
    %284 = vector.extract_strided_slice %198 {offsets = [14, 0], sizes = [1, 128], strides = [1, 1]} : vector<16x128xf32> to vector<1x128xf32>
    %285 = arith.truncf %284 : vector<1x128xf32> to vector<1x128xbf16>
    %c14 = arith.constant 14 : index
    %c0_277 = arith.constant 0 : index
    %c0_278 = arith.constant 0 : index
    %286 = vector.load %arg6[%c14, %c0_277, %c0_278] : memref<16x128x128xbf16, #tpu.memory_space<vmem>>, vector<1x128x128xbf16>
    %287 = vector.shape_cast %286 : vector<1x128x128xbf16> to vector<128x128xbf16>
    %cst_279 = arith.constant dense<0.000000e+00> : vector<1x128xf32>
    %288 = tpu.matmul %285, %287, %cst_279 {dimension_numbers = #tpu.dot_dimension_numbers<[1], [0], [0], [1], [0, 0, 1, 1], [], []>} : vector<1x128xbf16>, vector<128x128xbf16>, vector<1x128xf32> -> vector<1x128xf32>
    %289 = arith.addf %283, %288 : vector<1x128xf32>
    %290 = vector.extract_strided_slice %198 {offsets = [15, 0], sizes = [1, 128], strides = [1, 1]} : vector<16x128xf32> to vector<1x128xf32>
    %291 = arith.truncf %290 : vector<1x128xf32> to vector<1x128xbf16>
    %c15 = arith.constant 15 : index
    %c0_280 = arith.constant 0 : index
    %c0_281 = arith.constant 0 : index
    %292 = vector.load %arg6[%c15, %c0_280, %c0_281] : memref<16x128x128xbf16, #tpu.memory_space<vmem>>, vector<1x128x128xbf16>
    %293 = vector.shape_cast %292 : vector<1x128x128xbf16> to vector<128x128xbf16>
    %cst_282 = arith.constant dense<0.000000e+00> : vector<1x128xf32>
    %294 = tpu.matmul %291, %293, %cst_282 {dimension_numbers = #tpu.dot_dimension_numbers<[1], [0], [0], [1], [0, 0, 1, 1], [], []>} : vector<1x128xbf16>, vector<128x128xbf16>, vector<1x128xf32> -> vector<1x128xf32>
    %295 = arith.addf %289, %294 : vector<1x128xf32>
    %cst_283 = arith.constant 0.000000e+00 : f32
    %296 = vector.broadcast %cst_283 : f32 to vector<1x128xf32>
    %297 = arith.maximumf %295, %296 : vector<1x128xf32>
    %298 = arith.truncf %297 : vector<1x128xf32> to vector<1x128xbf16>
    %c0_284 = arith.constant 0 : index
    %c0_285 = arith.constant 0 : index
    %299 = vector.load %arg8[%c0_284, %c0_285] : memref<128x128xbf16, #tpu.memory_space<vmem>>, vector<128x128xbf16>
    %cst_286 = arith.constant dense<0.000000e+00> : vector<1x128xf32>
    %300 = tpu.matmul %298, %299, %cst_286 {dimension_numbers = #tpu.dot_dimension_numbers<[1], [0], [0], [1], [0, 0, 1, 1], [], []>} : vector<1x128xbf16>, vector<128x128xbf16>, vector<1x128xf32> -> vector<1x128xf32>
    %c0_287 = arith.constant 0 : index
    %c0_288 = arith.constant 0 : index
    %301 = vector.load %arg9[%c0_287, %c0_288] : memref<1x128xf32, #tpu.memory_space<vmem>>, vector<1x128xf32>
    %302 = arith.addf %300, %301 : vector<1x128xf32>
    %cst_289 = arith.constant dense<0xFF800000> : vector<1xf32>
    %303 = vector.multi_reduction <maximumf>, %302, %cst_289 [1] : vector<1x128xf32> to vector<1xf32>
    %304 = vector.shape_cast %303 : vector<1xf32> to vector<1x1xf32>
    %305 = vector.broadcast %304 : vector<1x1xf32> to vector<1x128xf32>
    %306 = arith.subf %302, %305 : vector<1x128xf32>
    %307 = math.exp %306 : vector<1x128xf32>
    %cst_290 = arith.constant dense<0.000000e+00> : vector<1xf32>
    %308 = vector.multi_reduction <add>, %307, %cst_290 [1] : vector<1x128xf32> to vector<1xf32>
    %309 = vector.shape_cast %308 : vector<1xf32> to vector<1x1xf32>
    %310 = tpu.reciprocal %309 {approx = true} : vector<1x1xf32> -> vector<1x1xf32>
    %311 = arith.mulf %309, %310 : vector<1x1xf32>
    %cst_291 = arith.constant 2.000000e+00 : f32
    %312 = vector.broadcast %cst_291 : f32 to vector<1x1xf32>
    %313 = arith.subf %312, %311 : vector<1x1xf32>
    %314 = arith.mulf %310, %313 : vector<1x1xf32>
    %315 = vector.broadcast %314 : vector<1x1xf32> to vector<1x128xf32>
    %316 = arith.mulf %307, %315 : vector<1x128xf32>
    %317 = vector.shape_cast %316 : vector<1x128xf32> to vector<1x1x128xf32>
    %c0_292 = arith.constant 0 : index
    %c0_293 = arith.constant 0 : index
    %c0_294 = arith.constant 0 : index
    %318 = vector.load %arg10[%c0_292, %c0_293, %c0_294] : memref<1x1x128xf32, #tpu.memory_space<vmem>>, vector<1x1x128xf32>
    tpu.vector_store %arg10[%c0_292, %c0_293, %c0_294], %317 {strides = array<i32>} : memref<1x1x128xf32, #tpu.memory_space<vmem>>, vector<1x1x128xf32>,
    return
  }
  func.func @transform_0(%arg0: i32) -> (i32, i32, i32, i32) {
    %c0_i32 = arith.constant 0 : i32
    %c0_i32_0 = arith.constant 0 : i32
    %c0_i32_1 = arith.constant 0 : i32
    %c0_i32_2 = arith.constant 0 : i32
    return %arg0, %c0_i32, %c0_i32_0, %c0_i32_1 : i32, i32, i32, i32
  }
  func.func @transform_1(%arg0: i32) -> (i32, i32, i32) {
    %c0_i32 = arith.constant 0 : i32
    %c0_i32_0 = arith.constant 0 : i32
    %c0_i32_1 = arith.constant 0 : i32
    %c0_i32_2 = arith.constant 0 : i32
    return %c0_i32, %c0_i32_0, %c0_i32_1 : i32, i32, i32
  }
  func.func @transform_2(%arg0: i32) -> (i32, i32) {
    %c0_i32 = arith.constant 0 : i32
    %c0_i32_0 = arith.constant 0 : i32
    %c0_i32_1 = arith.constant 0 : i32
    return %c0_i32, %c0_i32_0 : i32, i32
  }
  func.func @transform_3(%arg0: i32) -> (i32, i32, i32) {
    %c0_i32 = arith.constant 0 : i32
    %c0_i32_0 = arith.constant 0 : i32
    %c0_i32_1 = arith.constant 0 : i32
    %c0_i32_2 = arith.constant 0 : i32
    return %c0_i32, %c0_i32_0, %c0_i32_1 : i32, i32, i32
  }
  func.func @transform_4(%arg0: i32) -> (i32, i32) {
    %c0_i32 = arith.constant 0 : i32
    %c0_i32_0 = arith.constant 0 : i32
    %c0_i32_1 = arith.constant 0 : i32
    return %c0_i32, %c0_i32_0 : i32, i32
  }
  func.func @transform_5(%arg0: i32) -> (i32, i32, i32) {
    %c0_i32 = arith.constant 0 : i32
    %c0_i32_0 = arith.constant 0 : i32
    %c0_i32_1 = arith.constant 0 : i32
    %c0_i32_2 = arith.constant 0 : i32
    return %c0_i32, %c0_i32_0, %c0_i32_1 : i32, i32, i32
  }
  func.func @transform_6(%arg0: i32) -> (i32, i32) {
    %c0_i32 = arith.constant 0 : i32
    %c0_i32_0 = arith.constant 0 : i32
    %c0_i32_1 = arith.constant 0 : i32
    return %c0_i32, %c0_i32_0 : i32, i32
  }
  func.func @transform_7(%arg0: i32) -> (i32, i32) {
    %c0_i32 = arith.constant 0 : i32
    %c0_i32_0 = arith.constant 0 : i32
    %c0_i32_1 = arith.constant 0 : i32
    return %c0_i32, %c0_i32_0 : i32, i32
  }
  func.func @transform_8(%arg0: i32) -> (i32, i32) {
    %c0_i32 = arith.constant 0 : i32
    %c0_i32_0 = arith.constant 0 : i32
    %c0_i32_1 = arith.constant 0 : i32
    return %c0_i32, %c0_i32_0 : i32, i32
  }
  func.func @transform_9(%arg0: i32) -> (i32, i32, i32) {
    %c0_i32 = arith.constant 0 : i32
    %c0_i32_0 = arith.constant 0 : i32
    %c0_i32_1 = arith.constant 0 : i32
    return %arg0, %c0_i32, %c0_i32_0 : i32, i32, i32
  }
}

</mosaic_0001>

<llo_original>
// kernel: yourcodenet_forward.1
$region0: #{yourcodenet_forward.1}
  #allocation0 [shape = 'u32[]', space=smem, size = 0x4, offset = 0x4, fixed_abs, tag = 'smem constant byte address 0x4 - core index']
  #allocation1 [shape = 'u32[72,128]{1,0:T(1,128)}', space=vmem, size = 0x9000, scoped, tag = 'internal scratch']
  #allocation2 [shape = 'f32[10,10,128]{2,1,0:T(8,128)}', space=vmem, size = 0x14000, scoped, tag = 'scratch operand']
  #allocation3 [shape = 'f32[256,128]{1,0:T(8,128)}', space=vmem, size = 0x20000, scoped, tag = 'scratch operand']
  %s0 = inlined_call_operand.vmem [shape: f32[2,18,18,128], index: 0, kind: input, shape index: {}]
  %s1 = inlined_call_operand.vmem [shape: bf16[9,128,128], index: 1, kind: input, shape index: {}]
  %s2 = inlined_call_operand.vmem [shape: f32[1,128], index: 2, kind: input, shape index: {}]
  %s3 = inlined_call_operand.hbm [shape: bf16[9,128,128], index: 3, kind: input, shape index: {}]
  %s4 = inlined_call_operand.vmem [shape: f32[1,128], index: 4, kind: input, shape index: {}]
  %s5 = inlined_call_operand.vmem [shape: bf16[16,128,128], index: 5, kind: input, shape index: {}]
  %s6 = inlined_call_operand.vmem [shape: f32[1,128], index: 6, kind: input, shape index: {}]
  %s7 = inlined_call_operand.vmem [shape: bf16[128,128], index: 7, kind: input, shape index: {}]
  %s8 = inlined_call_operand.vmem [shape: f32[1,128], index: 8, kind: input, shape index: {}]
  %s9 = inlined_call_operand.hbm [shape: f32[2,1,128], index: 9, kind: output, shape index: {}]
  %s10 = sld [smem:[#allocation0]]
  $region73: #{yourcodenet_forward.1} parent=0
    _
  %s12 = ssub.s32 1, %s10
  %s13 = scalar_select 0, %s12, %s10
  $region1: #{yourcodenet_forward.1} parent=0
    #allocation4 [shape = 'u8[294912]{0}', space=vmem, size = 0x48000, scoped, tag = 'input window, operand 3, single buffered']
    #allocation5 [shape = 's32[2]{0}', space=sflag, size = 0x8, scoped, tag = 'scoped memory for yourcodenet_forward.1']
    #allocation6 [shape = 's32[2]{0}', space=sflag, size = 0x8, scoped, tag = 'scoped memory for yourcodenet_forward.1']
    #allocation7 [shape = 'u8[1024]{0}', space=vmem, size = 0x400, scoped, tag = 'output window, operand 0']
    %14 = vsyncpa [#allocation5], 0
    %15 = vsyncpa [#allocation6], 0
    %s16 = scalar_lea.sflag [#allocation6], 1
    %17 = vsyncpa %s16, 0
    loop: start=0, step=1, limit=4
    $region2: #{yourcodenet_forward.1} parent=1 // loop_pre_header
      _
    $region3: #{yourcodenet_forward.1} parent=1 // loop_header
      %s19 = sphi 0, %s23
      %p20 = scmp.ge.s32.totalorder %s19, 4
      %s29 = sphi 0, %s31
      %s32 = sphi 0, %s29
      %s33 = sphi 0, %s32
      %s49 = sphi 0, %s33
      %s53 = sphi 0, %s53
      %s55 = sphi 0, %s53
      %s56 = sphi 0, %s55
      %s70 = sphi 0, %s56
      %s74 = sphi 0, %s74
      %s76 = sphi 0, %s74
      %s77 = sphi 0, %s76
      %s91 = sphi 0, %s77
      %s95 = sphi 0, %s95
      %s97 = sphi 0, %s95
      %s98 = sphi 0, %s97
      %s112 = sphi 0, %s98
      %s116 = sphi 0, %s116
      %s118 = sphi 0, %s116
      %s119 = sphi 0, %s118
      %s133 = sphi 0, %s119
      %s137 = sphi 0, %s137
      %s139 = sphi 0, %s137
      %s140 = sphi 0, %s139
      %s154 = sphi 0, %s140
      %s158 = sphi 0, %s158
      %s160 = sphi 0, %s158
      %s161 = sphi 0, %s160
      %s175 = sphi 0, %s161
      %s179 = sphi 0, %s179
      %s181 = sphi 0, %s179
      %s182 = sphi 0, %s181
      %s196 = sphi 0, %s182
      %s200 = sphi 0, %s200
      %s202 = sphi 0, %s200
      %s203 = sphi 0, %s202
      %s217 = sphi 0, %s203
      %s223 = sphi 0, %s225
      %s226 = sphi 0, %s223
      %s227 = sphi 0, %s226
      %s243 = sphi 0, %s227
    $region4: #{yourcodenet_forward.1} parent=1 // loop_header_branch
      %22 = sbr.rel (%p20) target = $region8
    $region5: #{yourcodenet_forward.1} parent=1 // loop_body
      %s24 = ssub.s32 %s19, 1
      %s25 = ssub.s32 %s19, 2
      %s26 = sadd.s32 %s19, 1
      %s27 = ssub.s32 %s19, %s26
      %p28 = scmp.eq.s32.totalorder %s27, 0
      %s30 = sadd.s32 %s29, 1
      %s31 = scalar_select %p28, %s29, %s30
      %p34 = pneg %p28
      %p35 = scmp.eq.s32.totalorder %s19, 1
      %p36 = por %p34, %p35
      %p37 = scmp.ne.s32.totalorder %s29, %s32
      %p38 = scmp.eq.s32.totalorder %s19, 0
      %p39 = por %p37, %p38
      %p40 = scmp.ne.s32.totalorder %s29, %s32
      %p41 = scmp.eq.s32.totalorder %s24, 1
      %p42 = por %p40, %p41
      %p43 = scmp.ne.s32.totalorder %s32, %s33
      %p44 = scmp.eq.s32.totalorder %s24, 0
      %p45 = por %p43, %p44
      %p46 = scmp.ne.s32.totalorder %s32, %s33
      %p47 = scmp.eq.s32.totalorder %s25, 1
      %p48 = por %p46, %p47
      %p50 = scmp.ne.s32.totalorder %s33, %s49
      %p51 = scmp.eq.s32.totalorder %s25, 0
      %p52 = por %p50, %p51
      %s54 = sadd.s32 %s53, 1
      %p57 = scmp.eq.s32.totalorder %s19, 1
      %p58 = scmp.ne.s32.totalorder %s53, %s55
      %p59 = scmp.eq.s32.totalorder %s19, 0
      %p60 = por %p58, %p59
      %p61 = scmp.ne.s32.totalorder %s53, %s55
      %p62 = scmp.eq.s32.totalorder %s24, 1
      %p63 = por %p61, %p62
      %p64 = scmp.ne.s32.totalorder %s55, %s56
      %p65 = scmp.eq.s32.totalorder %s24, 0
      %p66 = por %p64, %p65
      %p67 = scmp.ne.s32.totalorder %s55, %s56
      %p68 = scmp.eq.s32.totalorder %s25, 1
      %p69 = por %p67, %p68
      %p71 = scmp.ne.s32.totalorder %s56, %s70
      %p72 = scmp.eq.s32.totalorder %s25, 0
      %p73 = por %p71, %p72
      %s75 = sadd.s32 %s74, 1
      %p78 = scmp.eq.s32.totalorder %s19, 1
      %p79 = scmp.ne.s32.totalorder %s74, %s76
      %p80 = scmp.eq.s32.totalorder %s19, 0
      %p81 = por %p79, %p80
      %p82 = scmp.ne.s32.totalorder %s74, %s76
      %p83 = scmp.eq.s32.totalorder %s24, 1
      %p84 = por %p82, %p83
      %p85 = scmp.ne.s32.totalorder %s76, %s77
      %p86 = scmp.eq.s32.totalorder %s24, 0
      %p87 = por %p85, %p86
      %p88 = scmp.ne.s32.totalorder %s76, %s77
      %p89 = scmp.eq.s32.totalorder %s25, 1
      %p90 = por %p88, %p89
      %p92 = scmp.ne.s32.totalorder %s77, %s91
      %p93 = scmp.eq.s32.totalorder %s25, 0
      %p94 = por %p92, %p93
      %s96 = sadd.s32 %s95, 1
      %p99 = scmp.eq.s32.totalorder %s19, 1
      %p100 = scmp.ne.s32.totalorder %s95, %s97
      %p101 = scmp.eq.s32.totalorder %s19, 0
      %p102 = por %p100, %p101
      %p103 = scmp.ne.s32.totalorder %s95, %s97
      %p104 = scmp.eq.s32.totalorder %s24, 1
      %p105 = por %p103, %p104
      %p106 = scmp.ne.s32.totalorder %s97, %s98
      %p107 = scmp.eq.s32.totalorder %s24, 0
      %p108 = por %p106, %p107
      %p109 = scmp.ne.s32.totalorder %s97, %s98
      %p110 = scmp.eq.s32.totalorder %s25, 1
      %p111 = por %p109, %p110
      %p113 = scmp.ne.s32.totalorder %s98, %s112
      %p114 = scmp.eq.s32.totalorder %s25, 0
      %p115 = por %p113, %p114
      %s117 = sadd.s32 %s116, 1
      %p120 = scmp.eq.s32.totalorder %s19, 1
      %p121 = scmp.ne.s32.totalorder %s116, %s118
      %p122 = scmp.eq.s32.totalorder %s19, 0
      %p123 = por %p121, %p122
      %p124 = scmp.ne.s32.totalorder %s116, %s118
      %p125 = scmp.eq.s32.totalorder %s24, 1
      %p126 = por %p124, %p125
      %p127 = scmp.ne.s32.totalorder %s118, %s119
      %p128 = scmp.eq.s32.totalorder %s24, 0
      %p129 = por %p127, %p128
      %p130 = scmp.ne.s32.totalorder %s118, %s119
      %p131 = scmp.eq.s32.totalorder %s25, 1
      %p132 = por %p130, %p131
      %p134 = scmp.ne.s32.totalorder %s119, %s133
      %p135 = scmp.eq.s32.totalorder %s25, 0
      %p136 = por %p134, %p135
      %s138 = sadd.s32 %s137, 1
      %p141 = scmp.eq.s32.totalorder %s19, 1
      %p142 = scmp.ne.s32.totalorder %s137, %s139
      %p143 = scmp.eq.s32.totalorder %s19, 0
      %p144 = por %p142, %p143
      %p145 = scmp.ne.s32.totalorder %s137, %s139
      %p146 = scmp.eq.s32.totalorder %s24, 1
      %p147 = por %p145, %p146
      %p148 = scmp.ne.s32.totalorder %s139, %s140
      %p149 = scmp.eq.s32.totalorder %s24, 0
      %p150 = por %p148, %p149
      %p151 = scmp.ne.s32.totalorder %s139, %s140
      %p152 = scmp.eq.s32.totalorder %s25, 1
      %p153 = por %p151, %p152
      %p155 = scmp.ne.s32.totalorder %s140, %s154
      %p156 = scmp.eq.s32.totalorder %s25, 0
      %p157 = por %p155, %p156
      %s159 = sadd.s32 %s158, 1
      %p162 = scmp.eq.s32.totalorder %s19, 1
      %p163 = scmp.ne.s32.totalorder %s158, %s160
      %p164 = scmp.eq.s32.totalorder %s19, 0
      %p165 = por %p163, %p164
      %p166 = scmp.ne.s32.totalorder %s158, %s160
      %p167 = scmp.eq.s32.totalorder %s24, 1
      %p168 = por %p166, %p167
      %p169 = scmp.ne.s32.totalorder %s160, %s161
      %p170 = scmp.eq.s32.totalorder %s24, 0
      %p171 = por %p169, %p170
      %p172 = scmp.ne.s32.totalorder %s160, %s161
      %p173 = scmp.eq.s32.totalorder %s25, 1
      %p174 = por %p172, %p173
      %p176 = scmp.ne.s32.totalorder %s161, %s175
      %p177 = scmp.eq.s32.totalorder %s25, 0
      %p178 = por %p176, %p177
      %s180 = sadd.s32 %s179, 1
      %p183 = scmp.eq.s32.totalorder %s19, 1
      %p184 = scmp.ne.s32.totalorder %s179, %s181
      %p185 = scmp.eq.s32.totalorder %s19, 0
      %p186 = por %p184, %p185
      %p187 = scmp.ne.s32.totalorder %s179, %s181
      %p188 = scmp.eq.s32.totalorder %s24, 1
      %p189 = por %p187, %p188
      %p190 = scmp.ne.s32.totalorder %s181, %s182
      %p191 = scmp.eq.s32.totalorder %s24, 0
      %p192 = por %p190, %p191
      %p193 = scmp.ne.s32.totalorder %s181, %s182
      %p194 = scmp.eq.s32.totalorder %s25, 1
      %p195 = por %p193, %p194
      %p197 = scmp.ne.s32.totalorder %s182, %s196
      %p198 = scmp.eq.s32.totalorder %s25, 0
      %p199 = por %p197, %p198
      %s201 = sadd.s32 %s200, 1
      %p204 = scmp.eq.s32.totalorder %s19, 1
      %p205 = scmp.ne.s32.totalorder %s200, %s202
      %p206 = scmp.eq.s32.totalorder %s19, 0
      %p207 = por %p205, %p206
      %p208 = scmp.ne.s32.totalorder %s200, %s202
      %p209 = scmp.eq.s32.totalorder %s24, 1
      %p210 = por %p208, %p209
      %p211 = scmp.ne.s32.totalorder %s202, %s203
      %p212 = scmp.eq.s32.totalorder %s24, 0
      %p213 = por %p211, %p212
      %p214 = scmp.ne.s32.totalorder %s202, %s203
      %p215 = scmp.eq.s32.totalorder %s25, 1
      %p216 = por %p214, %p215
      %p218 = scmp.ne.s32.totalorder %s203, %s217
      %p219 = scmp.eq.s32.totalorder %s25, 0
      %p220 = por %p218, %p219
      %s221 = ssub.s32 %s19, %s26
      %p222 = scmp.eq.s32.totalorder %s221, 0
      %s224 = sadd.s32 %s223, 1
      %s225 = scalar_select %p222, %s223, %s224
      %p228 = pneg %p222
      %p229 = scmp.eq.s32.totalorder %s19, 1
      %p230 = por %p228, %p229
      %p231 = scmp.ne.s32.totalorder %s223, %s226
      %p232 = scmp.eq.s32.totalorder %s19, 0
      %p233 = por %p231, %p232
      %p234 = scmp.ne.s32.totalorder %s223, %s226
      %p235 = scmp.eq.s32.totalorder %s24, 1
      %p236 = por %p234, %p235
      %p237 = scmp.ne.s32.totalorder %s226, %s227
      %p238 = scmp.eq.s32.totalorder %s24, 0
      %p239 = por %p237, %p238
      %p240 = scmp.ne.s32.totalorder %s226, %s227
      %p241 = scmp.eq.s32.totalorder %s25, 1
      %p242 = por %p240, %p241
      %p244 = scmp.ne.s32.totalorder %s227, %s243
      %p245 = scmp.eq.s32.totalorder %s25, 0
      %p246 = por %p244, %p245
      %p247 = scmp.le.s32.totalorder 1, %s19
      %p248 = scmp.lt.s32.totalorder %s19, 3
      %p249 = pnand %p247, %p248
      %p250 = pneg %p249
      // Predicated region
      $region9: #{yourcodenet_forward.1} parent=5 // pred_check
        _
      $region10: #{yourcodenet_forward.1} parent=5 // pred_check_branch
        %252 = sbr.rel (%p249) target = $region12
      $region11: #{yourcodenet_forward.1} parent=5 // pred_region
        %s253 = ssub.s32 %s19, 1
        // Predicated region
        $region13: #{yourcodenet_forward.1} parent=11 // pred_check
          %p254 = pneg %p66
        $region14: #{yourcodenet_forward.1} parent=11 // pred_check_branch
          %256 = sbr.rel (%p254) target = $region16
        $region15: #{yourcodenet_forward.1} parent=11 // pred_region
          _
        $region16: #{yourcodenet_forward.1} parent=11 // pred_fallthru
          _
        // Predicated region
        $region17: #{yourcodenet_forward.1} parent=11 // pred_check
          %p257 = pneg %p87
        $region18: #{yourcodenet_forward.1} parent=11 // pred_check_branch
          %259 = sbr.rel (%p257) target = $region20
        $region19: #{yourcodenet_forward.1} parent=11 // pred_region
          _
        $region20: #{yourcodenet_forward.1} parent=11 // pred_fallthru
          _
        // Predicated region
        $region21: #{yourcodenet_forward.1} parent=11 // pred_check
          %p260 = pneg %p108
        $region22: #{yourcodenet_forward.1} parent=11 // pred_check_branch
          %262 = sbr.rel (%p260) target = $region24
        $region23: #{yourcodenet_forward.1} parent=11 // pred_region
          %264 = vsyncadd [#allocation5], 0
          %s265 = sshll.u32 %s3, 4
          %s266 = int_to_ptr.hbm [resolvable:$true] %s265
          %s267 = sshll.u32 [#allocation4], 4
          %s268 = int_to_ptr.vmem [resolvable:$true] %s267
          %273 = dma.hbm_to_vmem [thread:$0]  %s266, 9216, %s268, [#allocation5], 64, 64, 4
        $region24: #{yourcodenet_forward.1} parent=11 // pred_fallthru
          _
        // Predicated region
        $region25: #{yourcodenet_forward.1} parent=11 // pred_check
          %p274 = pneg %p129
        $region26: #{yourcodenet_forward.1} parent=11 // pred_check_branch
          %276 = sbr.rel (%p274) target = $region28
        $region27: #{yourcodenet_forward.1} parent=11 // pred_region
          _
        $region28: #{yourcodenet_forward.1} parent=11 // pred_fallthru
          _
        // Predicated region
        $region29: #{yourcodenet_forward.1} parent=11 // pred_check
          %p277 = pneg %p150
        $region30: #{yourcodenet_forward.1} parent=11 // pred_check_branch
          %279 = sbr.rel (%p277) target = $region32
        $region31: #{yourcodenet_forward.1} parent=11 // pred_region
          _
        $region32: #{yourcodenet_forward.1} parent=11 // pred_fallthru
          _
        // Predicated region
        $region33: #{yourcodenet_forward.1} parent=11 // pred_check
          %p280 = pneg %p171
        $region34: #{yourcodenet_forward.1} parent=11 // pred_check_branch
          %282 = sbr.rel (%p280) target = $region36
        $region35: #{yourcodenet_forward.1} parent=11 // pred_region
          _
        $region36: #{yourcodenet_forward.1} parent=11 // pred_fallthru
          _
        // Predicated region
        $region37: #{yourcodenet_forward.1} parent=11 // pred_check
          %p283 = pneg %p192
        $region38: #{yourcodenet_forward.1} parent=11 // pred_check_branch
          %285 = sbr.rel (%p283) target = $region40
        $region39: #{yourcodenet_forward.1} parent=11 // pred_region
          _
        $region40: #{yourcodenet_forward.1} parent=11 // pred_fallthru
          _
        // Predicated region
        $region41: #{yourcodenet_forward.1} parent=11 // pred_check
          %p286 = pneg %p213
        $region42: #{yourcodenet_forward.1} parent=11 // pred_check_branch
          %288 = sbr.rel (%p286) target = $region44
        $region43: #{yourcodenet_forward.1} parent=11 // pred_region
          _
        $region44: #{yourcodenet_forward.1} parent=11 // pred_fallthru
          _
      $region12: #{yourcodenet_forward.1} parent=5 // pred_fallthru
        _
      %p289 = scmp.lt.s32.totalorder %s19, 2
      // Predicated region
      $region45: #{yourcodenet_forward.1} parent=5 // pred_check
        %p290 = pneg %p289
      $region46: #{yourcodenet_forward.1} parent=5 // pred_check_branch
        %292 = sbr.rel (%p290) target = $region48
      $region47: #{yourcodenet_forward.1} parent=5 // pred_region
        // Predicated region
        $region49: #{yourcodenet_forward.1} parent=47 // pred_check
          %p293 = pneg %p39
        $region50: #{yourcodenet_forward.1} parent=47 // pred_check_branch
          %295 = sbr.rel (%p293) target = $region52
        $region51: #{yourcodenet_forward.1} parent=47 // pred_region
          %p296 = scmp.lt.s32.totalorder %s19, 1
          %s297 = scalar_select %p296, %s19, 1
          %s298 = smul.addr %s297, 54
          %s299 = smul.addr %s298, 8
          %s300 = scalar_lea.vmem %s0, %s299
        $region52: #{yourcodenet_forward.1} parent=47 // pred_fallthru
          _
      $region48: #{yourcodenet_forward.1} parent=5 // pred_fallthru
        _
      %p301 = scmp.le.s32.totalorder 1, %s19
      %p302 = scmp.lt.s32.totalorder %s19, 3
      %p303 = pnand %p301, %p302
      %p304 = pneg %p303
      // Predicated region
      $region53: #{yourcodenet_forward.1} parent=5 // pred_check
        _
      $region54: #{yourcodenet_forward.1} parent=5 // pred_check_branch
        %306 = sbr.rel (%p303) target = $region56
      $region55: #{yourcodenet_forward.1} parent=5 // pred_region
        %s307 = ssub.s32 %s19, 1
        // Predicated region
        $region57: #{yourcodenet_forward.1} parent=55 // pred_check
          %p308 = pneg %p108
        $region58: #{yourcodenet_forward.1} parent=55 // pred_check_branch
          %310 = sbr.rel (%p308) target = $region60
        $region59: #{yourcodenet_forward.1} parent=55 // pred_region
          %312 = dma.done [#allocation5], 9216
        $region60: #{yourcodenet_forward.1} parent=55 // pred_fallthru
          _
        %p313 = scmp.lt.s32.totalorder %s24, 1
        %s314 = scalar_select %p313, %s24, 1
        %s315 = smul.addr %s314, 54
        %s316 = smul.addr %s315, 8
        %s317 = scalar_lea.vmem %s0, %s316
        %p318 = pneg %p45
        %p319 = pneg %p42
        %p320 = pneg %p66
        %p321 = pneg %p63
        %p322 = pneg %p87
        %p323 = pneg %p84
        %p324 = pneg %p108
        %p325 = pneg %p105
        %p326 = pneg %p129
        %p327 = pneg %p126
        %p328 = pneg %p150
        %p329 = pneg %p147
        %p330 = pneg %p171
        %p331 = pneg %p168
        %p332 = pneg %p192
        %p333 = pneg %p189
        %p334 = pneg %p213
        %p335 = pneg %p210
        %p336 = pneg %p239
        %p337 = pneg %p236
        %s338 = sand.u32 %s226, 1
        %s339 = scalar_lea.sflag [#allocation6], %s338
        %s340 = sand.u32 %s226, 1
        %s341 = scalar_lea.vmem [#allocation7], %s340
        %p342 = scmp.lt.s32.totalorder %s24, 1
        %s343 = scalar_select %p342, %s24, 1
        %s344 = smul.addr %s343, 54
        %s345 = smul.addr %s344, 8
        %s346 = scalar_lea.vmem %s0, %s345
        %347 = vst [vmem:[#allocation3] sm:$0xff] 0.0
        %348 = vst [vmem:[#allocation3 + $0x8] sm:$0xff] 0.0
        %349 = vst [vmem:[#allocation3 + $0x10] sm:$0xff] 0.0
        %350 = vst [vmem:[#allocation3 + $0x18] sm:$0xff] 0.0
        %351 = vst [vmem:[#allocation3 + $0x20] sm:$0xff] 0.0
        %352 = vst [vmem:[#allocation3 + $0x28] sm:$0xff] 0.0
        %353 = vst [vmem:[#allocation3 + $0x30] sm:$0xff] 0.0
        %354 = vst [vmem:[#allocation3 + $0x38] sm:$0xff] 0.0
        %355 = vst [vmem:[#allocation3 + $0x40] sm:$0xff] 0.0
        %356 = vst [vmem:[#allocation3 + $0x48] sm:$0xff] 0.0
        %357 = vst [vmem:[#allocation3 + $0x50] sm:$0xff] 0.0
        %358 = vst [vmem:[#allocation3 + $0x58] sm:$0xff] 0.0
        %359 = vst [vmem:[#allocation3 + $0x60] sm:$0xff] 0.0
        %360 = vst [vmem:[#allocation3 + $0x68] sm:$0xff] 0.0
        %361 = vst [vmem:[#allocation3 + $0x70] sm:$0xff] 0.0
        %362 = vst [vmem:[#allocation3 + $0x78] sm:$0xff] 0.0
        %363 = vst [vmem:[#allocation3 + $0x80] sm:$0xff] 0.0
        %364 = vst [vmem:[#allocation3 + $0x88] sm:$0xff] 0.0
        %365 = vst [vmem:[#allocation3 + $0x90] sm:$0xff] 0.0
        %366 = vst [vmem:[#allocation3 + $0x98] sm:$0xff] 0.0
        %367 = vst [vmem:[#allocation3 + $0xa0] sm:$0xff] 0.0
        %368 = vst [vmem:[#allocation3 + $0xa8] sm:$0xff] 0.0
        %369 = vst [vmem:[#allocation3 + $0xb0] sm:$0xff] 0.0
        %370 = vst [vmem:[#allocation3 + $0xb8] sm:$0xff] 0.0
        %371 = vst [vmem:[#allocation3 + $0xc0] sm:$0xff] 0.0
        %372 = vst [vmem:[#allocation3 + $0xc8] sm:$0xff] 0.0
        %373 = vst [vmem:[#allocation3 + $0xd0] sm:$0xff] 0.0
        %374 = vst [vmem:[#allocation3 + $0xd8] sm:$0xff] 0.0
        %375 = vst [vmem:[#allocation3 + $0xe0] sm:$0xff] 0.0
        %376 = vst [vmem:[#allocation3 + $0xe8] sm:$0xff] 0.0
        %377 = vst [vmem:[#allocation3 + $0xf0] sm:$0xff] 0.0
        %378 = vst [vmem:[#allocation3 + $0xf8] sm:$0xff] 0.0
        %v379 = vld [vmem:[%s346] sm:$0xff]
        %v380 = vld [vmem:[%s346 + $0x8] sm:$0xff]
        %v381 = vld [vmem:[%s346 + $0x18] sm:$0xff]
        %v382 = vld [vmem:[%s346 + $0x20] sm:$0xff]
        %v383 = vld [vmem:[%s346 + $0x30] sm:$0xff]
        %v384 = vld [vmem:[%s346 + $0x38] sm:$0xff]
        %v385 = vld [vmem:[%s346 + $0x48] sm:$0xff]
        %v386 = vld [vmem:[%s346 + $0x50] sm:$0xff]
        %v387 = vld [vmem:[%s346 + $0x60] sm:$0xff]
        %v388 = vld [vmem:[%s346 + $0x68] sm:$0xff]
        %v389 = vld [vmem:[%s346 + $0x78] sm:$0xff]
        %v390 = vld [vmem:[%s346 + $0x80] sm:$0xff]
        %v391 = vld [vmem:[%s346 + $0x90] sm:$0xff]
        %v392 = vld [vmem:[%s346 + $0x98] sm:$0xff]
        %v393 = vld [vmem:[%s346 + $0xa8] sm:$0xff]
        %v394 = vld [vmem:[%s346 + $0xb0] sm:$0xff]
        %v395 = vld [vmem:[%s346 + $0xc0] sm:$0xff]
        %v396 = vld [vmem:[%s346 + $0xc8] sm:$0xff]
        %v397 = vld [vmem:[%s346 + $0xd8] sm:$0xff]
        %v398 = vld [vmem:[%s346 + $0xe0] sm:$0xff]
        %v399 = vld [vmem:[%s346 + $0xf0] sm:$0xff]
        %v400 = vld [vmem:[%s346 + $0xf8] sm:$0xff]
        %v401 = vld [vmem:[%s346 + $0x108] sm:$0xff]
        %v402 = vld [vmem:[%s346 + $0x110] sm:$0xff]
        %v403 = vld [vmem:[%s346 + $0x120] sm:$0xff]
        %v404 = vld [vmem:[%s346 + $0x128] sm:$0xff]
        %v405 = vld [vmem:[%s346 + $0x138] sm:$0xff]
        %v406 = vld [vmem:[%s346 + $0x140] sm:$0xff]
        %v407 = vld [vmem:[%s346 + $0x150] sm:$0xff]
        %v408 = vld [vmem:[%s346 + $0x158] sm:$0xff]
        %v409 = vld [vmem:[%s346 + $0x168] sm:$0xff]
        %v410 = vld [vmem:[%s346 + $0x170] sm:$0xff]
        %v411 = vpack.c.bf16 %v379, %v379
        %v412 = vpack.c.bf16 %v380, %v380
        %v413 = vpack.c.bf16 %v381, %v381
        %v414 = vpack.c.bf16 %v382, %v382
        %v415 = vpack.c.bf16 %v383, %v383
        %v416 = vpack.c.bf16 %v384, %v384
        %v417 = vpack.c.bf16 %v385, %v385
        %v418 = vpack.c.bf16 %v386, %v386
        %v419 = vpack.c.bf16 %v387, %v387
        %v420 = vpack.c.bf16 %v388, %v388
        %v421 = vpack.c.bf16 %v389, %v389
        %v422 = vpack.c.bf16 %v390, %v390
        %v423 = vpack.c.bf16 %v391, %v391
        %v424 = vpack.c.bf16 %v392, %v392
        %v425 = vpack.c.bf16 %v393, %v393
        %v426 = vpack.c.bf16 %v394, %v394
        %v427 = vpack.c.bf16 %v395, %v395
        %v428 = vpack.c.bf16 %v396, %v396
        %v429 = vpack.c.bf16 %v397, %v397
        %v430 = vpack.c.bf16 %v398, %v398
        %v431 = vpack.c.bf16 %v399, %v399
        %v432 = vpack.c.bf16 %v400, %v400
        %v433 = vpack.c.bf16 %v401, %v401
        %v434 = vpack.c.bf16 %v402, %v402
        %v435 = vpack.c.bf16 %v403, %v403
        %v436 = vpack.c.bf16 %v404, %v404
        %v437 = vpack.c.bf16 %v405, %v405
        %v438 = vpack.c.bf16 %v406, %v406
        %v439 = vpack.c.bf16 %v407, %v407
        %v440 = vpack.c.bf16 %v408, %v408
        %v441 = vpack.c.bf16 %v409, %v409
        %v442 = vpack.c.bf16 %v410, %v410
        %v443 = vld [vmem:[#allocation3] sm:$0xff]
        %v444 = vld [vmem:[#allocation3 + $0x8] sm:$0xff]
        %v445 = vld [vmem:[#allocation3 + $0x10] sm:$0xff]
        %v446 = vld [vmem:[#allocation3 + $0x18] sm:$0xff]
        %v447 = vld [vmem:[#allocation3 + $0x20] sm:$0xff]
        %v448 = vld [vmem:[#allocation3 + $0x28] sm:$0xff]
        %v449 = vld [vmem:[#allocation3 + $0x30] sm:$0xff]
        %v450 = vld [vmem:[#allocation3 + $0x38] sm:$0xff]
        %v451 = vld [vmem:[#allocation3 + $0x40] sm:$0xff]
        %v452 = vld [vmem:[#allocation3 + $0x48] sm:$0xff]
        %v453 = vld [vmem:[#allocation3 + $0x50] sm:$0xff]
        %v454 = vld [vmem:[#allocation3 + $0x58] sm:$0xff]
        %v455 = vld [vmem:[#allocation3 + $0x60] sm:$0xff]
        %v456 = vld [vmem:[#allocation3 + $0x68] sm:$0xff]
        %v457 = vld [vmem:[#allocation3 + $0x70] sm:$0xff]
        %v458 = vld [vmem:[#allocation3 + $0x78] sm:$0xff]
        %v459 = vld [vmem:[#allocation3 + $0x80] sm:$0xff]
        %v460 = vld [vmem:[#allocation3 + $0x88] sm:$0xff]
        %v461 = vld [vmem:[#allocation3 + $0x90] sm:$0xff]
        %v462 = vld [vmem:[#allocation3 + $0x98] sm:$0xff]
        %v463 = vld [vmem:[#allocation3 + $0xa0] sm:$0xff]
        %v464 = vld [vmem:[#allocation3 + $0xa8] sm:$0xff]
        %v465 = vld [vmem:[#allocation3 + $0xb0] sm:$0xff]
        %v466 = vld [vmem:[#allocation3 + $0xb8] sm:$0xff]
        %v467 = vld [vmem:[#allocation3 + $0xc0] sm:$0xff]
        %v468 = vld [vmem:[#allocation3 + $0xc8] sm:$0xff]
        %v469 = vld [vmem:[#allocation3 + $0xd0] sm:$0xff]
        %v470 = vld [vmem:[#allocation3 + $0xd8] sm:$0xff]
        %v471 = vld [vmem:[#allocation3 + $0xe0] sm:$0xff]
        %v472 = vld [vmem:[#allocation3 + $0xe8] sm:$0xff]
        %v473 = vld [vmem:[#allocation3 + $0xf0] sm:$0xff]
        %v474 = vld [vmem:[#allocation3 + $0xf8] sm:$0xff]
        %v475 = vld [vmem:[%s1] sm:$0xf]
        %v476 = vld [vmem:[%s1 + $0x4] sm:$0xf]
        %v477 = vld [vmem:[%s1 + $0x8] sm:$0xf]
        %v478 = vld [vmem:[%s1 + $0xc] sm:$0xf]
        %v479 = vld [vmem:[%s1 + $0x10] sm:$0xf]
        %v480 = vld [vmem:[%s1 + $0x14] sm:$0xf]
        %v481 = vld [vmem:[%s1 + $0x18] sm:$0xf]
        %v482 = vld [vmem:[%s1 + $0x1c] sm:$0xf]
        %v483 = vld [vmem:[%s1 + $0x20] sm:$0xf]
        %v484 = vld [vmem:[%s1 + $0x24] sm:$0xf]
        %v485 = vld [vmem:[%s1 + $0x28] sm:$0xf]
        %v486 = vld [vmem:[%s1 + $0x2c] sm:$0xf]
        %v487 = vld [vmem:[%s1 + $0x30] sm:$0xf]
        %v488 = vld [vmem:[%s1 + $0x34] sm:$0xf]
        %v489 = vld [vmem:[%s1 + $0x38] sm:$0xf]
        %v490 = vld [vmem:[%s1 + $0x3c] sm:$0xf]
        %v523 = vunpack.c.l.b16 %v411
        %v524 = vunpack.c.l.b16 %v412
        %v525 = vunpack.c.l.b16 %v413
        %v526 = vunpack.c.l.b16 %v414
        %v527 = vunpack.c.l.b16 %v415
        %v528 = vunpack.c.l.b16 %v416
        %v529 = vunpack.c.l.b16 %v417
        %v530 = vunpack.c.l.b16 %v418
        %v531 = vunpack.c.l.b16 %v419
        %v532 = vunpack.c.l.b16 %v420
        %v533 = vunpack.c.l.b16 %v421
        %v534 = vunpack.c.l.b16 %v422
        %v535 = vunpack.c.l.b16 %v423
        %v536 = vunpack.c.l.b16 %v424
        %v537 = vunpack.c.l.b16 %v425
        %v538 = vunpack.c.l.b16 %v426
        %v539 = vunpack.c.l.b16 %v427
        %v540 = vunpack.c.l.b16 %v428
        %v541 = vunpack.c.l.b16 %v429
        %v542 = vunpack.c.l.b16 %v430
        %v543 = vunpack.c.l.b16 %v431
        %v544 = vunpack.c.l.b16 %v432
        %v545 = vunpack.c.l.b16 %v433
        %v546 = vunpack.c.l.b16 %v434
        %v547 = vunpack.c.l.b16 %v435
        %v548 = vunpack.c.l.b16 %v436
        %v549 = vunpack.c.l.b16 %v437
        %v550 = vunpack.c.l.b16 %v438
        %v551 = vunpack.c.l.b16 %v439
        %v552 = vunpack.c.l.b16 %v440
        %v553 = vunpack.c.l.b16 %v441
        %v554 = vunpack.c.l.b16 %v442
        %v555 = vpack.c.b16 %v524, %v523
        %v556 = vpack.c.b16 %v526, %v525
        %v557 = vpack.c.b16 %v528, %v527
        %v558 = vpack.c.b16 %v530, %v529
        %v559 = vpack.c.b16 %v532, %v531
        %v560 = vpack.c.b16 %v534, %v533
        %v561 = vpack.c.b16 %v536, %v535
        %v562 = vpack.c.b16 %v538, %v537
        %v563 = vpack.c.b16 %v540, %v539
        %v564 = vpack.c.b16 %v542, %v541
        %v565 = vpack.c.b16 %v544, %v543
        %v566 = vpack.c.b16 %v546, %v545
        %v567 = vpack.c.b16 %v548, %v547
        %v568 = vpack.c.b16 %v550, %v549
        %v569 = vpack.c.b16 %v552, %v551
        %v570 = vpack.c.b16 %v554, %v553
        %v603 = vunpack.c.l.b16 %v475
        %v604 = vunpack.c.l.b16 %v476
        %v605 = vunpack.c.l.b16 %v477
        %v606 = vunpack.c.l.b16 %v478
        %v607 = vunpack.c.l.b16 %v479
        %v608 = vunpack.c.l.b16 %v480
        %v609 = vunpack.c.l.b16 %v481
        %v610 = vunpack.c.l.b16 %v482
        %v611 = vunpack.c.l.b16 %v483
        %v612 = vunpack.c.l.b16 %v484
        %v613 = vunpack.c.l.b16 %v485
        %v614 = vunpack.c.l.b16 %v486
        %v615 = vunpack.c.l.b16 %v487
        %v616 = vunpack.c.l.b16 %v488
        %v617 = vunpack.c.l.b16 %v489
        %v618 = vunpack.c.l.b16 %v490
        %v619 = vpack.c.b16 %v604, %v603
        %v620 = vpack.c.b16 %v606, %v605
        %v621 = vpack.c.b16 %v608, %v607
        %v622 = vpack.c.b16 %v610, %v609
        %v623 = vpack.c.b16 %v612, %v611
        %v624 = vpack.c.b16 %v614, %v613
        %v625 = vpack.c.b16 %v616, %v615
        %v626 = vpack.c.b16 %v618, %v617
        %635 = vmatpush.bf16.msra.mxu0 %v626
        %636 = vmatpush.bf16.msra.mxu0 %v625
        %637 = vmatpush.bf16.msra.mxu0 %v624
        %638 = vmatpush.bf16.msra.mxu0 %v623
        %639 = vmatpush.bf16.msra.mxu0 %v622
        %640 = vmatpush.bf16.msra.mxu0 %v621
        %641 = vmatpush.bf16.msra.mxu0 %v620
        %642 = vmatpush.bf16.msra.mxu0 %v619
        %643 = vmatmul.bf16.gmra.mxu0 %v555
        %v644 = vpop.f32.mrf.mxu0
        %v645 = vadd.f32 0.0, %v644
        %v646 = vpop.f32.mrf.mxu0
        %v647 = vadd.f32 0.0, %v646
        %648 = vmatmul.bf16.gmra.mxu0 %v556
        %v649 = vpop.f32.mrf.mxu0
        %v650 = vadd.f32 0.0, %v649
        %v651 = vpop.f32.mrf.mxu0
        %v652 = vadd.f32 0.0, %v651
        %653 = vmatmul.bf16.gmra.mxu0 %v557
        %v654 = vpop.f32.mrf.mxu0
        %v655 = vadd.f32 0.0, %v654
        %v656 = vpop.f32.mrf.mxu0
        %v657 = vadd.f32 0.0, %v656
        %658 = vmatmul.bf16.gmra.mxu0 %v558
        %v659 = vpop.f32.mrf.mxu0
        %v660 = vadd.f32 0.0, %v659
        %v661 = vpop.f32.mrf.mxu0
        %v662 = vadd.f32 0.0, %v661
        %663 = vmatmul.bf16.gmra.mxu0 %v559
        %v664 = vpop.f32.mrf.mxu0
        %v665 = vadd.f32 0.0, %v664
        %v666 = vpop.f32.mrf.mxu0
        %v667 = vadd.f32 0.0, %v666
        %668 = vmatmul.bf16.gmra.mxu0 %v560
        %v669 = vpop.f32.mrf.mxu0
        %v670 = vadd.f32 0.0, %v669
        %v671 = vpop.f32.mrf.mxu0
        %v672 = vadd.f32 0.0, %v671
        %673 = vmatmul.bf16.gmra.mxu0 %v561
        %v674 = vpop.f32.mrf.mxu0
        %v675 = vadd.f32 0.0, %v674
        %v676 = vpop.f32.mrf.mxu0
        %v677 = vadd.f32 0.0, %v676
        %678 = vmatmul.bf16.gmra.mxu0 %v562
        %v679 = vpop.f32.mrf.mxu0
        %v680 = vadd.f32 0.0, %v679
        %v681 = vpop.f32.mrf.mxu0
        %v682 = vadd.f32 0.0, %v681
        %683 = vmatmul.bf16.gmra.mxu0 %v563
        %v684 = vpop.f32.mrf.mxu0
        %v685 = vadd.f32 0.0, %v684
        %v686 = vpop.f32.mrf.mxu0
        %v687 = vadd.f32 0.0, %v686
        %688 = vmatmul.bf16.gmra.mxu0 %v564
        %v689 = vpop.f32.mrf.mxu0
        %v690 = vadd.f32 0.0, %v689
        %v691 = vpop.f32.mrf.mxu0
        %v692 = vadd.f32 0.0, %v691
        %693 = vmatmul.bf16.gmra.mxu0 %v565
        %v694 = vpop.f32.mrf.mxu0
        %v695 = vadd.f32 0.0, %v694
        %v696 = vpop.f32.mrf.mxu0
        %v697 = vadd.f32 0.0, %v696
        %698 = vmatmul.bf16.gmra.mxu0 %v566
        %v699 = vpop.f32.mrf.mxu0
        %v700 = vadd.f32 0.0, %v699
        %v701 = vpop.f32.mrf.mxu0
        %v702 = vadd.f32 0.0, %v701
        %703 = vmatmul.bf16.gmra.mxu0 %v567
        %v704 = vpop.f32.mrf.mxu0
        %v705 = vadd.f32 0.0, %v704
        %v706 = vpop.f32.mrf.mxu0
        %v707 = vadd.f32 0.0, %v706
        %708 = vmatmul.bf16.gmra.mxu0 %v568
        %v709 = vpop.f32.mrf.mxu0
        %v710 = vadd.f32 0.0, %v709
        %v711 = vpop.f32.mrf.mxu0
        %v712 = vadd.f32 0.0, %v711
        %713 = vmatmul.bf16.gmra.mxu0 %v569
        %v714 = vpop.f32.mrf.mxu0
        %v715 = vadd.f32 0.0, %v714
        %v716 = vpop.f32.mrf.mxu0
        %v717 = vadd.f32 0.0, %v716
        %718 = vmatmul.bf16.gmra.mxu0 %v570
        %v719 = vpop.f32.mrf.mxu0
        %v720 = vadd.f32 0.0, %v719
        %v721 = vpop.f32.mrf.mxu0
        %v722 = vadd.f32 0.0, %v721
        %723 = vdwg.mxu0
        %v724 = vadd.f32 %v443, %v645
        %v725 = vadd.f32 %v444, %v647
        %v726 = vadd.f32 %v445, %v650
        %v727 = vadd.f32 %v446, %v652
        %v728 = vadd.f32 %v447, %v655
        %v729 = vadd.f32 %v448, %v657
        %v730 = vadd.f32 %v449, %v660
        %v731 = vadd.f32 %v450, %v662
        %v732 = vadd.f32 %v451, %v665
        %v733 = vadd.f32 %v452, %v667
        %v734 = vadd.f32 %v453, %v670
        %v735 = vadd.f32 %v454, %v672
        %v736 = vadd.f32 %v455, %v675
        %v737 = vadd.f32 %v456, %v677
        %v738 = vadd.f32 %v457, %v680
        %v739 = vadd.f32 %v458, %v682
        %v740 = vadd.f32 %v459, %v685
        %v741 = vadd.f32 %v460, %v687
        %v742 = vadd.f32 %v461, %v690
        %v743 = vadd.f32 %v462, %v692
        %v744 = vadd.f32 %v463, %v695
        %v745 = vadd.f32 %v464, %v697
        %v746 = vadd.f32 %v465, %v700
        %v747 = vadd.f32 %v466, %v702
        %v748 = vadd.f32 %v467, %v705
        %v749 = vadd.f32 %v468, %v707
        %v750 = vadd.f32 %v469, %v710
        %v751 = vadd.f32 %v470, %v712
        %v752 = vadd.f32 %v471, %v715
        %v753 = vadd.f32 %v472, %v717
        %v754 = vadd.f32 %v473, %v720
        %v755 = vadd.f32 %v474, %v722
        %756 = vst [vmem:[#allocation3] sm:$0xff] %v724
        %757 = vst [vmem:[#allocation3 + $0x8] sm:$0xff] %v725
        %758 = vst [vmem:[#allocation3 + $0x10] sm:$0xff] %v726
        %759 = vst [vmem:[#allocation3 + $0x18] sm:$0xff] %v727
        %760 = vst [vmem:[#allocation3 + $0x20] sm:$0xff] %v728
        %761 = vst [vmem:[#allocation3 + $0x28] sm:$0xff] %v729
        %762 = vst [vmem:[#allocation3 + $0x30] sm:$0xff] %v730
        %763 = vst [vmem:[#allocation3 + $0x38] sm:$0xff] %v731
        %764 = vst [vmem:[#allocation3 + $0x40] sm:$0xff] %v732
        %765 = vst [vmem:[#allocation3 + $0x48] sm:$0xff] %v733
        %766 = vst [vmem:[#allocation3 + $0x50] sm:$0xff] %v734
        %767 = vst [vmem:[#allocation3 + $0x58] sm:$0xff] %v735
        %768 = vst [vmem:[#allocation3 + $0x60] sm:$0xff] %v736
        %769 = vst [vmem:[#allocation3 + $0x68] sm:$0xff] %v737
        %770 = vst [vmem:[#allocation3 + $0x70] sm:$0xff] %v738
        %771 = vst [vmem:[#allocation3 + $0x78] sm:$0xff] %v739
        %772 = vst [vmem:[#allocation3 + $0x80] sm:$0xff] %v740
        %773 = vst [vmem:[#allocation3 + $0x88] sm:$0xff] %v741
        %774 = vst [vmem:[#allocation3 + $0x90] sm:$0xff] %v742
        %775 = vst [vmem:[#allocation3 + $0x98] sm:$0xff] %v743
        %776 = vst [vmem:[#allocation3 + $0xa0] sm:$0xff] %v744
        %777 = vst [vmem:[#allocation3 + $0xa8] sm:$0xff] %v745
        %778 = vst [vmem:[#allocation3 + $0xb0] sm:$0xff] %v746
        %779 = vst [vmem:[#allocation3 + $0xb8] sm:$0xff] %v747
        %780 = vst [vmem:[#allocation3 + $0xc0] sm:$0xff] %v748
        %781 = vst [vmem:[#allocation3 + $0xc8] sm:$0xff] %v749
        %782 = vst [vmem:[#allocation3 + $0xd0] sm:$0xff] %v750
        %783 = vst [vmem:[#allocation3 + $0xd8] sm:$0xff] %v751
        %784 = vst [vmem:[#allocation3 + $0xe0] sm:$0xff] %v752
        %785 = vst [vmem:[#allocation3 + $0xe8] sm:$0xff] %v753
        %786 = vst [vmem:[#allocation3 + $0xf0] sm:$0xff] %v754
        %787 = vst [vmem:[#allocation3 + $0xf8] sm:$0xff] %v755
        %v788 = vld [vmem:[%s346 + $0x1] sm:$0xff]
        %v789 = vld [vmem:[%s346 + $0x9] sm:$0xff]
        %v790 = vld [vmem:[%s346 + $0x19] sm:$0xff]
        %v791 = vld [vmem:[%s346 + $0x21] sm:$0xff]
        %v792 = vld [vmem:[%s346 + $0x31] sm:$0xff]
        %v793 = vld [vmem:[%s346 + $0x39] sm:$0xff]
        %v794 = vld [vmem:[%s346 + $0x49] sm:$0xff]
        %v795 = vld [vmem:[%s346 + $0x51] sm:$0xff]
        %v796 = vld [vmem:[%s346 + $0x61] sm:$0xff]
        %v797 = vld [vmem:[%s346 + $0x69] sm:$0xff]
        %v798 = vld [vmem:[%s346 + $0x79] sm:$0xff]
        %v799 = vld [vmem:[%s346 + $0x81] sm:$0xff]
        %v800 = vld [vmem:[%s346 + $0x91] sm:$0xff]
        %v801 = vld [vmem:[%s346 + $0x99] sm:$0xff]
        %v802 = vld [vmem:[%s346 + $0xa9] sm:$0xff]
        %v803 = vld [vmem:[%s346 + $0xb1] sm:$0xff]
        %v804 = vld [vmem:[%s346 + $0xc1] sm:$0xff]
        %v805 = vld [vmem:[%s346 + $0xc9] sm:$0xff]
        %v806 = vld [vmem:[%s346 + $0xd9] sm:$0xff]
        %v807 = vld [vmem:[%s346 + $0xe1] sm:$0xff]
        %v808 = vld [vmem:[%s346 + $0xf1] sm:$0xff]
        %v809 = vld [vmem:[%s346 + $0xf9] sm:$0xff]
        %v810 = vld [vmem:[%s346 + $0x109] sm:$0xff]
        %v811 = vld [vmem:[%s346 + $0x111] sm:$0xff]
        %v812 = vld [vmem:[%s346 + $0x121] sm:$0xff]
        %v813 = vld [vmem:[%s346 + $0x129] sm:$0xff]
        %v814 = vld [vmem:[%s346 + $0x139] sm:$0xff]
        %v815 = vld [vmem:[%s346 + $0x141] sm:$0xff]
        %v816 = vld [vmem:[%s346 + $0x151] sm:$0xff]
        %v817 = vld [vmem:[%s346 + $0x159] sm:$0xff]
        %v818 = vld [vmem:[%s346 + $0x169] sm:$0xff]
        %v819 = vld [vmem:[%s346 + $0x171] sm:$0xff]
        %v820 = vpack.c.bf16 %v788, %v788
        %v821 = vpack.c.bf16 %v789, %v789
        %v822 = vpack.c.bf16 %v790, %v790
        %v823 = vpack.c.bf16 %v791, %v791
        %v824 = vpack.c.bf16 %v792, %v792
        %v825 = vpack.c.bf16 %v793, %v793
        %v826 = vpack.c.bf16 %v794, %v794
        %v827 = vpack.c.bf16 %v795, %v795
        %v828 = vpack.c.bf16 %v796, %v796
        %v829 = vpack.c.bf16 %v797, %v797
        %v830 = vpack.c.bf16 %v798, %v798
        %v831 = vpack.c.bf16 %v799, %v799
        %v832 = vpack.c.bf16 %v800, %v800
        %v833 = vpack.c.bf16 %v801, %v801
        %v834 = vpack.c.bf16 %v802, %v802
        %v835 = vpack.c.bf16 %v803, %v803
        %v836 = vpack.c.bf16 %v804, %v804
        %v837 = vpack.c.bf16 %v805, %v805
        %v838 = vpack.c.bf16 %v806, %v806
        %v839 = vpack.c.bf16 %v807, %v807
        %v840 = vpack.c.bf16 %v808, %v808
        %v841 = vpack.c.bf16 %v809, %v809
        %v842 = vpack.c.bf16 %v810, %v810
        %v843 = vpack.c.bf16 %v811, %v811
        %v844 = vpack.c.bf16 %v812, %v812
        %v845 = vpack.c.bf16 %v813, %v813
        %v846 = vpack.c.bf16 %v814, %v814
        %v847 = vpack.c.bf16 %v815, %v815
        %v848 = vpack.c.bf16 %v816, %v816
        %v849 = vpack.c.bf16 %v817, %v817
        %v850 = vpack.c.bf16 %v818, %v818
        %v851 = vpack.c.bf16 %v819, %v819
        %v852 = vld [vmem:[#allocation3] sm:$0xff]
        %v853 = vld [vmem:[#allocation3 + $0x8] sm:$0xff]
        %v854 = vld [vmem:[#allocation3 + $0x10] sm:$0xff]
        %v855 = vld [vmem:[#allocation3 + $0x18] sm:$0xff]
        %v856 = vld [vmem:[#allocation3 + $0x20] sm:$0xff]
        %v857 = vld [vmem:[#allocation3 + $0x28] sm:$0xff]
        %v858 = vld [vmem:[#allocation3 + $0x30] sm:$0xff]
        %v859 = vld [vmem:[#allocation3 + $0x38] sm:$0xff]
        %v860 = vld [vmem:[#allocation3 + $0x40] sm:$0xff]
        %v861 = vld [vmem:[#allocation3 + $0x48] sm:$0xff]
        %v862 = vld [vmem:[#allocation3 + $0x50] sm:$0xff]
        %v863 = vld [vmem:[#allocation3 + $0x58] sm:$0xff]
        %v864 = vld [vmem:[#allocation3 + $0x60] sm:$0xff]
        %v865 = vld [vmem:[#allocation3 + $0x68] sm:$0xff]
        %v866 = vld [vmem:[#allocation3 + $0x70] sm:$0xff]
        %v867 = vld [vmem:[#allocation3 + $0x78] sm:$0xff]
        %v868 = vld [vmem:[#allocation3 + $0x80] sm:$0xff]
        %v869 = vld [vmem:[#allocation3 + $0x88] sm:$0xff]
        %v870 = vld [vmem:[#allocation3 + $0x90] sm:$0xff]
        %v871 = vld [vmem:[#allocation3 + $0x98] sm:$0xff]
        %v872 = vld [vmem:[#allocation3 + $0xa0] sm:$0xff]
        %v873 = vld [vmem:[#allocation3 + $0xa8] sm:$0xff]
        %v874 = vld [vmem:[#allocation3 + $0xb0] sm:$0xff]
        %v875 = vld [vmem:[#allocation3 + $0xb8] sm:$0xff]
        %v876 = vld [vmem:[#allocation3 + $0xc0] sm:$0xff]
        %v877 = vld [vmem:[#allocation3 + $0xc8] sm:$0xff]
        %v878 = vld [vmem:[#allocation3 + $0xd0] sm:$0xff]
        %v879 = vld [vmem:[#allocation3 + $0xd8] sm:$0xff]
        %v880 = vld [vmem:[#allocation3 + $0xe0] sm:$0xff]
        %v881 = vld [vmem:[#allocation3 + $0xe8] sm:$0xff]
        %v882 = vld [vmem:[#allocation3 + $0xf0] sm:$0xff]
        %v883 = vld [vmem:[#allocation3 + $0xf8] sm:$0xff]
        %s884 = scalar_lea.vmem %s1, 64
        %v885 = vld [vmem:[%s884] sm:$0xf]
        %v886 = vld [vmem:[%s884 + $0x4] sm:$0xf]
        %v887 = vld [vmem:[%s884 + $0x8] sm:$0xf]
        %v888 = vld [vmem:[%s884 + $0xc] sm:$0xf]
        %v889 = vld [vmem:[%s884 + $0x10] sm:$0xf]
        %v890 = vld [vmem:[%s884 + $0x14] sm:$0xf]
        %v891 = vld [vmem:[%s884 + $0x18] sm:$0xf]
        %v892 = vld [vmem:[%s884 + $0x1c] sm:$0xf]
        %v893 = vld [vmem:[%s884 + $0x20] sm:$0xf]
        %v894 = vld [vmem:[%s884 + $0x24] sm:$0xf]
        %v895 = vld [vmem:[%s884 + $0x28] sm:$0xf]
        %v896 = vld [vmem:[%s884 + $0x2c] sm:$0xf]
        %v897 = vld [vmem:[%s884 + $0x30] sm:$0xf]
        %v898 = vld [vmem:[%s884 + $0x34] sm:$0xf]
        %v899 = vld [vmem:[%s884 + $0x38] sm:$0xf]
        %v900 = vld [vmem:[%s884 + $0x3c] sm:$0xf]
        %v933 = vunpack.c.l.b16 %v820
        %v934 = vunpack.c.l.b16 %v821
        %v935 = vunpack.c.l.b16 %v822
        %v936 = vunpack.c.l.b16 %v823
        %v937 = vunpack.c.l.b16 %v824
        %v938 = vunpack.c.l.b16 %v825
        %v939 = vunpack.c.l.b16 %v826
        %v940 = vunpack.c.l.b16 %v827
        %v941 = vunpack.c.l.b16 %v828
        %v942 = vunpack.c.l.b16 %v829
        %v943 = vunpack.c.l.b16 %v830
        %v944 = vunpack.c.l.b16 %v831
        %v945 = vunpack.c.l.b16 %v832
        %v946 = vunpack.c.l.b16 %v833
        %v947 = vunpack.c.l.b16 %v834
        %v948 = vunpack.c.l.b16 %v835
        %v949 = vunpack.c.l.b16 %v836
        %v950 = vunpack.c.l.b16 %v837
        %v951 = vunpack.c.l.b16 %v838
        %v952 = vunpack.c.l.b16 %v839
        %v953 = vunpack.c.l.b16 %v840
        %v954 = vunpack.c.l.b16 %v841
        %v955 = vunpack.c.l.b16 %v842
        %v956 = vunpack.c.l.b16 %v843
        %v957 = vunpack.c.l.b16 %v844
        %v958 = vunpack.c.l.b16 %v845
        %v959 = vunpack.c.l.b16 %v846
        %v960 = vunpack.c.l.b16 %v847
        %v961 = vunpack.c.l.b16 %v848
        %v962 = vunpack.c.l.b16 %v849
        %v963 = vunpack.c.l.b16 %v850
        %v964 = vunpack.c.l.b16 %v851
        %v965 = vpack.c.b16 %v934, %v933
        %v966 = vpack.c.b16 %v936, %v935
        %v967 = vpack.c.b16 %v938, %v937
        %v968 = vpack.c.b16 %v940, %v939
        %v969 = vpack.c.b16 %v942, %v941
        %v970 = vpack.c.b16 %v944, %v943
        %v971 = vpack.c.b16 %v946, %v945
        %v972 = vpack.c.b16 %v948, %v947
        %v973 = vpack.c.b16 %v950, %v949
        %v974 = vpack.c.b16 %v952, %v951
        %v975 = vpack.c.b16 %v954, %v953
        %v976 = vpack.c.b16 %v956, %v955
        %v977 = vpack.c.b16 %v958, %v957
        %v978 = vpack.c.b16 %v960, %v959
        %v979 = vpack.c.b16 %v962, %v961
        %v980 = vpack.c.b16 %v964, %v963
        %v1013 = vunpack.c.l.b16 %v885
        %v1014 = vunpack.c.l.b16 %v886
        %v1015 = vunpack.c.l.b16 %v887
        %v1016 = vunpack.c.l.b16 %v888
        %v1017 = vunpack.c.l.b16 %v889
        %v1018 = vunpack.c.l.b16 %v890
        %v1019 = vunpack.c.l.b16 %v891
        %v1020 = vunpack.c.l.b16 %v892
        %v1021 = vunpack.c.l.b16 %v893
        %v1022 = vunpack.c.l.b16 %v894
        %v1023 = vunpack.c.l.b16 %v895
        %v1024 = vunpack.c.l.b16 %v896
        %v1025 = vunpack.c.l.b16 %v897
        %v1026 = vunpack.c.l.b16 %v898
        %v1027 = vunpack.c.l.b16 %v899
        %v1028 = vunpack.c.l.b16 %v900
        %v1029 = vpack.c.b16 %v1014, %v1013
        %v1030 = vpack.c.b16 %v1016, %v1015
        %v1031 = vpack.c.b16 %v1018, %v1017
        %v1032 = vpack.c.b16 %v1020, %v1019
        %v1033 = vpack.c.b16 %v1022, %v1021
        %v1034 = vpack.c.b16 %v1024, %v1023
        %v1035 = vpack.c.b16 %v1026, %v1025
        %v1036 = vpack.c.b16 %v1028, %v1027
        %1045 = vmatpush.bf16.msra.mxu0 %v1036
        %1046 = vmatpush.bf16.msra.mxu0 %v1035
        %1047 = vmatpush.bf16.msra.mxu0 %v1034
        %1048 = vmatpush.bf16.msra.mxu0 %v1033
        %1049 = vmatpush.bf16.msra.mxu0 %v1032
        %1050 = vmatpush.bf16.msra.mxu0 %v1031
        %1051 = vmatpush.bf16.msra.mxu0 %v1030
        %1052 = vmatpush.bf16.msra.mxu0 %v1029
        %1053 = vmatmul.bf16.gmra.mxu0 %v965
        %v1054 = vpop.f32.mrf.mxu0
        %v1055 = vadd.f32 0.0, %v1054
        %v1056 = vpop.f32.mrf.mxu0
        %v1057 = vadd.f32 0.0, %v1056
        %1058 = vmatmul.bf16.gmra.mxu0 %v966
        %v1059 = vpop.f32.mrf.mxu0
        %v1060 = vadd.f32 0.0, %v1059
        %v1061 = vpop.f32.mrf.mxu0
        %v1062 = vadd.f32 0.0, %v1061
        %1063 = vmatmul.bf16.gmra.mxu0 %v967
        %v1064 = vpop.f32.mrf.mxu0
        %v1065 = vadd.f32 0.0, %v1064
        %v1066 = vpop.f32.mrf.mxu0
        %v1067 = vadd.f32 0.0, %v1066
        %1068 = vmatmul.bf16.gmra.mxu0 %v968
        %v1069 = vpop.f32.mrf.mxu0
        %v1070 = vadd.f32 0.0, %v1069
        %v1071 = vpop.f32.mrf.mxu0
        %v1072 = vadd.f32 0.0, %v1071
        %1073 = vmatmul.bf16.gmra.mxu0 %v969
        %v1074 = vpop.f32.mrf.mxu0
        %v1075 = vadd.f32 0.0, %v1074
        %v1076 = vpop.f32.mrf.mxu0
        %v1077 = vadd.f32 0.0, %v1076
        %1078 = vmatmul.bf16.gmra.mxu0 %v970
        %v1079 = vpop.f32.mrf.mxu0
        %v1080 = vadd.f32 0.0, %v1079
        %v1081 = vpop.f32.mrf.mxu0
        %v1082 = vadd.f32 0.0, %v1081
        %1083 = vmatmul.bf16.gmra.mxu0 %v971
        %v1084 = vpop.f32.mrf.mxu0
        %v1085 = vadd.f32 0.0, %v1084
        %v1086 = vpop.f32.mrf.mxu0
        %v1087 = vadd.f32 0.0, %v1086
        %1088 = vmatmul.bf16.gmra.mxu0 %v972
        %v1089 = vpop.f32.mrf.mxu0
        %v1090 = vadd.f32 0.0, %v1089
        %v1091 = vpop.f32.mrf.mxu0
        %v1092 = vadd.f32 0.0, %v1091
        %1093 = vmatmul.bf16.gmra.mxu0 %v973
        %v1094 = vpop.f32.mrf.mxu0
        %v1095 = vadd.f32 0.0, %v1094
        %v1096 = vpop.f32.mrf.mxu0
        %v1097 = vadd.f32 0.0, %v1096
        %1098 = vmatmul.bf16.gmra.mxu0 %v974
        %v1099 = vpop.f32.mrf.mxu0
        %v1100 = vadd.f32 0.0, %v1099
        %v1101 = vpop.f32.mrf.mxu0
        %v1102 = vadd.f32 0.0, %v1101
        %1103 = vmatmul.bf16.gmra.mxu0 %v975
        %v1104 = vpop.f32.mrf.mxu0
        %v1105 = vadd.f32 0.0, %v1104
        %v1106 = vpop.f32.mrf.mxu0
        %v1107 = vadd.f32 0.0, %v1106
        %1108 = vmatmul.bf16.gmra.mxu0 %v976
        %v1109 = vpop.f32.mrf.mxu0
        %v1110 = vadd.f32 0.0, %v1109
        %v1111 = vpop.f32.mrf.mxu0
        %v1112 = vadd.f32 0.0, %v1111
        %1113 = vmatmul.bf16.gmra.mxu0 %v977
        %v1114 = vpop.f32.mrf.mxu0
        %v1115 = vadd.f32 0.0, %v1114
        %v1116 = vpop.f32.mrf.mxu0
        %v1117 = vadd.f32 0.0, %v1116
        %1118 = vmatmul.bf16.gmra.mxu0 %v978
        %v1119 = vpop.f32.mrf.mxu0
        %v1120 = vadd.f32 0.0, %v1119
        %v1121 = vpop.f32.mrf.mxu0
        %v1122 = vadd.f32 0.0, %v1121
        %1123 = vmatmul.bf16.gmra.mxu0 %v979
        %v1124 = vpop.f32.mrf.mxu0
        %v1125 = vadd.f32 0.0, %v1124
        %v1126 = vpop.f32.mrf.mxu0
        %v1127 = vadd.f32 0.0, %v1126
        %1128 = vmatmul.bf16.gmra.mxu0 %v980
        %v1129 = vpop.f32.mrf.mxu0
        %v1130 = vadd.f32 0.0, %v1129
        %v1131 = vpop.f32.mrf.mxu0
        %v1132 = vadd.f32 0.0, %v1131
        %1133 = vdwg.mxu0
        %v1134 = vadd.f32 %v852, %v1055
        %v1135 = vadd.f32 %v853, %v1057
        %v1136 = vadd.f32 %v854, %v1060
        %v1137 = vadd.f32 %v855, %v1062
        %v1138 = vadd.f32 %v856, %v1065
        %v1139 = vadd.f32 %v857, %v1067
        %v1140 = vadd.f32 %v858, %v1070
        %v1141 = vadd.f32 %v859, %v1072
        %v1142 = vadd.f32 %v860, %v1075
        %v1143 = vadd.f32 %v861, %v1077
        %v1144 = vadd.f32 %v862, %v1080
        %v1145 = vadd.f32 %v863, %v1082
        %v1146 = vadd.f32 %v864, %v1085
        %v1147 = vadd.f32 %v865, %v1087
        %v1148 = vadd.f32 %v866, %v1090
        %v1149 = vadd.f32 %v867, %v1092
        %v1150 = vadd.f32 %v868, %v1095
        %v1151 = vadd.f32 %v869, %v1097
        %v1152 = vadd.f32 %v870, %v1100
        %v1153 = vadd.f32 %v871, %v1102
        %v1154 = vadd.f32 %v872, %v1105
        %v1155 = vadd.f32 %v873, %v1107
        %v1156 = vadd.f32 %v874, %v1110
        %v1157 = vadd.f32 %v875, %v1112
        %v1158 = vadd.f32 %v876, %v1115
        %v1159 = vadd.f32 %v877, %v1117
        %v1160 = vadd.f32 %v878, %v1120
        %v1161 = vadd.f32 %v879, %v1122
        %v1162 = vadd.f32 %v880, %v1125
        %v1163 = vadd.f32 %v881, %v1127
        %v1164 = vadd.f32 %v882, %v1130
        %v1165 = vadd.f32 %v883, %v1132
        %1166 = vst [vmem:[#allocation3] sm:$0xff] %v1134
        %1167 = vst [vmem:[#allocation3 + $0x8] sm:$0xff] %v1135
        %1168 = vst [vmem:[#allocation3 + $0x10] sm:$0xff] %v1136
        %1169 = vst [vmem:[#allocation3 + $0x18] sm:$0xff] %v1137
        %1170 = vst [vmem:[#allocation3 + $0x20] sm:$0xff] %v1138
        %1171 = vst [vmem:[#allocation3 + $0x28] sm:$0xff] %v1139
        %1172 = vst [vmem:[#allocation3 + $0x30] sm:$0xff] %v1140
        %1173 = vst [vmem:[#allocation3 + $0x38] sm:$0xff] %v1141
        %1174 = vst [vmem:[#allocation3 + $0x40] sm:$0xff] %v1142
        %1175 = vst [vmem:[#allocation3 + $0x48] sm:$0xff] %v1143
        %1176 = vst [vmem:[#allocation3 + $0x50] sm:$0xff] %v1144
        %1177 = vst [vmem:[#allocation3 + $0x58] sm:$0xff] %v1145
        %1178 = vst [vmem:[#allocation3 + $0x60] sm:$0xff] %v1146
        %1179 = vst [vmem:[#allocation3 + $0x68] sm:$0xff] %v1147
        %1180 = vst [vmem:[#allocation3 + $0x70] sm:$0xff] %v1148
        %1181 = vst [vmem:[#allocation3 + $0x78] sm:$0xff] %v1149
        %1182 = vst [vmem:[#allocation3 + $0x80] sm:$0xff] %v1150
        %1183 = vst [vmem:[#allocation3 + $0x88] sm:$0xff] %v1151
        %1184 = vst [vmem:[#allocation3 + $0x90] sm:$0xff] %v1152
        %1185 = vst [vmem:[#allocation3 + $0x98] sm:$0xff] %v1153
        %1186 = vst [vmem:[#allocation3 + $0xa0] sm:$0xff] %v1154
        %1187 = vst [vmem:[#allocation3 + $0xa8] sm:$0xff] %v1155
        %1188 = vst [vmem:[#allocation3 + $0xb0] sm:$0xff] %v1156
        %1189 = vst [vmem:[#allocation3 + $0xb8] sm:$0xff] %v1157
        %1190 = vst [vmem:[#allocation3 + $0xc0] sm:$0xff] %v1158
        %1191 = vst [vmem:[#allocation3 + $0xc8] sm:$0xff] %v1159
        %1192 = vst [vmem:[#allocation3 + $0xd0] sm:$0xff] %v1160
        %1193 = vst [vmem:[#allocation3 + $0xd8] sm:$0xff] %v1161
        %1194 = vst [vmem:[#allocation3 + $0xe0] sm:$0xff] %v1162
        %1195 = vst [vmem:[#allocation3 + $0xe8] sm:$0xff] %v1163
        %1196 = vst [vmem:[#allocation3 + $0xf0] sm:$0xff] %v1164
        %1197 = vst [vmem:[#allocation3 + $0xf8] sm:$0xff] %v1165
        %v1198 = vld [vmem:[%s346 + $0x2] sm:$0xff]
        %v1199 = vld [vmem:[%s346 + $0xa] sm:$0xff]
        %v1200 = vld [vmem:[%s346 + $0x1a] sm:$0xff]
        %v1201 = vld [vmem:[%s346 + $0x22] sm:$0xff]
        %v1202 = vld [vmem:[%s346 + $0x32] sm:$0xff]
        %v1203 = vld [vmem:[%s346 + $0x3a] sm:$0xff]
        %v1204 = vld [vmem:[%s346 + $0x4a] sm:$0xff]
        %v1205 = vld [vmem:[%s346 + $0x52] sm:$0xff]
        %v1206 = vld [vmem:[%s346 + $0x62] sm:$0xff]
        %v1207 = vld [vmem:[%s346 + $0x6a] sm:$0xff]
        %v1208 = vld [vmem:[%s346 + $0x7a] sm:$0xff]
        %v1209 = vld [vmem:[%s346 + $0x82] sm:$0xff]
        %v1210 = vld [vmem:[%s346 + $0x92] sm:$0xff]
        %v1211 = vld [vmem:[%s346 + $0x9a] sm:$0xff]
        %v1212 = vld [vmem:[%s346 + $0xaa] sm:$0xff]
        %v1213 = vld [vmem:[%s346 + $0xb2] sm:$0xff]
        %v1214 = vld [vmem:[%s346 + $0xc2] sm:$0xff]
        %v1215 = vld [vmem:[%s346 + $0xca] sm:$0xff]
        %v1216 = vld [vmem:[%s346 + $0xda] sm:$0xff]
        %v1217 = vld [vmem:[%s346 + $0xe2] sm:$0xff]
        %v1218 = vld [vmem:[%s346 + $0xf2] sm:$0xff]
        %v1219 = vld [vmem:[%s346 + $0xfa] sm:$0xff]
        %v1220 = vld [vmem:[%s346 + $0x10a] sm:$0xff]
        %v1221 = vld [vmem:[%s346 + $0x112] sm:$0xff]
        %v1222 = vld [vmem:[%s346 + $0x122] sm:$0xff]
        %v1223 = vld [vmem:[%s346 + $0x12a] sm:$0xff]
        %v1224 = vld [vmem:[%s346 + $0x13a] sm:$0xff]
        %v1225 = vld [vmem:[%s346 + $0x142] sm:$0xff]
        %v1226 = vld [vmem:[%s346 + $0x152] sm:$0xff]
        %v1227 = vld [vmem:[%s346 + $0x15a] sm:$0xff]
        %v1228 = vld [vmem:[%s346 + $0x16a] sm:$0xff]
        %v1229 = vld [vmem:[%s346 + $0x172] sm:$0xff]
        %v1230 = vpack.c.bf16 %v1198, %v1198
        %v1231 = vpack.c.bf16 %v1199, %v1199
        %v1232 = vpack.c.bf16 %v1200, %v1200
        %v1233 = vpack.c.bf16 %v1201, %v1201
        %v1234 = vpack.c.bf16 %v1202, %v1202
        %v1235 = vpack.c.bf16 %v1203, %v1203
        %v1236 = vpack.c.bf16 %v1204, %v1204
        %v1237 = vpack.c.bf16 %v1205, %v1205
        %v1238 = vpack.c.bf16 %v1206, %v1206
        %v1239 = vpack.c.bf16 %v1207, %v1207
        %v1240 = vpack.c.bf16 %v1208, %v1208
        %v1241 = vpack.c.bf16 %v1209, %v1209
        %v1242 = vpack.c.bf16 %v1210, %v1210
        %v1243 = vpack.c.bf16 %v1211, %v1211
        %v1244 = vpack.c.bf16 %v1212, %v1212
        %v1245 = vpack.c.bf16 %v1213, %v1213
        %v1246 = vpack.c.bf16 %v1214, %v1214
        %v1247 = vpack.c.bf16 %v1215, %v1215
        %v1248 = vpack.c.bf16 %v1216, %v1216
        %v1249 = vpack.c.bf16 %v1217, %v1217
        %v1250 = vpack.c.bf16 %v1218, %v1218
        %v1251 = vpack.c.bf16 %v1219, %v1219
        %v1252 = vpack.c.bf16 %v1220, %v1220
        %v1253 = vpack.c.bf16 %v1221, %v1221
        %v1254 = vpack.c.bf16 %v1222, %v1222
        %v1255 = vpack.c.bf16 %v1223, %v1223
        %v1256 = vpack.c.bf16 %v1224, %v1224
        %v1257 = vpack.c.bf16 %v1225, %v1225
        %v1258 = vpack.c.bf16 %v1226, %v1226
        %v1259 = vpack.c.bf16 %v1227, %v1227
        %v1260 = vpack.c.bf16 %v1228, %v1228
        %v1261 = vpack.c.bf16 %v1229, %v1229
        %v1262 = vld [vmem:[#allocation3] sm:$0xff]
        %v1263 = vld [vmem:[#allocation3 + $0x8] sm:$0xff]
        %v1264 = vld [vmem:[#allocation3 + $0x10] sm:$0xff]
        %v1265 = vld [vmem:[#allocation3 + $0x18] sm:$0xff]
        %v1266 = vld [vmem:[#allocation3 + $0x20] sm:$0xff]
        %v1267 = vld [vmem:[#allocation3 + $0x28] sm:$0xff]
        %v1268 = vld [vmem:[#allocation3 + $0x30] sm:$0xff]
        %v1269 = vld [vmem:[#allocation3 + $0x38] sm:$0xff]
        %v1270 = vld [vmem:[#allocation3 + $0x40] sm:$0xff]
        %v1271 = vld [vmem:[#allocation3 + $0x48] sm:$0xff]
        %v1272 = vld [vmem:[#allocation3 + $0x50] sm:$0xff]
        %v1273 = vld [vmem:[#allocation3 + $0x58] sm:$0xff]
        %v1274 = vld [vmem:[#allocation3 + $0x60] sm:$0xff]
        %v1275 = vld [vmem:[#allocation3 + $0x68] sm:$0xff]
        %v1276 = vld [vmem:[#allocation3 + $0x70] sm:$0xff]
        %v1277 = vld [vmem:[#allocation3 + $0x78] sm:$0xff]
        %v1278 = vld [vmem:[#allocation3 + $0x80] sm:$0xff]
        %v1279 = vld [vmem:[#allocation3 + $0x88] sm:$0xff]
        %v1280 = vld [vmem:[#allocation3 + $0x90] sm:$0xff]
        %v1281 = vld [vmem:[#allocation3 + $0x98] sm:$0xff]
        %v1282 = vld [vmem:[#allocation3 + $0xa0] sm:$0xff]
        %v1283 = vld [vmem:[#allocation3 + $0xa8] sm:$0xff]
        %v1284 = vld [vmem:[#allocation3 + $0xb0] sm:$0xff]
        %v1285 = vld [vmem:[#allocation3 + $0xb8] sm:$0xff]
        %v1286 = vld [vmem:[#allocation3 + $0xc0] sm:$0xff]
        %v1287 = vld [vmem:[#allocation3 + $0xc8] sm:$0xff]
        %v1288 = vld [vmem:[#allocation3 + $0xd0] sm:$0xff]
        %v1289 = vld [vmem:[#allocation3 + $0xd8] sm:$0xff]
        %v1290 = vld [vmem:[#allocation3 + $0xe0] sm:$0xff]
        %v1291 = vld [vmem:[#allocation3 + $0xe8] sm:$0xff]
        %v1292 = vld [vmem:[#allocation3 + $0xf0] sm:$0xff]
        %v1293 = vld [vmem:[#allocation3 + $0xf8] sm:$0xff]
        %s1294 = scalar_lea.vmem %s1, 128
        %v1295 = vld [vmem:[%s1294] sm:$0xf]
        %v1296 = vld [vmem:[%s1294 + $0x4] sm:$0xf]
        %v1297 = vld [vmem:[%s1294 + $0x8] sm:$0xf]
        %v1298 = vld [vmem:[%s1294 + $0xc] sm:$0xf]
        %v1299 = vld [vmem:[%s1294 + $0x10] sm:$0xf]
        %v1300 = vld [vmem:[%s1294 + $0x14] sm:$0xf]
        %v1301 = vld [vmem:[%s1294 + $0x18] sm:$0xf]
        %v1302 = vld [vmem:[%s1294 + $0x1c] sm:$0xf]
        %v1303 = vld [vmem:[%s1294 + $0x20] sm:$0xf]
        %v1304 = vld [vmem:[%s1294 + $0x24] sm:$0xf]
        %v1305 = vld [vmem:[%s1294 + $0x28] sm:$0xf]
        %v1306 = vld [vmem:[%s1294 + $0x2c] sm:$0xf]
        %v1307 = vld [vmem:[%s1294 + $0x30] sm:$0xf]
        %v1308 = vld [vmem:[%s1294 + $0x34] sm:$0xf]
        %v1309 = vld [vmem:[%s1294 + $0x38] sm:$0xf]
        %v1310 = vld [vmem:[%s1294 + $0x3c] sm:$0xf]
        %v1343 = vunpack.c.l.b16 %v1230
        %v1344 = vunpack.c.l.b16 %v1231
        %v1345 = vunpack.c.l.b16 %v1232
        %v1346 = vunpack.c.l.b16 %v1233
        %v1347 = vunpack.c.l.b16 %v1234
        %v1348 = vunpack.c.l.b16 %v1235
        %v1349 = vunpack.c.l.b16 %v1236
        %v1350 = vunpack.c.l.b16 %v1237
        %v1351 = vunpack.c.l.b16 %v1238
        %v1352 = vunpack.c.l.b16 %v1239
        %v1353 = vunpack.c.l.b16 %v1240
        %v1354 = vunpack.c.l.b16 %v1241
        %v1355 = vunpack.c.l.b16 %v1242
        %v1356 = vunpack.c.l.b16 %v1243
        %v1357 = vunpack.c.l.b16 %v1244
        %v1358 = vunpack.c.l.b16 %v1245
        %v1359 = vunpack.c.l.b16 %v1246
        %v1360 = vunpack.c.l.b16 %v1247
        %v1361 = vunpack.c.l.b16 %v1248
        %v1362 = vunpack.c.l.b16 %v1249
        %v1363 = vunpack.c.l.b16 %v1250
        %v1364 = vunpack.c.l.b16 %v1251
        %v1365 = vunpack.c.l.b16 %v1252
        %v1366 = vunpack.c.l.b16 %v1253
        %v1367 = vunpack.c.l.b16 %v1254
        %v1368 = vunpack.c.l.b16 %v1255
        %v1369 = vunpack.c.l.b16 %v1256
        %v1370 = vunpack.c.l.b16 %v1257
        %v1371 = vunpack.c.l.b16 %v1258
        %v1372 = vunpack.c.l.b16 %v1259
        %v1373 = vunpack.c.l.b16 %v1260
        %v1374 = vunpack.c.l.b16 %v1261
        %v1375 = vpack.c.b16 %v1344, %v1343
        %v1376 = vpack.c.b16 %v1346, %v1345
        %v1377 = vpack.c.b16 %v1348, %v1347
        %v1378 = vpack.c.b16 %v1350, %v1349
        %v1379 = vpack.c.b16 %v1352, %v1351
        %v1380 = vpack.c.b16 %v1354, %v1353
        %v1381 = vpack.c.b16 %v1356, %v1355
        %v1382 = vpack.c.b16 %v1358, %v1357
        %v1383 = vpack.c.b16 %v1360, %v1359
        %v1384 = vpack.c.b16 %v1362, %v1361
        %v1385 = vpack.c.b16 %v1364, %v1363
        %v1386 = vpack.c.b16 %v1366, %v1365
        %v1387 = vpack.c.b16 %v1368, %v1367
        %v1388 = vpack.c.b16 %v1370, %v1369
        %v1389 = vpack.c.b16 %v1372, %v1371
        %v1390 = vpack.c.b16 %v1374, %v1373
        %v1423 = vunpack.c.l.b16 %v1295
        %v1424 = vunpack.c.l.b16 %v1296
        %v1425 = vunpack.c.l.b16 %v1297
        %v1426 = vunpack.c.l.b16 %v1298
        %v1427 = vunpack.c.l.b16 %v1299
        %v1428 = vunpack.c.l.b16 %v1300
        %v1429 = vunpack.c.l.b16 %v1301
        %v1430 = vunpack.c.l.b16 %v1302
        %v1431 = vunpack.c.l.b16 %v1303
        %v1432 = vunpack.c.l.b16 %v1304
        %v1433 = vunpack.c.l.b16 %v1305
        %v1434 = vunpack.c.l.b16 %v1306
        %v1435 = vunpack.c.l.b16 %v1307
        %v1436 = vunpack.c.l.b16 %v1308
        %v1437 = vunpack.c.l.b16 %v1309
        %v1438 = vunpack.c.l.b16 %v1310
        %v1439 = vpack.c.b16 %v1424, %v1423
        %v1440 = vpack.c.b16 %v1426, %v1425
        %v1441 = vpack.c.b16 %v1428, %v1427
        %v1442 = vpack.c.b16 %v1430, %v1429
        %v1443 = vpack.c.b16 %v1432, %v1431
        %v1444 = vpack.c.b16 %v1434, %v1433
        %v1445 = vpack.c.b16 %v1436, %v1435
        %v1446 = vpack.c.b16 %v1438, %v1437
        %1455 = vmatpush.bf16.msra.mxu0 %v1446
        %1456 = vmatpush.bf16.msra.mxu0 %v1445
        %1457 = vmatpush.bf16.msra.mxu0 %v1444
        %1458 = vmatpush.bf16.msra.mxu0 %v1443
        %1459 = vmatpush.bf16.msra.mxu0 %v1442
        %1460 = vmatpush.bf16.msra.mxu0 %v1441
        %1461 = vmatpush.bf16.msra.mxu0 %v1440
        %1462 = vmatpush.bf16.msra.mxu0 %v1439
        %1463 = vmatmul.bf16.gmra.mxu0 %v1375
        %v1464 = vpop.f32.mrf.mxu0
        %v1465 = vadd.f32 0.0, %v1464
        %v1466 = vpop.f32.mrf.mxu0
        %v1467 = vadd.f32 0.0, %v1466
        %1468 = vmatmul.bf16.gmra.mxu0 %v1376
        %v1469 = vpop.f32.mrf.mxu0
        %v1470 = vadd.f32 0.0, %v1469
        %v1471 = vpop.f32.mrf.mxu0
        %v1472 = vadd.f32 0.0, %v1471
        %1473 = vmatmul.bf16.gmra.mxu0 %v1377
        %v1474 = vpop.f32.mrf.mxu0
        %v1475 = vadd.f32 0.0, %v1474
        %v1476 = vpop.f32.mrf.mxu0
        %v1477 = vadd.f32 0.0, %v1476
        %1478 = vmatmul.bf16.gmra.mxu0 %v1378
        %v1479 = vpop.f32.mrf.mxu0
        %v1480 = vadd.f32 0.0, %v1479
        %v1481 = vpop.f32.mrf.mxu0
        %v1482 = vadd.f32 0.0, %v1481
        %1483 = vmatmul.bf16.gmra.mxu0 %v1379
        %v1484 = vpop.f32.mrf.mxu0
        %v1485 = vadd.f32 0.0, %v1484
        %v1486 = vpop.f32.mrf.mxu0
        %v1487 = vadd.f32 0.0, %v1486
        %1488 = vmatmul.bf16.gmra.mxu0 %v1380
        %v1489 = vpop.f32.mrf.mxu0
        %v1490 = vadd.f32 0.0, %v1489
        %v1491 = vpop.f32.mrf.mxu0
        %v1492 = vadd.f32 0.0, %v1491
        %1493 = vmatmul.bf16.gmra.mxu0 %v1381
        %v1494 = vpop.f32.mrf.mxu0
        %v1495 = vadd.f32 0.0, %v1494
        %v1496 = vpop.f32.mrf.mxu0
        %v1497 = vadd.f32 0.0, %v1496
        %1498 = vmatmul.bf16.gmra.mxu0 %v1382
        %v1499 = vpop.f32.mrf.mxu0
        %v1500 = vadd.f32 0.0, %v1499
        %v1501 = vpop.f32.mrf.mxu0
        %v1502 = vadd.f32 0.0, %v1501
        %1503 = vmatmul.bf16.gmra.mxu0 %v1383
        %v1504 = vpop.f32.mrf.mxu0
        %v1505 = vadd.f32 0.0, %v1504
        %v1506 = vpop.f32.mrf.mxu0
        %v1507 = vadd.f32 0.0, %v1506
        %1508 = vmatmul.bf16.gmra.mxu0 %v1384
        %v1509 = vpop.f32.mrf.mxu0
        %v1510 = vadd.f32 0.0, %v1509
        %v1511 = vpop.f32.mrf.mxu0
        %v1512 = vadd.f32 0.0, %v1511
        %1513 = vmatmul.bf16.gmra.mxu0 %v1385
        %v1514 = vpop.f32.mrf.mxu0
        %v1515 = vadd.f32 0.0, %v1514
        %v1516 = vpop.f32.mrf.mxu0
        %v1517 = vadd.f32 0.0, %v1516
        %1518 = vmatmul.bf16.gmra.mxu0 %v1386
        %v1519 = vpop.f32.mrf.mxu0
        %v1520 = vadd.f32 0.0, %v1519
        %v1521 = vpop.f32.mrf.mxu0
        %v1522 = vadd.f32 0.0, %v1521
        %1523 = vmatmul.bf16.gmra.mxu0 %v1387
        %v1524 = vpop.f32.mrf.mxu0
        %v1525 = vadd.f32 0.0, %v1524
        %v1526 = vpop.f32.mrf.mxu0
        %v1527 = vadd.f32 0.0, %v1526
        %1528 = vmatmul.bf16.gmra.mxu0 %v1388
        %v1529 = vpop.f32.mrf.mxu0
        %v1530 = vadd.f32 0.0, %v1529
        %v1531 = vpop.f32.mrf.mxu0
        %v1532 = vadd.f32 0.0, %v1531
        %1533 = vmatmul.bf16.gmra.mxu0 %v1389
        %v1534 = vpop.f32.mrf.mxu0
        %v1535 = vadd.f32 0.0, %v1534
        %v1536 = vpop.f32.mrf.mxu0
        %v1537 = vadd.f32 0.0, %v1536
        %1538 = vmatmul.bf16.gmra.mxu0 %v1390
        %v1539 = vpop.f32.mrf.mxu0
        %v1540 = vadd.f32 0.0, %v1539
        %v1541 = vpop.f32.mrf.mxu0
        %v1542 = vadd.f32 0.0, %v1541
        %1543 = vdwg.mxu0
        %v1544 = vadd.f32 %v1262, %v1465
        %v1545 = vadd.f32 %v1263, %v1467
        %v1546 = vadd.f32 %v1264, %v1470
        %v1547 = vadd.f32 %v1265, %v1472
        %v1548 = vadd.f32 %v1266, %v1475
        %v1549 = vadd.f32 %v1267, %v1477
        %v1550 = vadd.f32 %v1268, %v1480
        %v1551 = vadd.f32 %v1269, %v1482
        %v1552 = vadd.f32 %v1270, %v1485
        %v1553 = vadd.f32 %v1271, %v1487
        %v1554 = vadd.f32 %v1272, %v1490
        %v1555 = vadd.f32 %v1273, %v1492
        %v1556 = vadd.f32 %v1274, %v1495
        %v1557 = vadd.f32 %v1275, %v1497
        %v1558 = vadd.f32 %v1276, %v1500
        %v1559 = vadd.f32 %v1277, %v1502
        %v1560 = vadd.f32 %v1278, %v1505
        %v1561 = vadd.f32 %v1279, %v1507
        %v1562 = vadd.f32 %v1280, %v1510
        %v1563 = vadd.f32 %v1281, %v1512
        %v1564 = vadd.f32 %v1282, %v1515
        %v1565 = vadd.f32 %v1283, %v1517
        %v1566 = vadd.f32 %v1284, %v1520
        %v1567 = vadd.f32 %v1285, %v1522
        %v1568 = vadd.f32 %v1286, %v1525
        %v1569 = vadd.f32 %v1287, %v1527
        %v1570 = vadd.f32 %v1288, %v1530
        %v1571 = vadd.f32 %v1289, %v1532
        %v1572 = vadd.f32 %v1290, %v1535
        %v1573 = vadd.f32 %v1291, %v1537
        %v1574 = vadd.f32 %v1292, %v1540
        %v1575 = vadd.f32 %v1293, %v1542
        %1576 = vst [vmem:[#allocation3] sm:$0xff] %v1544
        %1577 = vst [vmem:[#allocation3 + $0x8] sm:$0xff] %v1545
        %1578 = vst [vmem:[#allocation3 + $0x10] sm:$0xff] %v1546
        %1579 = vst [vmem:[#allocation3 + $0x18] sm:$0xff] %v1547
        %1580 = vst [vmem:[#allocation3 + $0x20] sm:$0xff] %v1548
        %1581 = vst [vmem:[#allocation3 + $0x28] sm:$0xff] %v1549
        %1582 = vst [vmem:[#allocation3 + $0x30] sm:$0xff] %v1550
        %1583 = vst [vmem:[#allocation3 + $0x38] sm:$0xff] %v1551
        %1584 = vst [vmem:[#allocation3 + $0x40] sm:$0xff] %v1552
        %1585 = vst [vmem:[#allocation3 + $0x48] sm:$0xff] %v1553
        %1586 = vst [vmem:[#allocation3 + $0x50] sm:$0xff] %v1554
        %1587 = vst [vmem:[#allocation3 + $0x58] sm:$0xff] %v1555
        %1588 = vst [vmem:[#allocation3 + $0x60] sm:$0xff] %v1556
        %1589 = vst [vmem:[#allocation3 + $0x68] sm:$0xff] %v1557
        %1590 = vst [vmem:[#allocation3 + $0x70] sm:$0xff] %v1558
        %1591 = vst [vmem:[#allocation3 + $0x78] sm:$0xff] %v1559
        %1592 = vst [vmem:[#allocation3 + $0x80] sm:$0xff] %v1560
        %1593 = vst [vmem:[#allocation3 + $0x88] sm:$0xff] %v1561
        %1594 = vst [vmem:[#allocation3 + $0x90] sm:$0xff] %v1562
        %1595 = vst [vmem:[#allocation3 + $0x98] sm:$0xff] %v1563
        %1596 = vst [vmem:[#allocation3 + $0xa0] sm:$0xff] %v1564
        %1597 = vst [vmem:[#allocation3 + $0xa8] sm:$0xff] %v1565
        %1598 = vst [vmem:[#allocation3 + $0xb0] sm:$0xff] %v1566
        %1599 = vst [vmem:[#allocation3 + $0xb8] sm:$0xff] %v1567
        %1600 = vst [vmem:[#allocation3 + $0xc0] sm:$0xff] %v1568
        %1601 = vst [vmem:[#allocation3 + $0xc8] sm:$0xff] %v1569
        %1602 = vst [vmem:[#allocation3 + $0xd0] sm:$0xff] %v1570
        %1603 = vst [vmem:[#allocation3 + $0xd8] sm:$0xff] %v1571
        %1604 = vst [vmem:[#allocation3 + $0xe0] sm:$0xff] %v1572
        %1605 = vst [vmem:[#allocation3 + $0xe8] sm:$0xff] %v1573
        %1606 = vst [vmem:[#allocation3 + $0xf0] sm:$0xff] %v1574
        %1607 = vst [vmem:[#allocation3 + $0xf8] sm:$0xff] %v1575
        %s1608 = scalar_lea.vmem %s346, 24
        %v1609 = vld [vmem:[%s1608] sm:$0xff]
        %v1610 = vld [vmem:[%s1608 + $0x8] sm:$0xff]
        %v1611 = vld [vmem:[%s1608 + $0x18] sm:$0xff]
        %v1612 = vld [vmem:[%s1608 + $0x20] sm:$0xff]
        %v1613 = vld [vmem:[%s1608 + $0x30] sm:$0xff]
        %v1614 = vld [vmem:[%s1608 + $0x38] sm:$0xff]
        %v1615 = vld [vmem:[%s1608 + $0x48] sm:$0xff]
        %v1616 = vld [vmem:[%s1608 + $0x50] sm:$0xff]
        %v1617 = vld [vmem:[%s1608 + $0x60] sm:$0xff]
        %v1618 = vld [vmem:[%s1608 + $0x68] sm:$0xff]
        %v1619 = vld [vmem:[%s1608 + $0x78] sm:$0xff]
        %v1620 = vld [vmem:[%s1608 + $0x80] sm:$0xff]
        %v1621 = vld [vmem:[%s1608 + $0x90] sm:$0xff]
        %v1622 = vld [vmem:[%s1608 + $0x98] sm:$0xff]
        %v1623 = vld [vmem:[%s1608 + $0xa8] sm:$0xff]
        %v1624 = vld [vmem:[%s1608 + $0xb0] sm:$0xff]
        %v1625 = vld [vmem:[%s1608 + $0xc0] sm:$0xff]
        %v1626 = vld [vmem:[%s1608 + $0xc8] sm:$0xff]
        %v1627 = vld [vmem:[%s1608 + $0xd8] sm:$0xff]
        %v1628 = vld [vmem:[%s1608 + $0xe0] sm:$0xff]
        %v1629 = vld [vmem:[%s1608 + $0xf0] sm:$0xff]
        %v1630 = vld [vmem:[%s1608 + $0xf8] sm:$0xff]
        %v1631 = vld [vmem:[%s1608 + $0x108] sm:$0xff]
        %v1632 = vld [vmem:[%s1608 + $0x110] sm:$0xff]
        %v1633 = vld [vmem:[%s1608 + $0x120] sm:$0xff]
        %v1634 = vld [vmem:[%s1608 + $0x128] sm:$0xff]
        %v1635 = vld [vmem:[%s1608 + $0x138] sm:$0xff]
        %v1636 = vld [vmem:[%s1608 + $0x140] sm:$0xff]
        %v1637 = vld [vmem:[%s1608 + $0x150] sm:$0xff]
        %v1638 = vld [vmem:[%s1608 + $0x158] sm:$0xff]
        %v1639 = vld [vmem:[%s1608 + $0x168] sm:$0xff]
        %v1640 = vld [vmem:[%s1608 + $0x170] sm:$0xff]
        %v1641 = vpack.c.bf16 %v1609, %v1609
        %v1642 = vpack.c.bf16 %v1610, %v1610
        %v1643 = vpack.c.bf16 %v1611, %v1611
        %v1644 = vpack.c.bf16 %v1612, %v1612
        %v1645 = vpack.c.bf16 %v1613, %v1613
        %v1646 = vpack.c.bf16 %v1614, %v1614
        %v1647 = vpack.c.bf16 %v1615, %v1615
        %v1648 = vpack.c.bf16 %v1616, %v1616
        %v1649 = vpack.c.bf16 %v1617, %v1617
        %v1650 = vpack.c.bf16 %v1618, %v1618
        %v1651 = vpack.c.bf16 %v1619, %v1619
        %v1652 = vpack.c.bf16 %v1620, %v1620
        %v1653 = vpack.c.bf16 %v1621, %v1621
        %v1654 = vpack.c.bf16 %v1622, %v1622
        %v1655 = vpack.c.bf16 %v1623, %v1623
        %v1656 = vpack.c.bf16 %v1624, %v1624
        %v1657 = vpack.c.bf16 %v1625, %v1625
        %v1658 = vpack.c.bf16 %v1626, %v1626
        %v1659 = vpack.c.bf16 %v1627, %v1627
        %v1660 = vpack.c.bf16 %v1628, %v1628
        %v1661 = vpack.c.bf16 %v1629, %v1629
        %v1662 = vpack.c.bf16 %v1630, %v1630
        %v1663 = vpack.c.bf16 %v1631, %v1631
        %v1664 = vpack.c.bf16 %v1632, %v1632
        %v1665 = vpack.c.bf16 %v1633, %v1633
        %v1666 = vpack.c.bf16 %v1634, %v1634
        %v1667 = vpack.c.bf16 %v1635, %v1635
        %v1668 = vpack.c.bf16 %v1636, %v1636
        %v1669 = vpack.c.bf16 %v1637, %v1637
        %v1670 = vpack.c.bf16 %v1638, %v1638
        %v1671 = vpack.c.bf16 %v1639, %v1639
        %v1672 = vpack.c.bf16 %v1640, %v1640
        %v1673 = vld [vmem:[#allocation3] sm:$0xff]
        %v1674 = vld [vmem:[#allocation3 + $0x8] sm:$0xff]
        %v1675 = vld [vmem:[#allocation3 + $0x10] sm:$0xff]
        %v1676 = vld [vmem:[#allocation3 + $0x18] sm:$0xff]
        %v1677 = vld [vmem:[#allocation3 + $0x20] sm:$0xff]
        %v1678 = vld [vmem:[#allocation3 + $0x28] sm:$0xff]
        %v1679 = vld [vmem:[#allocation3 + $0x30] sm:$0xff]
        %v1680 = vld [vmem:[#allocation3 + $0x38] sm:$0xff]
        %v1681 = vld [vmem:[#allocation3 + $0x40] sm:$0xff]
        %v1682 = vld [vmem:[#allocation3 + $0x48] sm:$0xff]
        %v1683 = vld [vmem:[#allocation3 + $0x50] sm:$0xff]
        %v1684 = vld [vmem:[#allocation3 + $0x58] sm:$0xff]
        %v1685 = vld [vmem:[#allocation3 + $0x60] sm:$0xff]
        %v1686 = vld [vmem:[#allocation3 + $0x68] sm:$0xff]
        %v1687 = vld [vmem:[#allocation3 + $0x70] sm:$0xff]
        %v1688 = vld [vmem:[#allocation3 + $0x78] sm:$0xff]
        %v1689 = vld [vmem:[#allocation3 + $0x80] sm:$0xff]
        %v1690 = vld [vmem:[#allocation3 + $0x88] sm:$0xff]
        %v1691 = vld [vmem:[#allocation3 + $0x90] sm:$0xff]
        %v1692 = vld [vmem:[#allocation3 + $0x98] sm:$0xff]
        %v1693 = vld [vmem:[#allocation3 + $0xa0] sm:$0xff]
        %v1694 = vld [vmem:[#allocation3 + $0xa8] sm:$0xff]
        %v1695 = vld [vmem:[#allocation3 + $0xb0] sm:$0xff]
        %v1696 = vld [vmem:[#allocation3 + $0xb8] sm:$0xff]
        %v1697 = vld [vmem:[#allocation3 + $0xc0] sm:$0xff]
        %v1698 = vld [vmem:[#allocation3 + $0xc8] sm:$0xff]
        %v1699 = vld [vmem:[#allocation3 + $0xd0] sm:$0xff]
        %v1700 = vld [vmem:[#allocation3 + $0xd8] sm:$0xff]
        %v1701 = vld [vmem:[#allocation3 + $0xe0] sm:$0xff]
        %v1702 = vld [vmem:[#allocation3 + $0xe8] sm:$0xff]
        %v1703 = vld [vmem:[#allocation3 + $0xf0] sm:$0xff]
        %v1704 = vld [vmem:[#allocation3 + $0xf8] sm:$0xff]
        %s1705 = scalar_lea.vmem %s1, 192
        %v1706 = vld [vmem:[%s1705] sm:$0xf]
        %v1707 = vld [vmem:[%s1705 + $0x4] sm:$0xf]
        %v1708 = vld [vmem:[%s1705 + $0x8] sm:$0xf]
        %v1709 = vld [vmem:[%s1705 + $0xc] sm:$0xf]
        %v1710 = vld [vmem:[%s1705 + $0x10] sm:$0xf]
        %v1711 = vld [vmem:[%s1705 + $0x14] sm:$0xf]
        %v1712 = vld [vmem:[%s1705 + $0x18] sm:$0xf]
        %v1713 = vld [vmem:[%s1705 + $0x1c] sm:$0xf]
        %v1714 = vld [vmem:[%s1705 + $0x20] sm:$0xf]
        %v1715 = vld [vmem:[%s1705 + $0x24] sm:$0xf]
        %v1716 = vld [vmem:[%s1705 + $0x28] sm:$0xf]
        %v1717 = vld [vmem:[%s1705 + $0x2c] sm:$0xf]
        %v1718 = vld [vmem:[%s1705 + $0x30] sm:$0xf]
        %v1719 = vld [vmem:[%s1705 + $0x34] sm:$0xf]
        %v1720 = vld [vmem:[%s1705 + $0x38] sm:$0xf]
        %v1721 = vld [vmem:[%s1705 + $0x3c] sm:$0xf]
        %v1754 = vunpack.c.l.b16 %v1641
        %v1755 = vunpack.c.l.b16 %v1642
        %v1756 = vunpack.c.l.b16 %v1643
        %v1757 = vunpack.c.l.b16 %v1644
        %v1758 = vunpack.c.l.b16 %v1645
        %v1759 = vunpack.c.l.b16 %v1646
        %v1760 = vunpack.c.l.b16 %v1647
        %v1761 = vunpack.c.l.b16 %v1648
        %v1762 = vunpack.c.l.b16 %v1649
        %v1763 = vunpack.c.l.b16 %v1650
        %v1764 = vunpack.c.l.b16 %v1651
        %v1765 = vunpack.c.l.b16 %v1652
        %v1766 = vunpack.c.l.b16 %v1653
        %v1767 = vunpack.c.l.b16 %v1654
        %v1768 = vunpack.c.l.b16 %v1655
        %v1769 = vunpack.c.l.b16 %v1656
        %v1770 = vunpack.c.l.b16 %v1657
        %v1771 = vunpack.c.l.b16 %v1658
        %v1772 = vunpack.c.l.b16 %v1659
        %v1773 = vunpack.c.l.b16 %v1660
        %v1774 = vunpack.c.l.b16 %v1661
        %v1775 = vunpack.c.l.b16 %v1662
        %v1776 = vunpack.c.l.b16 %v1663
        %v1777 = vunpack.c.l.b16 %v1664
        %v1778 = vunpack.c.l.b16 %v1665
        %v1779 = vunpack.c.l.b16 %v1666
        %v1780 = vunpack.c.l.b16 %v1667
        %v1781 = vunpack.c.l.b16 %v1668
        %v1782 = vunpack.c.l.b16 %v1669
        %v1783 = vunpack.c.l.b16 %v1670
        %v1784 = vunpack.c.l.b16 %v1671
        %v1785 = vunpack.c.l.b16 %v1672
        %v1786 = vpack.c.b16 %v1755, %v1754
        %v1787 = vpack.c.b16 %v1757, %v1756
        %v1788 = vpack.c.b16 %v1759, %v1758
        %v1789 = vpack.c.b16 %v1761, %v1760
        %v1790 = vpack.c.b16 %v1763, %v1762
        %v1791 = vpack.c.b16 %v1765, %v1764
        %v1792 = vpack.c.b16 %v1767, %v1766
        %v1793 = vpack.c.b16 %v1769, %v1768
        %v1794 = vpack.c.b16 %v1771, %v1770
        %v1795 = vpack.c.b16 %v1773, %v1772
        %v1796 = vpack.c.b16 %v1775, %v1774
        %v1797 = vpack.c.b16 %v1777, %v1776
        %v1798 = vpack.c.b16 %v1779, %v1778
        %v1799 = vpack.c.b16 %v1781, %v1780
        %v1800 = vpack.c.b16 %v1783, %v1782
        %v1801 = vpack.c.b16 %v1785, %v1784
        %v1834 = vunpack.c.l.b16 %v1706
        %v1835 = vunpack.c.l.b16 %v1707
        %v1836 = vunpack.c.l.b16 %v1708
        %v1837 = vunpack.c.l.b16 %v1709
        %v1838 = vunpack.c.l.b16 %v1710
        %v1839 = vunpack.c.l.b16 %v1711
        %v1840 = vunpack.c.l.b16 %v1712
        %v1841 = vunpack.c.l.b16 %v1713
        %v1842 = vunpack.c.l.b16 %v1714
        %v1843 = vunpack.c.l.b16 %v1715
        %v1844 = vunpack.c.l.b16 %v1716
        %v1845 = vunpack.c.l.b16 %v1717
        %v1846 = vunpack.c.l.b16 %v1718
        %v1847 = vunpack.c.l.b16 %v1719
        %v1848 = vunpack.c.l.b16 %v1720
        %v1849 = vunpack.c.l.b16 %v1721
        %v1850 = vpack.c.b16 %v1835, %v1834
        %v1851 = vpack.c.b16 %v1837, %v1836
        %v1852 = vpack.c.b16 %v1839, %v1838
        %v1853 = vpack.c.b16 %v1841, %v1840
        %v1854 = vpack.c.b16 %v1843, %v1842
        %v1855 = vpack.c.b16 %v1845, %v1844
        %v1856 = vpack.c.b16 %v1847, %v1846
        %v1857 = vpack.c.b16 %v1849, %v1848
        %1866 = vmatpush.bf16.msra.mxu0 %v1857
        %1867 = vmatpush.bf16.msra.mxu0 %v1856
        %1868 = vmatpush.bf16.msra.mxu0 %v1855
        %1869 = vmatpush.bf16.msra.mxu0 %v1854
        %1870 = vmatpush.bf16.msra.mxu0 %v1853
        %1871 = vmatpush.bf16.msra.mxu0 %v1852
        %1872 = vmatpush.bf16.msra.mxu0 %v1851
        %1873 = vmatpush.bf16.msra.mxu0 %v1850
        %1874 = vmatmul.bf16.gmra.mxu0 %v1786
        %v1875 = vpop.f32.mrf.mxu0
        %v1876 = vadd.f32 0.0, %v1875
        %v1877 = vpop.f32.mrf.mxu0
        %v1878 = vadd.f32 0.0, %v1877
        %1879 = vmatmul.bf16.gmra.mxu0 %v1787
        %v1880 = vpop.f32.mrf.mxu0
        %v1881 = vadd.f32 0.0, %v1880
        %v1882 = vpop.f32.mrf.mxu0
        %v1883 = vadd.f32 0.0, %v1882
        %1884 = vmatmul.bf16.gmra.mxu0 %v1788
        %v1885 = vpop.f32.mrf.mxu0
        %v1886 = vadd.f32 0.0, %v1885
        %v1887 = vpop.f32.mrf.mxu0
        %v1888 = vadd.f32 0.0, %v1887
        %1889 = vmatmul.bf16.gmra.mxu0 %v1789
        %v1890 = vpop.f32.mrf.mxu0
        %v1891 = vadd.f32 0.0, %v1890
        %v1892 = vpop.f32.mrf.mxu0
        %v1893 = vadd.f32 0.0, %v1892
        %1894 = vmatmul.bf16.gmra.mxu0 %v1790
        %v1895 = vpop.f32.mrf.mxu0
        %v1896 = vadd.f32 0.0, %v1895
        %v1897 = vpop.f32.mrf.mxu0
        %v1898 = vadd.f32 0.0, %v1897
        %1899 = vmatmul.bf16.gmra.mxu0 %v1791
        %v1900 = vpop.f32.mrf.mxu0
        %v1901 = vadd.f32 0.0, %v1900
        %v1902 = vpop.f32.mrf.mxu0
        %v1903 = vadd.f32 0.0, %v1902
        %1904 = vmatmul.bf16.gmra.mxu0 %v1792
        %v1905 = vpop.f32.mrf.mxu0
        %v1906 = vadd.f32 0.0, %v1905
        %v1907 = vpop.f32.mrf.mxu0
        %v1908 = vadd.f32 0.0, %v1907
        %1909 = vmatmul.bf16.gmra.mxu0 %v1793
        %v1910 = vpop.f32.mrf.mxu0
        %v1911 = vadd.f32 0.0, %v1910
        %v1912 = vpop.f32.mrf.mxu0
        %v1913 = vadd.f32 0.0, %v1912
        %1914 = vmatmul.bf16.gmra.mxu0 %v1794
        %v1915 = vpop.f32.mrf.mxu0
        %v1916 = vadd.f32 0.0, %v1915
        %v1917 = vpop.f32.mrf.mxu0
        %v1918 = vadd.f32 0.0, %v1917
        %1919 = vmatmul.bf16.gmra.mxu0 %v1795
        %v1920 = vpop.f32.mrf.mxu0
        %v1921 = vadd.f32 0.0, %v1920
        %v1922 = vpop.f32.mrf.mxu0
        %v1923 = vadd.f32 0.0, %v1922
        %1924 = vmatmul.bf16.gmra.mxu0 %v1796
        %v1925 = vpop.f32.mrf.mxu0
        %v1926 = vadd.f32 0.0, %v1925
        %v1927 = vpop.f32.mrf.mxu0
        %v1928 = vadd.f32 0.0, %v1927
        %1929 = vmatmul.bf16.gmra.mxu0 %v1797
        %v1930 = vpop.f32.mrf.mxu0
        %v1931 = vadd.f32 0.0, %v1930
        %v1932 = vpop.f32.mrf.mxu0
        %v1933 = vadd.f32 0.0, %v1932
        %1934 = vmatmul.bf16.gmra.mxu0 %v1798
        %v1935 = vpop.f32.mrf.mxu0
        %v1936 = vadd.f32 0.0, %v1935
        %v1937 = vpop.f32.mrf.mxu0
        %v1938 = vadd.f32 0.0, %v1937
        %1939 = vmatmul.bf16.gmra.mxu0 %v1799
        %v1940 = vpop.f32.mrf.mxu0
        %v1941 = vadd.f32 0.0, %v1940
        %v1942 = vpop.f32.mrf.mxu0
        %v1943 = vadd.f32 0.0, %v1942
        %1944 = vmatmul.bf16.gmra.mxu0 %v1800
        %v1945 = vpop.f32.mrf.mxu0
        %v1946 = vadd.f32 0.0, %v1945
        %v1947 = vpop.f32.mrf.mxu0
        %v1948 = vadd.f32 0.0, %v1947
        %1949 = vmatmul.bf16.gmra.mxu0 %v1801
        %v1950 = vpop.f32.mrf.mxu0
        %v1951 = vadd.f32 0.0, %v1950
        %v1952 = vpop.f32.mrf.mxu0
        %v1953 = vadd.f32 0.0, %v1952
        %1954 = vdwg.mxu0
        %v1955 = vadd.f32 %v1673, %v1876
        %v1956 = vadd.f32 %v1674, %v1878
        %v1957 = vadd.f32 %v1675, %v1881
        %v1958 = vadd.f32 %v1676, %v1883
        %v1959 = vadd.f32 %v1677, %v1886
        %v1960 = vadd.f32 %v1678, %v1888
        %v1961 = vadd.f32 %v1679, %v1891
        %v1962 = vadd.f32 %v1680, %v1893
        %v1963 = vadd.f32 %v1681, %v1896
        %v1964 = vadd.f32 %v1682, %v1898
        %v1965 = vadd.f32 %v1683, %v1901
        %v1966 = vadd.f32 %v1684, %v1903
        %v1967 = vadd.f32 %v1685, %v1906
        %v1968 = vadd.f32 %v1686, %v1908
        %v1969 = vadd.f32 %v1687, %v1911
        %v1970 = vadd.f32 %v1688, %v1913
        %v1971 = vadd.f32 %v1689, %v1916
        %v1972 = vadd.f32 %v1690, %v1918
        %v1973 = vadd.f32 %v1691, %v1921
        %v1974 = vadd.f32 %v1692, %v1923
        %v1975 = vadd.f32 %v1693, %v1926
        %v1976 = vadd.f32 %v1694, %v1928
        %v1977 = vadd.f32 %v1695, %v1931
        %v1978 = vadd.f32 %v1696, %v1933
        %v1979 = vadd.f32 %v1697, %v1936
        %v1980 = vadd.f32 %v1698, %v1938
        %v1981 = vadd.f32 %v1699, %v1941
        %v1982 = vadd.f32 %v1700, %v1943
        %v1983 = vadd.f32 %v1701, %v1946
        %v1984 = vadd.f32 %v1702, %v1948
        %v1985 = vadd.f32 %v1703, %v1951
        %v1986 = vadd.f32 %v1704, %v1953
        %1987 = vst [vmem:[#allocation3] sm:$0xff] %v1955
        %1988 = vst [vmem:[#allocation3 + $0x8] sm:$0xff] %v1956
        %1989 = vst [vmem:[#allocation3 + $0x10] sm:$0xff] %v1957
        %1990 = vst [vmem:[#allocation3 + $0x18] sm:$0xff] %v1958
        %1991 = vst [vmem:[#allocation3 + $0x20] sm:$0xff] %v1959
        %1992 = vst [vmem:[#allocation3 + $0x28] sm:$0xff] %v1960
        %1993 = vst [vmem:[#allocation3 + $0x30] sm:$0xff] %v1961
        %1994 = vst [vmem:[#allocation3 + $0x38] sm:$0xff] %v1962
        %1995 = vst [vmem:[#allocation3 + $0x40] sm:$0xff] %v1963
        %1996 = vst [vmem:[#allocation3 + $0x48] sm:$0xff] %v1964
        %1997 = vst [vmem:[#allocation3 + $0x50] sm:$0xff] %v1965
        %1998 = vst [vmem:[#allocation3 + $0x58] sm:$0xff] %v1966
        %1999 = vst [vmem:[#allocation3 + $0x60] sm:$0xff] %v1967
        %2000 = vst [vmem:[#allocation3 + $0x68] sm:$0xff] %v1968
        %2001 = vst [vmem:[#allocation3 + $0x70] sm:$0xff] %v1969
        %2002 = vst [vmem:[#allocation3 + $0x78] sm:$0xff] %v1970
        %2003 = vst [vmem:[#allocation3 + $0x80] sm:$0xff] %v1971
        %2004 = vst [vmem:[#allocation3 + $0x88] sm:$0xff] %v1972
        %2005 = vst [vmem:[#allocation3 + $0x90] sm:$0xff] %v1973
        %2006 = vst [vmem:[#allocation3 + $0x98] sm:$0xff] %v1974
        %2007 = vst [vmem:[#allocation3 + $0xa0] sm:$0xff] %v1975
        %2008 = vst [vmem:[#allocation3 + $0xa8] sm:$0xff] %v1976
        %2009 = vst [vmem:[#allocation3 + $0xb0] sm:$0xff] %v1977
        %2010 = vst [vmem:[#allocation3 + $0xb8] sm:$0xff] %v1978
        %2011 = vst [vmem:[#allocation3 + $0xc0] sm:$0xff] %v1979
        %2012 = vst [vmem:[#allocation3 + $0xc8] sm:$0xff] %v1980
        %2013 = vst [vmem:[#allocation3 + $0xd0] sm:$0xff] %v1981
        %2014 = vst [vmem:[#allocation3 + $0xd8] sm:$0xff] %v1982
        %2015 = vst [vmem:[#allocation3 + $0xe0] sm:$0xff] %v1983
        %2016 = vst [vmem:[#allocation3 + $0xe8] sm:$0xff] %v1984
        %2017 = vst [vmem:[#allocation3 + $0xf0] sm:$0xff] %v1985
        %2018 = vst [vmem:[#allocation3 + $0xf8] sm:$0xff] %v1986
        %v2019 = vld [vmem:[%s1608 + $0x1] sm:$0xff]
        %v2020 = vld [vmem:[%s1608 + $0x9] sm:$0xff]
        %v2021 = vld [vmem:[%s1608 + $0x19] sm:$0xff]
        %v2022 = vld [vmem:[%s1608 + $0x21] sm:$0xff]
        %v2023 = vld [vmem:[%s1608 + $0x31] sm:$0xff]
        %v2024 = vld [vmem:[%s1608 + $0x39] sm:$0xff]
        %v2025 = vld [vmem:[%s1608 + $0x49] sm:$0xff]
        %v2026 = vld [vmem:[%s1608 + $0x51] sm:$0xff]
        %v2027 = vld [vmem:[%s1608 + $0x61] sm:$0xff]
        %v2028 = vld [vmem:[%s1608 + $0x69] sm:$0xff]
        %v2029 = vld [vmem:[%s1608 + $0x79] sm:$0xff]
        %v2030 = vld [vmem:[%s1608 + $0x81] sm:$0xff]
        %v2031 = vld [vmem:[%s1608 + $0x91] sm:$0xff]
        %v2032 = vld [vmem:[%s1608 + $0x99] sm:$0xff]
        %v2033 = vld [vmem:[%s1608 + $0xa9] sm:$0xff]
        %v2034 = vld [vmem:[%s1608 + $0xb1] sm:$0xff]
        %v2035 = vld [vmem:[%s1608 + $0xc1] sm:$0xff]
        %v2036 = vld [vmem:[%s1608 + $0xc9] sm:$0xff]
        %v2037 = vld [vmem:[%s1608 + $0xd9] sm:$0xff]
        %v2038 = vld [vmem:[%s1608 + $0xe1] sm:$0xff]
        %v2039 = vld [vmem:[%s1608 + $0xf1] sm:$0xff]
        %v2040 = vld [vmem:[%s1608 + $0xf9] sm:$0xff]
        %v2041 = vld [vmem:[%s1608 + $0x109] sm:$0xff]
        %v2042 = vld [vmem:[%s1608 + $0x111] sm:$0xff]
        %v2043 = vld [vmem:[%s1608 + $0x121] sm:$0xff]
        %v2044 = vld [vmem:[%s1608 + $0x129] sm:$0xff]
        %v2045 = vld [vmem:[%s1608 + $0x139] sm:$0xff]
        %v2046 = vld [vmem:[%s1608 + $0x141] sm:$0xff]
        %v2047 = vld [vmem:[%s1608 + $0x151] sm:$0xff]
        %v2048 = vld [vmem:[%s1608 + $0x159] sm:$0xff]
        %v2049 = vld [vmem:[%s1608 + $0x169] sm:$0xff]
        %v2050 = vld [vmem:[%s1608 + $0x171] sm:$0xff]
        %v2051 = vpack.c.bf16 %v2019, %v2019
        %v2052 = vpack.c.bf16 %v2020, %v2020
        %v2053 = vpack.c.bf16 %v2021, %v2021
        %v2054 = vpack.c.bf16 %v2022, %v2022
        %v2055 = vpack.c.bf16 %v2023, %v2023
        %v2056 = vpack.c.bf16 %v2024, %v2024
        %v2057 = vpack.c.bf16 %v2025, %v2025
        %v2058 = vpack.c.bf16 %v2026, %v2026
        %v2059 = vpack.c.bf16 %v2027, %v2027
        %v2060 = vpack.c.bf16 %v2028, %v2028
        %v2061 = vpack.c.bf16 %v2029, %v2029
        %v2062 = vpack.c.bf16 %v2030, %v2030
        %v2063 = vpack.c.bf16 %v2031, %v2031
        %v2064 = vpack.c.bf16 %v2032, %v2032
        %v2065 = vpack.c.bf16 %v2033, %v2033
        %v2066 = vpack.c.bf16 %v2034, %v2034
        %v2067 = vpack.c.bf16 %v2035, %v2035
        %v2068 = vpack.c.bf16 %v2036, %v2036
        %v2069 = vpack.c.bf16 %v2037, %v2037
        %v2070 = vpack.c.bf16 %v2038, %v2038
        %v2071 = vpack.c.bf16 %v2039, %v2039
        %v2072 = vpack.c.bf16 %v2040, %v2040
        %v2073 = vpack.c.bf16 %v2041, %v2041
        %v2074 = vpack.c.bf16 %v2042, %v2042
        %v2075 = vpack.c.bf16 %v2043, %v2043
        %v2076 = vpack.c.bf16 %v2044, %v2044
        %v2077 = vpack.c.bf16 %v2045, %v2045
        %v2078 = vpack.c.bf16 %v2046, %v2046
        %v2079 = vpack.c.bf16 %v2047, %v2047
        %v2080 = vpack.c.bf16 %v2048, %v2048
        %v2081 = vpack.c.bf16 %v2049, %v2049
        %v2082 = vpack.c.bf16 %v2050, %v2050
        %v2083 = vld [vmem:[#allocation3] sm:$0xff]
        %v2084 = vld [vmem:[#allocation3 + $0x8] sm:$0xff]
        %v2085 = vld [vmem:[#allocation3 + $0x10] sm:$0xff]
        %v2086 = vld [vmem:[#allocation3 + $0x18] sm:$0xff]
        %v2087 = vld [vmem:[#allocation3 + $0x20] sm:$0xff]
        %v2088 = vld [vmem:[#allocation3 + $0x28] sm:$0xff]
        %v2089 = vld [vmem:[#allocation3 + $0x30] sm:$0xff]
        %v2090 = vld [vmem:[#allocation3 + $0x38] sm:$0xff]
        %v2091 = vld [vmem:[#allocation3 + $0x40] sm:$0xff]
        %v2092 = vld [vmem:[#allocation3 + $0x48] sm:$0xff]
        %v2093 = vld [vmem:[#allocation3 + $0x50] sm:$0xff]
        %v2094 = vld [vmem:[#allocation3 + $0x58] sm:$0xff]
        %v2095 = vld [vmem:[#allocation3 + $0x60] sm:$0xff]
        %v2096 = vld [vmem:[#allocation3 + $0x68] sm:$0xff]
        %v2097 = vld [vmem:[#allocation3 + $0x70] sm:$0xff]
        %v2098 = vld [vmem:[#allocation3 + $0x78] sm:$0xff]
        %v2099 = vld [vmem:[#allocation3 + $0x80] sm:$0xff]
        %v2100 = vld [vmem:[#allocation3 + $0x88] sm:$0xff]
        %v2101 = vld [vmem:[#allocation3 + $0x90] sm:$0xff]
        %v2102 = vld [vmem:[#allocation3 + $0x98] sm:$0xff]
        %v2103 = vld [vmem:[#allocation3 + $0xa0] sm:$0xff]
        %v2104 = vld [vmem:[#allocation3 + $0xa8] sm:$0xff]
        %v2105 = vld [vmem:[#allocation3 + $0xb0] sm:$0xff]
        %v2106 = vld [vmem:[#allocation3 + $0xb8] sm:$0xff]
        %v2107 = vld [vmem:[#allocation3 + $0xc0] sm:$0xff]
        %v2108 = vld [vmem:[#allocation3 + $0xc8] sm:$0xff]
        %v2109 = vld [vmem:[#allocation3 + $0xd0] sm:$0xff]
        %v2110 = vld [vmem:[#allocation3 + $0xd8] sm:$0xff]
        %v2111 = vld [vmem:[#allocation3 + $0xe0] sm:$0xff]
        %v2112 = vld [vmem:[#allocation3 + $0xe8] sm:$0xff]
        %v2113 = vld [vmem:[#allocation3 + $0xf0] sm:$0xff]
        %v2114 = vld [vmem:[#allocation3 + $0xf8] sm:$0xff]
        %s2115 = scalar_lea.vmem %s1, 256
        %v2116 = vld [vmem:[%s2115] sm:$0xf]
        %v2117 = vld [vmem:[%s2115 + $0x4] sm:$0xf]
        %v2118 = vld [vmem:[%s2115 + $0x8] sm:$0xf]
        %v2119 = vld [vmem:[%s2115 + $0xc] sm:$0xf]
        %v2120 = vld [vmem:[%s2115 + $0x10] sm:$0xf]
        %v2121 = vld [vmem:[%s2115 + $0x14] sm:$0xf]
        %v2122 = vld [vmem:[%s2115 + $0x18] sm:$0xf]
        %v2123 = vld [vmem:[%s2115 + $0x1c] sm:$0xf]
        %v2124 = vld [vmem:[%s2115 + $0x20] sm:$0xf]
        %v2125 = vld [vmem:[%s2115 + $0x24] sm:$0xf]
        %v2126 = vld [vmem:[%s2115 + $0x28] sm:$0xf]
        %v2127 = vld [vmem:[%s2115 + $0x2c] sm:$0xf]
        %v2128 = vld [vmem:[%s2115 + $0x30] sm:$0xf]
        %v2129 = vld [vmem:[%s2115 + $0x34] sm:$0xf]
        %v2130 = vld [vmem:[%s2115 + $0x38] sm:$0xf]
        %v2131 = vld [vmem:[%s2115 + $0x3c] sm:$0xf]
        %v2164 = vunpack.c.l.b16 %v2051
        %v2165 = vunpack.c.l.b16 %v2052
        %v2166 = vunpack.c.l.b16 %v2053
        %v2167 = vunpack.c.l.b16 %v2054
        %v2168 = vunpack.c.l.b16 %v2055
        %v2169 = vunpack.c.l.b16 %v2056
        %v2170 = vunpack.c.l.b16 %v2057
        %v2171 = vunpack.c.l.b16 %v2058
        %v2172 = vunpack.c.l.b16 %v2059
        %v2173 = vunpack.c.l.b16 %v2060
        %v2174 = vunpack.c.l.b16 %v2061
        %v2175 = vunpack.c.l.b16 %v2062
        %v2176 = vunpack.c.l.b16 %v2063
        %v2177 = vunpack.c.l.b16 %v2064
        %v2178 = vunpack.c.l.b16 %v2065
        %v2179 = vunpack.c.l.b16 %v2066
        %v2180 = vunpack.c.l.b16 %v2067
        %v2181 = vunpack.c.l.b16 %v2068
        %v2182 = vunpack.c.l.b16 %v2069
        %v2183 = vunpack.c.l.b16 %v2070
        %v2184 = vunpack.c.l.b16 %v2071
        %v2185 = vunpack.c.l.b16 %v2072
        %v2186 = vunpack.c.l.b16 %v2073
        %v2187 = vunpack.c.l.b16 %v2074
        %v2188 = vunpack.c.l.b16 %v2075
        %v2189 = vunpack.c.l.b16 %v2076
        %v2190 = vunpack.c.l.b16 %v2077
        %v2191 = vunpack.c.l.b16 %v2078
        %v2192 = vunpack.c.l.b16 %v2079
        %v2193 = vunpack.c.l.b16 %v2080
        %v2194 = vunpack.c.l.b16 %v2081
        %v2195 = vunpack.c.l.b16 %v2082
        %v2196 = vpack.c.b16 %v2165, %v2164
        %v2197 = vpack.c.b16 %v2167, %v2166
        %v2198 = vpack.c.b16 %v2169, %v2168
        %v2199 = vpack.c.b16 %v2171, %v2170
        %v2200 = vpack.c.b16 %v2173, %v2172
        %v2201 = vpack.c.b16 %v2175, %v2174
        %v2202 = vpack.c.b16 %v2177, %v2176
        %v2203 = vpack.c.b16 %v2179, %v2178
        %v2204 = vpack.c.b16 %v2181, %v2180
        %v2205 = vpack.c.b16 %v2183, %v2182
        %v2206 = vpack.c.b16 %v2185, %v2184
        %v2207 = vpack.c.b16 %v2187, %v2186
        %v2208 = vpack.c.b16 %v2189, %v2188
        %v2209 = vpack.c.b16 %v2191, %v2190
        %v2210 = vpack.c.b16 %v2193, %v2192
        %v2211 = vpack.c.b16 %v2195, %v2194
        %v2244 = vunpack.c.l.b16 %v2116
        %v2245 = vunpack.c.l.b16 %v2117
        %v2246 = vunpack.c.l.b16 %v2118
        %v2247 = vunpack.c.l.b16 %v2119
        %v2248 = vunpack.c.l.b16 %v2120
        %v2249 = vunpack.c.l.b16 %v2121
        %v2250 = vunpack.c.l.b16 %v2122
        %v2251 = vunpack.c.l.b16 %v2123
        %v2252 = vunpack.c.l.b16 %v2124
        %v2253 = vunpack.c.l.b16 %v2125
        %v2254 = vunpack.c.l.b16 %v2126
        %v2255 = vunpack.c.l.b16 %v2127
        %v2256 = vunpack.c.l.b16 %v2128
        %v2257 = vunpack.c.l.b16 %v2129
        %v2258 = vunpack.c.l.b16 %v2130
        %v2259 = vunpack.c.l.b16 %v2131
        %v2260 = vpack.c.b16 %v2245, %v2244
        %v2261 = vpack.c.b16 %v2247, %v2246
        %v2262 = vpack.c.b16 %v2249, %v2248
        %v2263 = vpack.c.b16 %v2251, %v2250
        %v2264 = vpack.c.b16 %v2253, %v2252
        %v2265 = vpack.c.b16 %v2255, %v2254
        %v2266 = vpack.c.b16 %v2257, %v2256
        %v2267 = vpack.c.b16 %v2259, %v2258
        %2276 = vmatpush.bf16.msra.mxu0 %v2267
        %2277 = vmatpush.bf16.msra.mxu0 %v2266
        %2278 = vmatpush.bf16.msra.mxu0 %v2265
        %2279 = vmatpush.bf16.msra.mxu0 %v2264
        %2280 = vmatpush.bf16.msra.mxu0 %v2263
        %2281 = vmatpush.bf16.msra.mxu0 %v2262
        %2282 = vmatpush.bf16.msra.mxu0 %v2261
        %2283 = vmatpush.bf16.msra.mxu0 %v2260
        %2284 = vmatmul.bf16.gmra.mxu0 %v2196
        %v2285 = vpop.f32.mrf.mxu0
        %v2286 = vadd.f32 0.0, %v2285
        %v2287 = vpop.f32.mrf.mxu0
        %v2288 = vadd.f32 0.0, %v2287
        %2289 = vmatmul.bf16.gmra.mxu0 %v2197
        %v2290 = vpop.f32.mrf.mxu0
        %v2291 = vadd.f32 0.0, %v2290
        %v2292 = vpop.f32.mrf.mxu0
        %v2293 = vadd.f32 0.0, %v2292
        %2294 = vmatmul.bf16.gmra.mxu0 %v2198
        %v2295 = vpop.f32.mrf.mxu0
        %v2296 = vadd.f32 0.0, %v2295
        %v2297 = vpop.f32.mrf.mxu0
        %v2298 = vadd.f32 0.0, %v2297
        %2299 = vmatmul.bf16.gmra.mxu0 %v2199
        %v2300 = vpop.f32.mrf.mxu0
        %v2301 = vadd.f32 0.0, %v2300
        %v2302 = vpop.f32.mrf.mxu0
        %v2303 = vadd.f32 0.0, %v2302
        %2304 = vmatmul.bf16.gmra.mxu0 %v2200
        %v2305 = vpop.f32.mrf.mxu0
        %v2306 = vadd.f32 0.0, %v2305
        %v2307 = vpop.f32.mrf.mxu0
        %v2308 = vadd.f32 0.0, %v2307
        %2309 = vmatmul.bf16.gmra.mxu0 %v2201
        %v2310 = vpop.f32.mrf.mxu0
        %v2311 = vadd.f32 0.0, %v2310
        %v2312 = vpop.f32.mrf.mxu0
        %v2313 = vadd.f32 0.0, %v2312
        %2314 = vmatmul.bf16.gmra.mxu0 %v2202
        %v2315 = vpop.f32.mrf.mxu0
        %v2316 = vadd.f32 0.0, %v2315
        %v2317 = vpop.f32.mrf.mxu0
        %v2318 = vadd.f32 0.0, %v2317
        %2319 = vmatmul.bf16.gmra.mxu0 %v2203
        %v2320 = vpop.f32.mrf.mxu0
        %v2321 = vadd.f32 0.0, %v2320
        %v2322 = vpop.f32.mrf.mxu0
        %v2323 = vadd.f32 0.0, %v2322
        %2324 = vmatmul.bf16.gmra.mxu0 %v2204
        %v2325 = vpop.f32.mrf.mxu0
        %v2326 = vadd.f32 0.0, %v2325
        %v2327 = vpop.f32.mrf.mxu0
        %v2328 = vadd.f32 0.0, %v2327
        %2329 = vmatmul.bf16.gmra.mxu0 %v2205
        %v2330 = vpop.f32.mrf.mxu0
        %v2331 = vadd.f32 0.0, %v2330
        %v2332 = vpop.f32.mrf.mxu0
        %v2333 = vadd.f32 0.0, %v2332
        %2334 = vmatmul.bf16.gmra.mxu0 %v2206
        %v2335 = vpop.f32.mrf.mxu0
        %v2336 = vadd.f32 0.0, %v2335
        %v2337 = vpop.f32.mrf.mxu0
        %v2338 = vadd.f32 0.0, %v2337
        %2339 = vmatmul.bf16.gmra.mxu0 %v2207
        %v2340 = vpop.f32.mrf.mxu0
        %v2341 = vadd.f32 0.0, %v2340
        %v2342 = vpop.f32.mrf.mxu0
        %v2343 = vadd.f32 0.0, %v2342
        %2344 = vmatmul.bf16.gmra.mxu0 %v2208
        %v2345 = vpop.f32.mrf.mxu0
        %v2346 = vadd.f32 0.0, %v2345
        %v2347 = vpop.f32.mrf.mxu0
        %v2348 = vadd.f32 0.0, %v2347
        %2349 = vmatmul.bf16.gmra.mxu0 %v2209
        %v2350 = vpop.f32.mrf.mxu0
        %v2351 = vadd.f32 0.0, %v2350
        %v2352 = vpop.f32.mrf.mxu0
        %v2353 = vadd.f32 0.0, %v2352
        %2354 = vmatmul.bf16.gmra.mxu0 %v2210
        %v2355 = vpop.f32.mrf.mxu0
        %v2356 = vadd.f32 0.0, %v2355
        %v2357 = vpop.f32.mrf.mxu0
        %v2358 = vadd.f32 0.0, %v2357
        %2359 = vmatmul.bf16.gmra.mxu0 %v2211
        %v2360 = vpop.f32.mrf.mxu0
        %v2361 = vadd.f32 0.0, %v2360
        %v2362 = vpop.f32.mrf.mxu0
        %v2363 = vadd.f32 0.0, %v2362
        %2364 = vdwg.mxu0
        %v2365 = vadd.f32 %v2083, %v2286
        %v2366 = vadd.f32 %v2084, %v2288
        %v2367 = vadd.f32 %v2085, %v2291
        %v2368 = vadd.f32 %v2086, %v2293
        %v2369 = vadd.f32 %v2087, %v2296
        %v2370 = vadd.f32 %v2088, %v2298
        %v2371 = vadd.f32 %v2089, %v2301
        %v2372 = vadd.f32 %v2090, %v2303
        %v2373 = vadd.f32 %v2091, %v2306
        %v2374 = vadd.f32 %v2092, %v2308
        %v2375 = vadd.f32 %v2093, %v2311
        %v2376 = vadd.f32 %v2094, %v2313
        %v2377 = vadd.f32 %v2095, %v2316
        %v2378 = vadd.f32 %v2096, %v2318
        %v2379 = vadd.f32 %v2097, %v2321
        %v2380 = vadd.f32 %v2098, %v2323
        %v2381 = vadd.f32 %v2099, %v2326
        %v2382 = vadd.f32 %v2100, %v2328
        %v2383 = vadd.f32 %v2101, %v2331
        %v2384 = vadd.f32 %v2102, %v2333
        %v2385 = vadd.f32 %v2103, %v2336
        %v2386 = vadd.f32 %v2104, %v2338
        %v2387 = vadd.f32 %v2105, %v2341
        %v2388 = vadd.f32 %v2106, %v2343
        %v2389 = vadd.f32 %v2107, %v2346
        %v2390 = vadd.f32 %v2108, %v2348
        %v2391 = vadd.f32 %v2109, %v2351
        %v2392 = vadd.f32 %v2110, %v2353
        %v2393 = vadd.f32 %v2111, %v2356
        %v2394 = vadd.f32 %v2112, %v2358
        %v2395 = vadd.f32 %v2113, %v2361
        %v2396 = vadd.f32 %v2114, %v2363
        %2397 = vst [vmem:[#allocation3] sm:$0xff] %v2365
        %2398 = vst [vmem:[#allocation3 + $0x8] sm:$0xff] %v2366
        %2399 = vst [vmem:[#allocation3 + $0x10] sm:$0xff] %v2367
        %2400 = vst [vmem:[#allocation3 + $0x18] sm:$0xff] %v2368
        %2401 = vst [vmem:[#allocation3 + $0x20] sm:$0xff] %v2369
        %2402 = vst [vmem:[#allocation3 + $0x28] sm:$0xff] %v2370
        %2403 = vst [vmem:[#allocation3 + $0x30] sm:$0xff] %v2371
        %2404 = vst [vmem:[#allocation3 + $0x38] sm:$0xff] %v2372
        %2405 = vst [vmem:[#allocation3 + $0x40] sm:$0xff] %v2373
        %2406 = vst [vmem:[#allocation3 + $0x48] sm:$0xff] %v2374
        %2407 = vst [vmem:[#allocation3 + $0x50] sm:$0xff] %v2375
        %2408 = vst [vmem:[#allocation3 + $0x58] sm:$0xff] %v2376
        %2409 = vst [vmem:[#allocation3 + $0x60] sm:$0xff] %v2377
        %2410 = vst [vmem:[#allocation3 + $0x68] sm:$0xff] %v2378
        %2411 = vst [vmem:[#allocation3 + $0x70] sm:$0xff] %v2379
        %2412 = vst [vmem:[#allocation3 + $0x78] sm:$0xff] %v2380
        %2413 = vst [vmem:[#allocation3 + $0x80] sm:$0xff] %v2381
        %2414 = vst [vmem:[#allocation3 + $0x88] sm:$0xff] %v2382
        %2415 = vst [vmem:[#allocation3 + $0x90] sm:$0xff] %v2383
        %2416 = vst [vmem:[#allocation3 + $0x98] sm:$0xff] %v2384
        %2417 = vst [vmem:[#allocation3 + $0xa0] sm:$0xff] %v2385
        %2418 = vst [vmem:[#allocation3 + $0xa8] sm:$0xff] %v2386
        %2419 = vst [vmem:[#allocation3 + $0xb0] sm:$0xff] %v2387
        %2420 = vst [vmem:[#allocation3 + $0xb8] sm:$0xff] %v2388
        %2421 = vst [vmem:[#allocation3 + $0xc0] sm:$0xff] %v2389
        %2422 = vst [vmem:[#allocation3 + $0xc8] sm:$0xff] %v2390
        %2423 = vst [vmem:[#allocation3 + $0xd0] sm:$0xff] %v2391
        %2424 = vst [vmem:[#allocation3 + $0xd8] sm:$0xff] %v2392
        %2425 = vst [vmem:[#allocation3 + $0xe0] sm:$0xff] %v2393
        %2426 = vst [vmem:[#allocation3 + $0xe8] sm:$0xff] %v2394
        %2427 = vst [vmem:[#allocation3 + $0xf0] sm:$0xff] %v2395
        %2428 = vst [vmem:[#allocation3 + $0xf8] sm:$0xff] %v2396
        %v2429 = vld [vmem:[%s1608 + $0x2] sm:$0xff]
        %v2430 = vld [vmem:[%s1608 + $0xa] sm:$0xff]
        %v2431 = vld [vmem:[%s1608 + $0x1a] sm:$0xff]
        %v2432 = vld [vmem:[%s1608 + $0x22] sm:$0xff]
        %v2433 = vld [vmem:[%s1608 + $0x32] sm:$0xff]
        %v2434 = vld [vmem:[%s1608 + $0x3a] sm:$0xff]
        %v2435 = vld [vmem:[%s1608 + $0x4a] sm:$0xff]
        %v2436 = vld [vmem:[%s1608 + $0x52] sm:$0xff]
        %v2437 = vld [vmem:[%s1608 + $0x62] sm:$0xff]
        %v2438 = vld [vmem:[%s1608 + $0x6a] sm:$0xff]
        %v2439 = vld [vmem:[%s1608 + $0x7a] sm:$0xff]
        %v2440 = vld [vmem:[%s1608 + $0x82] sm:$0xff]
        %v2441 = vld [vmem:[%s1608 + $0x92] sm:$0xff]
        %v2442 = vld [vmem:[%s1608 + $0x9a] sm:$0xff]
        %v2443 = vld [vmem:[%s1608 + $0xaa] sm:$0xff]
        %v2444 = vld [vmem:[%s1608 + $0xb2] sm:$0xff]
        %v2445 = vld [vmem:[%s1608 + $0xc2] sm:$0xff]
        %v2446 = vld [vmem:[%s1608 + $0xca] sm:$0xff]
        %v2447 = vld [vmem:[%s1608 + $0xda] sm:$0xff]
        %v2448 = vld [vmem:[%s1608 + $0xe2] sm:$0xff]
        %v2449 = vld [vmem:[%s1608 + $0xf2] sm:$0xff]
        %v2450 = vld [vmem:[%s1608 + $0xfa] sm:$0xff]
        %v2451 = vld [vmem:[%s1608 + $0x10a] sm:$0xff]
        %v2452 = vld [vmem:[%s1608 + $0x112] sm:$0xff]
        %v2453 = vld [vmem:[%s1608 + $0x122] sm:$0xff]
        %v2454 = vld [vmem:[%s1608 + $0x12a] sm:$0xff]
        %v2455 = vld [vmem:[%s1608 + $0x13a] sm:$0xff]
        %v2456 = vld [vmem:[%s1608 + $0x142] sm:$0xff]
        %v2457 = vld [vmem:[%s1608 + $0x152] sm:$0xff]
        %v2458 = vld [vmem:[%s1608 + $0x15a] sm:$0xff]
        %v2459 = vld [vmem:[%s1608 + $0x16a] sm:$0xff]
        %v2460 = vld [vmem:[%s1608 + $0x172] sm:$0xff]
        %v2461 = vpack.c.bf16 %v2429, %v2429
        %v2462 = vpack.c.bf16 %v2430, %v2430
        %v2463 = vpack.c.bf16 %v2431, %v2431
        %v2464 = vpack.c.bf16 %v2432, %v2432
        %v2465 = vpack.c.bf16 %v2433, %v2433
        %v2466 = vpack.c.bf16 %v2434, %v2434
        %v2467 = vpack.c.bf16 %v2435, %v2435
        %v2468 = vpack.c.bf16 %v2436, %v2436
        %v2469 = vpack.c.bf16 %v2437, %v2437
        %v2470 = vpack.c.bf16 %v2438, %v2438
        %v2471 = vpack.c.bf16 %v2439, %v2439
        %v2472 = vpack.c.bf16 %v2440, %v2440
        %v2473 = vpack.c.bf16 %v2441, %v2441
        %v2474 = vpack.c.bf16 %v2442, %v2442
        %v2475 = vpack.c.bf16 %v2443, %v2443
        %v2476 = vpack.c.bf16 %v2444, %v2444
        %v2477 = vpack.c.bf16 %v2445, %v2445
        %v2478 = vpack.c.bf16 %v2446, %v2446
        %v2479 = vpack.c.bf16 %v2447, %v2447
        %v2480 = vpack.c.bf16 %v2448, %v2448
        %v2481 = vpack.c.bf16 %v2449, %v2449
        %v2482 = vpack.c.bf16 %v2450, %v2450
        %v2483 = vpack.c.bf16 %v2451, %v2451
        %v2484 = vpack.c.bf16 %v2452, %v2452
        %v2485 = vpack.c.bf16 %v2453, %v2453
        %v2486 = vpack.c.bf16 %v2454, %v2454
        %v2487 = vpack.c.bf16 %v2455, %v2455
        %v2488 = vpack.c.bf16 %v2456, %v2456
        %v2489 = vpack.c.bf16 %v2457, %v2457
        %v2490 = vpack.c.bf16 %v2458, %v2458
        %v2491 = vpack.c.bf16 %v2459, %v2459
        %v2492 = vpack.c.bf16 %v2460, %v2460
        %v2493 = vld [vmem:[#allocation3] sm:$0xff]
        %v2494 = vld [vmem:[#allocation3 + $0x8] sm:$0xff]
        %v2495 = vld [vmem:[#allocation3 + $0x10] sm:$0xff]
        %v2496 = vld [vmem:[#allocation3 + $0x18] sm:$0xff]
        %v2497 = vld [vmem:[#allocation3 + $0x20] sm:$0xff]
        %v2498 = vld [vmem:[#allocation3 + $0x28] sm:$0xff]
        %v2499 = vld [vmem:[#allocation3 + $0x30] sm:$0xff]
        %v2500 = vld [vmem:[#allocation3 + $0x38] sm:$0xff]
        %v2501 = vld [vmem:[#allocation3 + $0x40] sm:$0xff]
        %v2502 = vld [vmem:[#allocation3 + $0x48] sm:$0xff]
        %v2503 = vld [vmem:[#allocation3 + $0x50] sm:$0xff]
        %v2504 = vld [vmem:[#allocation3 + $0x58] sm:$0xff]
        %v2505 = vld [vmem:[#allocation3 + $0x60] sm:$0xff]
        %v2506 = vld [vmem:[#allocation3 + $0x68] sm:$0xff]
        %v2507 = vld [vmem:[#allocation3 + $0x70] sm:$0xff]
        %v2508 = vld [vmem:[#allocation3 + $0x78] sm:$0xff]
        %v2509 = vld [vmem:[#allocation3 + $0x80] sm:$0xff]
        %v2510 = vld [vmem:[#allocation3 + $0x88] sm:$0xff]
        %v2511 = vld [vmem:[#allocation3 + $0x90] sm:$0xff]
        %v2512 = vld [vmem:[#allocation3 + $0x98] sm:$0xff]
        %v2513 = vld [vmem:[#allocation3 + $0xa0] sm:$0xff]
        %v2514 = vld [vmem:[#allocation3 + $0xa8] sm:$0xff]
        %v2515 = vld [vmem:[#allocation3 + $0xb0] sm:$0xff]
        %v2516 = vld [vmem:[#allocation3 + $0xb8] sm:$0xff]
        %v2517 = vld [vmem:[#allocation3 + $0xc0] sm:$0xff]
        %v2518 = vld [vmem:[#allocation3 + $0xc8] sm:$0xff]
        %v2519 = vld [vmem:[#allocation3 + $0xd0] sm:$0xff]
        %v2520 = vld [vmem:[#allocation3 + $0xd8] sm:$0xff]
        %v2521 = vld [vmem:[#allocation3 + $0xe0] sm:$0xff]
        %v2522 = vld [vmem:[#allocation3 + $0xe8] sm:$0xff]
        %v2523 = vld [vmem:[#allocation3 + $0xf0] sm:$0xff]
        %v2524 = vld [vmem:[#allocation3 + $0xf8] sm:$0xff]
        %s2525 = scalar_lea.vmem %s1, 320
        %v2526 = vld [vmem:[%s2525] sm:$0xf]
        %v2527 = vld [vmem:[%s2525 + $0x4] sm:$0xf]
        %v2528 = vld [vmem:[%s2525 + $0x8] sm:$0xf]
        %v2529 = vld [vmem:[%s2525 + $0xc] sm:$0xf]
        %v2530 = vld [vmem:[%s2525 + $0x10] sm:$0xf]
        %v2531 = vld [vmem:[%s2525 + $0x14] sm:$0xf]
        %v2532 = vld [vmem:[%s2525 + $0x18] sm:$0xf]
        %v2533 = vld [vmem:[%s2525 + $0x1c] sm:$0xf]
        %v2534 = vld [vmem:[%s2525 + $0x20] sm:$0xf]
        %v2535 = vld [vmem:[%s2525 + $0x24] sm:$0xf]
        %v2536 = vld [vmem:[%s2525 + $0x28] sm:$0xf]
        %v2537 = vld [vmem:[%s2525 + $0x2c] sm:$0xf]
        %v2538 = vld [vmem:[%s2525 + $0x30] sm:$0xf]
        %v2539 = vld [vmem:[%s2525 + $0x34] sm:$0xf]
        %v2540 = vld [vmem:[%s2525 + $0x38] sm:$0xf]
        %v2541 = vld [vmem:[%s2525 + $0x3c] sm:$0xf]
        %v2574 = vunpack.c.l.b16 %v2461
        %v2575 = vunpack.c.l.b16 %v2462
        %v2576 = vunpack.c.l.b16 %v2463
        %v2577 = vunpack.c.l.b16 %v2464
        %v2578 = vunpack.c.l.b16 %v2465
        %v2579 = vunpack.c.l.b16 %v2466
        %v2580 = vunpack.c.l.b16 %v2467
        %v2581 = vunpack.c.l.b16 %v2468
        %v2582 = vunpack.c.l.b16 %v2469
        %v2583 = vunpack.c.l.b16 %v2470
        %v2584 = vunpack.c.l.b16 %v2471
        %v2585 = vunpack.c.l.b16 %v2472
        %v2586 = vunpack.c.l.b16 %v2473
        %v2587 = vunpack.c.l.b16 %v2474
        %v2588 = vunpack.c.l.b16 %v2475
        %v2589 = vunpack.c.l.b16 %v2476
        %v2590 = vunpack.c.l.b16 %v2477
        %v2591 = vunpack.c.l.b16 %v2478
        %v2592 = vunpack.c.l.b16 %v2479
        %v2593 = vunpack.c.l.b16 %v2480
        %v2594 = vunpack.c.l.b16 %v2481
        %v2595 = vunpack.c.l.b16 %v2482
        %v2596 = vunpack.c.l.b16 %v2483
        %v2597 = vunpack.c.l.b16 %v2484
        %v2598 = vunpack.c.l.b16 %v2485
        %v2599 = vunpack.c.l.b16 %v2486
        %v2600 = vunpack.c.l.b16 %v2487
        %v2601 = vunpack.c.l.b16 %v2488
        %v2602 = vunpack.c.l.b16 %v2489
        %v2603 = vunpack.c.l.b16 %v2490
        %v2604 = vunpack.c.l.b16 %v2491
        %v2605 = vunpack.c.l.b16 %v2492
        %v2606 = vpack.c.b16 %v2575, %v2574
        %v2607 = vpack.c.b16 %v2577, %v2576
        %v2608 = vpack.c.b16 %v2579, %v2578
        %v2609 = vpack.c.b16 %v2581, %v2580
        %v2610 = vpack.c.b16 %v2583, %v2582
        %v2611 = vpack.c.b16 %v2585, %v2584
        %v2612 = vpack.c.b16 %v2587, %v2586
        %v2613 = vpack.c.b16 %v2589, %v2588
        %v2614 = vpack.c.b16 %v2591, %v2590
        %v2615 = vpack.c.b16 %v2593, %v2592
        %v2616 = vpack.c.b16 %v2595, %v2594
        %v2617 = vpack.c.b16 %v2597, %v2596
        %v2618 = vpack.c.b16 %v2599, %v2598
        %v2619 = vpack.c.b16 %v2601, %v2600
        %v2620 = vpack.c.b16 %v2603, %v2602
        %v2621 = vpack.c.b16 %v2605, %v2604
        %v2654 = vunpack.c.l.b16 %v2526
        %v2655 = vunpack.c.l.b16 %v2527
        %v2656 = vunpack.c.l.b16 %v2528
        %v2657 = vunpack.c.l.b16 %v2529
        %v2658 = vunpack.c.l.b16 %v2530
        %v2659 = vunpack.c.l.b16 %v2531
        %v2660 = vunpack.c.l.b16 %v2532
        %v2661 = vunpack.c.l.b16 %v2533
        %v2662 = vunpack.c.l.b16 %v2534
        %v2663 = vunpack.c.l.b16 %v2535
        %v2664 = vunpack.c.l.b16 %v2536
        %v2665 = vunpack.c.l.b16 %v2537
        %v2666 = vunpack.c.l.b16 %v2538
        %v2667 = vunpack.c.l.b16 %v2539
        %v2668 = vunpack.c.l.b16 %v2540
        %v2669 = vunpack.c.l.b16 %v2541
        %v2670 = vpack.c.b16 %v2655, %v2654
        %v2671 = vpack.c.b16 %v2657, %v2656
        %v2672 = vpack.c.b16 %v2659, %v2658
        %v2673 = vpack.c.b16 %v2661, %v2660
        %v2674 = vpack.c.b16 %v2663, %v2662
        %v2675 = vpack.c.b16 %v2665, %v2664
        %v2676 = vpack.c.b16 %v2667, %v2666
        %v2677 = vpack.c.b16 %v2669, %v2668
        %2686 = vmatpush.bf16.msra.mxu0 %v2677
        %2687 = vmatpush.bf16.msra.mxu0 %v2676
        %2688 = vmatpush.bf16.msra.mxu0 %v2675
        %2689 = vmatpush.bf16.msra.mxu0 %v2674
        %2690 = vmatpush.bf16.msra.mxu0 %v2673
        %2691 = vmatpush.bf16.msra.mxu0 %v2672
        %2692 = vmatpush.bf16.msra.mxu0 %v2671
        %2693 = vmatpush.bf16.msra.mxu0 %v2670
        %2694 = vmatmul.bf16.gmra.mxu0 %v2606
        %v2695 = vpop.f32.mrf.mxu0
        %v2696 = vadd.f32 0.0, %v2695
        %v2697 = vpop.f32.mrf.mxu0
        %v2698 = vadd.f32 0.0, %v2697
        %2699 = vmatmul.bf16.gmra.mxu0 %v2607
        %v2700 = vpop.f32.mrf.mxu0
        %v2701 = vadd.f32 0.0, %v2700
        %v2702 = vpop.f32.mrf.mxu0
        %v2703 = vadd.f32 0.0, %v2702
        %2704 = vmatmul.bf16.gmra.mxu0 %v2608
        %v2705 = vpop.f32.mrf.mxu0
        %v2706 = vadd.f32 0.0, %v2705
        %v2707 = vpop.f32.mrf.mxu0
        %v2708 = vadd.f32 0.0, %v2707
        %2709 = vmatmul.bf16.gmra.mxu0 %v2609
        %v2710 = vpop.f32.mrf.mxu0
        %v2711 = vadd.f32 0.0, %v2710
        %v2712 = vpop.f32.mrf.mxu0
        %v2713 = vadd.f32 0.0, %v2712
        %2714 = vmatmul.bf16.gmra.mxu0 %v2610
        %v2715 = vpop.f32.mrf.mxu0
        %v2716 = vadd.f32 0.0, %v2715
        %v2717 = vpop.f32.mrf.mxu0
        %v2718 = vadd.f32 0.0, %v2717
        %2719 = vmatmul.bf16.gmra.mxu0 %v2611
        %v2720 = vpop.f32.mrf.mxu0
        %v2721 = vadd.f32 0.0, %v2720
        %v2722 = vpop.f32.mrf.mxu0
        %v2723 = vadd.f32 0.0, %v2722
        %2724 = vmatmul.bf16.gmra.mxu0 %v2612
        %v2725 = vpop.f32.mrf.mxu0
        %v2726 = vadd.f32 0.0, %v2725
        %v2727 = vpop.f32.mrf.mxu0
        %v2728 = vadd.f32 0.0, %v2727
        %2729 = vmatmul.bf16.gmra.mxu0 %v2613
        %v2730 = vpop.f32.mrf.mxu0
        %v2731 = vadd.f32 0.0, %v2730
        %v2732 = vpop.f32.mrf.mxu0
        %v2733 = vadd.f32 0.0, %v2732
        %2734 = vmatmul.bf16.gmra.mxu0 %v2614
        %v2735 = vpop.f32.mrf.mxu0
        %v2736 = vadd.f32 0.0, %v2735
        %v2737 = vpop.f32.mrf.mxu0
        %v2738 = vadd.f32 0.0, %v2737
        %2739 = vmatmul.bf16.gmra.mxu0 %v2615
        %v2740 = vpop.f32.mrf.mxu0
        %v2741 = vadd.f32 0.0, %v2740
        %v2742 = vpop.f32.mrf.mxu0
        %v2743 = vadd.f32 0.0, %v2742
        %2744 = vmatmul.bf16.gmra.mxu0 %v2616
        %v2745 = vpop.f32.mrf.mxu0
        %v2746 = vadd.f32 0.0, %v2745
        %v2747 = vpop.f32.mrf.mxu0
        %v2748 = vadd.f32 0.0, %v2747
        %2749 = vmatmul.bf16.gmra.mxu0 %v2617
        %v2750 = vpop.f32.mrf.mxu0
        %v2751 = vadd.f32 0.0, %v2750
        %v2752 = vpop.f32.mrf.mxu0
        %v2753 = vadd.f32 0.0, %v2752
        %2754 = vmatmul.bf16.gmra.mxu0 %v2618
        %v2755 = vpop.f32.mrf.mxu0
        %v2756 = vadd.f32 0.0, %v2755
        %v2757 = vpop.f32.mrf.mxu0
        %v2758 = vadd.f32 0.0, %v2757
        %2759 = vmatmul.bf16.gmra.mxu0 %v2619
        %v2760 = vpop.f32.mrf.mxu0
        %v2761 = vadd.f32 0.0, %v2760
        %v2762 = vpop.f32.mrf.mxu0
        %v2763 = vadd.f32 0.0, %v2762
        %2764 = vmatmul.bf16.gmra.mxu0 %v2620
        %v2765 = vpop.f32.mrf.mxu0
        %v2766 = vadd.f32 0.0, %v2765
        %v2767 = vpop.f32.mrf.mxu0
        %v2768 = vadd.f32 0.0, %v2767
        %2769 = vmatmul.bf16.gmra.mxu0 %v2621
        %v2770 = vpop.f32.mrf.mxu0
        %v2771 = vadd.f32 0.0, %v2770
        %v2772 = vpop.f32.mrf.mxu0
        %v2773 = vadd.f32 0.0, %v2772
        %2774 = vdwg.mxu0
        %v2775 = vadd.f32 %v2493, %v2696
        %v2776 = vadd.f32 %v2494, %v2698
        %v2777 = vadd.f32 %v2495, %v2701
        %v2778 = vadd.f32 %v2496, %v2703
        %v2779 = vadd.f32 %v2497, %v2706
        %v2780 = vadd.f32 %v2498, %v2708
        %v2781 = vadd.f32 %v2499, %v2711
        %v2782 = vadd.f32 %v2500, %v2713
        %v2783 = vadd.f32 %v2501, %v2716
        %v2784 = vadd.f32 %v2502, %v2718
        %v2785 = vadd.f32 %v2503, %v2721
        %v2786 = vadd.f32 %v2504, %v2723
        %v2787 = vadd.f32 %v2505, %v2726
        %v2788 = vadd.f32 %v2506, %v2728
        %v2789 = vadd.f32 %v2507, %v2731
        %v2790 = vadd.f32 %v2508, %v2733
        %v2791 = vadd.f32 %v2509, %v2736
        %v2792 = vadd.f32 %v2510, %v2738
        %v2793 = vadd.f32 %v2511, %v2741
        %v2794 = vadd.f32 %v2512, %v2743
        %v2795 = vadd.f32 %v2513, %v2746
        %v2796 = vadd.f32 %v2514, %v2748
        %v2797 = vadd.f32 %v2515, %v2751
        %v2798 = vadd.f32 %v2516, %v2753
        %v2799 = vadd.f32 %v2517, %v2756
        %v2800 = vadd.f32 %v2518, %v2758
        %v2801 = vadd.f32 %v2519, %v2761
        %v2802 = vadd.f32 %v2520, %v2763
        %v2803 = vadd.f32 %v2521, %v2766
        %v2804 = vadd.f32 %v2522, %v2768
        %v2805 = vadd.f32 %v2523, %v2771
        %v2806 = vadd.f32 %v2524, %v2773
        %2807 = vst [vmem:[#allocation3] sm:$0xff] %v2775
        %2808 = vst [vmem:[#allocation3 + $0x8] sm:$0xff] %v2776
        %2809 = vst [vmem:[#allocation3 + $0x10] sm:$0xff] %v2777
        %2810 = vst [vmem:[#allocation3 + $0x18] sm:$0xff] %v2778
        %2811 = vst [vmem:[#allocation3 + $0x20] sm:$0xff] %v2779
        %2812 = vst [vmem:[#allocation3 + $0x28] sm:$0xff] %v2780
        %2813 = vst [vmem:[#allocation3 + $0x30] sm:$0xff] %v2781
        %2814 = vst [vmem:[#allocation3 + $0x38] sm:$0xff] %v2782
        %2815 = vst [vmem:[#allocation3 + $0x40] sm:$0xff] %v2783
        %2816 = vst [vmem:[#allocation3 + $0x48] sm:$0xff] %v2784
        %2817 = vst [vmem:[#allocation3 + $0x50] sm:$0xff] %v2785
        %2818 = vst [vmem:[#allocation3 + $0x58] sm:$0xff] %v2786
        %2819 = vst [vmem:[#allocation3 + $0x60] sm:$0xff] %v2787
        %2820 = vst [vmem:[#allocation3 + $0x68] sm:$0xff] %v2788
        %2821 = vst [vmem:[#allocation3 + $0x70] sm:$0xff] %v2789
        %2822 = vst [vmem:[#allocation3 + $0x78] sm:$0xff] %v2790
        %2823 = vst [vmem:[#allocation3 + $0x80] sm:$0xff] %v2791
        %2824 = vst [vmem:[#allocation3 + $0x88] sm:$0xff] %v2792
        %2825 = vst [vmem:[#allocation3 + $0x90] sm:$0xff] %v2793
        %2826 = vst [vmem:[#allocation3 + $0x98] sm:$0xff] %v2794
        %2827 = vst [vmem:[#allocation3 + $0xa0] sm:$0xff] %v2795
        %2828 = vst [vmem:[#allocation3 + $0xa8] sm:$0xff] %v2796
        %2829 = vst [vmem:[#allocation3 + $0xb0] sm:$0xff] %v2797
        %2830 = vst [vmem:[#allocation3 + $0xb8] sm:$0xff] %v2798
        %2831 = vst [vmem:[#allocation3 + $0xc0] sm:$0xff] %v2799
        %2832 = vst [vmem:[#allocation3 + $0xc8] sm:$0xff] %v2800
        %2833 = vst [vmem:[#allocation3 + $0xd0] sm:$0xff] %v2801
        %2834 = vst [vmem:[#allocation3 + $0xd8] sm:$0xff] %v2802
        %2835 = vst [vmem:[#allocation3 + $0xe0] sm:$0xff] %v2803
        %2836 = vst [vmem:[#allocation3 + $0xe8] sm:$0xff] %v2804
        %2837 = vst [vmem:[#allocation3 + $0xf0] sm:$0xff] %v2805
        %2838 = vst [vmem:[#allocation3 + $0xf8] sm:$0xff] %v2806
        %s2839 = scalar_lea.vmem %s346, 48
        %v2840 = vld [vmem:[%s2839] sm:$0xff]
        %v2841 = vld [vmem:[%s2839 + $0x8] sm:$0xff]
        %v2842 = vld [vmem:[%s2839 + $0x18] sm:$0xff]
        %v2843 = vld [vmem:[%s2839 + $0x20] sm:$0xff]
        %v2844 = vld [vmem:[%s2839 + $0x30] sm:$0xff]
        %v2845 = vld [vmem:[%s2839 + $0x38] sm:$0xff]
        %v2846 = vld [vmem:[%s2839 + $0x48] sm:$0xff]
        %v2847 = vld [vmem:[%s2839 + $0x50] sm:$0xff]
        %v2848 = vld [vmem:[%s2839 + $0x60] sm:$0xff]
        %v2849 = vld [vmem:[%s2839 + $0x68] sm:$0xff]
        %v2850 = vld [vmem:[%s2839 + $0x78] sm:$0xff]
        %v2851 = vld [vmem:[%s2839 + $0x80] sm:$0xff]
        %v2852 = vld [vmem:[%s2839 + $0x90] sm:$0xff]
        %v2853 = vld [vmem:[%s2839 + $0x98] sm:$0xff]
        %v2854 = vld [vmem:[%s2839 + $0xa8] sm:$0xff]
        %v2855 = vld [vmem:[%s2839 + $0xb0] sm:$0xff]
        %v2856 = vld [vmem:[%s2839 + $0xc0] sm:$0xff]
        %v2857 = vld [vmem:[%s2839 + $0xc8] sm:$0xff]
        %v2858 = vld [vmem:[%s2839 + $0xd8] sm:$0xff]
        %v2859 = vld [vmem:[%s2839 + $0xe0] sm:$0xff]
        %v2860 = vld [vmem:[%s2839 + $0xf0] sm:$0xff]
        %v2861 = vld [vmem:[%s2839 + $0xf8] sm:$0xff]
        %v2862 = vld [vmem:[%s2839 + $0x108] sm:$0xff]
        %v2863 = vld [vmem:[%s2839 + $0x110] sm:$0xff]
        %v2864 = vld [vmem:[%s2839 + $0x120] sm:$0xff]
        %v2865 = vld [vmem:[%s2839 + $0x128] sm:$0xff]
        %v2866 = vld [vmem:[%s2839 + $0x138] sm:$0xff]
        %v2867 = vld [vmem:[%s2839 + $0x140] sm:$0xff]
        %v2868 = vld [vmem:[%s2839 + $0x150] sm:$0xff]
        %v2869 = vld [vmem:[%s2839 + $0x158] sm:$0xff]
        %v2870 = vld [vmem:[%s2839 + $0x168] sm:$0xff]
        %v2871 = vld [vmem:[%s2839 + $0x170] sm:$0xff]
        %v2872 = vpack.c.bf16 %v2840, %v2840
        %v2873 = vpack.c.bf16 %v2841, %v2841
        %v2874 = vpack.c.bf16 %v2842, %v2842
        %v2875 = vpack.c.bf16 %v2843, %v2843
        %v2876 = vpack.c.bf16 %v2844, %v2844
        %v2877 = vpack.c.bf16 %v2845, %v2845
        %v2878 = vpack.c.bf16 %v2846, %v2846
        %v2879 = vpack.c.bf16 %v2847, %v2847
        %v2880 = vpack.c.bf16 %v2848, %v2848
        %v2881 = vpack.c.bf16 %v2849, %v2849
        %v2882 = vpack.c.bf16 %v2850, %v2850
        %v2883 = vpack.c.bf16 %v2851, %v2851
        %v2884 = vpack.c.bf16 %v2852, %v2852
        %v2885 = vpack.c.bf16 %v2853, %v2853
        %v2886 = vpack.c.bf16 %v2854, %v2854
        %v2887 = vpack.c.bf16 %v2855, %v2855
        %v2888 = vpack.c.bf16 %v2856, %v2856
        %v2889 = vpack.c.bf16 %v2857, %v2857
        %v2890 = vpack.c.bf16 %v2858, %v2858
        %v2891 = vpack.c.bf16 %v2859, %v2859
        %v2892 = vpack.c.bf16 %v2860, %v2860
        %v2893 = vpack.c.bf16 %v2861, %v2861
        %v2894 = vpack.c.bf16 %v2862, %v2862
        %v2895 = vpack.c.bf16 %v2863, %v2863
        %v2896 = vpack.c.bf16 %v2864, %v2864
        %v2897 = vpack.c.bf16 %v2865, %v2865
        %v2898 = vpack.c.bf16 %v2866, %v2866
        %v2899 = vpack.c.bf16 %v2867, %v2867
        %v2900 = vpack.c.bf16 %v2868, %v2868
        %v2901 = vpack.c.bf16 %v2869, %v2869
        %v2902 = vpack.c.bf16 %v2870, %v2870
        %v2903 = vpack.c.bf16 %v2871, %v2871
        %v2904 = vld [vmem:[#allocation3] sm:$0xff]
        %v2905 = vld [vmem:[#allocation3 + $0x8] sm:$0xff]
        %v2906 = vld [vmem:[#allocation3 + $0x10] sm:$0xff]
        %v2907 = vld [vmem:[#allocation3 + $0x18] sm:$0xff]
        %v2908 = vld [vmem:[#allocation3 + $0x20] sm:$0xff]
        %v2909 = vld [vmem:[#allocation3 + $0x28] sm:$0xff]
        %v2910 = vld [vmem:[#allocation3 + $0x30] sm:$0xff]
        %v2911 = vld [vmem:[#allocation3 + $0x38] sm:$0xff]
        %v2912 = vld [vmem:[#allocation3 + $0x40] sm:$0xff]
        %v2913 = vld [vmem:[#allocation3 + $0x48] sm:$0xff]
        %v2914 = vld [vmem:[#allocation3 + $0x50] sm:$0xff]
        %v2915 = vld [vmem:[#allocation3 + $0x58] sm:$0xff]
        %v2916 = vld [vmem:[#allocation3 + $0x60] sm:$0xff]
        %v2917 = vld [vmem:[#allocation3 + $0x68] sm:$0xff]
        %v2918 = vld [vmem:[#allocation3 + $0x70] sm:$0xff]
        %v2919 = vld [vmem:[#allocation3 + $0x78] sm:$0xff]
        %v2920 = vld [vmem:[#allocation3 + $0x80] sm:$0xff]
        %v2921 = vld [vmem:[#allocation3 + $0x88] sm:$0xff]
        %v2922 = vld [vmem:[#allocation3 + $0x90] sm:$0xff]
        %v2923 = vld [vmem:[#allocation3 + $0x98] sm:$0xff]
        %v2924 = vld [vmem:[#allocation3 + $0xa0] sm:$0xff]
        %v2925 = vld [vmem:[#allocation3 + $0xa8] sm:$0xff]
        %v2926 = vld [vmem:[#allocation3 + $0xb0] sm:$0xff]
        %v2927 = vld [vmem:[#allocation3 + $0xb8] sm:$0xff]
        %v2928 = vld [vmem:[#allocation3 + $0xc0] sm:$0xff]
        %v2929 = vld [vmem:[#allocation3 + $0xc8] sm:$0xff]
        %v2930 = vld [vmem:[#allocation3 + $0xd0] sm:$0xff]
        %v2931 = vld [vmem:[#allocation3 + $0xd8] sm:$0xff]
        %v2932 = vld [vmem:[#allocation3 + $0xe0] sm:$0xff]
        %v2933 = vld [vmem:[#allocation3 + $0xe8] sm:$0xff]
        %v2934 = vld [vmem:[#allocation3 + $0xf0] sm:$0xff]
        %v2935 = vld [vmem:[#allocation3 + $0xf8] sm:$0xff]
        %s2936 = scalar_lea.vmem %s1, 384
        %v2937 = vld [vmem:[%s2936] sm:$0xf]
        %v2938 = vld [vmem:[%s2936 + $0x4] sm:$0xf]
        %v2939 = vld [vmem:[%s2936 + $0x8] sm:$0xf]
        %v2940 = vld [vmem:[%s2936 + $0xc] sm:$0xf]
        %v2941 = vld [vmem:[%s2936 + $0x10] sm:$0xf]
        %v2942 = vld [vmem:[%s2936 + $0x14] sm:$0xf]
        %v2943 = vld [vmem:[%s2936 + $0x18] sm:$0xf]
        %v2944 = vld [vmem:[%s2936 + $0x1c] sm:$0xf]
        %v2945 = vld [vmem:[%s2936 + $0x20] sm:$0xf]
        %v2946 = vld [vmem:[%s2936 + $0x24] sm:$0xf]
        %v2947 = vld [vmem:[%s2936 + $0x28] sm:$0xf]
        %v2948 = vld [vmem:[%s2936 + $0x2c] sm:$0xf]
        %v2949 = vld [vmem:[%s2936 + $0x30] sm:$0xf]
        %v2950 = vld [vmem:[%s2936 + $0x34] sm:$0xf]
        %v2951 = vld [vmem:[%s2936 + $0x38] sm:$0xf]
        %v2952 = vld [vmem:[%s2936 + $0x3c] sm:$0xf]
        %v2985 = vunpack.c.l.b16 %v2872
        %v2986 = vunpack.c.l.b16 %v2873
        %v2987 = vunpack.c.l.b16 %v2874
        %v2988 = vunpack.c.l.b16 %v2875
        %v2989 = vunpack.c.l.b16 %v2876
        %v2990 = vunpack.c.l.b16 %v2877
        %v2991 = vunpack.c.l.b16 %v2878
        %v2992 = vunpack.c.l.b16 %v2879
        %v2993 = vunpack.c.l.b16 %v2880
        %v2994 = vunpack.c.l.b16 %v2881
        %v2995 = vunpack.c.l.b16 %v2882
        %v2996 = vunpack.c.l.b16 %v2883
        %v2997 = vunpack.c.l.b16 %v2884
        %v2998 = vunpack.c.l.b16 %v2885
        %v2999 = vunpack.c.l.b16 %v2886
        %v3000 = vunpack.c.l.b16 %v2887
        %v3001 = vunpack.c.l.b16 %v2888
        %v3002 = vunpack.c.l.b16 %v2889
        %v3003 = vunpack.c.l.b16 %v2890
        %v3004 = vunpack.c.l.b16 %v2891
        %v3005 = vunpack.c.l.b16 %v2892
        %v3006 = vunpack.c.l.b16 %v2893
        %v3007 = vunpack.c.l.b16 %v2894
        %v3008 = vunpack.c.l.b16 %v2895
        %v3009 = vunpack.c.l.b16 %v2896
        %v3010 = vunpack.c.l.b16 %v2897
        %v3011 = vunpack.c.l.b16 %v2898
        %v3012 = vunpack.c.l.b16 %v2899
        %v3013 = vunpack.c.l.b16 %v2900
        %v3014 = vunpack.c.l.b16 %v2901
        %v3015 = vunpack.c.l.b16 %v2902
        %v3016 = vunpack.c.l.b16 %v2903
        %v3017 = vpack.c.b16 %v2986, %v2985
        %v3018 = vpack.c.b16 %v2988, %v2987
        %v3019 = vpack.c.b16 %v2990, %v2989
        %v3020 = vpack.c.b16 %v2992, %v2991
        %v3021 = vpack.c.b16 %v2994, %v2993
        %v3022 = vpack.c.b16 %v2996, %v2995
        %v3023 = vpack.c.b16 %v2998, %v2997
        %v3024 = vpack.c.b16 %v3000, %v2999
        %v3025 = vpack.c.b16 %v3002, %v3001
        %v3026 = vpack.c.b16 %v3004, %v3003
        %v3027 = vpack.c.b16 %v3006, %v3005
        %v3028 = vpack.c.b16 %v3008, %v3007
        %v3029 = vpack.c.b16 %v3010, %v3009
        %v3030 = vpack.c.b16 %v3012, %v3011
        %v3031 = vpack.c.b16 %v3014, %v3013
        %v3032 = vpack.c.b16 %v3016, %v3015
        %v3065 = vunpack.c.l.b16 %v2937
        %v3066 = vunpack.c.l.b16 %v2938
        %v3067 = vunpack.c.l.b16 %v2939
        %v3068 = vunpack.c.l.b16 %v2940
        %v3069 = vunpack.c.l.b16 %v2941
        %v3070 = vunpack.c.l.b16 %v2942
        %v3071 = vunpack.c.l.b16 %v2943
        %v3072 = vunpack.c.l.b16 %v2944
        %v3073 = vunpack.c.l.b16 %v2945
        %v3074 = vunpack.c.l.b16 %v2946
        %v3075 = vunpack.c.l.b16 %v2947
        %v3076 = vunpack.c.l.b16 %v2948
        %v3077 = vunpack.c.l.b16 %v2949
        %v3078 = vunpack.c.l.b16 %v2950
        %v3079 = vunpack.c.l.b16 %v2951
        %v3080 = vunpack.c.l.b16 %v2952
        %v3081 = vpack.c.b16 %v3066, %v3065
        %v3082 = vpack.c.b16 %v3068, %v3067
        %v3083 = vpack.c.b16 %v3070, %v3069
        %v3084 = vpack.c.b16 %v3072, %v3071
        %v3085 = vpack.c.b16 %v3074, %v3073
        %v3086 = vpack.c.b16 %v3076, %v3075
        %v3087 = vpack.c.b16 %v3078, %v3077
        %v3088 = vpack.c.b16 %v3080, %v3079
        %3097 = vmatpush.bf16.msra.mxu0 %v3088
        %3098 = vmatpush.bf16.msra.mxu0 %v3087
        %3099 = vmatpush.bf16.msra.mxu0 %v3086
        %3100 = vmatpush.bf16.msra.mxu0 %v3085
        %3101 = vmatpush.bf16.msra.mxu0 %v3084
        %3102 = vmatpush.bf16.msra.mxu0 %v3083
        %3103 = vmatpush.bf16.msra.mxu0 %v3082
        %3104 = vmatpush.bf16.msra.mxu0 %v3081
        %3105 = vmatmul.bf16.gmra.mxu0 %v3017
        %v3106 = vpop.f32.mrf.mxu0
        %v3107 = vadd.f32 0.0, %v3106
        %v3108 = vpop.f32.mrf.mxu0
        %v3109 = vadd.f32 0.0, %v3108
        %3110 = vmatmul.bf16.gmra.mxu0 %v3018
        %v3111 = vpop.f32.mrf.mxu0
        %v3112 = vadd.f32 0.0, %v3111
        %v3113 = vpop.f32.mrf.mxu0
        %v3114 = vadd.f32 0.0, %v3113
        %3115 = vmatmul.bf16.gmra.mxu0 %v3019
        %v3116 = vpop.f32.mrf.mxu0
        %v3117 = vadd.f32 0.0, %v3116
        %v3118 = vpop.f32.mrf.mxu0
        %v3119 = vadd.f32 0.0, %v3118
        %3120 = vmatmul.bf16.gmra.mxu0 %v3020
        %v3121 = vpop.f32.mrf.mxu0
        %v3122 = vadd.f32 0.0, %v3121
        %v3123 = vpop.f32.mrf.mxu0
        %v3124 = vadd.f32 0.0, %v3123
        %3125 = vmatmul.bf16.gmra.mxu0 %v3021
        %v3126 = vpop.f32.mrf.mxu0
        %v3127 = vadd.f32 0.0, %v3126
        %v3128 = vpop.f32.mrf.mxu0
        %v3129 = vadd.f32 0.0, %v3128
        %3130 = vmatmul.bf16.gmra.mxu0 %v3022
        %v3131 = vpop.f32.mrf.mxu0
        %v3132 = vadd.f32 0.0, %v3131
        %v3133 = vpop.f32.mrf.mxu0
        %v3134 = vadd.f32 0.0, %v3133
        %3135 = vmatmul.bf16.gmra.mxu0 %v3023
        %v3136 = vpop.f32.mrf.mxu0
        %v3137 = vadd.f32 0.0, %v3136
        %v3138 = vpop.f32.mrf.mxu0
        %v3139 = vadd.f32 0.0, %v3138
        %3140 = vmatmul.bf16.gmra.mxu0 %v3024
        %v3141 = vpop.f32.mrf.mxu0
        %v3142 = vadd.f32 0.0, %v3141
        %v3143 = vpop.f32.mrf.mxu0
        %v3144 = vadd.f32 0.0, %v3143
        %3145 = vmatmul.bf16.gmra.mxu0 %v3025
        %v3146 = vpop.f32.mrf.mxu0
        %v3147 = vadd.f32 0.0, %v3146
        %v3148 = vpop.f32.mrf.mxu0
        %v3149 = vadd.f32 0.0, %v3148
        %3150 = vmatmul.bf16.gmra.mxu0 %v3026
        %v3151 = vpop.f32.mrf.mxu0
        %v3152 = vadd.f32 0.0, %v3151
        %v3153 = vpop.f32.mrf.mxu0
        %v3154 = vadd.f32 0.0, %v3153
        %3155 = vmatmul.bf16.gmra.mxu0 %v3027
        %v3156 = vpop.f32.mrf.mxu0
        %v3157 = vadd.f32 0.0, %v3156
        %v3158 = vpop.f32.mrf.mxu0
        %v3159 = vadd.f32 0.0, %v3158
        %3160 = vmatmul.bf16.gmra.mxu0 %v3028
        %v3161 = vpop.f32.mrf.mxu0
        %v3162 = vadd.f32 0.0, %v3161
        %v3163 = vpop.f32.mrf.mxu0
        %v3164 = vadd.f32 0.0, %v3163
        %3165 = vmatmul.bf16.gmra.mxu0 %v3029
        %v3166 = vpop.f32.mrf.mxu0
        %v3167 = vadd.f32 0.0, %v3166
        %v3168 = vpop.f32.mrf.mxu0
        %v3169 = vadd.f32 0.0, %v3168
        %3170 = vmatmul.bf16.gmra.mxu0 %v3030
        %v3171 = vpop.f32.mrf.mxu0
        %v3172 = vadd.f32 0.0, %v3171
        %v3173 = vpop.f32.mrf.mxu0
        %v3174 = vadd.f32 0.0, %v3173
        %3175 = vmatmul.bf16.gmra.mxu0 %v3031
        %v3176 = vpop.f32.mrf.mxu0
        %v3177 = vadd.f32 0.0, %v3176
        %v3178 = vpop.f32.mrf.mxu0
        %v3179 = vadd.f32 0.0, %v3178
        %3180 = vmatmul.bf16.gmra.mxu0 %v3032
        %v3181 = vpop.f32.mrf.mxu0
        %v3182 = vadd.f32 0.0, %v3181
        %v3183 = vpop.f32.mrf.mxu0
        %v3184 = vadd.f32 0.0, %v3183
        %3185 = vdwg.mxu0
        %v3186 = vadd.f32 %v2904, %v3107
        %v3187 = vadd.f32 %v2905, %v3109
        %v3188 = vadd.f32 %v2906, %v3112
        %v3189 = vadd.f32 %v2907, %v3114
        %v3190 = vadd.f32 %v2908, %v3117
        %v3191 = vadd.f32 %v2909, %v3119
        %v3192 = vadd.f32 %v2910, %v3122
        %v3193 = vadd.f32 %v2911, %v3124
        %v3194 = vadd.f32 %v2912, %v3127
        %v3195 = vadd.f32 %v2913, %v3129
        %v3196 = vadd.f32 %v2914, %v3132
        %v3197 = vadd.f32 %v2915, %v3134
        %v3198 = vadd.f32 %v2916, %v3137
        %v3199 = vadd.f32 %v2917, %v3139
        %v3200 = vadd.f32 %v2918, %v3142
        %v3201 = vadd.f32 %v2919, %v3144
        %v3202 = vadd.f32 %v2920, %v3147
        %v3203 = vadd.f32 %v2921, %v3149
        %v3204 = vadd.f32 %v2922, %v3152
        %v3205 = vadd.f32 %v2923, %v3154
        %v3206 = vadd.f32 %v2924, %v3157
        %v3207 = vadd.f32 %v2925, %v3159
        %v3208 = vadd.f32 %v2926, %v3162
        %v3209 = vadd.f32 %v2927, %v3164
        %v3210 = vadd.f32 %v2928, %v3167
        %v3211 = vadd.f32 %v2929, %v3169
        %v3212 = vadd.f32 %v2930, %v3172
        %v3213 = vadd.f32 %v2931, %v3174
        %v3214 = vadd.f32 %v2932, %v3177
        %v3215 = vadd.f32 %v2933, %v3179
        %v3216 = vadd.f32 %v2934, %v3182
        %v3217 = vadd.f32 %v2935, %v3184
        %3218 = vst [vmem:[#allocation3] sm:$0xff] %v3186
        %3219 = vst [vmem:[#allocation3 + $0x8] sm:$0xff] %v3187
        %3220 = vst [vmem:[#allocation3 + $0x10] sm:$0xff] %v3188
        %3221 = vst [vmem:[#allocation3 + $0x18] sm:$0xff] %v3189
        %3222 = vst [vmem:[#allocation3 + $0x20] sm:$0xff] %v3190
        %3223 = vst [vmem:[#allocation3 + $0x28] sm:$0xff] %v3191
        %3224 = vst [vmem:[#allocation3 + $0x30] sm:$0xff] %v3192
        %3225 = vst [vmem:[#allocation3 + $0x38] sm:$0xff] %v3193
        %3226 = vst [vmem:[#allocation3 + $0x40] sm:$0xff] %v3194
        %3227 = vst [vmem:[#allocation3 + $0x48] sm:$0xff] %v3195
        %3228 = vst [vmem:[#allocation3 + $0x50] sm:$0xff] %v3196
        %3229 = vst [vmem:[#allocation3 + $0x58] sm:$0xff] %v3197
        %3230 = vst [vmem:[#allocation3 + $0x60] sm:$0xff] %v3198
        %3231 = vst [vmem:[#allocation3 + $0x68] sm:$0xff] %v3199
        %3232 = vst [vmem:[#allocation3 + $0x70] sm:$0xff] %v3200
        %3233 = vst [vmem:[#allocation3 + $0x78] sm:$0xff] %v3201
        %3234 = vst [vmem:[#allocation3 + $0x80] sm:$0xff] %v3202
        %3235 = vst [vmem:[#allocation3 + $0x88] sm:$0xff] %v3203
        %3236 = vst [vmem:[#allocation3 + $0x90] sm:$0xff] %v3204
        %3237 = vst [vmem:[#allocation3 + $0x98] sm:$0xff] %v3205
        %3238 = vst [vmem:[#allocation3 + $0xa0] sm:$0xff] %v3206
        %3239 = vst [vmem:[#allocation3 + $0xa8] sm:$0xff] %v3207
        %3240 = vst [vmem:[#allocation3 + $0xb0] sm:$0xff] %v3208
        %3241 = vst [vmem:[#allocation3 + $0xb8] sm:$0xff] %v3209
        %3242 = vst [vmem:[#allocation3 + $0xc0] sm:$0xff] %v3210
        %3243 = vst [vmem:[#allocation3 + $0xc8] sm:$0xff] %v3211
        %3244 = vst [vmem:[#allocation3 + $0xd0] sm:$0xff] %v3212
        %3245 = vst [vmem:[#allocation3 + $0xd8] sm:$0xff] %v3213
        %3246 = vst [vmem:[#allocation3 + $0xe0] sm:$0xff] %v3214
        %3247 = vst [vmem:[#allocation3 + $0xe8] sm:$0xff] %v3215
        %3248 = vst [vmem:[#allocation3 + $0xf0] sm:$0xff] %v3216
        %3249 = vst [vmem:[#allocation3 + $0xf8] sm:$0xff] %v3217
        %v3250 = vld [vmem:[%s2839 + $0x1] sm:$0xff]
        %v3251 = vld [vmem:[%s2839 + $0x9] sm:$0xff]
        %v3252 = vld [vmem:[%s2839 + $0x19] sm:$0xff]
        %v3253 = vld [vmem:[%s2839 + $0x21] sm:$0xff]
        %v3254 = vld [vmem:[%s2839 + $0x31] sm:$0xff]
        %v3255 = vld [vmem:[%s2839 + $0x39] sm:$0xff]
        %v3256 = vld [vmem:[%s2839 + $0x49] sm:$0xff]
        %v3257 = vld [vmem:[%s2839 + $0x51] sm:$0xff]
        %v3258 = vld [vmem:[%s2839 + $0x61] sm:$0xff]
        %v3259 = vld [vmem:[%s2839 + $0x69] sm:$0xff]
        %v3260 = vld [vmem:[%s2839 + $0x79] sm:$0xff]
        %v3261 = vld [vmem:[%s2839 + $0x81] sm:$0xff]
        %v3262 = vld [vmem:[%s2839 + $0x91] sm:$0xff]
        %v3263 = vld [vmem:[%s2839 + $0x99] sm:$0xff]
        %v3264 = vld [vmem:[%s2839 + $0xa9] sm:$0xff]
        %v3265 = vld [vmem:[%s2839 + $0xb1] sm:$0xff]
        %v3266 = vld [vmem:[%s2839 + $0xc1] sm:$0xff]
        %v3267 = vld [vmem:[%s2839 + $0xc9] sm:$0xff]
        %v3268 = vld [vmem:[%s2839 + $0xd9] sm:$0xff]
        %v3269 = vld [vmem:[%s2839 + $0xe1] sm:$0xff]
        %v3270 = vld [vmem:[%s2839 + $0xf1] sm:$0xff]
        %v3271 = vld [vmem:[%s2839 + $0xf9] sm:$0xff]
        %v3272 = vld [vmem:[%s2839 + $0x109] sm:$0xff]
        %v3273 = vld [vmem:[%s2839 + $0x111] sm:$0xff]
        %v3274 = vld [vmem:[%s2839 + $0x121] sm:$0xff]
        %v3275 = vld [vmem:[%s2839 + $0x129] sm:$0xff]
        %v3276 = vld [vmem:[%s2839 + $0x139] sm:$0xff]
        %v3277 = vld [vmem:[%s2839 + $0x141] sm:$0xff]
        %v3278 = vld [vmem:[%s2839 + $0x151] sm:$0xff]
        %v3279 = vld [vmem:[%s2839 + $0x159] sm:$0xff]
        %v3280 = vld [vmem:[%s2839 + $0x169] sm:$0xff]
        %v3281 = vld [vmem:[%s2839 + $0x171] sm:$0xff]
        %v3282 = vpack.c.bf16 %v3250, %v3250
        %v3283 = vpack.c.bf16 %v3251, %v3251
        %v3284 = vpack.c.bf16 %v3252, %v3252
        %v3285 = vpack.c.bf16 %v3253, %v3253
        %v3286 = vpack.c.bf16 %v3254, %v3254
        %v3287 = vpack.c.bf16 %v3255, %v3255
        %v3288 = vpack.c.bf16 %v3256, %v3256
        %v3289 = vpack.c.bf16 %v3257, %v3257
        %v3290 = vpack.c.bf16 %v3258, %v3258
        %v3291 = vpack.c.bf16 %v3259, %v3259
        %v3292 = vpack.c.bf16 %v3260, %v3260
        %v3293 = vpack.c.bf16 %v3261, %v3261
        %v3294 = vpack.c.bf16 %v3262, %v3262
        %v3295 = vpack.c.bf16 %v3263, %v3263
        %v3296 = vpack.c.bf16 %v3264, %v3264
        %v3297 = vpack.c.bf16 %v3265, %v3265
        %v3298 = vpack.c.bf16 %v3266, %v3266
        %v3299 = vpack.c.bf16 %v3267, %v3267
        %v3300 = vpack.c.bf16 %v3268, %v3268
        %v3301 = vpack.c.bf16 %v3269, %v3269
        %v3302 = vpack.c.bf16 %v3270, %v3270
        %v3303 = vpack.c.bf16 %v3271, %v3271
        %v3304 = vpack.c.bf16 %v3272, %v3272
        %v3305 = vpack.c.bf16 %v3273, %v3273
        %v3306 = vpack.c.bf16 %v3274, %v3274
        %v3307 = vpack.c.bf16 %v3275, %v3275
        %v3308 = vpack.c.bf16 %v3276, %v3276
        %v3309 = vpack.c.bf16 %v3277, %v3277
        %v3310 = vpack.c.bf16 %v3278, %v3278
        %v3311 = vpack.c.bf16 %v3279, %v3279
        %v3312 = vpack.c.bf16 %v3280, %v3280
        %v3313 = vpack.c.bf16 %v3281, %v3281
        %v3314 = vld [vmem:[#allocation3] sm:$0xff]
        %v3315 = vld [vmem:[#allocation3 + $0x8] sm:$0xff]
        %v3316 = vld [vmem:[#allocation3 + $0x10] sm:$0xff]
        %v3317 = vld [vmem:[#allocation3 + $0x18] sm:$0xff]
        %v3318 = vld [vmem:[#allocation3 + $0x20] sm:$0xff]
        %v3319 = vld [vmem:[#allocation3 + $0x28] sm:$0xff]
        %v3320 = vld [vmem:[#allocation3 + $0x30] sm:$0xff]
        %v3321 = vld [vmem:[#allocation3 + $0x38] sm:$0xff]
        %v3322 = vld [vmem:[#allocation3 + $0x40] sm:$0xff]
        %v3323 = vld [vmem:[#allocation3 + $0x48] sm:$0xff]
        %v3324 = vld [vmem:[#allocation3 + $0x50] sm:$0xff]
        %v3325 = vld [vmem:[#allocation3 + $0x58] sm:$0xff]
        %v3326 = vld [vmem:[#allocation3 + $0x60] sm:$0xff]
        %v3327 = vld [vmem:[#allocation3 + $0x68] sm:$0xff]
        %v3328 = vld [vmem:[#allocation3 + $0x70] sm:$0xff]
        %v3329 = vld [vmem:[#allocation3 + $0x78] sm:$0xff]
        %v3330 = vld [vmem:[#allocation3 + $0x80] sm:$0xff]
        %v3331 = vld [vmem:[#allocation3 + $0x88] sm:$0xff]
        %v3332 = vld [vmem:[#allocation3 + $0x90] sm:$0xff]
        %v3333 = vld [vmem:[#allocation3 + $0x98] sm:$0xff]
        %v3334 = vld [vmem:[#allocation3 + $0xa0] sm:$0xff]
        %v3335 = vld [vmem:[#allocation3 + $0xa8] sm:$0xff]
        %v3336 = vld [vmem:[#allocation3 + $0xb0] sm:$0xff]
        %v3337 = vld [vmem:[#allocation3 + $0xb8] sm:$0xff]
        %v3338 = vld [vmem:[#allocation3 + $0xc0] sm:$0xff]
        %v3339 = vld [vmem:[#allocation3 + $0xc8] sm:$0xff]
        %v3340 = vld [vmem:[#allocation3 + $0xd0] sm:$0xff]
        %v3341 = vld [vmem:[#allocation3 + $0xd8] sm:$0xff]
        %v3342 = vld [vmem:[#allocation3 + $0xe0] sm:$0xff]
        %v3343 = vld [vmem:[#allocation3 + $0xe8] sm:$0xff]
        %v3344 = vld [vmem:[#allocation3 + $0xf0] sm:$0xff]
        %v3345 = vld [vmem:[#allocation3 + $0xf8] sm:$0xff]
        %s3346 = scalar_lea.vmem %s1, 448
        %v3347 = vld [vmem:[%s3346] sm:$0xf]
        %v3348 = vld [vmem:[%s3346 + $0x4] sm:$0xf]
        %v3349 = vld [vmem:[%s3346 + $0x8] sm:$0xf]
        %v3350 = vld [vmem:[%s3346 + $0xc] sm:$0xf]
        %v3351 = vld [vmem:[%s3346 + $0x10] sm:$0xf]
        %v3352 = vld [vmem:[%s3346 + $0x14] sm:$0xf]
        %v3353 = vld [vmem:[%s3346 + $0x18] sm:$0xf]
        %v3354 = vld [vmem:[%s3346 + $0x1c] sm:$0xf]
        %v3355 = vld [vmem:[%s3346 + $0x20] sm:$0xf]
        %v3356 = vld [vmem:[%s3346 + $0x24] sm:$0xf]
        %v3357 = vld [vmem:[%s3346 + $0x28] sm:$0xf]
        %v3358 = vld [vmem:[%s3346 + $0x2c] sm:$0xf]
        %v3359 = vld [vmem:[%s3346 + $0x30] sm:$0xf]
        %v3360 = vld [vmem:[%s3346 + $0x34] sm:$0xf]
        %v3361 = vld [vmem:[%s3346 + $0x38] sm:$0xf]
        %v3362 = vld [vmem:[%s3346 + $0x3c] sm:$0xf]
        %v3395 = vunpack.c.l.b16 %v3282
        %v3396 = vunpack.c.l.b16 %v3283
        %v3397 = vunpack.c.l.b16 %v3284
        %v3398 = vunpack.c.l.b16 %v3285
        %v3399 = vunpack.c.l.b16 %v3286
        %v3400 = vunpack.c.l.b16 %v3287
        %v3401 = vunpack.c.l.b16 %v3288
        %v3402 = vunpack.c.l.b16 %v3289
        %v3403 = vunpack.c.l.b16 %v3290
        %v3404 = vunpack.c.l.b16 %v3291
        %v3405 = vunpack.c.l.b16 %v3292
        %v3406 = vunpack.c.l.b16 %v3293
        %v3407 = vunpack.c.l.b16 %v3294
        %v3408 = vunpack.c.l.b16 %v3295
        %v3409 = vunpack.c.l.b16 %v3296
        %v3410 = vunpack.c.l.b16 %v3297
        %v3411 = vunpack.c.l.b16 %v3298
        %v3412 = vunpack.c.l.b16 %v3299
        %v3413 = vunpack.c.l.b16 %v3300
        %v3414 = vunpack.c.l.b16 %v3301
        %v3415 = vunpack.c.l.b16 %v3302
        %v3416 = vunpack.c.l.b16 %v3303
        %v3417 = vunpack.c.l.b16 %v3304
        %v3418 = vunpack.c.l.b16 %v3305
        %v3419 = vunpack.c.l.b16 %v3306
        %v3420 = vunpack.c.l.b16 %v3307
        %v3421 = vunpack.c.l.b16 %v3308
        %v3422 = vunpack.c.l.b16 %v3309
        %v3423 = vunpack.c.l.b16 %v3310
        %v3424 = vunpack.c.l.b16 %v3311
        %v3425 = vunpack.c.l.b16 %v3312
        %v3426 = vunpack.c.l.b16 %v3313
        %v3427 = vpack.c.b16 %v3396, %v3395
        %v3428 = vpack.c.b16 %v3398, %v3397
        %v3429 = vpack.c.b16 %v3400, %v3399
        %v3430 = vpack.c.b16 %v3402, %v3401
        %v3431 = vpack.c.b16 %v3404, %v3403
        %v3432 = vpack.c.b16 %v3406, %v3405
        %v3433 = vpack.c.b16 %v3408, %v3407
        %v3434 = vpack.c.b16 %v3410, %v3409
        %v3435 = vpack.c.b16 %v3412, %v3411
        %v3436 = vpack.c.b16 %v3414, %v3413
        %v3437 = vpack.c.b16 %v3416, %v3415
        %v3438 = vpack.c.b16 %v3418, %v3417
        %v3439 = vpack.c.b16 %v3420, %v3419
        %v3440 = vpack.c.b16 %v3422, %v3421
        %v3441 = vpack.c.b16 %v3424, %v3423
        %v3442 = vpack.c.b16 %v3426, %v3425
        %v3475 = vunpack.c.l.b16 %v3347
        %v3476 = vunpack.c.l.b16 %v3348
        %v3477 = vunpack.c.l.b16 %v3349
        %v3478 = vunpack.c.l.b16 %v3350
        %v3479 = vunpack.c.l.b16 %v3351
        %v3480 = vunpack.c.l.b16 %v3352
        %v3481 = vunpack.c.l.b16 %v3353
        %v3482 = vunpack.c.l.b16 %v3354
        %v3483 = vunpack.c.l.b16 %v3355
        %v3484 = vunpack.c.l.b16 %v3356
        %v3485 = vunpack.c.l.b16 %v3357
        %v3486 = vunpack.c.l.b16 %v3358
        %v3487 = vunpack.c.l.b16 %v3359
        %v3488 = vunpack.c.l.b16 %v3360
        %v3489 = vunpack.c.l.b16 %v3361
        %v3490 = vunpack.c.l.b16 %v3362
        %v3491 = vpack.c.b16 %v3476, %v3475
        %v3492 = vpack.c.b16 %v3478, %v3477
        %v3493 = vpack.c.b16 %v3480, %v3479
        %v3494 = vpack.c.b16 %v3482, %v3481
        %v3495 = vpack.c.b16 %v3484, %v3483
        %v3496 = vpack.c.b16 %v3486, %v3485
        %v3497 = vpack.c.b16 %v3488, %v3487
        %v3498 = vpack.c.b16 %v3490, %v3489
        %3507 = vmatpush.bf16.msra.mxu0 %v3498
        %3508 = vmatpush.bf16.msra.mxu0 %v3497
        %3509 = vmatpush.bf16.msra.mxu0 %v3496
        %3510 = vmatpush.bf16.msra.mxu0 %v3495
        %3511 = vmatpush.bf16.msra.mxu0 %v3494
        %3512 = vmatpush.bf16.msra.mxu0 %v3493
        %3513 = vmatpush.bf16.msra.mxu0 %v3492
        %3514 = vmatpush.bf16.msra.mxu0 %v3491
        %3515 = vmatmul.bf16.gmra.mxu0 %v3427
        %v3516 = vpop.f32.mrf.mxu0
        %v3517 = vadd.f32 0.0, %v3516
        %v3518 = vpop.f32.mrf.mxu0
        %v3519 = vadd.f32 0.0, %v3518
        %3520 = vmatmul.bf16.gmra.mxu0 %v3428
        %v3521 = vpop.f32.mrf.mxu0
        %v3522 = vadd.f32 0.0, %v3521
        %v3523 = vpop.f32.mrf.mxu0
        %v3524 = vadd.f32 0.0, %v3523
        %3525 = vmatmul.bf16.gmra.mxu0 %v3429
        %v3526 = vpop.f32.mrf.mxu0
        %v3527 = vadd.f32 0.0, %v3526
        %v3528 = vpop.f32.mrf.mxu0
        %v3529 = vadd.f32 0.0, %v3528
        %3530 = vmatmul.bf16.gmra.mxu0 %v3430
        %v3531 = vpop.f32.mrf.mxu0
        %v3532 = vadd.f32 0.0, %v3531
        %v3533 = vpop.f32.mrf.mxu0
        %v3534 = vadd.f32 0.0, %v3533
        %3535 = vmatmul.bf16.gmra.mxu0 %v3431
        %v3536 = vpop.f32.mrf.mxu0
        %v3537 = vadd.f32 0.0, %v3536
        %v3538 = vpop.f32.mrf.mxu0
        %v3539 = vadd.f32 0.0, %v3538
        %3540 = vmatmul.bf16.gmra.mxu0 %v3432
        %v3541 = vpop.f32.mrf.mxu0
        %v3542 = vadd.f32 0.0, %v3541
        %v3543 = vpop.f32.mrf.mxu0
        %v3544 = vadd.f32 0.0, %v3543
        %3545 = vmatmul.bf16.gmra.mxu0 %v3433
        %v3546 = vpop.f32.mrf.mxu0
        %v3547 = vadd.f32 0.0, %v3546
        %v3548 = vpop.f32.mrf.mxu0
        %v3549 = vadd.f32 0.0, %v3548
        %3550 = vmatmul.bf16.gmra.mxu0 %v3434
        %v3551 = vpop.f32.mrf.mxu0
        %v3552 = vadd.f32 0.0, %v3551
        %v3553 = vpop.f32.mrf.mxu0
        %v3554 = vadd.f32 0.0, %v3553
        %3555 = vmatmul.bf16.gmra.mxu0 %v3435
        %v3556 = vpop.f32.mrf.mxu0
        %v3557 = vadd.f32 0.0, %v3556
        %v3558 = vpop.f32.mrf.mxu0
        %v3559 = vadd.f32 0.0, %v3558
        %3560 = vmatmul.bf16.gmra.mxu0 %v3436
        %v3561 = vpop.f32.mrf.mxu0
        %v3562 = vadd.f32 0.0, %v3561
        %v3563 = vpop.f32.mrf.mxu0
        %v3564 = vadd.f32 0.0, %v3563
        %3565 = vmatmul.bf16.gmra.mxu0 %v3437
        %v3566 = vpop.f32.mrf.mxu0
        %v3567 = vadd.f32 0.0, %v3566
        %v3568 = vpop.f32.mrf.mxu0
        %v3569 = vadd.f32 0.0, %v3568
        %3570 = vmatmul.bf16.gmra.mxu0 %v3438
        %v3571 = vpop.f32.mrf.mxu0
        %v3572 = vadd.f32 0.0, %v3571
        %v3573 = vpop.f32.mrf.mxu0
        %v3574 = vadd.f32 0.0, %v3573
        %3575 = vmatmul.bf16.gmra.mxu0 %v3439
        %v3576 = vpop.f32.mrf.mxu0
        %v3577 = vadd.f32 0.0, %v3576
        %v3578 = vpop.f32.mrf.mxu0
        %v3579 = vadd.f32 0.0, %v3578
        %3580 = vmatmul.bf16.gmra.mxu0 %v3440
        %v3581 = vpop.f32.mrf.mxu0
        %v3582 = vadd.f32 0.0, %v3581
        %v3583 = vpop.f32.mrf.mxu0
        %v3584 = vadd.f32 0.0, %v3583
        %3585 = vmatmul.bf16.gmra.mxu0 %v3441
        %v3586 = vpop.f32.mrf.mxu0
        %v3587 = vadd.f32 0.0, %v3586
        %v3588 = vpop.f32.mrf.mxu0
        %v3589 = vadd.f32 0.0, %v3588
        %3590 = vmatmul.bf16.gmra.mxu0 %v3442
        %v3591 = vpop.f32.mrf.mxu0
        %v3592 = vadd.f32 0.0, %v3591
        %v3593 = vpop.f32.mrf.mxu0
        %v3594 = vadd.f32 0.0, %v3593
        %3595 = vdwg.mxu0
        %v3596 = vadd.f32 %v3314, %v3517
        %v3597 = vadd.f32 %v3315, %v3519
        %v3598 = vadd.f32 %v3316, %v3522
        %v3599 = vadd.f32 %v3317, %v3524
        %v3600 = vadd.f32 %v3318, %v3527
        %v3601 = vadd.f32 %v3319, %v3529
        %v3602 = vadd.f32 %v3320, %v3532
        %v3603 = vadd.f32 %v3321, %v3534
        %v3604 = vadd.f32 %v3322, %v3537
        %v3605 = vadd.f32 %v3323, %v3539
        %v3606 = vadd.f32 %v3324, %v3542
        %v3607 = vadd.f32 %v3325, %v3544
        %v3608 = vadd.f32 %v3326, %v3547
        %v3609 = vadd.f32 %v3327, %v3549
        %v3610 = vadd.f32 %v3328, %v3552
        %v3611 = vadd.f32 %v3329, %v3554
        %v3612 = vadd.f32 %v3330, %v3557
        %v3613 = vadd.f32 %v3331, %v3559
        %v3614 = vadd.f32 %v3332, %v3562
        %v3615 = vadd.f32 %v3333, %v3564
        %v3616 = vadd.f32 %v3334, %v3567
        %v3617 = vadd.f32 %v3335, %v3569
        %v3618 = vadd.f32 %v3336, %v3572
        %v3619 = vadd.f32 %v3337, %v3574
        %v3620 = vadd.f32 %v3338, %v3577
        %v3621 = vadd.f32 %v3339, %v3579
        %v3622 = vadd.f32 %v3340, %v3582
        %v3623 = vadd.f32 %v3341, %v3584
        %v3624 = vadd.f32 %v3342, %v3587
        %v3625 = vadd.f32 %v3343, %v3589
        %v3626 = vadd.f32 %v3344, %v3592
        %v3627 = vadd.f32 %v3345, %v3594
        %3628 = vst [vmem:[#allocation3] sm:$0xff] %v3596
        %3629 = vst [vmem:[#allocation3 + $0x8] sm:$0xff] %v3597
        %3630 = vst [vmem:[#allocation3 + $0x10] sm:$0xff] %v3598
        %3631 = vst [vmem:[#allocation3 + $0x18] sm:$0xff] %v3599
        %3632 = vst [vmem:[#allocation3 + $0x20] sm:$0xff] %v3600
        %3633 = vst [vmem:[#allocation3 + $0x28] sm:$0xff] %v3601
        %3634 = vst [vmem:[#allocation3 + $0x30] sm:$0xff] %v3602
        %3635 = vst [vmem:[#allocation3 + $0x38] sm:$0xff] %v3603
        %3636 = vst [vmem:[#allocation3 + $0x40] sm:$0xff] %v3604
        %3637 = vst [vmem:[#allocation3 + $0x48] sm:$0xff] %v3605
        %3638 = vst [vmem:[#allocation3 + $0x50] sm:$0xff] %v3606
        %3639 = vst [vmem:[#allocation3 + $0x58] sm:$0xff] %v3607
        %3640 = vst [vmem:[#allocation3 + $0x60] sm:$0xff] %v3608
        %3641 = vst [vmem:[#allocation3 + $0x68] sm:$0xff] %v3609
        %3642 = vst [vmem:[#allocation3 + $0x70] sm:$0xff] %v3610
        %3643 = vst [vmem:[#allocation3 + $0x78] sm:$0xff] %v3611
        %3644 = vst [vmem:[#allocation3 + $0x80] sm:$0xff] %v3612
        %3645 = vst [vmem:[#allocation3 + $0x88] sm:$0xff] %v3613
        %3646 = vst [vmem:[#allocation3 + $0x90] sm:$0xff] %v3614
        %3647 = vst [vmem:[#allocation3 + $0x98] sm:$0xff] %v3615
        %3648 = vst [vmem:[#allocation3 + $0xa0] sm:$0xff] %v3616
        %3649 = vst [vmem:[#allocation3 + $0xa8] sm:$0xff] %v3617
        %3650 = vst [vmem:[#allocation3 + $0xb0] sm:$0xff] %v3618
        %3651 = vst [vmem:[#allocation3 + $0xb8] sm:$0xff] %v3619
        %3652 = vst [vmem:[#allocation3 + $0xc0] sm:$0xff] %v3620
        %3653 = vst [vmem:[#allocation3 + $0xc8] sm:$0xff] %v3621
        %3654 = vst [vmem:[#allocation3 + $0xd0] sm:$0xff] %v3622
        %3655 = vst [vmem:[#allocation3 + $0xd8] sm:$0xff] %v3623
        %3656 = vst [vmem:[#allocation3 + $0xe0] sm:$0xff] %v3624
        %3657 = vst [vmem:[#allocation3 + $0xe8] sm:$0xff] %v3625
        %3658 = vst [vmem:[#allocation3 + $0xf0] sm:$0xff] %v3626
        %3659 = vst [vmem:[#allocation3 + $0xf8] sm:$0xff] %v3627
        %v3660 = vld [vmem:[%s2839 + $0x2] sm:$0xff]
        %v3661 = vld [vmem:[%s2839 + $0xa] sm:$0xff]
        %v3662 = vld [vmem:[%s2839 + $0x1a] sm:$0xff]
        %v3663 = vld [vmem:[%s2839 + $0x22] sm:$0xff]
        %v3664 = vld [vmem:[%s2839 + $0x32] sm:$0xff]
        %v3665 = vld [vmem:[%s2839 + $0x3a] sm:$0xff]
        %v3666 = vld [vmem:[%s2839 + $0x4a] sm:$0xff]
        %v3667 = vld [vmem:[%s2839 + $0x52] sm:$0xff]
        %v3668 = vld [vmem:[%s2839 + $0x62] sm:$0xff]
        %v3669 = vld [vmem:[%s2839 + $0x6a] sm:$0xff]
        %v3670 = vld [vmem:[%s2839 + $0x7a] sm:$0xff]
        %v3671 = vld [vmem:[%s2839 + $0x82] sm:$0xff]
        %v3672 = vld [vmem:[%s2839 + $0x92] sm:$0xff]
        %v3673 = vld [vmem:[%s2839 + $0x9a] sm:$0xff]
        %v3674 = vld [vmem:[%s2839 + $0xaa] sm:$0xff]
        %v3675 = vld [vmem:[%s2839 + $0xb2] sm:$0xff]
        %v3676 = vld [vmem:[%s2839 + $0xc2] sm:$0xff]
        %v3677 = vld [vmem:[%s2839 + $0xca] sm:$0xff]
        %v3678 = vld [vmem:[%s2839 + $0xda] sm:$0xff]
        %v3679 = vld [vmem:[%s2839 + $0xe2] sm:$0xff]
        %v3680 = vld [vmem:[%s2839 + $0xf2] sm:$0xff]
        %v3681 = vld [vmem:[%s2839 + $0xfa] sm:$0xff]
        %v3682 = vld [vmem:[%s2839 + $0x10a] sm:$0xff]
        %v3683 = vld [vmem:[%s2839 + $0x112] sm:$0xff]
        %v3684 = vld [vmem:[%s2839 + $0x122] sm:$0xff]
        %v3685 = vld [vmem:[%s2839 + $0x12a] sm:$0xff]
        %v3686 = vld [vmem:[%s2839 + $0x13a] sm:$0xff]
        %v3687 = vld [vmem:[%s2839 + $0x142] sm:$0xff]
        %v3688 = vld [vmem:[%s2839 + $0x152] sm:$0xff]
        %v3689 = vld [vmem:[%s2839 + $0x15a] sm:$0xff]
        %v3690 = vld [vmem:[%s2839 + $0x16a] sm:$0xff]
        %v3691 = vld [vmem:[%s2839 + $0x172] sm:$0xff]
        %v3692 = vpack.c.bf16 %v3660, %v3660
        %v3693 = vpack.c.bf16 %v3661, %v3661
        %v3694 = vpack.c.bf16 %v3662, %v3662
        %v3695 = vpack.c.bf16 %v3663, %v3663
        %v3696 = vpack.c.bf16 %v3664, %v3664
        %v3697 = vpack.c.bf16 %v3665, %v3665
        %v3698 = vpack.c.bf16 %v3666, %v3666
        %v3699 = vpack.c.bf16 %v3667, %v3667
        %v3700 = vpack.c.bf16 %v3668, %v3668
        %v3701 = vpack.c.bf16 %v3669, %v3669
        %v3702 = vpack.c.bf16 %v3670, %v3670
        %v3703 = vpack.c.bf16 %v3671, %v3671
        %v3704 = vpack.c.bf16 %v3672, %v3672
        %v3705 = vpack.c.bf16 %v3673, %v3673
        %v3706 = vpack.c.bf16 %v3674, %v3674
        %v3707 = vpack.c.bf16 %v3675, %v3675
        %v3708 = vpack.c.bf16 %v3676, %v3676
        %v3709 = vpack.c.bf16 %v3677, %v3677
        %v3710 = vpack.c.bf16 %v3678, %v3678
        %v3711 = vpack.c.bf16 %v3679, %v3679
        %v3712 = vpack.c.bf16 %v3680, %v3680
        %v3713 = vpack.c.bf16 %v3681, %v3681
        %v3714 = vpack.c.bf16 %v3682, %v3682
        %v3715 = vpack.c.bf16 %v3683, %v3683
        %v3716 = vpack.c.bf16 %v3684, %v3684
        %v3717 = vpack.c.bf16 %v3685, %v3685
        %v3718 = vpack.c.bf16 %v3686, %v3686
        %v3719 = vpack.c.bf16 %v3687, %v3687
        %v3720 = vpack.c.bf16 %v3688, %v3688
        %v3721 = vpack.c.bf16 %v3689, %v3689
        %v3722 = vpack.c.bf16 %v3690, %v3690
        %v3723 = vpack.c.bf16 %v3691, %v3691
        %v3724 = vld [vmem:[#allocation3] sm:$0xff]
        %v3725 = vld [vmem:[#allocation3 + $0x8] sm:$0xff]
        %v3726 = vld [vmem:[#allocation3 + $0x10] sm:$0xff]
        %v3727 = vld [vmem:[#allocation3 + $0x18] sm:$0xff]
        %v3728 = vld [vmem:[#allocation3 + $0x20] sm:$0xff]
        %v3729 = vld [vmem:[#allocation3 + $0x28] sm:$0xff]
        %v3730 = vld [vmem:[#allocation3 + $0x30] sm:$0xff]
        %v3731 = vld [vmem:[#allocation3 + $0x38] sm:$0xff]
        %v3732 = vld [vmem:[#allocation3 + $0x40] sm:$0xff]
        %v3733 = vld [vmem:[#allocation3 + $0x48] sm:$0xff]
        %v3734 = vld [vmem:[#allocation3 + $0x50] sm:$0xff]
        %v3735 = vld [vmem:[#allocation3 + $0x58] sm:$0xff]
        %v3736 = vld [vmem:[#allocation3 + $0x60] sm:$0xff]
        %v3737 = vld [vmem:[#allocation3 + $0x68] sm:$0xff]
        %v3738 = vld [vmem:[#allocation3 + $0x70] sm:$0xff]
        %v3739 = vld [vmem:[#allocation3 + $0x78] sm:$0xff]
        %v3740 = vld [vmem:[#allocation3 + $0x80] sm:$0xff]
        %v3741 = vld [vmem:[#allocation3 + $0x88] sm:$0xff]
        %v3742 = vld [vmem:[#allocation3 + $0x90] sm:$0xff]
        %v3743 = vld [vmem:[#allocation3 + $0x98] sm:$0xff]
        %v3744 = vld [vmem:[#allocation3 + $0xa0] sm:$0xff]
        %v3745 = vld [vmem:[#allocation3 + $0xa8] sm:$0xff]
        %v3746 = vld [vmem:[#allocation3 + $0xb0] sm:$0xff]
        %v3747 = vld [vmem:[#allocation3 + $0xb8] sm:$0xff]
        %v3748 = vld [vmem:[#allocation3 + $0xc0] sm:$0xff]
        %v3749 = vld [vmem:[#allocation3 + $0xc8] sm:$0xff]
        %v3750 = vld [vmem:[#allocation3 + $0xd0] sm:$0xff]
        %v3751 = vld [vmem:[#allocation3 + $0xd8] sm:$0xff]
        %v3752 = vld [vmem:[#allocation3 + $0xe0] sm:$0xff]
        %v3753 = vld [vmem:[#allocation3 + $0xe8] sm:$0xff]
        %v3754 = vld [vmem:[#allocation3 + $0xf0] sm:$0xff]
        %v3755 = vld [vmem:[#allocation3 + $0xf8] sm:$0xff]
        %s3756 = scalar_lea.vmem %s1, 512
        %v3757 = vld [vmem:[%s3756] sm:$0xf]
        %v3758 = vld [vmem:[%s3756 + $0x4] sm:$0xf]
        %v3759 = vld [vmem:[%s3756 + $0x8] sm:$0xf]
        %v3760 = vld [vmem:[%s3756 + $0xc] sm:$0xf]
        %v3761 = vld [vmem:[%s3756 + $0x10] sm:$0xf]
        %v3762 = vld [vmem:[%s3756 + $0x14] sm:$0xf]
        %v3763 = vld [vmem:[%s3756 + $0x18] sm:$0xf]
        %v3764 = vld [vmem:[%s3756 + $0x1c] sm:$0xf]
        %v3765 = vld [vmem:[%s3756 + $0x20] sm:$0xf]
        %v3766 = vld [vmem:[%s3756 + $0x24] sm:$0xf]
        %v3767 = vld [vmem:[%s3756 + $0x28] sm:$0xf]
        %v3768 = vld [vmem:[%s3756 + $0x2c] sm:$0xf]
        %v3769 = vld [vmem:[%s3756 + $0x30] sm:$0xf]
        %v3770 = vld [vmem:[%s3756 + $0x34] sm:$0xf]
        %v3771 = vld [vmem:[%s3756 + $0x38] sm:$0xf]
        %v3772 = vld [vmem:[%s3756 + $0x3c] sm:$0xf]
        %v3805 = vunpack.c.l.b16 %v3692
        %v3806 = vunpack.c.l.b16 %v3693
        %v3807 = vunpack.c.l.b16 %v3694
        %v3808 = vunpack.c.l.b16 %v3695
        %v3809 = vunpack.c.l.b16 %v3696
        %v3810 = vunpack.c.l.b16 %v3697
        %v3811 = vunpack.c.l.b16 %v3698
        %v3812 = vunpack.c.l.b16 %v3699
        %v3813 = vunpack.c.l.b16 %v3700
        %v3814 = vunpack.c.l.b16 %v3701
        %v3815 = vunpack.c.l.b16 %v3702
        %v3816 = vunpack.c.l.b16 %v3703
        %v3817 = vunpack.c.l.b16 %v3704
        %v3818 = vunpack.c.l.b16 %v3705
        %v3819 = vunpack.c.l.b16 %v3706
        %v3820 = vunpack.c.l.b16 %v3707
        %v3821 = vunpack.c.l.b16 %v3708
        %v3822 = vunpack.c.l.b16 %v3709
        %v3823 = vunpack.c.l.b16 %v3710
        %v3824 = vunpack.c.l.b16 %v3711
        %v3825 = vunpack.c.l.b16 %v3712
        %v3826 = vunpack.c.l.b16 %v3713
        %v3827 = vunpack.c.l.b16 %v3714
        %v3828 = vunpack.c.l.b16 %v3715
        %v3829 = vunpack.c.l.b16 %v3716
        %v3830 = vunpack.c.l.b16 %v3717
        %v3831 = vunpack.c.l.b16 %v3718
        %v3832 = vunpack.c.l.b16 %v3719
        %v3833 = vunpack.c.l.b16 %v3720
        %v3834 = vunpack.c.l.b16 %v3721
        %v3835 = vunpack.c.l.b16 %v3722
        %v3836 = vunpack.c.l.b16 %v3723
        %v3837 = vpack.c.b16 %v3806, %v3805
        %v3838 = vpack.c.b16 %v3808, %v3807
        %v3839 = vpack.c.b16 %v3810, %v3809
        %v3840 = vpack.c.b16 %v3812, %v3811
        %v3841 = vpack.c.b16 %v3814, %v3813
        %v3842 = vpack.c.b16 %v3816, %v3815
        %v3843 = vpack.c.b16 %v3818, %v3817
        %v3844 = vpack.c.b16 %v3820, %v3819
        %v3845 = vpack.c.b16 %v3822, %v3821
        %v3846 = vpack.c.b16 %v3824, %v3823
        %v3847 = vpack.c.b16 %v3826, %v3825
        %v3848 = vpack.c.b16 %v3828, %v3827
        %v3849 = vpack.c.b16 %v3830, %v3829
        %v3850 = vpack.c.b16 %v3832, %v3831
        %v3851 = vpack.c.b16 %v3834, %v3833
        %v3852 = vpack.c.b16 %v3836, %v3835
        %v3885 = vunpack.c.l.b16 %v3757
        %v3886 = vunpack.c.l.b16 %v3758
        %v3887 = vunpack.c.l.b16 %v3759
        %v3888 = vunpack.c.l.b16 %v3760
        %v3889 = vunpack.c.l.b16 %v3761
        %v3890 = vunpack.c.l.b16 %v3762
        %v3891 = vunpack.c.l.b16 %v3763
        %v3892 = vunpack.c.l.b16 %v3764
        %v3893 = vunpack.c.l.b16 %v3765
        %v3894 = vunpack.c.l.b16 %v3766
        %v3895 = vunpack.c.l.b16 %v3767
        %v3896 = vunpack.c.l.b16 %v3768
        %v3897 = vunpack.c.l.b16 %v3769
        %v3898 = vunpack.c.l.b16 %v3770
        %v3899 = vunpack.c.l.b16 %v3771
        %v3900 = vunpack.c.l.b16 %v3772
        %v3901 = vpack.c.b16 %v3886, %v3885
        %v3902 = vpack.c.b16 %v3888, %v3887
        %v3903 = vpack.c.b16 %v3890, %v3889
        %v3904 = vpack.c.b16 %v3892, %v3891
        %v3905 = vpack.c.b16 %v3894, %v3893
        %v3906 = vpack.c.b16 %v3896, %v3895
        %v3907 = vpack.c.b16 %v3898, %v3897
        %v3908 = vpack.c.b16 %v3900, %v3899
        %3917 = vmatpush.bf16.msra.mxu0 %v3908
        %3918 = vmatpush.bf16.msra.mxu0 %v3907
        %3919 = vmatpush.bf16.msra.mxu0 %v3906
        %3920 = vmatpush.bf16.msra.mxu0 %v3905
        %3921 = vmatpush.bf16.msra.mxu0 %v3904
        %3922 = vmatpush.bf16.msra.mxu0 %v3903
        %3923 = vmatpush.bf16.msra.mxu0 %v3902
        %3924 = vmatpush.bf16.msra.mxu0 %v3901
        %3925 = vmatmul.bf16.gmra.mxu0 %v3837
        %v3926 = vpop.f32.mrf.mxu0
        %v3927 = vadd.f32 0.0, %v3926
        %v3928 = vpop.f32.mrf.mxu0
        %v3929 = vadd.f32 0.0, %v3928
        %3930 = vmatmul.bf16.gmra.mxu0 %v3838
        %v3931 = vpop.f32.mrf.mxu0
        %v3932 = vadd.f32 0.0, %v3931
        %v3933 = vpop.f32.mrf.mxu0
        %v3934 = vadd.f32 0.0, %v3933
        %3935 = vmatmul.bf16.gmra.mxu0 %v3839
        %v3936 = vpop.f32.mrf.mxu0
        %v3937 = vadd.f32 0.0, %v3936
        %v3938 = vpop.f32.mrf.mxu0
        %v3939 = vadd.f32 0.0, %v3938
        %3940 = vmatmul.bf16.gmra.mxu0 %v3840
        %v3941 = vpop.f32.mrf.mxu0
        %v3942 = vadd.f32 0.0, %v3941
        %v3943 = vpop.f32.mrf.mxu0
        %v3944 = vadd.f32 0.0, %v3943
        %3945 = vmatmul.bf16.gmra.mxu0 %v3841
        %v3946 = vpop.f32.mrf.mxu0
        %v3947 = vadd.f32 0.0, %v3946
        %v3948 = vpop.f32.mrf.mxu0
        %v3949 = vadd.f32 0.0, %v3948
        %3950 = vmatmul.bf16.gmra.mxu0 %v3842
        %v3951 = vpop.f32.mrf.mxu0
        %v3952 = vadd.f32 0.0, %v3951
        %v3953 = vpop.f32.mrf.mxu0
        %v3954 = vadd.f32 0.0, %v3953
        %3955 = vmatmul.bf16.gmra.mxu0 %v3843
        %v3956 = vpop.f32.mrf.mxu0
        %v3957 = vadd.f32 0.0, %v3956
        %v3958 = vpop.f32.mrf.mxu0
        %v3959 = vadd.f32 0.0, %v3958
        %3960 = vmatmul.bf16.gmra.mxu0 %v3844
        %v3961 = vpop.f32.mrf.mxu0
        %v3962 = vadd.f32 0.0, %v3961
        %v3963 = vpop.f32.mrf.mxu0
        %v3964 = vadd.f32 0.0, %v3963
        %3965 = vmatmul.bf16.gmra.mxu0 %v3845
        %v3966 = vpop.f32.mrf.mxu0
        %v3967 = vadd.f32 0.0, %v3966
        %v3968 = vpop.f32.mrf.mxu0
        %v3969 = vadd.f32 0.0, %v3968
        %3970 = vmatmul.bf16.gmra.mxu0 %v3846
        %v3971 = vpop.f32.mrf.mxu0
        %v3972 = vadd.f32 0.0, %v3971
        %v3973 = vpop.f32.mrf.mxu0
        %v3974 = vadd.f32 0.0, %v3973
        %3975 = vmatmul.bf16.gmra.mxu0 %v3847
        %v3976 = vpop.f32.mrf.mxu0
        %v3977 = vadd.f32 0.0, %v3976
        %v3978 = vpop.f32.mrf.mxu0
        %v3979 = vadd.f32 0.0, %v3978
        %3980 = vmatmul.bf16.gmra.mxu0 %v3848
        %v3981 = vpop.f32.mrf.mxu0
        %v3982 = vadd.f32 0.0, %v3981
        %v3983 = vpop.f32.mrf.mxu0
        %v3984 = vadd.f32 0.0, %v3983
        %3985 = vmatmul.bf16.gmra.mxu0 %v3849
        %v3986 = vpop.f32.mrf.mxu0
        %v3987 = vadd.f32 0.0, %v3986
        %v3988 = vpop.f32.mrf.mxu0
        %v3989 = vadd.f32 0.0, %v3988
        %3990 = vmatmul.bf16.gmra.mxu0 %v3850
        %v3991 = vpop.f32.mrf.mxu0
        %v3992 = vadd.f32 0.0, %v3991
        %v3993 = vpop.f32.mrf.mxu0
        %v3994 = vadd.f32 0.0, %v3993
        %3995 = vmatmul.bf16.gmra.mxu0 %v3851
        %v3996 = vpop.f32.mrf.mxu0
        %v3997 = vadd.f32 0.0, %v3996
        %v3998 = vpop.f32.mrf.mxu0
        %v3999 = vadd.f32 0.0, %v3998
        %4000 = vmatmul.bf16.gmra.mxu0 %v3852
        %v4001 = vpop.f32.mrf.mxu0
        %v4002 = vadd.f32 0.0, %v4001
        %v4003 = vpop.f32.mrf.mxu0
        %v4004 = vadd.f32 0.0, %v4003
        %4005 = vdwg.mxu0
        %v4006 = vadd.f32 %v3724, %v3927
        %v4007 = vadd.f32 %v3725, %v3929
        %v4008 = vadd.f32 %v3726, %v3932
        %v4009 = vadd.f32 %v3727, %v3934
        %v4010 = vadd.f32 %v3728, %v3937
        %v4011 = vadd.f32 %v3729, %v3939
        %v4012 = vadd.f32 %v3730, %v3942
        %v4013 = vadd.f32 %v3731, %v3944
        %v4014 = vadd.f32 %v3732, %v3947
        %v4015 = vadd.f32 %v3733, %v3949
        %v4016 = vadd.f32 %v3734, %v3952
        %v4017 = vadd.f32 %v3735, %v3954
        %v4018 = vadd.f32 %v3736, %v3957
        %v4019 = vadd.f32 %v3737, %v3959
        %v4020 = vadd.f32 %v3738, %v3962
        %v4021 = vadd.f32 %v3739, %v3964
        %v4022 = vadd.f32 %v3740, %v3967
        %v4023 = vadd.f32 %v3741, %v3969
        %v4024 = vadd.f32 %v3742, %v3972
        %v4025 = vadd.f32 %v3743, %v3974
        %v4026 = vadd.f32 %v3744, %v3977
        %v4027 = vadd.f32 %v3745, %v3979
        %v4028 = vadd.f32 %v3746, %v3982
        %v4029 = vadd.f32 %v3747, %v3984
        %v4030 = vadd.f32 %v3748, %v3987
        %v4031 = vadd.f32 %v3749, %v3989
        %v4032 = vadd.f32 %v3750, %v3992
        %v4033 = vadd.f32 %v3751, %v3994
        %v4034 = vadd.f32 %v3752, %v3997
        %v4035 = vadd.f32 %v3753, %v3999
        %v4036 = vadd.f32 %v3754, %v4002
        %v4037 = vadd.f32 %v3755, %v4004
        %4038 = vst [vmem:[#allocation3] sm:$0xff] %v4006
        %4039 = vst [vmem:[#allocation3 + $0x8] sm:$0xff] %v4007
        %4040 = vst [vmem:[#allocation3 + $0x10] sm:$0xff] %v4008
        %4041 = vst [vmem:[#allocation3 + $0x18] sm:$0xff] %v4009
        %4042 = vst [vmem:[#allocation3 + $0x20] sm:$0xff] %v4010
        %4043 = vst [vmem:[#allocation3 + $0x28] sm:$0xff] %v4011
        %4044 = vst [vmem:[#allocation3 + $0x30] sm:$0xff] %v4012
        %4045 = vst [vmem:[#allocation3 + $0x38] sm:$0xff] %v4013
        %4046 = vst [vmem:[#allocation3 + $0x40] sm:$0xff] %v4014
        %4047 = vst [vmem:[#allocation3 + $0x48] sm:$0xff] %v4015
        %4048 = vst [vmem:[#allocation3 + $0x50] sm:$0xff] %v4016
        %4049 = vst [vmem:[#allocation3 + $0x58] sm:$0xff] %v4017
        %4050 = vst [vmem:[#allocation3 + $0x60] sm:$0xff] %v4018
        %4051 = vst [vmem:[#allocation3 + $0x68] sm:$0xff] %v4019
        %4052 = vst [vmem:[#allocation3 + $0x70] sm:$0xff] %v4020
        %4053 = vst [vmem:[#allocation3 + $0x78] sm:$0xff] %v4021
        %4054 = vst [vmem:[#allocation3 + $0x80] sm:$0xff] %v4022
        %4055 = vst [vmem:[#allocation3 + $0x88] sm:$0xff] %v4023
        %4056 = vst [vmem:[#allocation3 + $0x90] sm:$0xff] %v4024
        %4057 = vst [vmem:[#allocation3 + $0x98] sm:$0xff] %v4025
        %4058 = vst [vmem:[#allocation3 + $0xa0] sm:$0xff] %v4026
        %4059 = vst [vmem:[#allocation3 + $0xa8] sm:$0xff] %v4027
        %4060 = vst [vmem:[#allocation3 + $0xb0] sm:$0xff] %v4028
        %4061 = vst [vmem:[#allocation3 + $0xb8] sm:$0xff] %v4029
        %4062 = vst [vmem:[#allocation3 + $0xc0] sm:$0xff] %v4030
        %4063 = vst [vmem:[#allocation3 + $0xc8] sm:$0xff] %v4031
        %4064 = vst [vmem:[#allocation3 + $0xd0] sm:$0xff] %v4032
        %4065 = vst [vmem:[#allocation3 + $0xd8] sm:$0xff] %v4033
        %4066 = vst [vmem:[#allocation3 + $0xe0] sm:$0xff] %v4034
        %4067 = vst [vmem:[#allocation3 + $0xe8] sm:$0xff] %v4035
        %4068 = vst [vmem:[#allocation3 + $0xf0] sm:$0xff] %v4036
        %4069 = vst [vmem:[#allocation3 + $0xf8] sm:$0xff] %v4037
        %v4070 = vld [vmem:[#allocation3] sm:$0xff]
        %v4071 = vld [vmem:[#allocation3 + $0x8] sm:$0xff]
        %v4072 = vld [vmem:[#allocation3 + $0x10] sm:$0xff]
        %v4073 = vld [vmem:[#allocation3 + $0x18] sm:$0xff]
        %v4074 = vld [vmem:[#allocation3 + $0x20] sm:$0xff]
        %v4075 = vld [vmem:[#allocation3 + $0x28] sm:$0xff]
        %v4076 = vld [vmem:[#allocation3 + $0x30] sm:$0xff]
        %v4077 = vld [vmem:[#allocation3 + $0x38] sm:$0xff]
        %v4078 = vld [vmem:[#allocation3 + $0x40] sm:$0xff]
        %v4079 = vld [vmem:[#allocation3 + $0x48] sm:$0xff]
        %v4080 = vld [vmem:[#allocation3 + $0x50] sm:$0xff]
        %v4081 = vld [vmem:[#allocation3 + $0x58] sm:$0xff]
        %v4082 = vld [vmem:[#allocation3 + $0x60] sm:$0xff]
        %v4083 = vld [vmem:[#allocation3 + $0x68] sm:$0xff]
        %v4084 = vld [vmem:[#allocation3 + $0x70] sm:$0xff]
        %v4085 = vld [vmem:[#allocation3 + $0x78] sm:$0xff]
        %v4086 = vld [vmem:[#allocation3 + $0x80] sm:$0xff]
        %v4087 = vld [vmem:[#allocation3 + $0x88] sm:$0xff]
        %v4088 = vld [vmem:[#allocation3 + $0x90] sm:$0xff]
        %v4089 = vld [vmem:[#allocation3 + $0x98] sm:$0xff]
        %v4090 = vld [vmem:[#allocation3 + $0xa0] sm:$0xff]
        %v4091 = vld [vmem:[#allocation3 + $0xa8] sm:$0xff]
        %v4092 = vld [vmem:[#allocation3 + $0xb0] sm:$0xff]
        %v4093 = vld [vmem:[#allocation3 + $0xb8] sm:$0xff]
        %v4094 = vld [vmem:[#allocation3 + $0xc0] sm:$0xff]
        %v4095 = vld [vmem:[#allocation3 + $0xc8] sm:$0xff]
        %v4096 = vld [vmem:[#allocation3 + $0xd0] sm:$0xff]
        %v4097 = vld [vmem:[#allocation3 + $0xd8] sm:$0xff]
        %v4098 = vld [vmem:[#allocation3 + $0xe0] sm:$0xff]
        %v4099 = vld [vmem:[#allocation3 + $0xe8] sm:$0xff]
        %v4100 = vld [vmem:[#allocation3 + $0xf0] sm:$0xff]
        %v4101 = vld [vmem:[#allocation3 + $0xf8] sm:$0xff]
        %v4102 = vld [vmem:[%s2] sm:$0x1]
        %v4104 = vperm.slane %v4102, 0
        %v4106 = vadd.f32 %v4070, %v4104
        %v4107 = vadd.f32 %v4071, %v4104
        %v4108 = vadd.f32 %v4072, %v4104
        %v4109 = vadd.f32 %v4073, %v4104
        %v4110 = vadd.f32 %v4074, %v4104
        %v4111 = vadd.f32 %v4075, %v4104
        %v4112 = vadd.f32 %v4076, %v4104
        %v4113 = vadd.f32 %v4077, %v4104
        %v4114 = vadd.f32 %v4078, %v4104
        %v4115 = vadd.f32 %v4079, %v4104
        %v4116 = vadd.f32 %v4080, %v4104
        %v4117 = vadd.f32 %v4081, %v4104
        %v4118 = vadd.f32 %v4082, %v4104
        %v4119 = vadd.f32 %v4083, %v4104
        %v4120 = vadd.f32 %v4084, %v4104
        %v4121 = vadd.f32 %v4085, %v4104
        %v4122 = vadd.f32 %v4086, %v4104
        %v4123 = vadd.f32 %v4087, %v4104
        %v4124 = vadd.f32 %v4088, %v4104
        %v4125 = vadd.f32 %v4089, %v4104
        %v4126 = vadd.f32 %v4090, %v4104
        %v4127 = vadd.f32 %v4091, %v4104
        %v4128 = vadd.f32 %v4092, %v4104
        %v4129 = vadd.f32 %v4093, %v4104
        %v4130 = vadd.f32 %v4094, %v4104
        %v4131 = vadd.f32 %v4095, %v4104
        %v4132 = vadd.f32 %v4096, %v4104
        %v4133 = vadd.f32 %v4097, %v4104
        %v4134 = vadd.f32 %v4098, %v4104
        %v4135 = vadd.f32 %v4099, %v4104
        %v4136 = vadd.f32 %v4100, %v4104
        %v4137 = vadd.f32 %v4101, %v4104
        %v4138 = vmax.f32 %v4106, 0.0
        %v4139 = vmax.f32 %v4107, 0.0
        %v4140 = vmax.f32 %v4108, 0.0
        %v4141 = vmax.f32 %v4109, 0.0
        %v4142 = vmax.f32 %v4110, 0.0
        %v4143 = vmax.f32 %v4111, 0.0
        %v4144 = vmax.f32 %v4112, 0.0
        %v4145 = vmax.f32 %v4113, 0.0
        %v4146 = vmax.f32 %v4114, 0.0
        %v4147 = vmax.f32 %v4115, 0.0
        %v4148 = vmax.f32 %v4116, 0.0
        %v4149 = vmax.f32 %v4117, 0.0
        %v4150 = vmax.f32 %v4118, 0.0
        %v4151 = vmax.f32 %v4119, 0.0
        %v4152 = vmax.f32 %v4120, 0.0
        %v4153 = vmax.f32 %v4121, 0.0
        %v4154 = vmax.f32 %v4122, 0.0
        %v4155 = vmax.f32 %v4123, 0.0
        %v4156 = vmax.f32 %v4124, 0.0
        %v4157 = vmax.f32 %v4125, 0.0
        %v4158 = vmax.f32 %v4126, 0.0
        %v4159 = vmax.f32 %v4127, 0.0
        %v4160 = vmax.f32 %v4128, 0.0
        %v4161 = vmax.f32 %v4129, 0.0
        %v4162 = vmax.f32 %v4130, 0.0
        %v4163 = vmax.f32 %v4131, 0.0
        %v4164 = vmax.f32 %v4132, 0.0
        %v4165 = vmax.f32 %v4133, 0.0
        %v4166 = vmax.f32 %v4134, 0.0
        %v4167 = vmax.f32 %v4135, 0.0
        %v4168 = vmax.f32 %v4136, 0.0
        %v4169 = vmax.f32 %v4137, 0.0
        %4170 = vst [vmem:[#allocation2] sm:$0xff] 0.0
        %4171 = vst [vmem:[#allocation2 + $0x8] sm:$0x3] 0.0
        %4172 = vst [vmem:[#allocation2 + $0x10] sm:$0xff] 0.0
        %4173 = vst [vmem:[#allocation2 + $0x18] sm:$0x3] 0.0
        %4174 = vst [vmem:[#allocation2 + $0x20] sm:$0xff] 0.0
        %4175 = vst [vmem:[#allocation2 + $0x28] sm:$0x3] 0.0
        %4176 = vst [vmem:[#allocation2 + $0x30] sm:$0xff] 0.0
        %4177 = vst [vmem:[#allocation2 + $0x38] sm:$0x3] 0.0
        %4178 = vst [vmem:[#allocation2 + $0x40] sm:$0xff] 0.0
        %4179 = vst [vmem:[#allocation2 + $0x48] sm:$0x3] 0.0
        %4180 = vst [vmem:[#allocation2 + $0x50] sm:$0xff] 0.0
        %4181 = vst [vmem:[#allocation2 + $0x58] sm:$0x3] 0.0
        %4182 = vst [vmem:[#allocation2 + $0x60] sm:$0xff] 0.0
        %4183 = vst [vmem:[#allocation2 + $0x68] sm:$0x3] 0.0
        %4184 = vst [vmem:[#allocation2 + $0x70] sm:$0xff] 0.0
        %4185 = vst [vmem:[#allocation2 + $0x78] sm:$0x3] 0.0
        %4186 = vst [vmem:[#allocation2 + $0x80] sm:$0xff] 0.0
        %4187 = vst [vmem:[#allocation2 + $0x88] sm:$0x3] 0.0
        %4188 = vst [vmem:[#allocation2 + $0x90] sm:$0xff] 0.0
        %4189 = vst [vmem:[#allocation2 + $0x98] sm:$0x3] 0.0
        %v4222 = vrot.slane %v4138, 2
        %v4223 = vrot.slane %v4138, 4
        %v4224 = vrot.slane %v4138, 6
        %v4225 = vrot.slane %v4139, 2
        %v4226 = vrot.slane %v4139, 4
        %v4227 = vrot.slane %v4139, 6
        %v4228 = vrot.slane %v4140, 2
        %v4229 = vrot.slane %v4140, 4
        %v4230 = vrot.slane %v4140, 6
        %v4231 = vrot.slane %v4141, 2
        %v4232 = vrot.slane %v4141, 4
        %v4233 = vrot.slane %v4141, 6
        %v4234 = vrot.slane %v4142, 2
        %v4235 = vrot.slane %v4142, 4
        %v4236 = vrot.slane %v4142, 6
        %v4237 = vrot.slane %v4143, 2
        %v4238 = vrot.slane %v4143, 4
        %v4239 = vrot.slane %v4143, 6
        %v4240 = vrot.slane %v4144, 2
        %v4241 = vrot.slane %v4144, 4
        %v4242 = vrot.slane %v4144, 6
        %v4243 = vrot.slane %v4145, 2
        %v4244 = vrot.slane %v4145, 4
        %v4245 = vrot.slane %v4145, 6
        %v4246 = vrot.slane %v4146, 2
        %v4247 = vrot.slane %v4146, 4
        %v4248 = vrot.slane %v4146, 6
        %v4249 = vrot.slane %v4147, 2
        %v4250 = vrot.slane %v4147, 4
        %v4251 = vrot.slane %v4147, 6
        %v4252 = vrot.slane %v4148, 2
        %v4253 = vrot.slane %v4148, 4
        %v4254 = vrot.slane %v4148, 6
        %v4255 = vrot.slane %v4149, 2
        %v4256 = vrot.slane %v4149, 4
        %v4257 = vrot.slane %v4149, 6
        %v4258 = vrot.slane %v4150, 2
        %v4259 = vrot.slane %v4150, 4
        %v4260 = vrot.slane %v4150, 6
        %v4261 = vrot.slane %v4151, 2
        %v4262 = vrot.slane %v4151, 4
        %v4263 = vrot.slane %v4151, 6
        %v4264 = vrot.slane %v4152, 2
        %v4265 = vrot.slane %v4152, 4
        %v4266 = vrot.slane %v4152, 6
        %v4267 = vrot.slane %v4153, 2
        %v4268 = vrot.slane %v4153, 4
        %v4269 = vrot.slane %v4153, 6
        %v4270 = vrot.slane %v4154, 2
        %v4271 = vrot.slane %v4154, 4
        %v4272 = vrot.slane %v4154, 6
        %v4273 = vrot.slane %v4155, 2
        %v4274 = vrot.slane %v4155, 4
        %v4275 = vrot.slane %v4155, 6
        %v4276 = vrot.slane %v4156, 2
        %v4277 = vrot.slane %v4156, 4
        %v4278 = vrot.slane %v4156, 6
        %v4279 = vrot.slane %v4157, 2
        %v4280 = vrot.slane %v4157, 4
        %v4281 = vrot.slane %v4157, 6
        %v4282 = vrot.slane %v4158, 2
        %v4283 = vrot.slane %v4158, 4
        %v4284 = vrot.slane %v4158, 6
        %v4285 = vrot.slane %v4159, 2
        %v4286 = vrot.slane %v4159, 4
        %v4287 = vrot.slane %v4159, 6
        %v4288 = vrot.slane %v4160, 2
        %v4289 = vrot.slane %v4160, 4
        %v4290 = vrot.slane %v4160, 6
        %v4291 = vrot.slane %v4161, 2
        %v4292 = vrot.slane %v4161, 4
        %v4293 = vrot.slane %v4161, 6
        %v4294 = vrot.slane %v4162, 2
        %v4295 = vrot.slane %v4162, 4
        %v4296 = vrot.slane %v4162, 6
        %v4297 = vrot.slane %v4163, 2
        %v4298 = vrot.slane %v4163, 4
        %v4299 = vrot.slane %v4163, 6
        %v4300 = vrot.slane %v4164, 2
        %v4301 = vrot.slane %v4164, 4
        %v4302 = vrot.slane %v4164, 6
        %v4303 = vrot.slane %v4165, 2
        %v4304 = vrot.slane %v4165, 4
        %v4305 = vrot.slane %v4165, 6
        %v4306 = vrot.slane %v4166, 2
        %v4307 = vrot.slane %v4166, 4
        %v4308 = vrot.slane %v4166, 6
        %v4309 = vrot.slane %v4167, 2
        %v4310 = vrot.slane %v4167, 4
        %v4311 = vrot.slane %v4167, 6
        %v4312 = vrot.slane %v4168, 2
        %v4313 = vrot.slane %v4168, 4
        %v4314 = vrot.slane %v4168, 6
        %v4315 = vrot.slane %v4169, 2
        %v4316 = vrot.slane %v4169, 4
        %v4317 = vrot.slane %v4169, 6
        %vm4414 = vcmask 1041408
        %v4415 = vsel %vm4414, %v4138, -inf
        %v4416 = vrot.slane %v4415, 4
        %v4417 = vmax.f32 %v4415, %v4416
        %v4418 = vrot.slane %v4417, 2
        %v4419 = vmax.f32 %v4417, %v4418
        %v4420 = vrot.slane %v4419, 1
        %v4421 = vmax.f32 %v4419, %v4420
        %v4422 = vsel %vm4414, %v4222, -inf
        %v4423 = vrot.slane %v4422, 4
        %v4424 = vmax.f32 %v4422, %v4423
        %v4425 = vrot.slane %v4424, 2
        %v4426 = vmax.f32 %v4424, %v4425
        %v4427 = vrot.slane %v4426, 1
        %v4428 = vmax.f32 %v4426, %v4427
        %v4429 = vsel %vm4414, %v4223, -inf
        %v4430 = vrot.slane %v4429, 4
        %v4431 = vmax.f32 %v4429, %v4430
        %v4432 = vrot.slane %v4431, 2
        %v4433 = vmax.f32 %v4431, %v4432
        %v4434 = vrot.slane %v4433, 1
        %v4435 = vmax.f32 %v4433, %v4434
        %v4436 = vsel %vm4414, %v4224, -inf
        %v4437 = vrot.slane %v4436, 4
        %v4438 = vmax.f32 %v4436, %v4437
        %v4439 = vrot.slane %v4438, 2
        %v4440 = vmax.f32 %v4438, %v4439
        %v4441 = vrot.slane %v4440, 1
        %v4442 = vmax.f32 %v4440, %v4441
        %v4443 = vsel %vm4414, %v4139, -inf
        %v4444 = vrot.slane %v4443, 4
        %v4445 = vmax.f32 %v4443, %v4444
        %v4446 = vrot.slane %v4445, 2
        %v4447 = vmax.f32 %v4445, %v4446
        %v4448 = vrot.slane %v4447, 1
        %v4449 = vmax.f32 %v4447, %v4448
        %v4450 = vsel %vm4414, %v4225, -inf
        %v4451 = vrot.slane %v4450, 4
        %v4452 = vmax.f32 %v4450, %v4451
        %v4453 = vrot.slane %v4452, 2
        %v4454 = vmax.f32 %v4452, %v4453
        %v4455 = vrot.slane %v4454, 1
        %v4456 = vmax.f32 %v4454, %v4455
        %v4457 = vsel %vm4414, %v4226, -inf
        %v4458 = vrot.slane %v4457, 4
        %v4459 = vmax.f32 %v4457, %v4458
        %v4460 = vrot.slane %v4459, 2
        %v4461 = vmax.f32 %v4459, %v4460
        %v4462 = vrot.slane %v4461, 1
        %v4463 = vmax.f32 %v4461, %v4462
        %v4464 = vsel %vm4414, %v4227, -inf
        %v4465 = vrot.slane %v4464, 4
        %v4466 = vmax.f32 %v4464, %v4465
        %v4467 = vrot.slane %v4466, 2
        %v4468 = vmax.f32 %v4466, %v4467
        %v4469 = vrot.slane %v4468, 1
        %v4470 = vmax.f32 %v4468, %v4469
        %v4471 = vsel %vm4414, %v4140, -inf
        %v4472 = vrot.slane %v4471, 4
        %v4473 = vmax.f32 %v4471, %v4472
        %v4474 = vrot.slane %v4473, 2
        %v4475 = vmax.f32 %v4473, %v4474
        %v4476 = vrot.slane %v4475, 1
        %v4477 = vmax.f32 %v4475, %v4476
        %v4478 = vsel %vm4414, %v4228, -inf
        %v4479 = vrot.slane %v4478, 4
        %v4480 = vmax.f32 %v4478, %v4479
        %v4481 = vrot.slane %v4480, 2
        %v4482 = vmax.f32 %v4480, %v4481
        %v4483 = vrot.slane %v4482, 1
        %v4484 = vmax.f32 %v4482, %v4483
        %v4485 = vsel %vm4414, %v4229, -inf
        %v4486 = vrot.slane %v4485, 4
        %v4487 = vmax.f32 %v4485, %v4486
        %v4488 = vrot.slane %v4487, 2
        %v4489 = vmax.f32 %v4487, %v4488
        %v4490 = vrot.slane %v4489, 1
        %v4491 = vmax.f32 %v4489, %v4490
        %v4492 = vsel %vm4414, %v4230, -inf
        %v4493 = vrot.slane %v4492, 4
        %v4494 = vmax.f32 %v4492, %v4493
        %v4495 = vrot.slane %v4494, 2
        %v4496 = vmax.f32 %v4494, %v4495
        %v4497 = vrot.slane %v4496, 1
        %v4498 = vmax.f32 %v4496, %v4497
        %v4499 = vsel %vm4414, %v4141, -inf
        %v4500 = vrot.slane %v4499, 4
        %v4501 = vmax.f32 %v4499, %v4500
        %v4502 = vrot.slane %v4501, 2
        %v4503 = vmax.f32 %v4501, %v4502
        %v4504 = vrot.slane %v4503, 1
        %v4505 = vmax.f32 %v4503, %v4504
        %v4506 = vsel %vm4414, %v4231, -inf
        %v4507 = vrot.slane %v4506, 4
        %v4508 = vmax.f32 %v4506, %v4507
        %v4509 = vrot.slane %v4508, 2
        %v4510 = vmax.f32 %v4508, %v4509
        %v4511 = vrot.slane %v4510, 1
        %v4512 = vmax.f32 %v4510, %v4511
        %v4513 = vsel %vm4414, %v4232, -inf
        %v4514 = vrot.slane %v4513, 4
        %v4515 = vmax.f32 %v4513, %v4514
        %v4516 = vrot.slane %v4515, 2
        %v4517 = vmax.f32 %v4515, %v4516
        %v4518 = vrot.slane %v4517, 1
        %v4519 = vmax.f32 %v4517, %v4518
        %v4520 = vsel %vm4414, %v4233, -inf
        %v4521 = vrot.slane %v4520, 4
        %v4522 = vmax.f32 %v4520, %v4521
        %v4523 = vrot.slane %v4522, 2
        %v4524 = vmax.f32 %v4522, %v4523
        %v4525 = vrot.slane %v4524, 1
        %v4526 = vmax.f32 %v4524, %v4525
        %v4527 = vsel %vm4414, %v4142, -inf
        %v4528 = vrot.slane %v4527, 4
        %v4529 = vmax.f32 %v4527, %v4528
        %v4530 = vrot.slane %v4529, 2
        %v4531 = vmax.f32 %v4529, %v4530
        %v4532 = vrot.slane %v4531, 1
        %v4533 = vmax.f32 %v4531, %v4532
        %v4534 = vsel %vm4414, %v4234, -inf
        %v4535 = vrot.slane %v4534, 4
        %v4536 = vmax.f32 %v4534, %v4535
        %v4537 = vrot.slane %v4536, 2
        %v4538 = vmax.f32 %v4536, %v4537
        %v4539 = vrot.slane %v4538, 1
        %v4540 = vmax.f32 %v4538, %v4539
        %v4541 = vsel %vm4414, %v4235, -inf
        %v4542 = vrot.slane %v4541, 4
        %v4543 = vmax.f32 %v4541, %v4542
        %v4544 = vrot.slane %v4543, 2
        %v4545 = vmax.f32 %v4543, %v4544
        %v4546 = vrot.slane %v4545, 1
        %v4547 = vmax.f32 %v4545, %v4546
        %v4548 = vsel %vm4414, %v4236, -inf
        %v4549 = vrot.slane %v4548, 4
        %v4550 = vmax.f32 %v4548, %v4549
        %v4551 = vrot.slane %v4550, 2
        %v4552 = vmax.f32 %v4550, %v4551
        %v4553 = vrot.slane %v4552, 1
        %v4554 = vmax.f32 %v4552, %v4553
        %v4555 = vsel %vm4414, %v4143, -inf
        %v4556 = vrot.slane %v4555, 4
        %v4557 = vmax.f32 %v4555, %v4556
        %v4558 = vrot.slane %v4557, 2
        %v4559 = vmax.f32 %v4557, %v4558
        %v4560 = vrot.slane %v4559, 1
        %v4561 = vmax.f32 %v4559, %v4560
        %v4562 = vsel %vm4414, %v4237, -inf
        %v4563 = vrot.slane %v4562, 4
        %v4564 = vmax.f32 %v4562, %v4563
        %v4565 = vrot.slane %v4564, 2
        %v4566 = vmax.f32 %v4564, %v4565
        %v4567 = vrot.slane %v4566, 1
        %v4568 = vmax.f32 %v4566, %v4567
        %v4569 = vsel %vm4414, %v4238, -inf
        %v4570 = vrot.slane %v4569, 4
        %v4571 = vmax.f32 %v4569, %v4570
        %v4572 = vrot.slane %v4571, 2
        %v4573 = vmax.f32 %v4571, %v4572
        %v4574 = vrot.slane %v4573, 1
        %v4575 = vmax.f32 %v4573, %v4574
        %v4576 = vsel %vm4414, %v4239, -inf
        %v4577 = vrot.slane %v4576, 4
        %v4578 = vmax.f32 %v4576, %v4577
        %v4579 = vrot.slane %v4578, 2
        %v4580 = vmax.f32 %v4578, %v4579
        %v4581 = vrot.slane %v4580, 1
        %v4582 = vmax.f32 %v4580, %v4581
        %v4583 = vsel %vm4414, %v4144, -inf
        %v4584 = vrot.slane %v4583, 4
        %v4585 = vmax.f32 %v4583, %v4584
        %v4586 = vrot.slane %v4585, 2
        %v4587 = vmax.f32 %v4585, %v4586
        %v4588 = vrot.slane %v4587, 1
        %v4589 = vmax.f32 %v4587, %v4588
        %v4590 = vsel %vm4414, %v4240, -inf
        %v4591 = vrot.slane %v4590, 4
        %v4592 = vmax.f32 %v4590, %v4591
        %v4593 = vrot.slane %v4592, 2
        %v4594 = vmax.f32 %v4592, %v4593
        %v4595 = vrot.slane %v4594, 1
        %v4596 = vmax.f32 %v4594, %v4595
        %v4597 = vsel %vm4414, %v4241, -inf
        %v4598 = vrot.slane %v4597, 4
        %v4599 = vmax.f32 %v4597, %v4598
        %v4600 = vrot.slane %v4599, 2
        %v4601 = vmax.f32 %v4599, %v4600
        %v4602 = vrot.slane %v4601, 1
        %v4603 = vmax.f32 %v4601, %v4602
        %v4604 = vsel %vm4414, %v4242, -inf
        %v4605 = vrot.slane %v4604, 4
        %v4606 = vmax.f32 %v4604, %v4605
        %v4607 = vrot.slane %v4606, 2
        %v4608 = vmax.f32 %v4606, %v4607
        %v4609 = vrot.slane %v4608, 1
        %v4610 = vmax.f32 %v4608, %v4609
        %v4611 = vsel %vm4414, %v4145, -inf
        %v4612 = vrot.slane %v4611, 4
        %v4613 = vmax.f32 %v4611, %v4612
        %v4614 = vrot.slane %v4613, 2
        %v4615 = vmax.f32 %v4613, %v4614
        %v4616 = vrot.slane %v4615, 1
        %v4617 = vmax.f32 %v4615, %v4616
        %v4618 = vsel %vm4414, %v4243, -inf
        %v4619 = vrot.slane %v4618, 4
        %v4620 = vmax.f32 %v4618, %v4619
        %v4621 = vrot.slane %v4620, 2
        %v4622 = vmax.f32 %v4620, %v4621
        %v4623 = vrot.slane %v4622, 1
        %v4624 = vmax.f32 %v4622, %v4623
        %v4625 = vsel %vm4414, %v4244, -inf
        %v4626 = vrot.slane %v4625, 4
        %v4627 = vmax.f32 %v4625, %v4626
        %v4628 = vrot.slane %v4627, 2
        %v4629 = vmax.f32 %v4627, %v4628
        %v4630 = vrot.slane %v4629, 1
        %v4631 = vmax.f32 %v4629, %v4630
        %v4632 = vsel %vm4414, %v4245, -inf
        %v4633 = vrot.slane %v4632, 4
        %v4634 = vmax.f32 %v4632, %v4633
        %v4635 = vrot.slane %v4634, 2
        %v4636 = vmax.f32 %v4634, %v4635
        %v4637 = vrot.slane %v4636, 1
        %v4638 = vmax.f32 %v4636, %v4637
        %v4639 = vsel %vm4414, %v4146, -inf
        %v4640 = vrot.slane %v4639, 4
        %v4641 = vmax.f32 %v4639, %v4640
        %v4642 = vrot.slane %v4641, 2
        %v4643 = vmax.f32 %v4641, %v4642
        %v4644 = vrot.slane %v4643, 1
        %v4645 = vmax.f32 %v4643, %v4644
        %v4646 = vsel %vm4414, %v4246, -inf
        %v4647 = vrot.slane %v4646, 4
        %v4648 = vmax.f32 %v4646, %v4647
        %v4649 = vrot.slane %v4648, 2
        %v4650 = vmax.f32 %v4648, %v4649
        %v4651 = vrot.slane %v4650, 1
        %v4652 = vmax.f32 %v4650, %v4651
        %v4653 = vsel %vm4414, %v4247, -inf
        %v4654 = vrot.slane %v4653, 4
        %v4655 = vmax.f32 %v4653, %v4654
        %v4656 = vrot.slane %v4655, 2
        %v4657 = vmax.f32 %v4655, %v4656
        %v4658 = vrot.slane %v4657, 1
        %v4659 = vmax.f32 %v4657, %v4658
        %v4660 = vsel %vm4414, %v4248, -inf
        %v4661 = vrot.slane %v4660, 4
        %v4662 = vmax.f32 %v4660, %v4661
        %v4663 = vrot.slane %v4662, 2
        %v4664 = vmax.f32 %v4662, %v4663
        %v4665 = vrot.slane %v4664, 1
        %v4666 = vmax.f32 %v4664, %v4665
        %v4667 = vsel %vm4414, %v4147, -inf
        %v4668 = vrot.slane %v4667, 4
        %v4669 = vmax.f32 %v4667, %v4668
        %v4670 = vrot.slane %v4669, 2
        %v4671 = vmax.f32 %v4669, %v4670
        %v4672 = vrot.slane %v4671, 1
        %v4673 = vmax.f32 %v4671, %v4672
        %v4674 = vsel %vm4414, %v4249, -inf
        %v4675 = vrot.slane %v4674, 4
        %v4676 = vmax.f32 %v4674, %v4675
        %v4677 = vrot.slane %v4676, 2
        %v4678 = vmax.f32 %v4676, %v4677
        %v4679 = vrot.slane %v4678, 1
        %v4680 = vmax.f32 %v4678, %v4679
        %v4681 = vsel %vm4414, %v4250, -inf
        %v4682 = vrot.slane %v4681, 4
        %v4683 = vmax.f32 %v4681, %v4682
        %v4684 = vrot.slane %v4683, 2
        %v4685 = vmax.f32 %v4683, %v4684
        %v4686 = vrot.slane %v4685, 1
        %v4687 = vmax.f32 %v4685, %v4686
        %v4688 = vsel %vm4414, %v4251, -inf
        %v4689 = vrot.slane %v4688, 4
        %v4690 = vmax.f32 %v4688, %v4689
        %v4691 = vrot.slane %v4690, 2
        %v4692 = vmax.f32 %v4690, %v4691
        %v4693 = vrot.slane %v4692, 1
        %v4694 = vmax.f32 %v4692, %v4693
        %v4695 = vsel %vm4414, %v4148, -inf
        %v4696 = vrot.slane %v4695, 4
        %v4697 = vmax.f32 %v4695, %v4696
        %v4698 = vrot.slane %v4697, 2
        %v4699 = vmax.f32 %v4697, %v4698
        %v4700 = vrot.slane %v4699, 1
        %v4701 = vmax.f32 %v4699, %v4700
        %v4702 = vsel %vm4414, %v4252, -inf
        %v4703 = vrot.slane %v4702, 4
        %v4704 = vmax.f32 %v4702, %v4703
        %v4705 = vrot.slane %v4704, 2
        %v4706 = vmax.f32 %v4704, %v4705
        %v4707 = vrot.slane %v4706, 1
        %v4708 = vmax.f32 %v4706, %v4707
        %v4709 = vsel %vm4414, %v4253, -inf
        %v4710 = vrot.slane %v4709, 4
        %v4711 = vmax.f32 %v4709, %v4710
        %v4712 = vrot.slane %v4711, 2
        %v4713 = vmax.f32 %v4711, %v4712
        %v4714 = vrot.slane %v4713, 1
        %v4715 = vmax.f32 %v4713, %v4714
        %v4716 = vsel %vm4414, %v4254, -inf
        %v4717 = vrot.slane %v4716, 4
        %v4718 = vmax.f32 %v4716, %v4717
        %v4719 = vrot.slane %v4718, 2
        %v4720 = vmax.f32 %v4718, %v4719
        %v4721 = vrot.slane %v4720, 1
        %v4722 = vmax.f32 %v4720, %v4721
        %v4723 = vsel %vm4414, %v4149, -inf
        %v4724 = vrot.slane %v4723, 4
        %v4725 = vmax.f32 %v4723, %v4724
        %v4726 = vrot.slane %v4725, 2
        %v4727 = vmax.f32 %v4725, %v4726
        %v4728 = vrot.slane %v4727, 1
        %v4729 = vmax.f32 %v4727, %v4728
        %v4730 = vsel %vm4414, %v4255, -inf
        %v4731 = vrot.slane %v4730, 4
        %v4732 = vmax.f32 %v4730, %v4731
        %v4733 = vrot.slane %v4732, 2
        %v4734 = vmax.f32 %v4732, %v4733
        %v4735 = vrot.slane %v4734, 1
        %v4736 = vmax.f32 %v4734, %v4735
        %v4737 = vsel %vm4414, %v4256, -inf
        %v4738 = vrot.slane %v4737, 4
        %v4739 = vmax.f32 %v4737, %v4738
        %v4740 = vrot.slane %v4739, 2
        %v4741 = vmax.f32 %v4739, %v4740
        %v4742 = vrot.slane %v4741, 1
        %v4743 = vmax.f32 %v4741, %v4742
        %v4744 = vsel %vm4414, %v4257, -inf
        %v4745 = vrot.slane %v4744, 4
        %v4746 = vmax.f32 %v4744, %v4745
        %v4747 = vrot.slane %v4746, 2
        %v4748 = vmax.f32 %v4746, %v4747
        %v4749 = vrot.slane %v4748, 1
        %v4750 = vmax.f32 %v4748, %v4749
        %v4751 = vsel %vm4414, %v4150, -inf
        %v4752 = vrot.slane %v4751, 4
        %v4753 = vmax.f32 %v4751, %v4752
        %v4754 = vrot.slane %v4753, 2
        %v4755 = vmax.f32 %v4753, %v4754
        %v4756 = vrot.slane %v4755, 1
        %v4757 = vmax.f32 %v4755, %v4756
        %v4758 = vsel %vm4414, %v4258, -inf
        %v4759 = vrot.slane %v4758, 4
        %v4760 = vmax.f32 %v4758, %v4759
        %v4761 = vrot.slane %v4760, 2
        %v4762 = vmax.f32 %v4760, %v4761
        %v4763 = vrot.slane %v4762, 1
        %v4764 = vmax.f32 %v4762, %v4763
        %v4765 = vsel %vm4414, %v4259, -inf
        %v4766 = vrot.slane %v4765, 4
        %v4767 = vmax.f32 %v4765, %v4766
        %v4768 = vrot.slane %v4767, 2
        %v4769 = vmax.f32 %v4767, %v4768
        %v4770 = vrot.slane %v4769, 1
        %v4771 = vmax.f32 %v4769, %v4770
        %v4772 = vsel %vm4414, %v4260, -inf
        %v4773 = vrot.slane %v4772, 4
        %v4774 = vmax.f32 %v4772, %v4773
        %v4775 = vrot.slane %v4774, 2
        %v4776 = vmax.f32 %v4774, %v4775
        %v4777 = vrot.slane %v4776, 1
        %v4778 = vmax.f32 %v4776, %v4777
        %v4779 = vsel %vm4414, %v4151, -inf
        %v4780 = vrot.slane %v4779, 4
        %v4781 = vmax.f32 %v4779, %v4780
        %v4782 = vrot.slane %v4781, 2
        %v4783 = vmax.f32 %v4781, %v4782
        %v4784 = vrot.slane %v4783, 1
        %v4785 = vmax.f32 %v4783, %v4784
        %v4786 = vsel %vm4414, %v4261, -inf
        %v4787 = vrot.slane %v4786, 4
        %v4788 = vmax.f32 %v4786, %v4787
        %v4789 = vrot.slane %v4788, 2
        %v4790 = vmax.f32 %v4788, %v4789
        %v4791 = vrot.slane %v4790, 1
        %v4792 = vmax.f32 %v4790, %v4791
        %v4793 = vsel %vm4414, %v4262, -inf
        %v4794 = vrot.slane %v4793, 4
        %v4795 = vmax.f32 %v4793, %v4794
        %v4796 = vrot.slane %v4795, 2
        %v4797 = vmax.f32 %v4795, %v4796
        %v4798 = vrot.slane %v4797, 1
        %v4799 = vmax.f32 %v4797, %v4798
        %v4800 = vsel %vm4414, %v4263, -inf
        %v4801 = vrot.slane %v4800, 4
        %v4802 = vmax.f32 %v4800, %v4801
        %v4803 = vrot.slane %v4802, 2
        %v4804 = vmax.f32 %v4802, %v4803
        %v4805 = vrot.slane %v4804, 1
        %v4806 = vmax.f32 %v4804, %v4805
        %v4807 = vsel %vm4414, %v4152, -inf
        %v4808 = vrot.slane %v4807, 4
        %v4809 = vmax.f32 %v4807, %v4808
        %v4810 = vrot.slane %v4809, 2
        %v4811 = vmax.f32 %v4809, %v4810
        %v4812 = vrot.slane %v4811, 1
        %v4813 = vmax.f32 %v4811, %v4812
        %v4814 = vsel %vm4414, %v4264, -inf
        %v4815 = vrot.slane %v4814, 4
        %v4816 = vmax.f32 %v4814, %v4815
        %v4817 = vrot.slane %v4816, 2
        %v4818 = vmax.f32 %v4816, %v4817
        %v4819 = vrot.slane %v4818, 1
        %v4820 = vmax.f32 %v4818, %v4819
        %v4821 = vsel %vm4414, %v4265, -inf
        %v4822 = vrot.slane %v4821, 4
        %v4823 = vmax.f32 %v4821, %v4822
        %v4824 = vrot.slane %v4823, 2
        %v4825 = vmax.f32 %v4823, %v4824
        %v4826 = vrot.slane %v4825, 1
        %v4827 = vmax.f32 %v4825, %v4826
        %v4828 = vsel %vm4414, %v4266, -inf
        %v4829 = vrot.slane %v4828, 4
        %v4830 = vmax.f32 %v4828, %v4829
        %v4831 = vrot.slane %v4830, 2
        %v4832 = vmax.f32 %v4830, %v4831
        %v4833 = vrot.slane %v4832, 1
        %v4834 = vmax.f32 %v4832, %v4833
        %v4835 = vsel %vm4414, %v4153, -inf
        %v4836 = vrot.slane %v4835, 4
        %v4837 = vmax.f32 %v4835, %v4836
        %v4838 = vrot.slane %v4837, 2
        %v4839 = vmax.f32 %v4837, %v4838
        %v4840 = vrot.slane %v4839, 1
        %v4841 = vmax.f32 %v4839, %v4840
        %v4842 = vsel %vm4414, %v4267, -inf
        %v4843 = vrot.slane %v4842, 4
        %v4844 = vmax.f32 %v4842, %v4843
        %v4845 = vrot.slane %v4844, 2
        %v4846 = vmax.f32 %v4844, %v4845
        %v4847 = vrot.slane %v4846, 1
        %v4848 = vmax.f32 %v4846, %v4847
        %v4849 = vsel %vm4414, %v4268, -inf
        %v4850 = vrot.slane %v4849, 4
        %v4851 = vmax.f32 %v4849, %v4850
        %v4852 = vrot.slane %v4851, 2
        %v4853 = vmax.f32 %v4851, %v4852
        %v4854 = vrot.slane %v4853, 1
        %v4855 = vmax.f32 %v4853, %v4854
        %v4856 = vsel %vm4414, %v4269, -inf
        %v4857 = vrot.slane %v4856, 4
        %v4858 = vmax.f32 %v4856, %v4857
        %v4859 = vrot.slane %v4858, 2
        %v4860 = vmax.f32 %v4858, %v4859
        %v4861 = vrot.slane %v4860, 1
        %v4862 = vmax.f32 %v4860, %v4861
        %v4863 = vsel %vm4414, %v4154, -inf
        %v4864 = vrot.slane %v4863, 4
        %v4865 = vmax.f32 %v4863, %v4864
        %v4866 = vrot.slane %v4865, 2
        %v4867 = vmax.f32 %v4865, %v4866
        %v4868 = vrot.slane %v4867, 1
        %v4869 = vmax.f32 %v4867, %v4868
        %v4870 = vsel %vm4414, %v4270, -inf
        %v4871 = vrot.slane %v4870, 4
        %v4872 = vmax.f32 %v4870, %v4871
        %v4873 = vrot.slane %v4872, 2
        %v4874 = vmax.f32 %v4872, %v4873
        %v4875 = vrot.slane %v4874, 1
        %v4876 = vmax.f32 %v4874, %v4875
        %v4877 = vsel %vm4414, %v4271, -inf
        %v4878 = vrot.slane %v4877, 4
        %v4879 = vmax.f32 %v4877, %v4878
        %v4880 = vrot.slane %v4879, 2
        %v4881 = vmax.f32 %v4879, %v4880
        %v4882 = vrot.slane %v4881, 1
        %v4883 = vmax.f32 %v4881, %v4882
        %v4884 = vsel %vm4414, %v4272, -inf
        %v4885 = vrot.slane %v4884, 4
        %v4886 = vmax.f32 %v4884, %v4885
        %v4887 = vrot.slane %v4886, 2
        %v4888 = vmax.f32 %v4886, %v4887
        %v4889 = vrot.slane %v4888, 1
        %v4890 = vmax.f32 %v4888, %v4889
        %v4891 = vsel %vm4414, %v4155, -inf
        %v4892 = vrot.slane %v4891, 4
        %v4893 = vmax.f32 %v4891, %v4892
        %v4894 = vrot.slane %v4893, 2
        %v4895 = vmax.f32 %v4893, %v4894
        %v4896 = vrot.slane %v4895, 1
        %v4897 = vmax.f32 %v4895, %v4896
        %v4898 = vsel %vm4414, %v4273, -inf
        %v4899 = vrot.slane %v4898, 4
        %v4900 = vmax.f32 %v4898, %v4899
        %v4901 = vrot.slane %v4900, 2
        %v4902 = vmax.f32 %v4900, %v4901
        %v4903 = vrot.slane %v4902, 1
        %v4904 = vmax.f32 %v4902, %v4903
        %v4905 = vsel %vm4414, %v4274, -inf
        %v4906 = vrot.slane %v4905, 4
        %v4907 = vmax.f32 %v4905, %v4906
        %v4908 = vrot.slane %v4907, 2
        %v4909 = vmax.f32 %v4907, %v4908
        %v4910 = vrot.slane %v4909, 1
        %v4911 = vmax.f32 %v4909, %v4910
        %v4912 = vsel %vm4414, %v4275, -inf
        %v4913 = vrot.slane %v4912, 4
        %v4914 = vmax.f32 %v4912, %v4913
        %v4915 = vrot.slane %v4914, 2
        %v4916 = vmax.f32 %v4914, %v4915
        %v4917 = vrot.slane %v4916, 1
        %v4918 = vmax.f32 %v4916, %v4917
        %v4919 = vsel %vm4414, %v4156, -inf
        %v4920 = vrot.slane %v4919, 4
        %v4921 = vmax.f32 %v4919, %v4920
        %v4922 = vrot.slane %v4921, 2
        %v4923 = vmax.f32 %v4921, %v4922
        %v4924 = vrot.slane %v4923, 1
        %v4925 = vmax.f32 %v4923, %v4924
        %v4926 = vsel %vm4414, %v4276, -inf
        %v4927 = vrot.slane %v4926, 4
        %v4928 = vmax.f32 %v4926, %v4927
        %v4929 = vrot.slane %v4928, 2
        %v4930 = vmax.f32 %v4928, %v4929
        %v4931 = vrot.slane %v4930, 1
        %v4932 = vmax.f32 %v4930, %v4931
        %v4933 = vsel %vm4414, %v4277, -inf
        %v4934 = vrot.slane %v4933, 4
        %v4935 = vmax.f32 %v4933, %v4934
        %v4936 = vrot.slane %v4935, 2
        %v4937 = vmax.f32 %v4935, %v4936
        %v4938 = vrot.slane %v4937, 1
        %v4939 = vmax.f32 %v4937, %v4938
        %v4940 = vsel %vm4414, %v4278, -inf
        %v4941 = vrot.slane %v4940, 4
        %v4942 = vmax.f32 %v4940, %v4941
        %v4943 = vrot.slane %v4942, 2
        %v4944 = vmax.f32 %v4942, %v4943
        %v4945 = vrot.slane %v4944, 1
        %v4946 = vmax.f32 %v4944, %v4945
        %v4947 = vsel %vm4414, %v4157, -inf
        %v4948 = vrot.slane %v4947, 4
        %v4949 = vmax.f32 %v4947, %v4948
        %v4950 = vrot.slane %v4949, 2
        %v4951 = vmax.f32 %v4949, %v4950
        %v4952 = vrot.slane %v4951, 1
        %v4953 = vmax.f32 %v4951, %v4952
        %v4954 = vsel %vm4414, %v4279, -inf
        %v4955 = vrot.slane %v4954, 4
        %v4956 = vmax.f32 %v4954, %v4955
        %v4957 = vrot.slane %v4956, 2
        %v4958 = vmax.f32 %v4956, %v4957
        %v4959 = vrot.slane %v4958, 1
        %v4960 = vmax.f32 %v4958, %v4959
        %v4961 = vsel %vm4414, %v4280, -inf
        %v4962 = vrot.slane %v4961, 4
        %v4963 = vmax.f32 %v4961, %v4962
        %v4964 = vrot.slane %v4963, 2
        %v4965 = vmax.f32 %v4963, %v4964
        %v4966 = vrot.slane %v4965, 1
        %v4967 = vmax.f32 %v4965, %v4966
        %v4968 = vsel %vm4414, %v4281, -inf
        %v4969 = vrot.slane %v4968, 4
        %v4970 = vmax.f32 %v4968, %v4969
        %v4971 = vrot.slane %v4970, 2
        %v4972 = vmax.f32 %v4970, %v4971
        %v4973 = vrot.slane %v4972, 1
        %v4974 = vmax.f32 %v4972, %v4973
        %v4975 = vsel %vm4414, %v4158, -inf
        %v4976 = vrot.slane %v4975, 4
        %v4977 = vmax.f32 %v4975, %v4976
        %v4978 = vrot.slane %v4977, 2
        %v4979 = vmax.f32 %v4977, %v4978
        %v4980 = vrot.slane %v4979, 1
        %v4981 = vmax.f32 %v4979, %v4980
        %v4982 = vsel %vm4414, %v4282, -inf
        %v4983 = vrot.slane %v4982, 4
        %v4984 = vmax.f32 %v4982, %v4983
        %v4985 = vrot.slane %v4984, 2
        %v4986 = vmax.f32 %v4984, %v4985
        %v4987 = vrot.slane %v4986, 1
        %v4988 = vmax.f32 %v4986, %v4987
        %v4989 = vsel %vm4414, %v4283, -inf
        %v4990 = vrot.slane %v4989, 4
        %v4991 = vmax.f32 %v4989, %v4990
        %v4992 = vrot.slane %v4991, 2
        %v4993 = vmax.f32 %v4991, %v4992
        %v4994 = vrot.slane %v4993, 1
        %v4995 = vmax.f32 %v4993, %v4994
        %v4996 = vsel %vm4414, %v4284, -inf
        %v4997 = vrot.slane %v4996, 4
        %v4998 = vmax.f32 %v4996, %v4997
        %v4999 = vrot.slane %v4998, 2
        %v5000 = vmax.f32 %v4998, %v4999
        %v5001 = vrot.slane %v5000, 1
        %v5002 = vmax.f32 %v5000, %v5001
        %v5003 = vsel %vm4414, %v4159, -inf
        %v5004 = vrot.slane %v5003, 4
        %v5005 = vmax.f32 %v5003, %v5004
        %v5006 = vrot.slane %v5005, 2
        %v5007 = vmax.f32 %v5005, %v5006
        %v5008 = vrot.slane %v5007, 1
        %v5009 = vmax.f32 %v5007, %v5008
        %v5010 = vsel %vm4414, %v4285, -inf
        %v5011 = vrot.slane %v5010, 4
        %v5012 = vmax.f32 %v5010, %v5011
        %v5013 = vrot.slane %v5012, 2
        %v5014 = vmax.f32 %v5012, %v5013
        %v5015 = vrot.slane %v5014, 1
        %v5016 = vmax.f32 %v5014, %v5015
        %v5017 = vsel %vm4414, %v4286, -inf
        %v5018 = vrot.slane %v5017, 4
        %v5019 = vmax.f32 %v5017, %v5018
        %v5020 = vrot.slane %v5019, 2
        %v5021 = vmax.f32 %v5019, %v5020
        %v5022 = vrot.slane %v5021, 1
        %v5023 = vmax.f32 %v5021, %v5022
        %v5024 = vsel %vm4414, %v4287, -inf
        %v5025 = vrot.slane %v5024, 4
        %v5026 = vmax.f32 %v5024, %v5025
        %v5027 = vrot.slane %v5026, 2
        %v5028 = vmax.f32 %v5026, %v5027
        %v5029 = vrot.slane %v5028, 1
        %v5030 = vmax.f32 %v5028, %v5029
        %v5031 = vsel %vm4414, %v4160, -inf
        %v5032 = vrot.slane %v5031, 4
        %v5033 = vmax.f32 %v5031, %v5032
        %v5034 = vrot.slane %v5033, 2
        %v5035 = vmax.f32 %v5033, %v5034
        %v5036 = vrot.slane %v5035, 1
        %v5037 = vmax.f32 %v5035, %v5036
        %v5038 = vsel %vm4414, %v4288, -inf
        %v5039 = vrot.slane %v5038, 4
        %v5040 = vmax.f32 %v5038, %v5039
        %v5041 = vrot.slane %v5040, 2
        %v5042 = vmax.f32 %v5040, %v5041
        %v5043 = vrot.slane %v5042, 1
        %v5044 = vmax.f32 %v5042, %v5043
        %v5045 = vsel %vm4414, %v4289, -inf
        %v5046 = vrot.slane %v5045, 4
        %v5047 = vmax.f32 %v5045, %v5046
        %v5048 = vrot.slane %v5047, 2
        %v5049 = vmax.f32 %v5047, %v5048
        %v5050 = vrot.slane %v5049, 1
        %v5051 = vmax.f32 %v5049, %v5050
        %v5052 = vsel %vm4414, %v4290, -inf
        %v5053 = vrot.slane %v5052, 4
        %v5054 = vmax.f32 %v5052, %v5053
        %v5055 = vrot.slane %v5054, 2
        %v5056 = vmax.f32 %v5054, %v5055
        %v5057 = vrot.slane %v5056, 1
        %v5058 = vmax.f32 %v5056, %v5057
        %v5059 = vsel %vm4414, %v4161, -inf
        %v5060 = vrot.slane %v5059, 4
        %v5061 = vmax.f32 %v5059, %v5060
        %v5062 = vrot.slane %v5061, 2
        %v5063 = vmax.f32 %v5061, %v5062
        %v5064 = vrot.slane %v5063, 1
        %v5065 = vmax.f32 %v5063, %v5064
        %v5066 = vsel %vm4414, %v4291, -inf
        %v5067 = vrot.slane %v5066, 4
        %v5068 = vmax.f32 %v5066, %v5067
        %v5069 = vrot.slane %v5068, 2
        %v5070 = vmax.f32 %v5068, %v5069
        %v5071 = vrot.slane %v5070, 1
        %v5072 = vmax.f32 %v5070, %v5071
        %v5073 = vsel %vm4414, %v4292, -inf
        %v5074 = vrot.slane %v5073, 4
        %v5075 = vmax.f32 %v5073, %v5074
        %v5076 = vrot.slane %v5075, 2
        %v5077 = vmax.f32 %v5075, %v5076
        %v5078 = vrot.slane %v5077, 1
        %v5079 = vmax.f32 %v5077, %v5078
        %v5080 = vsel %vm4414, %v4293, -inf
        %v5081 = vrot.slane %v5080, 4
        %v5082 = vmax.f32 %v5080, %v5081
        %v5083 = vrot.slane %v5082, 2
        %v5084 = vmax.f32 %v5082, %v5083
        %v5085 = vrot.slane %v5084, 1
        %v5086 = vmax.f32 %v5084, %v5085
        %v5087 = vsel %vm4414, %v4162, -inf
        %v5088 = vrot.slane %v5087, 4
        %v5089 = vmax.f32 %v5087, %v5088
        %v5090 = vrot.slane %v5089, 2
        %v5091 = vmax.f32 %v5089, %v5090
        %v5092 = vrot.slane %v5091, 1
        %v5093 = vmax.f32 %v5091, %v5092
        %v5094 = vsel %vm4414, %v4294, -inf
        %v5095 = vrot.slane %v5094, 4
        %v5096 = vmax.f32 %v5094, %v5095
        %v5097 = vrot.slane %v5096, 2
        %v5098 = vmax.f32 %v5096, %v5097
        %v5099 = vrot.slane %v5098, 1
        %v5100 = vmax.f32 %v5098, %v5099
        %v5101 = vsel %vm4414, %v4295, -inf
        %v5102 = vrot.slane %v5101, 4
        %v5103 = vmax.f32 %v5101, %v5102
        %v5104 = vrot.slane %v5103, 2
        %v5105 = vmax.f32 %v5103, %v5104
        %v5106 = vrot.slane %v5105, 1
        %v5107 = vmax.f32 %v5105, %v5106
        %v5108 = vsel %vm4414, %v4296, -inf
        %v5109 = vrot.slane %v5108, 4
        %v5110 = vmax.f32 %v5108, %v5109
        %v5111 = vrot.slane %v5110, 2
        %v5112 = vmax.f32 %v5110, %v5111
        %v5113 = vrot.slane %v5112, 1
        %v5114 = vmax.f32 %v5112, %v5113
        %v5115 = vsel %vm4414, %v4163, -inf
        %v5116 = vrot.slane %v5115, 4
        %v5117 = vmax.f32 %v5115, %v5116
        %v5118 = vrot.slane %v5117, 2
        %v5119 = vmax.f32 %v5117, %v5118
        %v5120 = vrot.slane %v5119, 1
        %v5121 = vmax.f32 %v5119, %v5120
        %v5122 = vsel %vm4414, %v4297, -inf
        %v5123 = vrot.slane %v5122, 4
        %v5124 = vmax.f32 %v5122, %v5123
        %v5125 = vrot.slane %v5124, 2
        %v5126 = vmax.f32 %v5124, %v5125
        %v5127 = vrot.slane %v5126, 1
        %v5128 = vmax.f32 %v5126, %v5127
        %v5129 = vsel %vm4414, %v4298, -inf
        %v5130 = vrot.slane %v5129, 4
        %v5131 = vmax.f32 %v5129, %v5130
        %v5132 = vrot.slane %v5131, 2
        %v5133 = vmax.f32 %v5131, %v5132
        %v5134 = vrot.slane %v5133, 1
        %v5135 = vmax.f32 %v5133, %v5134
        %v5136 = vsel %vm4414, %v4299, -inf
        %v5137 = vrot.slane %v5136, 4
        %v5138 = vmax.f32 %v5136, %v5137
        %v5139 = vrot.slane %v5138, 2
        %v5140 = vmax.f32 %v5138, %v5139
        %v5141 = vrot.slane %v5140, 1
        %v5142 = vmax.f32 %v5140, %v5141
        %v5143 = vsel %vm4414, %v4164, -inf
        %v5144 = vrot.slane %v5143, 4
        %v5145 = vmax.f32 %v5143, %v5144
        %v5146 = vrot.slane %v5145, 2
        %v5147 = vmax.f32 %v5145, %v5146
        %v5148 = vrot.slane %v5147, 1
        %v5149 = vmax.f32 %v5147, %v5148
        %v5150 = vsel %vm4414, %v4300, -inf
        %v5151 = vrot.slane %v5150, 4
        %v5152 = vmax.f32 %v5150, %v5151
        %v5153 = vrot.slane %v5152, 2
        %v5154 = vmax.f32 %v5152, %v5153
        %v5155 = vrot.slane %v5154, 1
        %v5156 = vmax.f32 %v5154, %v5155
        %v5157 = vsel %vm4414, %v4301, -inf
        %v5158 = vrot.slane %v5157, 4
        %v5159 = vmax.f32 %v5157, %v5158
        %v5160 = vrot.slane %v5159, 2
        %v5161 = vmax.f32 %v5159, %v5160
        %v5162 = vrot.slane %v5161, 1
        %v5163 = vmax.f32 %v5161, %v5162
        %v5164 = vsel %vm4414, %v4302, -inf
        %v5165 = vrot.slane %v5164, 4
        %v5166 = vmax.f32 %v5164, %v5165
        %v5167 = vrot.slane %v5166, 2
        %v5168 = vmax.f32 %v5166, %v5167
        %v5169 = vrot.slane %v5168, 1
        %v5170 = vmax.f32 %v5168, %v5169
        %v5171 = vsel %vm4414, %v4165, -inf
        %v5172 = vrot.slane %v5171, 4
        %v5173 = vmax.f32 %v5171, %v5172
        %v5174 = vrot.slane %v5173, 2
        %v5175 = vmax.f32 %v5173, %v5174
        %v5176 = vrot.slane %v5175, 1
        %v5177 = vmax.f32 %v5175, %v5176
        %v5178 = vsel %vm4414, %v4303, -inf
        %v5179 = vrot.slane %v5178, 4
        %v5180 = vmax.f32 %v5178, %v5179
        %v5181 = vrot.slane %v5180, 2
        %v5182 = vmax.f32 %v5180, %v5181
        %v5183 = vrot.slane %v5182, 1
        %v5184 = vmax.f32 %v5182, %v5183
        %v5185 = vsel %vm4414, %v4304, -inf
        %v5186 = vrot.slane %v5185, 4
        %v5187 = vmax.f32 %v5185, %v5186
        %v5188 = vrot.slane %v5187, 2
        %v5189 = vmax.f32 %v5187, %v5188
        %v5190 = vrot.slane %v5189, 1
        %v5191 = vmax.f32 %v5189, %v5190
        %v5192 = vsel %vm4414, %v4305, -inf
        %v5193 = vrot.slane %v5192, 4
        %v5194 = vmax.f32 %v5192, %v5193
        %v5195 = vrot.slane %v5194, 2
        %v5196 = vmax.f32 %v5194, %v5195
        %v5197 = vrot.slane %v5196, 1
        %v5198 = vmax.f32 %v5196, %v5197
        %v5199 = vsel %vm4414, %v4166, -inf
        %v5200 = vrot.slane %v5199, 4
        %v5201 = vmax.f32 %v5199, %v5200
        %v5202 = vrot.slane %v5201, 2
        %v5203 = vmax.f32 %v5201, %v5202
        %v5204 = vrot.slane %v5203, 1
        %v5205 = vmax.f32 %v5203, %v5204
        %v5206 = vsel %vm4414, %v4306, -inf
        %v5207 = vrot.slane %v5206, 4
        %v5208 = vmax.f32 %v5206, %v5207
        %v5209 = vrot.slane %v5208, 2
        %v5210 = vmax.f32 %v5208, %v5209
        %v5211 = vrot.slane %v5210, 1
        %v5212 = vmax.f32 %v5210, %v5211
        %v5213 = vsel %vm4414, %v4307, -inf
        %v5214 = vrot.slane %v5213, 4
        %v5215 = vmax.f32 %v5213, %v5214
        %v5216 = vrot.slane %v5215, 2
        %v5217 = vmax.f32 %v5215, %v5216
        %v5218 = vrot.slane %v5217, 1
        %v5219 = vmax.f32 %v5217, %v5218
        %v5220 = vsel %vm4414, %v4308, -inf
        %v5221 = vrot.slane %v5220, 4
        %v5222 = vmax.f32 %v5220, %v5221
        %v5223 = vrot.slane %v5222, 2
        %v5224 = vmax.f32 %v5222, %v5223
        %v5225 = vrot.slane %v5224, 1
        %v5226 = vmax.f32 %v5224, %v5225
        %v5227 = vsel %vm4414, %v4167, -inf
        %v5228 = vrot.slane %v5227, 4
        %v5229 = vmax.f32 %v5227, %v5228
        %v5230 = vrot.slane %v5229, 2
        %v5231 = vmax.f32 %v5229, %v5230
        %v5232 = vrot.slane %v5231, 1
        %v5233 = vmax.f32 %v5231, %v5232
        %v5234 = vsel %vm4414, %v4309, -inf
        %v5235 = vrot.slane %v5234, 4
        %v5236 = vmax.f32 %v5234, %v5235
        %v5237 = vrot.slane %v5236, 2
        %v5238 = vmax.f32 %v5236, %v5237
        %v5239 = vrot.slane %v5238, 1
        %v5240 = vmax.f32 %v5238, %v5239
        %v5241 = vsel %vm4414, %v4310, -inf
        %v5242 = vrot.slane %v5241, 4
        %v5243 = vmax.f32 %v5241, %v5242
        %v5244 = vrot.slane %v5243, 2
        %v5245 = vmax.f32 %v5243, %v5244
        %v5246 = vrot.slane %v5245, 1
        %v5247 = vmax.f32 %v5245, %v5246
        %v5248 = vsel %vm4414, %v4311, -inf
        %v5249 = vrot.slane %v5248, 4
        %v5250 = vmax.f32 %v5248, %v5249
        %v5251 = vrot.slane %v5250, 2
        %v5252 = vmax.f32 %v5250, %v5251
        %v5253 = vrot.slane %v5252, 1
        %v5254 = vmax.f32 %v5252, %v5253
        %v5255 = vsel %vm4414, %v4168, -inf
        %v5256 = vrot.slane %v5255, 4
        %v5257 = vmax.f32 %v5255, %v5256
        %v5258 = vrot.slane %v5257, 2
        %v5259 = vmax.f32 %v5257, %v5258
        %v5260 = vrot.slane %v5259, 1
        %v5261 = vmax.f32 %v5259, %v5260
        %v5262 = vsel %vm4414, %v4312, -inf
        %v5263 = vrot.slane %v5262, 4
        %v5264 = vmax.f32 %v5262, %v5263
        %v5265 = vrot.slane %v5264, 2
        %v5266 = vmax.f32 %v5264, %v5265
        %v5267 = vrot.slane %v5266, 1
        %v5268 = vmax.f32 %v5266, %v5267
        %v5269 = vsel %vm4414, %v4313, -inf
        %v5270 = vrot.slane %v5269, 4
        %v5271 = vmax.f32 %v5269, %v5270
        %v5272 = vrot.slane %v5271, 2
        %v5273 = vmax.f32 %v5271, %v5272
        %v5274 = vrot.slane %v5273, 1
        %v5275 = vmax.f32 %v5273, %v5274
        %v5276 = vsel %vm4414, %v4314, -inf
        %v5277 = vrot.slane %v5276, 4
        %v5278 = vmax.f32 %v5276, %v5277
        %v5279 = vrot.slane %v5278, 2
        %v5280 = vmax.f32 %v5278, %v5279
        %v5281 = vrot.slane %v5280, 1
        %v5282 = vmax.f32 %v5280, %v5281
        %v5283 = vsel %vm4414, %v4169, -inf
        %v5284 = vrot.slane %v5283, 4
        %v5285 = vmax.f32 %v5283, %v5284
        %v5286 = vrot.slane %v5285, 2
        %v5287 = vmax.f32 %v5285, %v5286
        %v5288 = vrot.slane %v5287, 1
        %v5289 = vmax.f32 %v5287, %v5288
        %v5290 = vsel %vm4414, %v4315, -inf
        %v5291 = vrot.slane %v5290, 4
        %v5292 = vmax.f32 %v5290, %v5291
        %v5293 = vrot.slane %v5292, 2
        %v5294 = vmax.f32 %v5292, %v5293
        %v5295 = vrot.slane %v5294, 1
        %v5296 = vmax.f32 %v5294, %v5295
        %v5297 = vsel %vm4414, %v4316, -inf
        %v5298 = vrot.slane %v5297, 4
        %v5299 = vmax.f32 %v5297, %v5298
        %v5300 = vrot.slane %v5299, 2
        %v5301 = vmax.f32 %v5299, %v5300
        %v5302 = vrot.slane %v5301, 1
        %v5303 = vmax.f32 %v5301, %v5302
        %v5304 = vsel %vm4414, %v4317, -inf
        %v5305 = vrot.slane %v5304, 4
        %v5306 = vmax.f32 %v5304, %v5305
        %v5307 = vrot.slane %v5306, 2
        %v5308 = vmax.f32 %v5306, %v5307
        %v5309 = vrot.slane %v5308, 1
        %v5310 = vmax.f32 %v5308, %v5309
        %v5311 = vmax.f32 %v4421, %v4477
        %v5312 = vmax.f32 %v4428, %v4484
        %v5313 = vmax.f32 %v4435, %v4491
        %v5314 = vmax.f32 %v4442, %v4498
        %v5315 = vmax.f32 %v4449, %v4505
        %v5316 = vmax.f32 %v4456, %v4512
        %v5317 = vmax.f32 %v4463, %v4519
        %v5318 = vmax.f32 %v4470, %v4526
        %v5319 = vmax.f32 %v4533, %v4589
        %v5320 = vmax.f32 %v4540, %v4596
        %v5321 = vmax.f32 %v4547, %v4603
        %v5322 = vmax.f32 %v4554, %v4610
        %v5323 = vmax.f32 %v4561, %v4617
        %v5324 = vmax.f32 %v4568, %v4624
        %v5325 = vmax.f32 %v4575, %v4631
        %v5326 = vmax.f32 %v4582, %v4638
        %v5327 = vmax.f32 %v4645, %v4701
        %v5328 = vmax.f32 %v4652, %v4708
        %v5329 = vmax.f32 %v4659, %v4715
        %v5330 = vmax.f32 %v4666, %v4722
        %v5331 = vmax.f32 %v4673, %v4729
        %v5332 = vmax.f32 %v4680, %v4736
        %v5333 = vmax.f32 %v4687, %v4743
        %v5334 = vmax.f32 %v4694, %v4750
        %v5335 = vmax.f32 %v4757, %v4813
        %v5336 = vmax.f32 %v4764, %v4820
        %v5337 = vmax.f32 %v4771, %v4827
        %v5338 = vmax.f32 %v4778, %v4834
        %v5339 = vmax.f32 %v4785, %v4841
        %v5340 = vmax.f32 %v4792, %v4848
        %v5341 = vmax.f32 %v4799, %v4855
        %v5342 = vmax.f32 %v4806, %v4862
        %v5343 = vmax.f32 %v4869, %v4925
        %v5344 = vmax.f32 %v4876, %v4932
        %v5345 = vmax.f32 %v4883, %v4939
        %v5346 = vmax.f32 %v4890, %v4946
        %v5347 = vmax.f32 %v4897, %v4953
        %v5348 = vmax.f32 %v4904, %v4960
        %v5349 = vmax.f32 %v4911, %v4967
        %v5350 = vmax.f32 %v4918, %v4974
        %v5351 = vmax.f32 %v4981, %v5037
        %v5352 = vmax.f32 %v4988, %v5044
        %v5353 = vmax.f32 %v4995, %v5051
        %v5354 = vmax.f32 %v5002, %v5058
        %v5355 = vmax.f32 %v5009, %v5065
        %v5356 = vmax.f32 %v5016, %v5072
        %v5357 = vmax.f32 %v5023, %v5079
        %v5358 = vmax.f32 %v5030, %v5086
        %v5359 = vmax.f32 %v5093, %v5149
        %v5360 = vmax.f32 %v5100, %v5156
        %v5361 = vmax.f32 %v5107, %v5163
        %v5362 = vmax.f32 %v5114, %v5170
        %v5363 = vmax.f32 %v5121, %v5177
        %v5364 = vmax.f32 %v5128, %v5184
        %v5365 = vmax.f32 %v5135, %v5191
        %v5366 = vmax.f32 %v5142, %v5198
        %v5367 = vmax.f32 %v5205, %v5261
        %v5368 = vmax.f32 %v5212, %v5268
        %v5369 = vmax.f32 %v5219, %v5275
        %v5370 = vmax.f32 %v5226, %v5282
        %v5371 = vmax.f32 %v5233, %v5289
        %v5372 = vmax.f32 %v5240, %v5296
        %v5373 = vmax.f32 %v5247, %v5303
        %v5374 = vmax.f32 %v5254, %v5310
        %vm5439 = vcmask 1041409
        %v5440 = vsel %vm5439, %v5312, %v5311
        %vm5441 = vcmask 1042434
        %v5442 = vsel %vm5441, %v5313, %v5440
        %vm5443 = vcmask 1043459
        %v5444 = vsel %vm5443, %v5314, %v5442
        %vm5445 = vcmask 1044484
        %v5446 = vsel %vm5445, %v5315, %v5444
        %vm5447 = vcmask 1045509
        %v5448 = vsel %vm5447, %v5316, %v5446
        %vm5449 = vcmask 1046534
        %v5450 = vsel %vm5449, %v5317, %v5448
        %vm5451 = vcmask 1047559
        %v5452 = vsel %vm5451, %v5318, %v5450
        %v5453 = vsel %vm5439, %v5320, %v5319
        %v5454 = vsel %vm5441, %v5321, %v5453
        %v5455 = vsel %vm5443, %v5322, %v5454
        %v5456 = vsel %vm5445, %v5323, %v5455
        %v5457 = vsel %vm5447, %v5324, %v5456
        %v5458 = vsel %vm5449, %v5325, %v5457
        %v5459 = vsel %vm5451, %v5326, %v5458
        %v5460 = vsel %vm5439, %v5328, %v5327
        %v5461 = vsel %vm5441, %v5329, %v5460
        %v5462 = vsel %vm5443, %v5330, %v5461
        %v5463 = vsel %vm5445, %v5331, %v5462
        %v5464 = vsel %vm5447, %v5332, %v5463
        %v5465 = vsel %vm5449, %v5333, %v5464
        %v5466 = vsel %vm5451, %v5334, %v5465
        %v5467 = vsel %vm5439, %v5336, %v5335
        %v5468 = vsel %vm5441, %v5337, %v5467
        %v5469 = vsel %vm5443, %v5338, %v5468
        %v5470 = vsel %vm5445, %v5339, %v5469
        %v5471 = vsel %vm5447, %v5340, %v5470
        %v5472 = vsel %vm5449, %v5341, %v5471
        %v5473 = vsel %vm5451, %v5342, %v5472
        %v5474 = vsel %vm5439, %v5344, %v5343
        %v5475 = vsel %vm5441, %v5345, %v5474
        %v5476 = vsel %vm5443, %v5346, %v5475
        %v5477 = vsel %vm5445, %v5347, %v5476
        %v5478 = vsel %vm5447, %v5348, %v5477
        %v5479 = vsel %vm5449, %v5349, %v5478
        %v5480 = vsel %vm5451, %v5350, %v5479
        %v5481 = vsel %vm5439, %v5352, %v5351
        %v5482 = vsel %vm5441, %v5353, %v5481
        %v5483 = vsel %vm5443, %v5354, %v5482
        %v5484 = vsel %vm5445, %v5355, %v5483
        %v5485 = vsel %vm5447, %v5356, %v5484
        %v5486 = vsel %vm5449, %v5357, %v5485
        %v5487 = vsel %vm5451, %v5358, %v5486
        %v5488 = vsel %vm5439, %v5360, %v5359
        %v5489 = vsel %vm5441, %v5361, %v5488
        %v5490 = vsel %vm5443, %v5362, %v5489
        %v5491 = vsel %vm5445, %v5363, %v5490
        %v5492 = vsel %vm5447, %v5364, %v5491
        %v5493 = vsel %vm5449, %v5365, %v5492
        %v5494 = vsel %vm5451, %v5366, %v5493
        %v5495 = vsel %vm5439, %v5368, %v5367
        %v5496 = vsel %vm5441, %v5369, %v5495
        %v5497 = vsel %vm5443, %v5370, %v5496
        %v5498 = vsel %vm5445, %v5371, %v5497
        %v5499 = vsel %vm5447, %v5372, %v5498
        %v5500 = vsel %vm5449, %v5373, %v5499
        %v5501 = vsel %vm5451, %v5374, %v5500
        %s5510 = scalar_lea.vmem [#allocation2], 16
        %5511 = vst [vmem:[%s5510 + $0x1] sm:$0xff] %v5452
        %5512 = vst [vmem:[%s5510 + $0x11] sm:$0xff] %v5459
        %5513 = vst [vmem:[%s5510 + $0x21] sm:$0xff] %v5466
        %5514 = vst [vmem:[%s5510 + $0x31] sm:$0xff] %v5473
        %5515 = vst [vmem:[%s5510 + $0x41] sm:$0xff] %v5480
        %5516 = vst [vmem:[%s5510 + $0x51] sm:$0xff] %v5487
        %5517 = vst [vmem:[%s5510 + $0x61] sm:$0xff] %v5494
        %5518 = vst [vmem:[%s5510 + $0x71] sm:$0xff] %v5501
        %5519 = vst [vmem:[#allocation3] sm:$0xff] 0.0
        %5520 = vst [vmem:[#allocation3 + $0x8] sm:$0xff] 0.0
        %5521 = vst [vmem:[#allocation3 + $0x10] sm:$0xff] 0.0
        %5522 = vst [vmem:[#allocation3 + $0x18] sm:$0xff] 0.0
        %5523 = vst [vmem:[#allocation3 + $0x20] sm:$0xff] 0.0
        %5524 = vst [vmem:[#allocation3 + $0x28] sm:$0xff] 0.0
        %5525 = vst [vmem:[#allocation3 + $0x30] sm:$0xff] 0.0
        %5526 = vst [vmem:[#allocation3 + $0x38] sm:$0xff] 0.0
        %v5527 = vld [vmem:[#allocation2] sm:$0xff]
        %v5528 = vld [vmem:[#allocation2 + $0x10] sm:$0xff]
        %v5529 = vld [vmem:[#allocation2 + $0x20] sm:$0xff]
        %v5530 = vld [vmem:[#allocation2 + $0x30] sm:$0xff]
        %v5531 = vld [vmem:[#allocation2 + $0x40] sm:$0xff]
        %v5532 = vld [vmem:[#allocation2 + $0x50] sm:$0xff]
        %v5533 = vld [vmem:[#allocation2 + $0x60] sm:$0xff]
        %v5534 = vld [vmem:[#allocation2 + $0x70] sm:$0xff]
        %v5535 = vpack.c.bf16 %v5527, %v5527
        %v5536 = vpack.c.bf16 %v5528, %v5528
        %v5537 = vpack.c.bf16 %v5529, %v5529
        %v5538 = vpack.c.bf16 %v5530, %v5530
        %v5539 = vpack.c.bf16 %v5531, %v5531
        %v5540 = vpack.c.bf16 %v5532, %v5532
        %v5541 = vpack.c.bf16 %v5533, %v5533
        %v5542 = vpack.c.bf16 %v5534, %v5534
        %v5543 = vld [vmem:[#allocation3] sm:$0xff]
        %v5544 = vld [vmem:[#allocation3 + $0x8] sm:$0xff]
        %v5545 = vld [vmem:[#allocation3 + $0x10] sm:$0xff]
        %v5546 = vld [vmem:[#allocation3 + $0x18] sm:$0xff]
        %v5547 = vld [vmem:[#allocation3 + $0x20] sm:$0xff]
        %v5548 = vld [vmem:[#allocation3 + $0x28] sm:$0xff]
        %v5549 = vld [vmem:[#allocation3 + $0x30] sm:$0xff]
        %v5550 = vld [vmem:[#allocation3 + $0x38] sm:$0xff]
        %v5551 = vld [vmem:[#allocation4] sm:$0xf]
        %v5552 = vld [vmem:[#allocation4 + $0x4] sm:$0xf]
        %v5553 = vld [vmem:[#allocation4 + $0x8] sm:$0xf]
        %v5554 = vld [vmem:[#allocation4 + $0xc] sm:$0xf]
        %v5555 = vld [vmem:[#allocation4 + $0x10] sm:$0xf]
        %v5556 = vld [vmem:[#allocation4 + $0x14] sm:$0xf]
        %v5557 = vld [vmem:[#allocation4 + $0x18] sm:$0xf]
        %v5558 = vld [vmem:[#allocation4 + $0x1c] sm:$0xf]
        %v5559 = vld [vmem:[#allocation4 + $0x20] sm:$0xf]
        %v5560 = vld [vmem:[#allocation4 + $0x24] sm:$0xf]
        %v5561 = vld [vmem:[#allocation4 + $0x28] sm:$0xf]
        %v5562 = vld [vmem:[#allocation4 + $0x2c] sm:$0xf]
        %v5563 = vld [vmem:[#allocation4 + $0x30] sm:$0xf]
        %v5564 = vld [vmem:[#allocation4 + $0x34] sm:$0xf]
        %v5565 = vld [vmem:[#allocation4 + $0x38] sm:$0xf]
        %v5566 = vld [vmem:[#allocation4 + $0x3c] sm:$0xf]
        %v5575 = vunpack.c.l.b16 %v5535
        %v5576 = vunpack.c.l.b16 %v5536
        %v5577 = vunpack.c.l.b16 %v5537
        %v5578 = vunpack.c.l.b16 %v5538
        %v5579 = vunpack.c.l.b16 %v5539
        %v5580 = vunpack.c.l.b16 %v5540
        %v5581 = vunpack.c.l.b16 %v5541
        %v5582 = vunpack.c.l.b16 %v5542
        %v5583 = vpack.c.b16 %v5576, %v5575
        %v5584 = vpack.c.b16 %v5578, %v5577
        %v5585 = vpack.c.b16 %v5580, %v5579
        %v5586 = vpack.c.b16 %v5582, %v5581
        %v5607 = vunpack.c.l.b16 %v5551
        %v5608 = vunpack.c.l.b16 %v5552
        %v5609 = vunpack.c.l.b16 %v5553
        %v5610 = vunpack.c.l.b16 %v5554
        %v5611 = vunpack.c.l.b16 %v5555
        %v5612 = vunpack.c.l.b16 %v5556
        %v5613 = vunpack.c.l.b16 %v5557
        %v5614 = vunpack.c.l.b16 %v5558
        %v5615 = vunpack.c.l.b16 %v5559
        %v5616 = vunpack.c.l.b16 %v5560
        %v5617 = vunpack.c.l.b16 %v5561
        %v5618 = vunpack.c.l.b16 %v5562
        %v5619 = vunpack.c.l.b16 %v5563
        %v5620 = vunpack.c.l.b16 %v5564
        %v5621 = vunpack.c.l.b16 %v5565
        %v5622 = vunpack.c.l.b16 %v5566
        %v5623 = vpack.c.b16 %v5608, %v5607
        %v5624 = vpack.c.b16 %v5610, %v5609
        %v5625 = vpack.c.b16 %v5612, %v5611
        %v5626 = vpack.c.b16 %v5614, %v5613
        %v5627 = vpack.c.b16 %v5616, %v5615
        %v5628 = vpack.c.b16 %v5618, %v5617
        %v5629 = vpack.c.b16 %v5620, %v5619
        %v5630 = vpack.c.b16 %v5622, %v5621
        %5639 = vmatpush.bf16.msra.mxu0 %v5630
        %5640 = vmatpush.bf16.msra.mxu0 %v5629
        %5641 = vmatpush.bf16.msra.mxu0 %v5628
        %5642 = vmatpush.bf16.msra.mxu0 %v5627
        %5643 = vmatpush.bf16.msra.mxu0 %v5626
        %5644 = vmatpush.bf16.msra.mxu0 %v5625
        %5645 = vmatpush.bf16.msra.mxu0 %v5624
        %5646 = vmatpush.bf16.msra.mxu0 %v5623
        %5647 = vmatmul.bf16.gmra.mxu0 %v5583
        %v5648 = vpop.f32.mrf.mxu0
        %v5649 = vadd.f32 0.0, %v5648
        %v5650 = vpop.f32.mrf.mxu0
        %v5651 = vadd.f32 0.0, %v5650
        %5652 = vmatmul.bf16.gmra.mxu0 %v5584
        %v5653 = vpop.f32.mrf.mxu0
        %v5654 = vadd.f32 0.0, %v5653
        %v5655 = vpop.f32.mrf.mxu0
        %v5656 = vadd.f32 0.0, %v5655
        %5657 = vmatmul.bf16.gmra.mxu0 %v5585
        %v5658 = vpop.f32.mrf.mxu0
        %v5659 = vadd.f32 0.0, %v5658
        %v5660 = vpop.f32.mrf.mxu0
        %v5661 = vadd.f32 0.0, %v5660
        %5662 = vmatmul.bf16.gmra.mxu0 %v5586
        %v5663 = vpop.f32.mrf.mxu0
        %v5664 = vadd.f32 0.0, %v5663
        %v5665 = vpop.f32.mrf.mxu0
        %v5666 = vadd.f32 0.0, %v5665
        %5667 = vdwg.mxu0
        %v5668 = vadd.f32 %v5543, %v5649
        %v5669 = vadd.f32 %v5544, %v5651
        %v5670 = vadd.f32 %v5545, %v5654
        %v5671 = vadd.f32 %v5546, %v5656
        %v5672 = vadd.f32 %v5547, %v5659
        %v5673 = vadd.f32 %v5548, %v5661
        %v5674 = vadd.f32 %v5549, %v5664
        %v5675 = vadd.f32 %v5550, %v5666
        %5676 = vst [vmem:[#allocation3] sm:$0xff] %v5668
        %5677 = vst [vmem:[#allocation3 + $0x8] sm:$0xff] %v5669
        %5678 = vst [vmem:[#allocation3 + $0x10] sm:$0xff] %v5670
        %5679 = vst [vmem:[#allocation3 + $0x18] sm:$0xff] %v5671
        %5680 = vst [vmem:[#allocation3 + $0x20] sm:$0xff] %v5672
        %5681 = vst [vmem:[#allocation3 + $0x28] sm:$0xff] %v5673
        %5682 = vst [vmem:[#allocation3 + $0x30] sm:$0xff] %v5674
        %5683 = vst [vmem:[#allocation3 + $0x38] sm:$0xff] %v5675
        %v5684 = vld [vmem:[#allocation2 + $0x1] sm:$0xff]
        %v5685 = vld [vmem:[#allocation2 + $0x11] sm:$0xff]
        %v5686 = vld [vmem:[#allocation2 + $0x21] sm:$0xff]
        %v5687 = vld [vmem:[#allocation2 + $0x31] sm:$0xff]
        %v5688 = vld [vmem:[#allocation2 + $0x41] sm:$0xff]
        %v5689 = vld [vmem:[#allocation2 + $0x51] sm:$0xff]
        %v5690 = vld [vmem:[#allocation2 + $0x61] sm:$0xff]
        %v5691 = vld [vmem:[#allocation2 + $0x71] sm:$0xff]
        %v5692 = vpack.c.bf16 %v5684, %v5684
        %v5693 = vpack.c.bf16 %v5685, %v5685
        %v5694 = vpack.c.bf16 %v5686, %v5686
        %v5695 = vpack.c.bf16 %v5687, %v5687
        %v5696 = vpack.c.bf16 %v5688, %v5688
        %v5697 = vpack.c.bf16 %v5689, %v5689
        %v5698 = vpack.c.bf16 %v5690, %v5690
        %v5699 = vpack.c.bf16 %v5691, %v5691
        %v5700 = vld [vmem:[#allocation3] sm:$0xff]
        %v5701 = vld [vmem:[#allocation3 + $0x8] sm:$0xff]
        %v5702 = vld [vmem:[#allocation3 + $0x10] sm:$0xff]
        %v5703 = vld [vmem:[#allocation3 + $0x18] sm:$0xff]
        %v5704 = vld [vmem:[#allocation3 + $0x20] sm:$0xff]
        %v5705 = vld [vmem:[#allocation3 + $0x28] sm:$0xff]
        %v5706 = vld [vmem:[#allocation3 + $0x30] sm:$0xff]
        %v5707 = vld [vmem:[#allocation3 + $0x38] sm:$0xff]
        %s5708 = scalar_lea.vmem [#allocation4], 64
        %v5709 = vld [vmem:[%s5708] sm:$0xf]
        %v5710 = vld [vmem:[%s5708 + $0x4] sm:$0xf]
        %v5711 = vld [vmem:[%s5708 + $0x8] sm:$0xf]
        %v5712 = vld [vmem:[%s5708 + $0xc] sm:$0xf]
        %v5713 = vld [vmem:[%s5708 + $0x10] sm:$0xf]
        %v5714 = vld [vmem:[%s5708 + $0x14] sm:$0xf]
        %v5715 = vld [vmem:[%s5708 + $0x18] sm:$0xf]
        %v5716 = vld [vmem:[%s5708 + $0x1c] sm:$0xf]
        %v5717 = vld [vmem:[%s5708 + $0x20] sm:$0xf]
        %v5718 = vld [vmem:[%s5708 + $0x24] sm:$0xf]
        %v5719 = vld [vmem:[%s5708 + $0x28] sm:$0xf]
        %v5720 = vld [vmem:[%s5708 + $0x2c] sm:$0xf]
        %v5721 = vld [vmem:[%s5708 + $0x30] sm:$0xf]
        %v5722 = vld [vmem:[%s5708 + $0x34] sm:$0xf]
        %v5723 = vld [vmem:[%s5708 + $0x38] sm:$0xf]
        %v5724 = vld [vmem:[%s5708 + $0x3c] sm:$0xf]
        %v5733 = vunpack.c.l.b16 %v5692
        %v5734 = vunpack.c.l.b16 %v5693
        %v5735 = vunpack.c.l.b16 %v5694
        %v5736 = vunpack.c.l.b16 %v5695
        %v5737 = vunpack.c.l.b16 %v5696
        %v5738 = vunpack.c.l.b16 %v5697
        %v5739 = vunpack.c.l.b16 %v5698
        %v5740 = vunpack.c.l.b16 %v5699
        %v5741 = vpack.c.b16 %v5734, %v5733
        %v5742 = vpack.c.b16 %v5736, %v5735
        %v5743 = vpack.c.b16 %v5738, %v5737
        %v5744 = vpack.c.b16 %v5740, %v5739
        %v5765 = vunpack.c.l.b16 %v5709
        %v5766 = vunpack.c.l.b16 %v5710
        %v5767 = vunpack.c.l.b16 %v5711
        %v5768 = vunpack.c.l.b16 %v5712
        %v5769 = vunpack.c.l.b16 %v5713
        %v5770 = vunpack.c.l.b16 %v5714
        %v5771 = vunpack.c.l.b16 %v5715
        %v5772 = vunpack.c.l.b16 %v5716
        %v5773 = vunpack.c.l.b16 %v5717
        %v5774 = vunpack.c.l.b16 %v5718
        %v5775 = vunpack.c.l.b16 %v5719
        %v5776 = vunpack.c.l.b16 %v5720
        %v5777 = vunpack.c.l.b16 %v5721
        %v5778 = vunpack.c.l.b16 %v5722
        %v5779 = vunpack.c.l.b16 %v5723
        %v5780 = vunpack.c.l.b16 %v5724
        %v5781 = vpack.c.b16 %v5766, %v5765
        %v5782 = vpack.c.b16 %v5768, %v5767
        %v5783 = vpack.c.b16 %v5770, %v5769
        %v5784 = vpack.c.b16 %v5772, %v5771
        %v5785 = vpack.c.b16 %v5774, %v5773
        %v5786 = vpack.c.b16 %v5776, %v5775
        %v5787 = vpack.c.b16 %v5778, %v5777
        %v5788 = vpack.c.b16 %v5780, %v5779
        %5797 = vmatpush.bf16.msra.mxu0 %v5788
        %5798 = vmatpush.bf16.msra.mxu0 %v5787
        %5799 = vmatpush.bf16.msra.mxu0 %v5786
        %5800 = vmatpush.bf16.msra.mxu0 %v5785
        %5801 = vmatpush.bf16.msra.mxu0 %v5784
        %5802 = vmatpush.bf16.msra.mxu0 %v5783
        %5803 = vmatpush.bf16.msra.mxu0 %v5782
        %5804 = vmatpush.bf16.msra.mxu0 %v5781
        %5805 = vmatmul.bf16.gmra.mxu0 %v5741
        %v5806 = vpop.f32.mrf.mxu0
        %v5807 = vadd.f32 0.0, %v5806
        %v5808 = vpop.f32.mrf.mxu0
        %v5809 = vadd.f32 0.0, %v5808
        %5810 = vmatmul.bf16.gmra.mxu0 %v5742
        %v5811 = vpop.f32.mrf.mxu0
        %v5812 = vadd.f32 0.0, %v5811
        %v5813 = vpop.f32.mrf.mxu0
        %v5814 = vadd.f32 0.0, %v5813
        %5815 = vmatmul.bf16.gmra.mxu0 %v5743
        %v5816 = vpop.f32.mrf.mxu0
        %v5817 = vadd.f32 0.0, %v5816
        %v5818 = vpop.f32.mrf.mxu0
        %v5819 = vadd.f32 0.0, %v5818
        %5820 = vmatmul.bf16.gmra.mxu0 %v5744
        %v5821 = vpop.f32.mrf.mxu0
        %v5822 = vadd.f32 0.0, %v5821
        %v5823 = vpop.f32.mrf.mxu0
        %v5824 = vadd.f32 0.0, %v5823
        %5825 = vdwg.mxu0
        %v5826 = vadd.f32 %v5700, %v5807
        %v5827 = vadd.f32 %v5701, %v5809
        %v5828 = vadd.f32 %v5702, %v5812
        %v5829 = vadd.f32 %v5703, %v5814
        %v5830 = vadd.f32 %v5704, %v5817
        %v5831 = vadd.f32 %v5705, %v5819
        %v5832 = vadd.f32 %v5706, %v5822
        %v5833 = vadd.f32 %v5707, %v5824
        %5834 = vst [vmem:[#allocation3] sm:$0xff] %v5826
        %5835 = vst [vmem:[#allocation3 + $0x8] sm:$0xff] %v5827
        %5836 = vst [vmem:[#allocation3 + $0x10] sm:$0xff] %v5828
        %5837 = vst [vmem:[#allocation3 + $0x18] sm:$0xff] %v5829
        %5838 = vst [vmem:[#allocation3 + $0x20] sm:$0xff] %v5830
        %5839 = vst [vmem:[#allocation3 + $0x28] sm:$0xff] %v5831
        %5840 = vst [vmem:[#allocation3 + $0x30] sm:$0xff] %v5832
        %5841 = vst [vmem:[#allocation3 + $0x38] sm:$0xff] %v5833
        %v5842 = vld [vmem:[#allocation2 + $0x2] sm:$0xff]
        %v5843 = vld [vmem:[#allocation2 + $0x12] sm:$0xff]
        %v5844 = vld [vmem:[#allocation2 + $0x22] sm:$0xff]
        %v5845 = vld [vmem:[#allocation2 + $0x32] sm:$0xff]
        %v5846 = vld [vmem:[#allocation2 + $0x42] sm:$0xff]
        %v5847 = vld [vmem:[#allocation2 + $0x52] sm:$0xff]
        %v5848 = vld [vmem:[#allocation2 + $0x62] sm:$0xff]
        %v5849 = vld [vmem:[#allocation2 + $0x72] sm:$0xff]
        %v5850 = vpack.c.bf16 %v5842, %v5842
        %v5851 = vpack.c.bf16 %v5843, %v5843
        %v5852 = vpack.c.bf16 %v5844, %v5844
        %v5853 = vpack.c.bf16 %v5845, %v5845
        %v5854 = vpack.c.bf16 %v5846, %v5846
        %v5855 = vpack.c.bf16 %v5847, %v5847
        %v5856 = vpack.c.bf16 %v5848, %v5848
        %v5857 = vpack.c.bf16 %v5849, %v5849
        %v5858 = vld [vmem:[#allocation3] sm:$0xff]
        %v5859 = vld [vmem:[#allocation3 + $0x8] sm:$0xff]
        %v5860 = vld [vmem:[#allocation3 + $0x10] sm:$0xff]
        %v5861 = vld [vmem:[#allocation3 + $0x18] sm:$0xff]
        %v5862 = vld [vmem:[#allocation3 + $0x20] sm:$0xff]
        %v5863 = vld [vmem:[#allocation3 + $0x28] sm:$0xff]
        %v5864 = vld [vmem:[#allocation3 + $0x30] sm:$0xff]
        %v5865 = vld [vmem:[#allocation3 + $0x38] sm:$0xff]
        %s5866 = scalar_lea.vmem [#allocation4], 128
        %v5867 = vld [vmem:[%s5866] sm:$0xf]
        %v5868 = vld [vmem:[%s5866 + $0x4] sm:$0xf]
        %v5869 = vld [vmem:[%s5866 + $0x8] sm:$0xf]
        %v5870 = vld [vmem:[%s5866 + $0xc] sm:$0xf]
        %v5871 = vld [vmem:[%s5866 + $0x10] sm:$0xf]
        %v5872 = vld [vmem:[%s5866 + $0x14] sm:$0xf]
        %v5873 = vld [vmem:[%s5866 + $0x18] sm:$0xf]
        %v5874 = vld [vmem:[%s5866 + $0x1c] sm:$0xf]
        %v5875 = vld [vmem:[%s5866 + $0x20] sm:$0xf]
        %v5876 = vld [vmem:[%s5866 + $0x24] sm:$0xf]
        %v5877 = vld [vmem:[%s5866 + $0x28] sm:$0xf]
        %v5878 = vld [vmem:[%s5866 + $0x2c] sm:$0xf]
        %v5879 = vld [vmem:[%s5866 + $0x30] sm:$0xf]
        %v5880 = vld [vmem:[%s5866 + $0x34] sm:$0xf]
        %v5881 = vld [vmem:[%s5866 + $0x38] sm:$0xf]
        %v5882 = vld [vmem:[%s5866 + $0x3c] sm:$0xf]
        %v5891 = vunpack.c.l.b16 %v5850
        %v5892 = vunpack.c.l.b16 %v5851
        %v5893 = vunpack.c.l.b16 %v5852
        %v5894 = vunpack.c.l.b16 %v5853
        %v5895 = vunpack.c.l.b16 %v5854
        %v5896 = vunpack.c.l.b16 %v5855
        %v5897 = vunpack.c.l.b16 %v5856
        %v5898 = vunpack.c.l.b16 %v5857
        %v5899 = vpack.c.b16 %v5892, %v5891
        %v5900 = vpack.c.b16 %v5894, %v5893
        %v5901 = vpack.c.b16 %v5896, %v5895
        %v5902 = vpack.c.b16 %v5898, %v5897
        %v5923 = vunpack.c.l.b16 %v5867
        %v5924 = vunpack.c.l.b16 %v5868
        %v5925 = vunpack.c.l.b16 %v5869
        %v5926 = vunpack.c.l.b16 %v5870
        %v5927 = vunpack.c.l.b16 %v5871
        %v5928 = vunpack.c.l.b16 %v5872
        %v5929 = vunpack.c.l.b16 %v5873
        %v5930 = vunpack.c.l.b16 %v5874
        %v5931 = vunpack.c.l.b16 %v5875
        %v5932 = vunpack.c.l.b16 %v5876
        %v5933 = vunpack.c.l.b16 %v5877
        %v5934 = vunpack.c.l.b16 %v5878
        %v5935 = vunpack.c.l.b16 %v5879
        %v5936 = vunpack.c.l.b16 %v5880
        %v5937 = vunpack.c.l.b16 %v5881
        %v5938 = vunpack.c.l.b16 %v5882
        %v5939 = vpack.c.b16 %v5924, %v5923
        %v5940 = vpack.c.b16 %v5926, %v5925
        %v5941 = vpack.c.b16 %v5928, %v5927
        %v5942 = vpack.c.b16 %v5930, %v5929
        %v5943 = vpack.c.b16 %v5932, %v5931
        %v5944 = vpack.c.b16 %v5934, %v5933
        %v5945 = vpack.c.b16 %v5936, %v5935
        %v5946 = vpack.c.b16 %v5938, %v5937
        %5955 = vmatpush.bf16.msra.mxu0 %v5946
        %5956 = vmatpush.bf16.msra.mxu0 %v5945
        %5957 = vmatpush.bf16.msra.mxu0 %v5944
        %5958 = vmatpush.bf16.msra.mxu0 %v5943
        %5959 = vmatpush.bf16.msra.mxu0 %v5942
        %5960 = vmatpush.bf16.msra.mxu0 %v5941
        %5961 = vmatpush.bf16.msra.mxu0 %v5940
        %5962 = vmatpush.bf16.msra.mxu0 %v5939
        %5963 = vmatmul.bf16.gmra.mxu0 %v5899
        %v5964 = vpop.f32.mrf.mxu0
        %v5965 = vadd.f32 0.0, %v5964
        %v5966 = vpop.f32.mrf.mxu0
        %v5967 = vadd.f32 0.0, %v5966
        %5968 = vmatmul.bf16.gmra.mxu0 %v5900
        %v5969 = vpop.f32.mrf.mxu0
        %v5970 = vadd.f32 0.0, %v5969
        %v5971 = vpop.f32.mrf.mxu0
        %v5972 = vadd.f32 0.0, %v5971
        %5973 = vmatmul.bf16.gmra.mxu0 %v5901
        %v5974 = vpop.f32.mrf.mxu0
        %v5975 = vadd.f32 0.0, %v5974
        %v5976 = vpop.f32.mrf.mxu0
        %v5977 = vadd.f32 0.0, %v5976
        %5978 = vmatmul.bf16.gmra.mxu0 %v5902
        %v5979 = vpop.f32.mrf.mxu0
        %v5980 = vadd.f32 0.0, %v5979
        %v5981 = vpop.f32.mrf.mxu0
        %v5982 = vadd.f32 0.0, %v5981
        %5983 = vdwg.mxu0
        %v5984 = vadd.f32 %v5858, %v5965
        %v5985 = vadd.f32 %v5859, %v5967
        %v5986 = vadd.f32 %v5860, %v5970
        %v5987 = vadd.f32 %v5861, %v5972
        %v5988 = vadd.f32 %v5862, %v5975
        %v5989 = vadd.f32 %v5863, %v5977
        %v5990 = vadd.f32 %v5864, %v5980
        %v5991 = vadd.f32 %v5865, %v5982
        %5992 = vst [vmem:[#allocation3] sm:$0xff] %v5984
        %5993 = vst [vmem:[#allocation3 + $0x8] sm:$0xff] %v5985
        %5994 = vst [vmem:[#allocation3 + $0x10] sm:$0xff] %v5986
        %5995 = vst [vmem:[#allocation3 + $0x18] sm:$0xff] %v5987
        %5996 = vst [vmem:[#allocation3 + $0x20] sm:$0xff] %v5988
        %5997 = vst [vmem:[#allocation3 + $0x28] sm:$0xff] %v5989
        %5998 = vst [vmem:[#allocation3 + $0x30] sm:$0xff] %v5990
        %5999 = vst [vmem:[#allocation3 + $0x38] sm:$0xff] %v5991
        %v6000 = vld [vmem:[%s5510] sm:$0xff]
        %v6001 = vld [vmem:[%s5510 + $0x10] sm:$0xff]
        %v6002 = vld [vmem:[%s5510 + $0x20] sm:$0xff]
        %v6003 = vld [vmem:[%s5510 + $0x30] sm:$0xff]
        %v6004 = vld [vmem:[%s5510 + $0x40] sm:$0xff]
        %v6005 = vld [vmem:[%s5510 + $0x50] sm:$0xff]
        %v6006 = vld [vmem:[%s5510 + $0x60] sm:$0xff]
        %v6007 = vld [vmem:[%s5510 + $0x70] sm:$0xff]
        %v6008 = vpack.c.bf16 %v6000, %v6000
        %v6009 = vpack.c.bf16 %v6001, %v6001
        %v6010 = vpack.c.bf16 %v6002, %v6002
        %v6011 = vpack.c.bf16 %v6003, %v6003
        %v6012 = vpack.c.bf16 %v6004, %v6004
        %v6013 = vpack.c.bf16 %v6005, %v6005
        %v6014 = vpack.c.bf16 %v6006, %v6006
        %v6015 = vpack.c.bf16 %v6007, %v6007
        %v6016 = vld [vmem:[#allocation3] sm:$0xff]
        %v6017 = vld [vmem:[#allocation3 + $0x8] sm:$0xff]
        %v6018 = vld [vmem:[#allocation3 + $0x10] sm:$0xff]
        %v6019 = vld [vmem:[#allocation3 + $0x18] sm:$0xff]
        %v6020 = vld [vmem:[#allocation3 + $0x20] sm:$0xff]
        %v6021 = vld [vmem:[#allocation3 + $0x28] sm:$0xff]
        %v6022 = vld [vmem:[#allocation3 + $0x30] sm:$0xff]
        %v6023 = vld [vmem:[#allocation3 + $0x38] sm:$0xff]
        %s6024 = scalar_lea.vmem [#allocation4], 192
        %v6025 = vld [vmem:[%s6024] sm:$0xf]
        %v6026 = vld [vmem:[%s6024 + $0x4] sm:$0xf]
        %v6027 = vld [vmem:[%s6024 + $0x8] sm:$0xf]
        %v6028 = vld [vmem:[%s6024 + $0xc] sm:$0xf]
        %v6029 = vld [vmem:[%s6024 + $0x10] sm:$0xf]
        %v6030 = vld [vmem:[%s6024 + $0x14] sm:$0xf]
        %v6031 = vld [vmem:[%s6024 + $0x18] sm:$0xf]
        %v6032 = vld [vmem:[%s6024 + $0x1c] sm:$0xf]
        %v6033 = vld [vmem:[%s6024 + $0x20] sm:$0xf]
        %v6034 = vld [vmem:[%s6024 + $0x24] sm:$0xf]
        %v6035 = vld [vmem:[%s6024 + $0x28] sm:$0xf]
        %v6036 = vld [vmem:[%s6024 + $0x2c] sm:$0xf]
        %v6037 = vld [vmem:[%s6024 + $0x30] sm:$0xf]
        %v6038 = vld [vmem:[%s6024 + $0x34] sm:$0xf]
        %v6039 = vld [vmem:[%s6024 + $0x38] sm:$0xf]
        %v6040 = vld [vmem:[%s6024 + $0x3c] sm:$0xf]
        %v6049 = vunpack.c.l.b16 %v6008
        %v6050 = vunpack.c.l.b16 %v6009
        %v6051 = vunpack.c.l.b16 %v6010
        %v6052 = vunpack.c.l.b16 %v6011
        %v6053 = vunpack.c.l.b16 %v6012
        %v6054 = vunpack.c.l.b16 %v6013
        %v6055 = vunpack.c.l.b16 %v6014
        %v6056 = vunpack.c.l.b16 %v6015
        %v6057 = vpack.c.b16 %v6050, %v6049
        %v6058 = vpack.c.b16 %v6052, %v6051
        %v6059 = vpack.c.b16 %v6054, %v6053
        %v6060 = vpack.c.b16 %v6056, %v6055
        %v6081 = vunpack.c.l.b16 %v6025
        %v6082 = vunpack.c.l.b16 %v6026
        %v6083 = vunpack.c.l.b16 %v6027
        %v6084 = vunpack.c.l.b16 %v6028
        %v6085 = vunpack.c.l.b16 %v6029
        %v6086 = vunpack.c.l.b16 %v6030
        %v6087 = vunpack.c.l.b16 %v6031
        %v6088 = vunpack.c.l.b16 %v6032
        %v6089 = vunpack.c.l.b16 %v6033
        %v6090 = vunpack.c.l.b16 %v6034
        %v6091 = vunpack.c.l.b16 %v6035
        %v6092 = vunpack.c.l.b16 %v6036
        %v6093 = vunpack.c.l.b16 %v6037
        %v6094 = vunpack.c.l.b16 %v6038
        %v6095 = vunpack.c.l.b16 %v6039
        %v6096 = vunpack.c.l.b16 %v6040
        %v6097 = vpack.c.b16 %v6082, %v6081
        %v6098 = vpack.c.b16 %v6084, %v6083
        %v6099 = vpack.c.b16 %v6086, %v6085
        %v6100 = vpack.c.b16 %v6088, %v6087
        %v6101 = vpack.c.b16 %v6090, %v6089
        %v6102 = vpack.c.b16 %v6092, %v6091
        %v6103 = vpack.c.b16 %v6094, %v6093
        %v6104 = vpack.c.b16 %v6096, %v6095
        %6113 = vmatpush.bf16.msra.mxu0 %v6104
        %6114 = vmatpush.bf16.msra.mxu0 %v6103
        %6115 = vmatpush.bf16.msra.mxu0 %v6102
        %6116 = vmatpush.bf16.msra.mxu0 %v6101
        %6117 = vmatpush.bf16.msra.mxu0 %v6100
        %6118 = vmatpush.bf16.msra.mxu0 %v6099
        %6119 = vmatpush.bf16.msra.mxu0 %v6098
        %6120 = vmatpush.bf16.msra.mxu0 %v6097
        %6121 = vmatmul.bf16.gmra.mxu0 %v6057
        %v6122 = vpop.f32.mrf.mxu0
        %v6123 = vadd.f32 0.0, %v6122
        %v6124 = vpop.f32.mrf.mxu0
        %v6125 = vadd.f32 0.0, %v6124
        %6126 = vmatmul.bf16.gmra.mxu0 %v6058
        %v6127 = vpop.f32.mrf.mxu0
        %v6128 = vadd.f32 0.0, %v6127
        %v6129 = vpop.f32.mrf.mxu0
        %v6130 = vadd.f32 0.0, %v6129
        %6131 = vmatmul.bf16.gmra.mxu0 %v6059
        %v6132 = vpop.f32.mrf.mxu0
        %v6133 = vadd.f32 0.0, %v6132
        %v6134 = vpop.f32.mrf.mxu0
        %v6135 = vadd.f32 0.0, %v6134
        %6136 = vmatmul.bf16.gmra.mxu0 %v6060
        %v6137 = vpop.f32.mrf.mxu0
        %v6138 = vadd.f32 0.0, %v6137
        %v6139 = vpop.f32.mrf.mxu0
        %v6140 = vadd.f32 0.0, %v6139
        %6141 = vdwg.mxu0
        %v6142 = vadd.f32 %v6016, %v6123
        %v6143 = vadd.f32 %v6017, %v6125
        %v6144 = vadd.f32 %v6018, %v6128
        %v6145 = vadd.f32 %v6019, %v6130
        %v6146 = vadd.f32 %v6020, %v6133
        %v6147 = vadd.f32 %v6021, %v6135
        %v6148 = vadd.f32 %v6022, %v6138
        %v6149 = vadd.f32 %v6023, %v6140
        %6150 = vst [vmem:[#allocation3] sm:$0xff] %v6142
        %6151 = vst [vmem:[#allocation3 + $0x8] sm:$0xff] %v6143
        %6152 = vst [vmem:[#allocation3 + $0x10] sm:$0xff] %v6144
        %6153 = vst [vmem:[#allocation3 + $0x18] sm:$0xff] %v6145
        %6154 = vst [vmem:[#allocation3 + $0x20] sm:$0xff] %v6146
        %6155 = vst [vmem:[#allocation3 + $0x28] sm:$0xff] %v6147
        %6156 = vst [vmem:[#allocation3 + $0x30] sm:$0xff] %v6148
        %6157 = vst [vmem:[#allocation3 + $0x38] sm:$0xff] %v6149
        %v6158 = vld [vmem:[%s5510 + $0x1] sm:$0xff]
        %v6159 = vld [vmem:[%s5510 + $0x11] sm:$0xff]
        %v6160 = vld [vmem:[%s5510 + $0x21] sm:$0xff]
        %v6161 = vld [vmem:[%s5510 + $0x31] sm:$0xff]
        %v6162 = vld [vmem:[%s5510 + $0x41] sm:$0xff]
        %v6163 = vld [vmem:[%s5510 + $0x51] sm:$0xff]
        %v6164 = vld [vmem:[%s5510 + $0x61] sm:$0xff]
        %v6165 = vld [vmem:[%s5510 + $0x71] sm:$0xff]
        %v6166 = vpack.c.bf16 %v6158, %v6158
        %v6167 = vpack.c.bf16 %v6159, %v6159
        %v6168 = vpack.c.bf16 %v6160, %v6160
        %v6169 = vpack.c.bf16 %v6161, %v6161
        %v6170 = vpack.c.bf16 %v6162, %v6162
        %v6171 = vpack.c.bf16 %v6163, %v6163
        %v6172 = vpack.c.bf16 %v6164, %v6164
        %v6173 = vpack.c.bf16 %v6165, %v6165
        %v6174 = vld [vmem:[#allocation3] sm:$0xff]
        %v6175 = vld [vmem:[#allocation3 + $0x8] sm:$0xff]
        %v6176 = vld [vmem:[#allocation3 + $0x10] sm:$0xff]
        %v6177 = vld [vmem:[#allocation3 + $0x18] sm:$0xff]
        %v6178 = vld [vmem:[#allocation3 + $0x20] sm:$0xff]
        %v6179 = vld [vmem:[#allocation3 + $0x28] sm:$0xff]
        %v6180 = vld [vmem:[#allocation3 + $0x30] sm:$0xff]
        %v6181 = vld [vmem:[#allocation3 + $0x38] sm:$0xff]
        %s6182 = scalar_lea.vmem [#allocation4], 256
        %v6183 = vld [vmem:[%s6182] sm:$0xf]
        %v6184 = vld [vmem:[%s6182 + $0x4] sm:$0xf]
        %v6185 = vld [vmem:[%s6182 + $0x8] sm:$0xf]
        %v6186 = vld [vmem:[%s6182 + $0xc] sm:$0xf]
        %v6187 = vld [vmem:[%s6182 + $0x10] sm:$0xf]
        %v6188 = vld [vmem:[%s6182 + $0x14] sm:$0xf]
        %v6189 = vld [vmem:[%s6182 + $0x18] sm:$0xf]
        %v6190 = vld [vmem:[%s6182 + $0x1c] sm:$0xf]
        %v6191 = vld [vmem:[%s6182 + $0x20] sm:$0xf]
        %v6192 = vld [vmem:[%s6182 + $0x24] sm:$0xf]
        %v6193 = vld [vmem:[%s6182 + $0x28] sm:$0xf]
        %v6194 = vld [vmem:[%s6182 + $0x2c] sm:$0xf]
        %v6195 = vld [vmem:[%s6182 + $0x30] sm:$0xf]
        %v6196 = vld [vmem:[%s6182 + $0x34] sm:$0xf]
        %v6197 = vld [vmem:[%s6182 + $0x38] sm:$0xf]
        %v6198 = vld [vmem:[%s6182 + $0x3c] sm:$0xf]
        %v6207 = vunpack.c.l.b16 %v6166
        %v6208 = vunpack.c.l.b16 %v6167
        %v6209 = vunpack.c.l.b16 %v6168
        %v6210 = vunpack.c.l.b16 %v6169
        %v6211 = vunpack.c.l.b16 %v6170
        %v6212 = vunpack.c.l.b16 %v6171
        %v6213 = vunpack.c.l.b16 %v6172
        %v6214 = vunpack.c.l.b16 %v6173
        %v6215 = vpack.c.b16 %v6208, %v6207
        %v6216 = vpack.c.b16 %v6210, %v6209
        %v6217 = vpack.c.b16 %v6212, %v6211
        %v6218 = vpack.c.b16 %v6214, %v6213
        %v6239 = vunpack.c.l.b16 %v6183
        %v6240 = vunpack.c.l.b16 %v6184
        %v6241 = vunpack.c.l.b16 %v6185
        %v6242 = vunpack.c.l.b16 %v6186
        %v6243 = vunpack.c.l.b16 %v6187
        %v6244 = vunpack.c.l.b16 %v6188
        %v6245 = vunpack.c.l.b16 %v6189
        %v6246 = vunpack.c.l.b16 %v6190
        %v6247 = vunpack.c.l.b16 %v6191
        %v6248 = vunpack.c.l.b16 %v6192
        %v6249 = vunpack.c.l.b16 %v6193
        %v6250 = vunpack.c.l.b16 %v6194
        %v6251 = vunpack.c.l.b16 %v6195
        %v6252 = vunpack.c.l.b16 %v6196
        %v6253 = vunpack.c.l.b16 %v6197
        %v6254 = vunpack.c.l.b16 %v6198
        %v6255 = vpack.c.b16 %v6240, %v6239
        %v6256 = vpack.c.b16 %v6242, %v6241
        %v6257 = vpack.c.b16 %v6244, %v6243
        %v6258 = vpack.c.b16 %v6246, %v6245
        %v6259 = vpack.c.b16 %v6248, %v6247
        %v6260 = vpack.c.b16 %v6250, %v6249
        %v6261 = vpack.c.b16 %v6252, %v6251
        %v6262 = vpack.c.b16 %v6254, %v6253
        %6271 = vmatpush.bf16.msra.mxu0 %v6262
        %6272 = vmatpush.bf16.msra.mxu0 %v6261
        %6273 = vmatpush.bf16.msra.mxu0 %v6260
        %6274 = vmatpush.bf16.msra.mxu0 %v6259
        %6275 = vmatpush.bf16.msra.mxu0 %v6258
        %6276 = vmatpush.bf16.msra.mxu0 %v6257
        %6277 = vmatpush.bf16.msra.mxu0 %v6256
        %6278 = vmatpush.bf16.msra.mxu0 %v6255
        %6279 = vmatmul.bf16.gmra.mxu0 %v6215
        %v6280 = vpop.f32.mrf.mxu0
        %v6281 = vadd.f32 0.0, %v6280
        %v6282 = vpop.f32.mrf.mxu0
        %v6283 = vadd.f32 0.0, %v6282
        %6284 = vmatmul.bf16.gmra.mxu0 %v6216
        %v6285 = vpop.f32.mrf.mxu0
        %v6286 = vadd.f32 0.0, %v6285
        %v6287 = vpop.f32.mrf.mxu0
        %v6288 = vadd.f32 0.0, %v6287
        %6289 = vmatmul.bf16.gmra.mxu0 %v6217
        %v6290 = vpop.f32.mrf.mxu0
        %v6291 = vadd.f32 0.0, %v6290
        %v6292 = vpop.f32.mrf.mxu0
        %v6293 = vadd.f32 0.0, %v6292
        %6294 = vmatmul.bf16.gmra.mxu0 %v6218
        %v6295 = vpop.f32.mrf.mxu0
        %v6296 = vadd.f32 0.0, %v6295
        %v6297 = vpop.f32.mrf.mxu0
        %v6298 = vadd.f32 0.0, %v6297
        %6299 = vdwg.mxu0
        %v6300 = vadd.f32 %v6174, %v6281
        %v6301 = vadd.f32 %v6175, %v6283
        %v6302 = vadd.f32 %v6176, %v6286
        %v6303 = vadd.f32 %v6177, %v6288
        %v6304 = vadd.f32 %v6178, %v6291
        %v6305 = vadd.f32 %v6179, %v6293
        %v6306 = vadd.f32 %v6180, %v6296
        %v6307 = vadd.f32 %v6181, %v6298
        %6308 = vst [vmem:[#allocation3] sm:$0xff] %v6300
        %6309 = vst [vmem:[#allocation3 + $0x8] sm:$0xff] %v6301
        %6310 = vst [vmem:[#allocation3 + $0x10] sm:$0xff] %v6302
        %6311 = vst [vmem:[#allocation3 + $0x18] sm:$0xff] %v6303
        %6312 = vst [vmem:[#allocation3 + $0x20] sm:$0xff] %v6304
        %6313 = vst [vmem:[#allocation3 + $0x28] sm:$0xff] %v6305
        %6314 = vst [vmem:[#allocation3 + $0x30] sm:$0xff] %v6306
        %6315 = vst [vmem:[#allocation3 + $0x38] sm:$0xff] %v6307
        %v6316 = vld [vmem:[%s5510 + $0x2] sm:$0xff]
        %v6317 = vld [vmem:[%s5510 + $0x12] sm:$0xff]
        %v6318 = vld [vmem:[%s5510 + $0x22] sm:$0xff]
        %v6319 = vld [vmem:[%s5510 + $0x32] sm:$0xff]
        %v6320 = vld [vmem:[%s5510 + $0x42] sm:$0xff]
        %v6321 = vld [vmem:[%s5510 + $0x52] sm:$0xff]
        %v6322 = vld [vmem:[%s5510 + $0x62] sm:$0xff]
        %v6323 = vld [vmem:[%s5510 + $0x72] sm:$0xff]
        %v6324 = vpack.c.bf16 %v6316, %v6316
        %v6325 = vpack.c.bf16 %v6317, %v6317
        %v6326 = vpack.c.bf16 %v6318, %v6318
        %v6327 = vpack.c.bf16 %v6319, %v6319
        %v6328 = vpack.c.bf16 %v6320, %v6320
        %v6329 = vpack.c.bf16 %v6321, %v6321
        %v6330 = vpack.c.bf16 %v6322, %v6322
        %v6331 = vpack.c.bf16 %v6323, %v6323
        %v6332 = vld [vmem:[#allocation3] sm:$0xff]
        %v6333 = vld [vmem:[#allocation3 + $0x8] sm:$0xff]
        %v6334 = vld [vmem:[#allocation3 + $0x10] sm:$0xff]
        %v6335 = vld [vmem:[#allocation3 + $0x18] sm:$0xff]
        %v6336 = vld [vmem:[#allocation3 + $0x20] sm:$0xff]
        %v6337 = vld [vmem:[#allocation3 + $0x28] sm:$0xff]
        %v6338 = vld [vmem:[#allocation3 + $0x30] sm:$0xff]
        %v6339 = vld [vmem:[#allocation3 + $0x38] sm:$0xff]
        %s6340 = scalar_lea.vmem [#allocation4], 320
        %v6341 = vld [vmem:[%s6340] sm:$0xf]
        %v6342 = vld [vmem:[%s6340 + $0x4] sm:$0xf]
        %v6343 = vld [vmem:[%s6340 + $0x8] sm:$0xf]
        %v6344 = vld [vmem:[%s6340 + $0xc] sm:$0xf]
        %v6345 = vld [vmem:[%s6340 + $0x10] sm:$0xf]
        %v6346 = vld [vmem:[%s6340 + $0x14] sm:$0xf]
        %v6347 = vld [vmem:[%s6340 + $0x18] sm:$0xf]
        %v6348 = vld [vmem:[%s6340 + $0x1c] sm:$0xf]
        %v6349 = vld [vmem:[%s6340 + $0x20] sm:$0xf]
        %v6350 = vld [vmem:[%s6340 + $0x24] sm:$0xf]
        %v6351 = vld [vmem:[%s6340 + $0x28] sm:$0xf]
        %v6352 = vld [vmem:[%s6340 + $0x2c] sm:$0xf]
        %v6353 = vld [vmem:[%s6340 + $0x30] sm:$0xf]
        %v6354 = vld [vmem:[%s6340 + $0x34] sm:$0xf]
        %v6355 = vld [vmem:[%s6340 + $0x38] sm:$0xf]
        %v6356 = vld [vmem:[%s6340 + $0x3c] sm:$0xf]
        %v6365 = vunpack.c.l.b16 %v6324
        %v6366 = vunpack.c.l.b16 %v6325
        %v6367 = vunpack.c.l.b16 %v6326
        %v6368 = vunpack.c.l.b16 %v6327
        %v6369 = vunpack.c.l.b16 %v6328
        %v6370 = vunpack.c.l.b16 %v6329
        %v6371 = vunpack.c.l.b16 %v6330
        %v6372 = vunpack.c.l.b16 %v6331
        %v6373 = vpack.c.b16 %v6366, %v6365
        %v6374 = vpack.c.b16 %v6368, %v6367
        %v6375 = vpack.c.b16 %v6370, %v6369
        %v6376 = vpack.c.b16 %v6372, %v6371
        %v6397 = vunpack.c.l.b16 %v6341
        %v6398 = vunpack.c.l.b16 %v6342
        %v6399 = vunpack.c.l.b16 %v6343
        %v6400 = vunpack.c.l.b16 %v6344
        %v6401 = vunpack.c.l.b16 %v6345
        %v6402 = vunpack.c.l.b16 %v6346
        %v6403 = vunpack.c.l.b16 %v6347
        %v6404 = vunpack.c.l.b16 %v6348
        %v6405 = vunpack.c.l.b16 %v6349
        %v6406 = vunpack.c.l.b16 %v6350
        %v6407 = vunpack.c.l.b16 %v6351
        %v6408 = vunpack.c.l.b16 %v6352
        %v6409 = vunpack.c.l.b16 %v6353
        %v6410 = vunpack.c.l.b16 %v6354
        %v6411 = vunpack.c.l.b16 %v6355
        %v6412 = vunpack.c.l.b16 %v6356
        %v6413 = vpack.c.b16 %v6398, %v6397
        %v6414 = vpack.c.b16 %v6400, %v6399
        %v6415 = vpack.c.b16 %v6402, %v6401
        %v6416 = vpack.c.b16 %v6404, %v6403
        %v6417 = vpack.c.b16 %v6406, %v6405
        %v6418 = vpack.c.b16 %v6408, %v6407
        %v6419 = vpack.c.b16 %v6410, %v6409
        %v6420 = vpack.c.b16 %v6412, %v6411
        %6429 = vmatpush.bf16.msra.mxu0 %v6420
        %6430 = vmatpush.bf16.msra.mxu0 %v6419
        %6431 = vmatpush.bf16.msra.mxu0 %v6418
        %6432 = vmatpush.bf16.msra.mxu0 %v6417
        %6433 = vmatpush.bf16.msra.mxu0 %v6416
        %6434 = vmatpush.bf16.msra.mxu0 %v6415
        %6435 = vmatpush.bf16.msra.mxu0 %v6414
        %6436 = vmatpush.bf16.msra.mxu0 %v6413
        %6437 = vmatmul.bf16.gmra.mxu0 %v6373
        %v6438 = vpop.f32.mrf.mxu0
        %v6439 = vadd.f32 0.0, %v6438
        %v6440 = vpop.f32.mrf.mxu0
        %v6441 = vadd.f32 0.0, %v6440
        %6442 = vmatmul.bf16.gmra.mxu0 %v6374
        %v6443 = vpop.f32.mrf.mxu0
        %v6444 = vadd.f32 0.0, %v6443
        %v6445 = vpop.f32.mrf.mxu0
        %v6446 = vadd.f32 0.0, %v6445
        %6447 = vmatmul.bf16.gmra.mxu0 %v6375
        %v6448 = vpop.f32.mrf.mxu0
        %v6449 = vadd.f32 0.0, %v6448
        %v6450 = vpop.f32.mrf.mxu0
        %v6451 = vadd.f32 0.0, %v6450
        %6452 = vmatmul.bf16.gmra.mxu0 %v6376
        %v6453 = vpop.f32.mrf.mxu0
        %v6454 = vadd.f32 0.0, %v6453
        %v6455 = vpop.f32.mrf.mxu0
        %v6456 = vadd.f32 0.0, %v6455
        %6457 = vdwg.mxu0
        %v6458 = vadd.f32 %v6332, %v6439
        %v6459 = vadd.f32 %v6333, %v6441
        %v6460 = vadd.f32 %v6334, %v6444
        %v6461 = vadd.f32 %v6335, %v6446
        %v6462 = vadd.f32 %v6336, %v6449
        %v6463 = vadd.f32 %v6337, %v6451
        %v6464 = vadd.f32 %v6338, %v6454
        %v6465 = vadd.f32 %v6339, %v6456
        %6466 = vst [vmem:[#allocation3] sm:$0xff] %v6458
        %6467 = vst [vmem:[#allocation3 + $0x8] sm:$0xff] %v6459
        %6468 = vst [vmem:[#allocation3 + $0x10] sm:$0xff] %v6460
        %6469 = vst [vmem:[#allocation3 + $0x18] sm:$0xff] %v6461
        %6470 = vst [vmem:[#allocation3 + $0x20] sm:$0xff] %v6462
        %6471 = vst [vmem:[#allocation3 + $0x28] sm:$0xff] %v6463
        %6472 = vst [vmem:[#allocation3 + $0x30] sm:$0xff] %v6464
        %6473 = vst [vmem:[#allocation3 + $0x38] sm:$0xff] %v6465
        %s6474 = scalar_lea.vmem [#allocation2], 32
        %v6475 = vld [vmem:[%s6474] sm:$0xff]
        %v6476 = vld [vmem:[%s6474 + $0x10] sm:$0xff]
        %v6477 = vld [vmem:[%s6474 + $0x20] sm:$0xff]
        %v6478 = vld [vmem:[%s6474 + $0x30] sm:$0xff]
        %v6479 = vld [vmem:[%s6474 + $0x40] sm:$0xff]
        %v6480 = vld [vmem:[%s6474 + $0x50] sm:$0xff]
        %v6481 = vld [vmem:[%s6474 + $0x60] sm:$0xff]
        %v6482 = vld [vmem:[%s6474 + $0x70] sm:$0xff]
        %v6483 = vpack.c.bf16 %v6475, %v6475
        %v6484 = vpack.c.bf16 %v6476, %v6476
        %v6485 = vpack.c.bf16 %v6477, %v6477
        %v6486 = vpack.c.bf16 %v6478, %v6478
        %v6487 = vpack.c.bf16 %v6479, %v6479
        %v6488 = vpack.c.bf16 %v6480, %v6480
        %v6489 = vpack.c.bf16 %v6481, %v6481
        %v6490 = vpack.c.bf16 %v6482, %v6482
        %v6491 = vld [vmem:[#allocation3] sm:$0xff]
        %v6492 = vld [vmem:[#allocation3 + $0x8] sm:$0xff]
        %v6493 = vld [vmem:[#allocation3 + $0x10] sm:$0xff]
        %v6494 = vld [vmem:[#allocation3 + $0x18] sm:$0xff]
        %v6495 = vld [vmem:[#allocation3 + $0x20] sm:$0xff]
        %v6496 = vld [vmem:[#allocation3 + $0x28] sm:$0xff]
        %v6497 = vld [vmem:[#allocation3 + $0x30] sm:$0xff]
        %v6498 = vld [vmem:[#allocation3 + $0x38] sm:$0xff]
        %s6499 = scalar_lea.vmem [#allocation4], 384
        %v6500 = vld [vmem:[%s6499] sm:$0xf]
        %v6501 = vld [vmem:[%s6499 + $0x4] sm:$0xf]
        %v6502 = vld [vmem:[%s6499 + $0x8] sm:$0xf]
        %v6503 = vld [vmem:[%s6499 + $0xc] sm:$0xf]
        %v6504 = vld [vmem:[%s6499 + $0x10] sm:$0xf]
        %v6505 = vld [vmem:[%s6499 + $0x14] sm:$0xf]
        %v6506 = vld [vmem:[%s6499 + $0x18] sm:$0xf]
        %v6507 = vld [vmem:[%s6499 + $0x1c] sm:$0xf]
        %v6508 = vld [vmem:[%s6499 + $0x20] sm:$0xf]
        %v6509 = vld [vmem:[%s6499 + $0x24] sm:$0xf]
        %v6510 = vld [vmem:[%s6499 + $0x28] sm:$0xf]
        %v6511 = vld [vmem:[%s6499 + $0x2c] sm:$0xf]
        %v6512 = vld [vmem:[%s6499 + $0x30] sm:$0xf]
        %v6513 = vld [vmem:[%s6499 + $0x34] sm:$0xf]
        %v6514 = vld [vmem:[%s6499 + $0x38] sm:$0xf]
        %v6515 = vld [vmem:[%s6499 + $0x3c] sm:$0xf]
        %v6524 = vunpack.c.l.b16 %v6483
        %v6525 = vunpack.c.l.b16 %v6484
        %v6526 = vunpack.c.l.b16 %v6485
        %v6527 = vunpack.c.l.b16 %v6486
        %v6528 = vunpack.c.l.b16 %v6487
        %v6529 = vunpack.c.l.b16 %v6488
        %v6530 = vunpack.c.l.b16 %v6489
        %v6531 = vunpack.c.l.b16 %v6490
        %v6532 = vpack.c.b16 %v6525, %v6524
        %v6533 = vpack.c.b16 %v6527, %v6526
        %v6534 = vpack.c.b16 %v6529, %v6528
        %v6535 = vpack.c.b16 %v6531, %v6530
        %v6556 = vunpack.c.l.b16 %v6500
        %v6557 = vunpack.c.l.b16 %v6501
        %v6558 = vunpack.c.l.b16 %v6502
        %v6559 = vunpack.c.l.b16 %v6503
        %v6560 = vunpack.c.l.b16 %v6504
        %v6561 = vunpack.c.l.b16 %v6505
        %v6562 = vunpack.c.l.b16 %v6506
        %v6563 = vunpack.c.l.b16 %v6507
        %v6564 = vunpack.c.l.b16 %v6508
        %v6565 = vunpack.c.l.b16 %v6509
        %v6566 = vunpack.c.l.b16 %v6510
        %v6567 = vunpack.c.l.b16 %v6511
        %v6568 = vunpack.c.l.b16 %v6512
        %v6569 = vunpack.c.l.b16 %v6513
        %v6570 = vunpack.c.l.b16 %v6514
        %v6571 = vunpack.c.l.b16 %v6515
        %v6572 = vpack.c.b16 %v6557, %v6556
        %v6573 = vpack.c.b16 %v6559, %v6558
        %v6574 = vpack.c.b16 %v6561, %v6560
        %v6575 = vpack.c.b16 %v6563, %v6562
        %v6576 = vpack.c.b16 %v6565, %v6564
        %v6577 = vpack.c.b16 %v6567, %v6566
        %v6578 = vpack.c.b16 %v6569, %v6568
        %v6579 = vpack.c.b16 %v6571, %v6570
        %6588 = vmatpush.bf16.msra.mxu0 %v6579
        %6589 = vmatpush.bf16.msra.mxu0 %v6578
        %6590 = vmatpush.bf16.msra.mxu0 %v6577
        %6591 = vmatpush.bf16.msra.mxu0 %v6576
        %6592 = vmatpush.bf16.msra.mxu0 %v6575
        %6593 = vmatpush.bf16.msra.mxu0 %v6574
        %6594 = vmatpush.bf16.msra.mxu0 %v6573
        %6595 = vmatpush.bf16.msra.mxu0 %v6572
        %6596 = vmatmul.bf16.gmra.mxu0 %v6532
        %v6597 = vpop.f32.mrf.mxu0
        %v6598 = vadd.f32 0.0, %v6597
        %v6599 = vpop.f32.mrf.mxu0
        %v6600 = vadd.f32 0.0, %v6599
        %6601 = vmatmul.bf16.gmra.mxu0 %v6533
        %v6602 = vpop.f32.mrf.mxu0
        %v6603 = vadd.f32 0.0, %v6602
        %v6604 = vpop.f32.mrf.mxu0
        %v6605 = vadd.f32 0.0, %v6604
        %6606 = vmatmul.bf16.gmra.mxu0 %v6534
        %v6607 = vpop.f32.mrf.mxu0
        %v6608 = vadd.f32 0.0, %v6607
        %v6609 = vpop.f32.mrf.mxu0
        %v6610 = vadd.f32 0.0, %v6609
        %6611 = vmatmul.bf16.gmra.mxu0 %v6535
        %v6612 = vpop.f32.mrf.mxu0
        %v6613 = vadd.f32 0.0, %v6612
        %v6614 = vpop.f32.mrf.mxu0
        %v6615 = vadd.f32 0.0, %v6614
        %6616 = vdwg.mxu0
        %v6617 = vadd.f32 %v6491, %v6598
        %v6618 = vadd.f32 %v6492, %v6600
        %v6619 = vadd.f32 %v6493, %v6603
        %v6620 = vadd.f32 %v6494, %v6605
        %v6621 = vadd.f32 %v6495, %v6608
        %v6622 = vadd.f32 %v6496, %v6610
        %v6623 = vadd.f32 %v6497, %v6613
        %v6624 = vadd.f32 %v6498, %v6615
        %6625 = vst [vmem:[#allocation3] sm:$0xff] %v6617
        %6626 = vst [vmem:[#allocation3 + $0x8] sm:$0xff] %v6618
        %6627 = vst [vmem:[#allocation3 + $0x10] sm:$0xff] %v6619
        %6628 = vst [vmem:[#allocation3 + $0x18] sm:$0xff] %v6620
        %6629 = vst [vmem:[#allocation3 + $0x20] sm:$0xff] %v6621
        %6630 = vst [vmem:[#allocation3 + $0x28] sm:$0xff] %v6622
        %6631 = vst [vmem:[#allocation3 + $0x30] sm:$0xff] %v6623
        %6632 = vst [vmem:[#allocation3 + $0x38] sm:$0xff] %v6624
        %v6633 = vld [vmem:[%s6474 + $0x1] sm:$0xff]
        %v6634 = vld [vmem:[%s6474 + $0x11] sm:$0xff]
        %v6635 = vld [vmem:[%s6474 + $0x21] sm:$0xff]
        %v6636 = vld [vmem:[%s6474 + $0x31] sm:$0xff]
        %v6637 = vld [vmem:[%s6474 + $0x41] sm:$0xff]
        %v6638 = vld [vmem:[%s6474 + $0x51] sm:$0xff]
        %v6639 = vld [vmem:[%s6474 + $0x61] sm:$0xff]
        %v6640 = vld [vmem:[%s6474 + $0x71] sm:$0xff]
        %v6641 = vpack.c.bf16 %v6633, %v6633
        %v6642 = vpack.c.bf16 %v6634, %v6634
        %v6643 = vpack.c.bf16 %v6635, %v6635
        %v6644 = vpack.c.bf16 %v6636, %v6636
        %v6645 = vpack.c.bf16 %v6637, %v6637
        %v6646 = vpack.c.bf16 %v6638, %v6638
        %v6647 = vpack.c.bf16 %v6639, %v6639
        %v6648 = vpack.c.bf16 %v6640, %v6640
        %v6649 = vld [vmem:[#allocation3] sm:$0xff]
        %v6650 = vld [vmem:[#allocation3 + $0x8] sm:$0xff]
        %v6651 = vld [vmem:[#allocation3 + $0x10] sm:$0xff]
        %v6652 = vld [vmem:[#allocation3 + $0x18] sm:$0xff]
        %v6653 = vld [vmem:[#allocation3 + $0x20] sm:$0xff]
        %v6654 = vld [vmem:[#allocation3 + $0x28] sm:$0xff]
        %v6655 = vld [vmem:[#allocation3 + $0x30] sm:$0xff]
        %v6656 = vld [vmem:[#allocation3 + $0x38] sm:$0xff]
        %s6657 = scalar_lea.vmem [#allocation4], 448
        %v6658 = vld [vmem:[%s6657] sm:$0xf]
        %v6659 = vld [vmem:[%s6657 + $0x4] sm:$0xf]
        %v6660 = vld [vmem:[%s6657 + $0x8] sm:$0xf]
        %v6661 = vld [vmem:[%s6657 + $0xc] sm:$0xf]
        %v6662 = vld [vmem:[%s6657 + $0x10] sm:$0xf]
        %v6663 = vld [vmem:[%s6657 + $0x14] sm:$0xf]
        %v6664 = vld [vmem:[%s6657 + $0x18] sm:$0xf]
        %v6665 = vld [vmem:[%s6657 + $0x1c] sm:$0xf]
        %v6666 = vld [vmem:[%s6657 + $0x20] sm:$0xf]
        %v6667 = vld [vmem:[%s6657 + $0x24] sm:$0xf]
        %v6668 = vld [vmem:[%s6657 + $0x28] sm:$0xf]
        %v6669 = vld [vmem:[%s6657 + $0x2c] sm:$0xf]
        %v6670 = vld [vmem:[%s6657 + $0x30] sm:$0xf]
        %v6671 = vld [vmem:[%s6657 + $0x34] sm:$0xf]
        %v6672 = vld [vmem:[%s6657 + $0x38] sm:$0xf]
        %v6673 = vld [vmem:[%s6657 + $0x3c] sm:$0xf]
        %v6682 = vunpack.c.l.b16 %v6641
        %v6683 = vunpack.c.l.b16 %v6642
        %v6684 = vunpack.c.l.b16 %v6643
        %v6685 = vunpack.c.l.b16 %v6644
        %v6686 = vunpack.c.l.b16 %v6645
        %v6687 = vunpack.c.l.b16 %v6646
        %v6688 = vunpack.c.l.b16 %v6647
        %v6689 = vunpack.c.l.b16 %v6648
        %v6690 = vpack.c.b16 %v6683, %v6682
        %v6691 = vpack.c.b16 %v6685, %v6684
        %v6692 = vpack.c.b16 %v6687, %v6686
        %v6693 = vpack.c.b16 %v6689, %v6688
        %v6714 = vunpack.c.l.b16 %v6658
        %v6715 = vunpack.c.l.b16 %v6659
        %v6716 = vunpack.c.l.b16 %v6660
        %v6717 = vunpack.c.l.b16 %v6661
        %v6718 = vunpack.c.l.b16 %v6662
        %v6719 = vunpack.c.l.b16 %v6663
        %v6720 = vunpack.c.l.b16 %v6664
        %v6721 = vunpack.c.l.b16 %v6665
        %v6722 = vunpack.c.l.b16 %v6666
        %v6723 = vunpack.c.l.b16 %v6667
        %v6724 = vunpack.c.l.b16 %v6668
        %v6725 = vunpack.c.l.b16 %v6669
        %v6726 = vunpack.c.l.b16 %v6670
        %v6727 = vunpack.c.l.b16 %v6671
        %v6728 = vunpack.c.l.b16 %v6672
        %v6729 = vunpack.c.l.b16 %v6673
        %v6730 = vpack.c.b16 %v6715, %v6714
        %v6731 = vpack.c.b16 %v6717, %v6716
        %v6732 = vpack.c.b16 %v6719, %v6718
        %v6733 = vpack.c.b16 %v6721, %v6720
        %v6734 = vpack.c.b16 %v6723, %v6722
        %v6735 = vpack.c.b16 %v6725, %v6724
        %v6736 = vpack.c.b16 %v6727, %v6726
        %v6737 = vpack.c.b16 %v6729, %v6728
        %6746 = vmatpush.bf16.msra.mxu0 %v6737
        %6747 = vmatpush.bf16.msra.mxu0 %v6736
        %6748 = vmatpush.bf16.msra.mxu0 %v6735
        %6749 = vmatpush.bf16.msra.mxu0 %v6734
        %6750 = vmatpush.bf16.msra.mxu0 %v6733
        %6751 = vmatpush.bf16.msra.mxu0 %v6732
        %6752 = vmatpush.bf16.msra.mxu0 %v6731
        %6753 = vmatpush.bf16.msra.mxu0 %v6730
        %6754 = vmatmul.bf16.gmra.mxu0 %v6690
        %v6755 = vpop.f32.mrf.mxu0
        %v6756 = vadd.f32 0.0, %v6755
        %v6757 = vpop.f32.mrf.mxu0
        %v6758 = vadd.f32 0.0, %v6757
        %6759 = vmatmul.bf16.gmra.mxu0 %v6691
        %v6760 = vpop.f32.mrf.mxu0
        %v6761 = vadd.f32 0.0, %v6760
        %v6762 = vpop.f32.mrf.mxu0
        %v6763 = vadd.f32 0.0, %v6762
        %6764 = vmatmul.bf16.gmra.mxu0 %v6692
        %v6765 = vpop.f32.mrf.mxu0
        %v6766 = vadd.f32 0.0, %v6765
        %v6767 = vpop.f32.mrf.mxu0
        %v6768 = vadd.f32 0.0, %v6767
        %6769 = vmatmul.bf16.gmra.mxu0 %v6693
        %v6770 = vpop.f32.mrf.mxu0
        %v6771 = vadd.f32 0.0, %v6770
        %v6772 = vpop.f32.mrf.mxu0
        %v6773 = vadd.f32 0.0, %v6772
        %6774 = vdwg.mxu0
        %v6775 = vadd.f32 %v6649, %v6756
        %v6776 = vadd.f32 %v6650, %v6758
        %v6777 = vadd.f32 %v6651, %v6761
        %v6778 = vadd.f32 %v6652, %v6763
        %v6779 = vadd.f32 %v6653, %v6766
        %v6780 = vadd.f32 %v6654, %v6768
        %v6781 = vadd.f32 %v6655, %v6771
        %v6782 = vadd.f32 %v6656, %v6773
        %6783 = vst [vmem:[#allocation3] sm:$0xff] %v6775
        %6784 = vst [vmem:[#allocation3 + $0x8] sm:$0xff] %v6776
        %6785 = vst [vmem:[#allocation3 + $0x10] sm:$0xff] %v6777
        %6786 = vst [vmem:[#allocation3 + $0x18] sm:$0xff] %v6778
        %6787 = vst [vmem:[#allocation3 + $0x20] sm:$0xff] %v6779
        %6788 = vst [vmem:[#allocation3 + $0x28] sm:$0xff] %v6780
        %6789 = vst [vmem:[#allocation3 + $0x30] sm:$0xff] %v6781
        %6790 = vst [vmem:[#allocation3 + $0x38] sm:$0xff] %v6782
        %v6791 = vld [vmem:[%s6474 + $0x2] sm:$0xff]
        %v6792 = vld [vmem:[%s6474 + $0x12] sm:$0xff]
        %v6793 = vld [vmem:[%s6474 + $0x22] sm:$0xff]
        %v6794 = vld [vmem:[%s6474 + $0x32] sm:$0xff]
        %v6795 = vld [vmem:[%s6474 + $0x42] sm:$0xff]
        %v6796 = vld [vmem:[%s6474 + $0x52] sm:$0xff]
        %v6797 = vld [vmem:[%s6474 + $0x62] sm:$0xff]
        %v6798 = vld [vmem:[%s6474 + $0x72] sm:$0xff]
        %v6799 = vpack.c.bf16 %v6791, %v6791
        %v6800 = vpack.c.bf16 %v6792, %v6792
        %v6801 = vpack.c.bf16 %v6793, %v6793
        %v6802 = vpack.c.bf16 %v6794, %v6794
        %v6803 = vpack.c.bf16 %v6795, %v6795
        %v6804 = vpack.c.bf16 %v6796, %v6796
        %v6805 = vpack.c.bf16 %v6797, %v6797
        %v6806 = vpack.c.bf16 %v6798, %v6798
        %v6807 = vld [vmem:[#allocation3] sm:$0xff]
        %v6808 = vld [vmem:[#allocation3 + $0x8] sm:$0xff]
        %v6809 = vld [vmem:[#allocation3 + $0x10] sm:$0xff]
        %v6810 = vld [vmem:[#allocation3 + $0x18] sm:$0xff]
        %v6811 = vld [vmem:[#allocation3 + $0x20] sm:$0xff]
        %v6812 = vld [vmem:[#allocation3 + $0x28] sm:$0xff]
        %v6813 = vld [vmem:[#allocation3 + $0x30] sm:$0xff]
        %v6814 = vld [vmem:[#allocation3 + $0x38] sm:$0xff]
        %s6815 = scalar_lea.vmem [#allocation4], 512
        %v6816 = vld [vmem:[%s6815] sm:$0xf]
        %v6817 = vld [vmem:[%s6815 + $0x4] sm:$0xf]
        %v6818 = vld [vmem:[%s6815 + $0x8] sm:$0xf]
        %v6819 = vld [vmem:[%s6815 + $0xc] sm:$0xf]
        %v6820 = vld [vmem:[%s6815 + $0x10] sm:$0xf]
        %v6821 = vld [vmem:[%s6815 + $0x14] sm:$0xf]
        %v6822 = vld [vmem:[%s6815 + $0x18] sm:$0xf]
        %v6823 = vld [vmem:[%s6815 + $0x1c] sm:$0xf]
        %v6824 = vld [vmem:[%s6815 + $0x20] sm:$0xf]
        %v6825 = vld [vmem:[%s6815 + $0x24] sm:$0xf]
        %v6826 = vld [vmem:[%s6815 + $0x28] sm:$0xf]
        %v6827 = vld [vmem:[%s6815 + $0x2c] sm:$0xf]
        %v6828 = vld [vmem:[%s6815 + $0x30] sm:$0xf]
        %v6829 = vld [vmem:[%s6815 + $0x34] sm:$0xf]
        %v6830 = vld [vmem:[%s6815 + $0x38] sm:$0xf]
        %v6831 = vld [vmem:[%s6815 + $0x3c] sm:$0xf]
        %v6840 = vunpack.c.l.b16 %v6799
        %v6841 = vunpack.c.l.b16 %v6800
        %v6842 = vunpack.c.l.b16 %v6801
        %v6843 = vunpack.c.l.b16 %v6802
        %v6844 = vunpack.c.l.b16 %v6803
        %v6845 = vunpack.c.l.b16 %v6804
        %v6846 = vunpack.c.l.b16 %v6805
        %v6847 = vunpack.c.l.b16 %v6806
        %v6848 = vpack.c.b16 %v6841, %v6840
        %v6849 = vpack.c.b16 %v6843, %v6842
        %v6850 = vpack.c.b16 %v6845, %v6844
        %v6851 = vpack.c.b16 %v6847, %v6846
        %v6872 = vunpack.c.l.b16 %v6816
        %v6873 = vunpack.c.l.b16 %v6817
        %v6874 = vunpack.c.l.b16 %v6818
        %v6875 = vunpack.c.l.b16 %v6819
        %v6876 = vunpack.c.l.b16 %v6820
        %v6877 = vunpack.c.l.b16 %v6821
        %v6878 = vunpack.c.l.b16 %v6822
        %v6879 = vunpack.c.l.b16 %v6823
        %v6880 = vunpack.c.l.b16 %v6824
        %v6881 = vunpack.c.l.b16 %v6825
        %v6882 = vunpack.c.l.b16 %v6826
        %v6883 = vunpack.c.l.b16 %v6827
        %v6884 = vunpack.c.l.b16 %v6828
        %v6885 = vunpack.c.l.b16 %v6829
        %v6886 = vunpack.c.l.b16 %v6830
        %v6887 = vunpack.c.l.b16 %v6831
        %v6888 = vpack.c.b16 %v6873, %v6872
        %v6889 = vpack.c.b16 %v6875, %v6874
        %v6890 = vpack.c.b16 %v6877, %v6876
        %v6891 = vpack.c.b16 %v6879, %v6878
        %v6892 = vpack.c.b16 %v6881, %v6880
        %v6893 = vpack.c.b16 %v6883, %v6882
        %v6894 = vpack.c.b16 %v6885, %v6884
        %v6895 = vpack.c.b16 %v6887, %v6886
        %6904 = vmatpush.bf16.msra.mxu0 %v6895
        %6905 = vmatpush.bf16.msra.mxu0 %v6894
        %6906 = vmatpush.bf16.msra.mxu0 %v6893
        %6907 = vmatpush.bf16.msra.mxu0 %v6892
        %6908 = vmatpush.bf16.msra.mxu0 %v6891
        %6909 = vmatpush.bf16.msra.mxu0 %v6890
        %6910 = vmatpush.bf16.msra.mxu0 %v6889
        %6911 = vmatpush.bf16.msra.mxu0 %v6888
        %6912 = vmatmul.bf16.gmra.mxu0 %v6848
        %v6913 = vpop.f32.mrf.mxu0
        %v6914 = vadd.f32 0.0, %v6913
        %v6915 = vpop.f32.mrf.mxu0
        %v6916 = vadd.f32 0.0, %v6915
        %6917 = vmatmul.bf16.gmra.mxu0 %v6849
        %v6918 = vpop.f32.mrf.mxu0
        %v6919 = vadd.f32 0.0, %v6918
        %v6920 = vpop.f32.mrf.mxu0
        %v6921 = vadd.f32 0.0, %v6920
        %6922 = vmatmul.bf16.gmra.mxu0 %v6850
        %v6923 = vpop.f32.mrf.mxu0
        %v6924 = vadd.f32 0.0, %v6923
        %v6925 = vpop.f32.mrf.mxu0
        %v6926 = vadd.f32 0.0, %v6925
        %6927 = vmatmul.bf16.gmra.mxu0 %v6851
        %v6928 = vpop.f32.mrf.mxu0
        %v6929 = vadd.f32 0.0, %v6928
        %v6930 = vpop.f32.mrf.mxu0
        %v6931 = vadd.f32 0.0, %v6930
        %6932 = vdwg.mxu0
        %v6933 = vadd.f32 %v6807, %v6914
        %v6934 = vadd.f32 %v6808, %v6916
        %v6935 = vadd.f32 %v6809, %v6919
        %v6936 = vadd.f32 %v6810, %v6921
        %v6937 = vadd.f32 %v6811, %v6924
        %v6938 = vadd.f32 %v6812, %v6926
        %v6939 = vadd.f32 %v6813, %v6929
        %v6940 = vadd.f32 %v6814, %v6931
        %6941 = vst [vmem:[#allocation3] sm:$0xff] %v6933
        %6942 = vst [vmem:[#allocation3 + $0x8] sm:$0xff] %v6934
        %6943 = vst [vmem:[#allocation3 + $0x10] sm:$0xff] %v6935
        %6944 = vst [vmem:[#allocation3 + $0x18] sm:$0xff] %v6936
        %6945 = vst [vmem:[#allocation3 + $0x20] sm:$0xff] %v6937
        %6946 = vst [vmem:[#allocation3 + $0x28] sm:$0xff] %v6938
        %6947 = vst [vmem:[#allocation3 + $0x30] sm:$0xff] %v6939
        %6948 = vst [vmem:[#allocation3 + $0x38] sm:$0xff] %v6940
        %v6949 = vld [vmem:[#allocation3] sm:$0xff]
        %v6950 = vld [vmem:[#allocation3 + $0x8] sm:$0xff]
        %v6951 = vld [vmem:[#allocation3 + $0x10] sm:$0xff]
        %v6952 = vld [vmem:[#allocation3 + $0x18] sm:$0xff]
        %v6953 = vld [vmem:[#allocation3 + $0x20] sm:$0xff]
        %v6954 = vld [vmem:[#allocation3 + $0x28] sm:$0xff]
        %v6955 = vld [vmem:[#allocation3 + $0x30] sm:$0xff]
        %v6956 = vld [vmem:[#allocation3 + $0x38] sm:$0xff]
        %v6957 = vld [vmem:[%s4] sm:$0x1]
        %v6959 = vperm.slane %v6957, 0
        %v6961 = vadd.f32 %v6949, %v6959
        %v6962 = vadd.f32 %v6950, %v6959
        %v6963 = vadd.f32 %v6951, %v6959
        %v6964 = vadd.f32 %v6952, %v6959
        %v6965 = vadd.f32 %v6953, %v6959
        %v6966 = vadd.f32 %v6954, %v6959
        %v6967 = vadd.f32 %v6955, %v6959
        %v6968 = vadd.f32 %v6956, %v6959
        %v6969 = vmax.f32 %v6961, 0.0
        %v6970 = vmax.f32 %v6962, 0.0
        %v6971 = vmax.f32 %v6963, 0.0
        %v6972 = vmax.f32 %v6964, 0.0
        %v6973 = vmax.f32 %v6965, 0.0
        %v6974 = vmax.f32 %v6966, 0.0
        %v6975 = vmax.f32 %v6967, 0.0
        %v6976 = vmax.f32 %v6968, 0.0
        %v6985 = vrot.slane %v6969, 2
        %v6986 = vrot.slane %v6969, 4
        %v6987 = vrot.slane %v6969, 6
        %v6988 = vrot.slane %v6970, 2
        %v6989 = vrot.slane %v6970, 4
        %v6990 = vrot.slane %v6970, 6
        %v6991 = vrot.slane %v6971, 2
        %v6992 = vrot.slane %v6971, 4
        %v6993 = vrot.slane %v6971, 6
        %v6994 = vrot.slane %v6972, 2
        %v6995 = vrot.slane %v6972, 4
        %v6996 = vrot.slane %v6972, 6
        %v6997 = vrot.slane %v6973, 2
        %v6998 = vrot.slane %v6973, 4
        %v6999 = vrot.slane %v6973, 6
        %v7000 = vrot.slane %v6974, 2
        %v7001 = vrot.slane %v6974, 4
        %v7002 = vrot.slane %v6974, 6
        %v7003 = vrot.slane %v6975, 2
        %v7004 = vrot.slane %v6975, 4
        %v7005 = vrot.slane %v6975, 6
        %v7006 = vrot.slane %v6976, 2
        %v7007 = vrot.slane %v6976, 4
        %v7008 = vrot.slane %v6976, 6
        %v7033 = vsel %vm4414, %v6969, -inf
        %v7034 = vrot.slane %v7033, 4
        %v7035 = vmax.f32 %v7033, %v7034
        %v7036 = vrot.slane %v7035, 2
        %v7037 = vmax.f32 %v7035, %v7036
        %v7038 = vrot.slane %v7037, 1
        %v7039 = vmax.f32 %v7037, %v7038
        %v7040 = vsel %vm4414, %v6985, -inf
        %v7041 = vrot.slane %v7040, 4
        %v7042 = vmax.f32 %v7040, %v7041
        %v7043 = vrot.slane %v7042, 2
        %v7044 = vmax.f32 %v7042, %v7043
        %v7045 = vrot.slane %v7044, 1
        %v7046 = vmax.f32 %v7044, %v7045
        %v7047 = vsel %vm4414, %v6986, -inf
        %v7048 = vrot.slane %v7047, 4
        %v7049 = vmax.f32 %v7047, %v7048
        %v7050 = vrot.slane %v7049, 2
        %v7051 = vmax.f32 %v7049, %v7050
        %v7052 = vrot.slane %v7051, 1
        %v7053 = vmax.f32 %v7051, %v7052
        %v7054 = vsel %vm4414, %v6987, -inf
        %v7055 = vrot.slane %v7054, 4
        %v7056 = vmax.f32 %v7054, %v7055
        %v7057 = vrot.slane %v7056, 2
        %v7058 = vmax.f32 %v7056, %v7057
        %v7059 = vrot.slane %v7058, 1
        %v7060 = vmax.f32 %v7058, %v7059
        %v7061 = vsel %vm4414, %v6970, -inf
        %v7062 = vrot.slane %v7061, 4
        %v7063 = vmax.f32 %v7061, %v7062
        %v7064 = vrot.slane %v7063, 2
        %v7065 = vmax.f32 %v7063, %v7064
        %v7066 = vrot.slane %v7065, 1
        %v7067 = vmax.f32 %v7065, %v7066
        %v7068 = vsel %vm4414, %v6988, -inf
        %v7069 = vrot.slane %v7068, 4
        %v7070 = vmax.f32 %v7068, %v7069
        %v7071 = vrot.slane %v7070, 2
        %v7072 = vmax.f32 %v7070, %v7071
        %v7073 = vrot.slane %v7072, 1
        %v7074 = vmax.f32 %v7072, %v7073
        %v7075 = vsel %vm4414, %v6989, -inf
        %v7076 = vrot.slane %v7075, 4
        %v7077 = vmax.f32 %v7075, %v7076
        %v7078 = vrot.slane %v7077, 2
        %v7079 = vmax.f32 %v7077, %v7078
        %v7080 = vrot.slane %v7079, 1
        %v7081 = vmax.f32 %v7079, %v7080
        %v7082 = vsel %vm4414, %v6990, -inf
        %v7083 = vrot.slane %v7082, 4
        %v7084 = vmax.f32 %v7082, %v7083
        %v7085 = vrot.slane %v7084, 2
        %v7086 = vmax.f32 %v7084, %v7085
        %v7087 = vrot.slane %v7086, 1
        %v7088 = vmax.f32 %v7086, %v7087
        %v7089 = vsel %vm4414, %v6971, -inf
        %v7090 = vrot.slane %v7089, 4
        %v7091 = vmax.f32 %v7089, %v7090
        %v7092 = vrot.slane %v7091, 2
        %v7093 = vmax.f32 %v7091, %v7092
        %v7094 = vrot.slane %v7093, 1
        %v7095 = vmax.f32 %v7093, %v7094
        %v7096 = vsel %vm4414, %v6991, -inf
        %v7097 = vrot.slane %v7096, 4
        %v7098 = vmax.f32 %v7096, %v7097
        %v7099 = vrot.slane %v7098, 2
        %v7100 = vmax.f32 %v7098, %v7099
        %v7101 = vrot.slane %v7100, 1
        %v7102 = vmax.f32 %v7100, %v7101
        %v7103 = vsel %vm4414, %v6992, -inf
        %v7104 = vrot.slane %v7103, 4
        %v7105 = vmax.f32 %v7103, %v7104
        %v7106 = vrot.slane %v7105, 2
        %v7107 = vmax.f32 %v7105, %v7106
        %v7108 = vrot.slane %v7107, 1
        %v7109 = vmax.f32 %v7107, %v7108
        %v7110 = vsel %vm4414, %v6993, -inf
        %v7111 = vrot.slane %v7110, 4
        %v7112 = vmax.f32 %v7110, %v7111
        %v7113 = vrot.slane %v7112, 2
        %v7114 = vmax.f32 %v7112, %v7113
        %v7115 = vrot.slane %v7114, 1
        %v7116 = vmax.f32 %v7114, %v7115
        %v7117 = vsel %vm4414, %v6972, -inf
        %v7118 = vrot.slane %v7117, 4
        %v7119 = vmax.f32 %v7117, %v7118
        %v7120 = vrot.slane %v7119, 2
        %v7121 = vmax.f32 %v7119, %v7120
        %v7122 = vrot.slane %v7121, 1
        %v7123 = vmax.f32 %v7121, %v7122
        %v7124 = vsel %vm4414, %v6994, -inf
        %v7125 = vrot.slane %v7124, 4
        %v7126 = vmax.f32 %v7124, %v7125
        %v7127 = vrot.slane %v7126, 2
        %v7128 = vmax.f32 %v7126, %v7127
        %v7129 = vrot.slane %v7128, 1
        %v7130 = vmax.f32 %v7128, %v7129
        %v7131 = vsel %vm4414, %v6995, -inf
        %v7132 = vrot.slane %v7131, 4
        %v7133 = vmax.f32 %v7131, %v7132
        %v7134 = vrot.slane %v7133, 2
        %v7135 = vmax.f32 %v7133, %v7134
        %v7136 = vrot.slane %v7135, 1
        %v7137 = vmax.f32 %v7135, %v7136
        %v7138 = vsel %vm4414, %v6996, -inf
        %v7139 = vrot.slane %v7138, 4
        %v7140 = vmax.f32 %v7138, %v7139
        %v7141 = vrot.slane %v7140, 2
        %v7142 = vmax.f32 %v7140, %v7141
        %v7143 = vrot.slane %v7142, 1
        %v7144 = vmax.f32 %v7142, %v7143
        %v7145 = vsel %vm4414, %v6973, -inf
        %v7146 = vrot.slane %v7145, 4
        %v7147 = vmax.f32 %v7145, %v7146
        %v7148 = vrot.slane %v7147, 2
        %v7149 = vmax.f32 %v7147, %v7148
        %v7150 = vrot.slane %v7149, 1
        %v7151 = vmax.f32 %v7149, %v7150
        %v7152 = vsel %vm4414, %v6997, -inf
        %v7153 = vrot.slane %v7152, 4
        %v7154 = vmax.f32 %v7152, %v7153
        %v7155 = vrot.slane %v7154, 2
        %v7156 = vmax.f32 %v7154, %v7155
        %v7157 = vrot.slane %v7156, 1
        %v7158 = vmax.f32 %v7156, %v7157
        %v7159 = vsel %vm4414, %v6998, -inf
        %v7160 = vrot.slane %v7159, 4
        %v7161 = vmax.f32 %v7159, %v7160
        %v7162 = vrot.slane %v7161, 2
        %v7163 = vmax.f32 %v7161, %v7162
        %v7164 = vrot.slane %v7163, 1
        %v7165 = vmax.f32 %v7163, %v7164
        %v7166 = vsel %vm4414, %v6999, -inf
        %v7167 = vrot.slane %v7166, 4
        %v7168 = vmax.f32 %v7166, %v7167
        %v7169 = vrot.slane %v7168, 2
        %v7170 = vmax.f32 %v7168, %v7169
        %v7171 = vrot.slane %v7170, 1
        %v7172 = vmax.f32 %v7170, %v7171
        %v7173 = vsel %vm4414, %v6974, -inf
        %v7174 = vrot.slane %v7173, 4
        %v7175 = vmax.f32 %v7173, %v7174
        %v7176 = vrot.slane %v7175, 2
        %v7177 = vmax.f32 %v7175, %v7176
        %v7178 = vrot.slane %v7177, 1
        %v7179 = vmax.f32 %v7177, %v7178
        %v7180 = vsel %vm4414, %v7000, -inf
        %v7181 = vrot.slane %v7180, 4
        %v7182 = vmax.f32 %v7180, %v7181
        %v7183 = vrot.slane %v7182, 2
        %v7184 = vmax.f32 %v7182, %v7183
        %v7185 = vrot.slane %v7184, 1
        %v7186 = vmax.f32 %v7184, %v7185
        %v7187 = vsel %vm4414, %v7001, -inf
        %v7188 = vrot.slane %v7187, 4
        %v7189 = vmax.f32 %v7187, %v7188
        %v7190 = vrot.slane %v7189, 2
        %v7191 = vmax.f32 %v7189, %v7190
        %v7192 = vrot.slane %v7191, 1
        %v7193 = vmax.f32 %v7191, %v7192
        %v7194 = vsel %vm4414, %v7002, -inf
        %v7195 = vrot.slane %v7194, 4
        %v7196 = vmax.f32 %v7194, %v7195
        %v7197 = vrot.slane %v7196, 2
        %v7198 = vmax.f32 %v7196, %v7197
        %v7199 = vrot.slane %v7198, 1
        %v7200 = vmax.f32 %v7198, %v7199
        %v7201 = vsel %vm4414, %v6975, -inf
        %v7202 = vrot.slane %v7201, 4
        %v7203 = vmax.f32 %v7201, %v7202
        %v7204 = vrot.slane %v7203, 2
        %v7205 = vmax.f32 %v7203, %v7204
        %v7206 = vrot.slane %v7205, 1
        %v7207 = vmax.f32 %v7205, %v7206
        %v7208 = vsel %vm4414, %v7003, -inf
        %v7209 = vrot.slane %v7208, 4
        %v7210 = vmax.f32 %v7208, %v7209
        %v7211 = vrot.slane %v7210, 2
        %v7212 = vmax.f32 %v7210, %v7211
        %v7213 = vrot.slane %v7212, 1
        %v7214 = vmax.f32 %v7212, %v7213
        %v7215 = vsel %vm4414, %v7004, -inf
        %v7216 = vrot.slane %v7215, 4
        %v7217 = vmax.f32 %v7215, %v7216
        %v7218 = vrot.slane %v7217, 2
        %v7219 = vmax.f32 %v7217, %v7218
        %v7220 = vrot.slane %v7219, 1
        %v7221 = vmax.f32 %v7219, %v7220
        %v7222 = vsel %vm4414, %v7005, -inf
        %v7223 = vrot.slane %v7222, 4
        %v7224 = vmax.f32 %v7222, %v7223
        %v7225 = vrot.slane %v7224, 2
        %v7226 = vmax.f32 %v7224, %v7225
        %v7227 = vrot.slane %v7226, 1
        %v7228 = vmax.f32 %v7226, %v7227
        %v7229 = vsel %vm4414, %v6976, -inf
        %v7230 = vrot.slane %v7229, 4
        %v7231 = vmax.f32 %v7229, %v7230
        %v7232 = vrot.slane %v7231, 2
        %v7233 = vmax.f32 %v7231, %v7232
        %v7234 = vrot.slane %v7233, 1
        %v7235 = vmax.f32 %v7233, %v7234
        %v7236 = vsel %vm4414, %v7006, -inf
        %v7237 = vrot.slane %v7236, 4
        %v7238 = vmax.f32 %v7236, %v7237
        %v7239 = vrot.slane %v7238, 2
        %v7240 = vmax.f32 %v7238, %v7239
        %v7241 = vrot.slane %v7240, 1
        %v7242 = vmax.f32 %v7240, %v7241
        %v7243 = vsel %vm4414, %v7007, -inf
        %v7244 = vrot.slane %v7243, 4
        %v7245 = vmax.f32 %v7243, %v7244
        %v7246 = vrot.slane %v7245, 2
        %v7247 = vmax.f32 %v7245, %v7246
        %v7248 = vrot.slane %v7247, 1
        %v7249 = vmax.f32 %v7247, %v7248
        %v7250 = vsel %vm4414, %v7008, -inf
        %v7251 = vrot.slane %v7250, 4
        %v7252 = vmax.f32 %v7250, %v7251
        %v7253 = vrot.slane %v7252, 2
        %v7254 = vmax.f32 %v7252, %v7253
        %v7255 = vrot.slane %v7254, 1
        %v7256 = vmax.f32 %v7254, %v7255
        %v7257 = vmax.f32 %v7039, %v7067
        %v7258 = vmax.f32 %v7046, %v7074
        %v7259 = vmax.f32 %v7053, %v7081
        %v7260 = vmax.f32 %v7060, %v7088
        %v7261 = vmax.f32 %v7095, %v7123
        %v7262 = vmax.f32 %v7102, %v7130
        %v7263 = vmax.f32 %v7109, %v7137
        %v7264 = vmax.f32 %v7116, %v7144
        %v7265 = vmax.f32 %v7151, %v7179
        %v7266 = vmax.f32 %v7158, %v7186
        %v7267 = vmax.f32 %v7165, %v7193
        %v7268 = vmax.f32 %v7172, %v7200
        %v7269 = vmax.f32 %v7207, %v7235
        %v7270 = vmax.f32 %v7214, %v7242
        %v7271 = vmax.f32 %v7221, %v7249
        %v7272 = vmax.f32 %v7228, %v7256
        %v7273 = vld [vmem:[%s6] sm:$0x1]
        %v7274 = vpack.c.bf16 %v7257, %v7257
        %v7275 = vld [vmem:[%s5] sm:$0xf]
        %v7276 = vld [vmem:[%s5 + $0x4] sm:$0xf]
        %v7277 = vld [vmem:[%s5 + $0x8] sm:$0xf]
        %v7278 = vld [vmem:[%s5 + $0xc] sm:$0xf]
        %v7279 = vld [vmem:[%s5 + $0x10] sm:$0xf]
        %v7280 = vld [vmem:[%s5 + $0x14] sm:$0xf]
        %v7281 = vld [vmem:[%s5 + $0x18] sm:$0xf]
        %v7282 = vld [vmem:[%s5 + $0x1c] sm:$0xf]
        %v7283 = vld [vmem:[%s5 + $0x20] sm:$0xf]
        %v7284 = vld [vmem:[%s5 + $0x24] sm:$0xf]
        %v7285 = vld [vmem:[%s5 + $0x28] sm:$0xf]
        %v7286 = vld [vmem:[%s5 + $0x2c] sm:$0xf]
        %v7287 = vld [vmem:[%s5 + $0x30] sm:$0xf]
        %v7288 = vld [vmem:[%s5 + $0x34] sm:$0xf]
        %v7289 = vld [vmem:[%s5 + $0x38] sm:$0xf]
        %v7290 = vld [vmem:[%s5 + $0x3c] sm:$0xf]
        %v7307 = vunpack.c.l.b16 %v7275
        %v7308 = vunpack.c.l.b16 %v7276
        %v7309 = vunpack.c.l.b16 %v7277
        %v7310 = vunpack.c.l.b16 %v7278
        %v7311 = vunpack.c.l.b16 %v7279
        %v7312 = vunpack.c.l.b16 %v7280
        %v7313 = vunpack.c.l.b16 %v7281
        %v7314 = vunpack.c.l.b16 %v7282
        %v7315 = vunpack.c.l.b16 %v7283
        %v7316 = vunpack.c.l.b16 %v7284
        %v7317 = vunpack.c.l.b16 %v7285
        %v7318 = vunpack.c.l.b16 %v7286
        %v7319 = vunpack.c.l.b16 %v7287
        %v7320 = vunpack.c.l.b16 %v7288
        %v7321 = vunpack.c.l.b16 %v7289
        %v7322 = vunpack.c.l.b16 %v7290
        %v7323 = vpack.c.b16 %v7308, %v7307
        %v7324 = vpack.c.b16 %v7310, %v7309
        %v7325 = vpack.c.b16 %v7312, %v7311
        %v7326 = vpack.c.b16 %v7314, %v7313
        %v7327 = vpack.c.b16 %v7316, %v7315
        %v7328 = vpack.c.b16 %v7318, %v7317
        %v7329 = vpack.c.b16 %v7320, %v7319
        %v7330 = vpack.c.b16 %v7322, %v7321
        %7339 = vmatpush.bf16.msra.mxu0 %v7330
        %7340 = vmatpush.bf16.msra.mxu0 %v7329
        %7341 = vmatpush.bf16.msra.mxu0 %v7328
        %7342 = vmatpush.bf16.msra.mxu0 %v7327
        %7343 = vmatpush.bf16.msra.mxu0 %v7326
        %7344 = vmatpush.bf16.msra.mxu0 %v7325
        %7345 = vmatpush.bf16.msra.mxu0 %v7324
        %7346 = vmatpush.bf16.msra.mxu0 %v7323
        %7347 = vmatmul.bf16.gmra.mxu0 %v7274
        %v7348 = vpop.f32.mrf.mxu0
        %v7349 = vadd.f32 0.0, %v7348
        %v7350 = vpop.f32.mrf.mxu0
        %7351 = vdwg.mxu0
        %v7352 = vadd.f32 %v7273, %v7349
        %v7353 = vpack.c.bf16 %v7258, %v7258
        %s7354 = scalar_lea.vmem %s5, 64
        %v7355 = vld [vmem:[%s7354] sm:$0xf]
        %v7356 = vld [vmem:[%s7354 + $0x4] sm:$0xf]
        %v7357 = vld [vmem:[%s7354 + $0x8] sm:$0xf]
        %v7358 = vld [vmem:[%s7354 + $0xc] sm:$0xf]
        %v7359 = vld [vmem:[%s7354 + $0x10] sm:$0xf]
        %v7360 = vld [vmem:[%s7354 + $0x14] sm:$0xf]
        %v7361 = vld [vmem:[%s7354 + $0x18] sm:$0xf]
        %v7362 = vld [vmem:[%s7354 + $0x1c] sm:$0xf]
        %v7363 = vld [vmem:[%s7354 + $0x20] sm:$0xf]
        %v7364 = vld [vmem:[%s7354 + $0x24] sm:$0xf]
        %v7365 = vld [vmem:[%s7354 + $0x28] sm:$0xf]
        %v7366 = vld [vmem:[%s7354 + $0x2c] sm:$0xf]
        %v7367 = vld [vmem:[%s7354 + $0x30] sm:$0xf]
        %v7368 = vld [vmem:[%s7354 + $0x34] sm:$0xf]
        %v7369 = vld [vmem:[%s7354 + $0x38] sm:$0xf]
        %v7370 = vld [vmem:[%s7354 + $0x3c] sm:$0xf]
        %v7387 = vunpack.c.l.b16 %v7355
        %v7388 = vunpack.c.l.b16 %v7356
        %v7389 = vunpack.c.l.b16 %v7357
        %v7390 = vunpack.c.l.b16 %v7358
        %v7391 = vunpack.c.l.b16 %v7359
        %v7392 = vunpack.c.l.b16 %v7360
        %v7393 = vunpack.c.l.b16 %v7361
        %v7394 = vunpack.c.l.b16 %v7362
        %v7395 = vunpack.c.l.b16 %v7363
        %v7396 = vunpack.c.l.b16 %v7364
        %v7397 = vunpack.c.l.b16 %v7365
        %v7398 = vunpack.c.l.b16 %v7366
        %v7399 = vunpack.c.l.b16 %v7367
        %v7400 = vunpack.c.l.b16 %v7368
        %v7401 = vunpack.c.l.b16 %v7369
        %v7402 = vunpack.c.l.b16 %v7370
        %v7403 = vpack.c.b16 %v7388, %v7387
        %v7404 = vpack.c.b16 %v7390, %v7389
        %v7405 = vpack.c.b16 %v7392, %v7391
        %v7406 = vpack.c.b16 %v7394, %v7393
        %v7407 = vpack.c.b16 %v7396, %v7395
        %v7408 = vpack.c.b16 %v7398, %v7397
        %v7409 = vpack.c.b16 %v7400, %v7399
        %v7410 = vpack.c.b16 %v7402, %v7401
        %7419 = vmatpush.bf16.msra.mxu0 %v7410
        %7420 = vmatpush.bf16.msra.mxu0 %v7409
        %7421 = vmatpush.bf16.msra.mxu0 %v7408
        %7422 = vmatpush.bf16.msra.mxu0 %v7407
        %7423 = vmatpush.bf16.msra.mxu0 %v7406
        %7424 = vmatpush.bf16.msra.mxu0 %v7405
        %7425 = vmatpush.bf16.msra.mxu0 %v7404
        %7426 = vmatpush.bf16.msra.mxu0 %v7403
        %7427 = vmatmul.bf16.gmra.mxu0 %v7353
        %v7428 = vpop.f32.mrf.mxu0
        %v7429 = vadd.f32 0.0, %v7428
        %v7430 = vpop.f32.mrf.mxu0
        %7431 = vdwg.mxu0
        %v7432 = vadd.f32 %v7352, %v7429
        %v7433 = vpack.c.bf16 %v7259, %v7259
        %s7434 = scalar_lea.vmem %s5, 128
        %v7435 = vld [vmem:[%s7434] sm:$0xf]
        %v7436 = vld [vmem:[%s7434 + $0x4] sm:$0xf]
        %v7437 = vld [vmem:[%s7434 + $0x8] sm:$0xf]
        %v7438 = vld [vmem:[%s7434 + $0xc] sm:$0xf]
        %v7439 = vld [vmem:[%s7434 + $0x10] sm:$0xf]
        %v7440 = vld [vmem:[%s7434 + $0x14] sm:$0xf]
        %v7441 = vld [vmem:[%s7434 + $0x18] sm:$0xf]
        %v7442 = vld [vmem:[%s7434 + $0x1c] sm:$0xf]
        %v7443 = vld [vmem:[%s7434 + $0x20] sm:$0xf]
        %v7444 = vld [vmem:[%s7434 + $0x24] sm:$0xf]
        %v7445 = vld [vmem:[%s7434 + $0x28] sm:$0xf]
        %v7446 = vld [vmem:[%s7434 + $0x2c] sm:$0xf]
        %v7447 = vld [vmem:[%s7434 + $0x30] sm:$0xf]
        %v7448 = vld [vmem:[%s7434 + $0x34] sm:$0xf]
        %v7449 = vld [vmem:[%s7434 + $0x38] sm:$0xf]
        %v7450 = vld [vmem:[%s7434 + $0x3c] sm:$0xf]
        %v7467 = vunpack.c.l.b16 %v7435
        %v7468 = vunpack.c.l.b16 %v7436
        %v7469 = vunpack.c.l.b16 %v7437
        %v7470 = vunpack.c.l.b16 %v7438
        %v7471 = vunpack.c.l.b16 %v7439
        %v7472 = vunpack.c.l.b16 %v7440
        %v7473 = vunpack.c.l.b16 %v7441
        %v7474 = vunpack.c.l.b16 %v7442
        %v7475 = vunpack.c.l.b16 %v7443
        %v7476 = vunpack.c.l.b16 %v7444
        %v7477 = vunpack.c.l.b16 %v7445
        %v7478 = vunpack.c.l.b16 %v7446
        %v7479 = vunpack.c.l.b16 %v7447
        %v7480 = vunpack.c.l.b16 %v7448
        %v7481 = vunpack.c.l.b16 %v7449
        %v7482 = vunpack.c.l.b16 %v7450
        %v7483 = vpack.c.b16 %v7468, %v7467
        %v7484 = vpack.c.b16 %v7470, %v7469
        %v7485 = vpack.c.b16 %v7472, %v7471
        %v7486 = vpack.c.b16 %v7474, %v7473
        %v7487 = vpack.c.b16 %v7476, %v7475
        %v7488 = vpack.c.b16 %v7478, %v7477
        %v7489 = vpack.c.b16 %v7480, %v7479
        %v7490 = vpack.c.b16 %v7482, %v7481
        %7499 = vmatpush.bf16.msra.mxu0 %v7490
        %7500 = vmatpush.bf16.msra.mxu0 %v7489
        %7501 = vmatpush.bf16.msra.mxu0 %v7488
        %7502 = vmatpush.bf16.msra.mxu0 %v7487
        %7503 = vmatpush.bf16.msra.mxu0 %v7486
        %7504 = vmatpush.bf16.msra.mxu0 %v7485
        %7505 = vmatpush.bf16.msra.mxu0 %v7484
        %7506 = vmatpush.bf16.msra.mxu0 %v7483
        %7507 = vmatmul.bf16.gmra.mxu0 %v7433
        %v7508 = vpop.f32.mrf.mxu0
        %v7509 = vadd.f32 0.0, %v7508
        %v7510 = vpop.f32.mrf.mxu0
        %7511 = vdwg.mxu0
        %v7512 = vadd.f32 %v7432, %v7509
        %v7513 = vpack.c.bf16 %v7260, %v7260
        %s7514 = scalar_lea.vmem %s5, 192
        %v7515 = vld [vmem:[%s7514] sm:$0xf]
        %v7516 = vld [vmem:[%s7514 + $0x4] sm:$0xf]
        %v7517 = vld [vmem:[%s7514 + $0x8] sm:$0xf]
        %v7518 = vld [vmem:[%s7514 + $0xc] sm:$0xf]
        %v7519 = vld [vmem:[%s7514 + $0x10] sm:$0xf]
        %v7520 = vld [vmem:[%s7514 + $0x14] sm:$0xf]
        %v7521 = vld [vmem:[%s7514 + $0x18] sm:$0xf]
        %v7522 = vld [vmem:[%s7514 + $0x1c] sm:$0xf]
        %v7523 = vld [vmem:[%s7514 + $0x20] sm:$0xf]
        %v7524 = vld [vmem:[%s7514 + $0x24] sm:$0xf]
        %v7525 = vld [vmem:[%s7514 + $0x28] sm:$0xf]
        %v7526 = vld [vmem:[%s7514 + $0x2c] sm:$0xf]
        %v7527 = vld [vmem:[%s7514 + $0x30] sm:$0xf]
        %v7528 = vld [vmem:[%s7514 + $0x34] sm:$0xf]
        %v7529 = vld [vmem:[%s7514 + $0x38] sm:$0xf]
        %v7530 = vld [vmem:[%s7514 + $0x3c] sm:$0xf]
        %v7547 = vunpack.c.l.b16 %v7515
        %v7548 = vunpack.c.l.b16 %v7516
        %v7549 = vunpack.c.l.b16 %v7517
        %v7550 = vunpack.c.l.b16 %v7518
        %v7551 = vunpack.c.l.b16 %v7519
        %v7552 = vunpack.c.l.b16 %v7520
        %v7553 = vunpack.c.l.b16 %v7521
        %v7554 = vunpack.c.l.b16 %v7522
        %v7555 = vunpack.c.l.b16 %v7523
        %v7556 = vunpack.c.l.b16 %v7524
        %v7557 = vunpack.c.l.b16 %v7525
        %v7558 = vunpack.c.l.b16 %v7526
        %v7559 = vunpack.c.l.b16 %v7527
        %v7560 = vunpack.c.l.b16 %v7528
        %v7561 = vunpack.c.l.b16 %v7529
        %v7562 = vunpack.c.l.b16 %v7530
        %v7563 = vpack.c.b16 %v7548, %v7547
        %v7564 = vpack.c.b16 %v7550, %v7549
        %v7565 = vpack.c.b16 %v7552, %v7551
        %v7566 = vpack.c.b16 %v7554, %v7553
        %v7567 = vpack.c.b16 %v7556, %v7555
        %v7568 = vpack.c.b16 %v7558, %v7557
        %v7569 = vpack.c.b16 %v7560, %v7559
        %v7570 = vpack.c.b16 %v7562, %v7561
        %7579 = vmatpush.bf16.msra.mxu0 %v7570
        %7580 = vmatpush.bf16.msra.mxu0 %v7569
        %7581 = vmatpush.bf16.msra.mxu0 %v7568
        %7582 = vmatpush.bf16.msra.mxu0 %v7567
        %7583 = vmatpush.bf16.msra.mxu0 %v7566
        %7584 = vmatpush.bf16.msra.mxu0 %v7565
        %7585 = vmatpush.bf16.msra.mxu0 %v7564
        %7586 = vmatpush.bf16.msra.mxu0 %v7563
        %7587 = vmatmul.bf16.gmra.mxu0 %v7513
        %v7588 = vpop.f32.mrf.mxu0
        %v7589 = vadd.f32 0.0, %v7588
        %v7590 = vpop.f32.mrf.mxu0
        %7591 = vdwg.mxu0
        %v7592 = vadd.f32 %v7512, %v7589
        %v7593 = vpack.c.bf16 %v7261, %v7261
        %s7594 = scalar_lea.vmem %s5, 256
        %v7595 = vld [vmem:[%s7594] sm:$0xf]
        %v7596 = vld [vmem:[%s7594 + $0x4] sm:$0xf]
        %v7597 = vld [vmem:[%s7594 + $0x8] sm:$0xf]
        %v7598 = vld [vmem:[%s7594 + $0xc] sm:$0xf]
        %v7599 = vld [vmem:[%s7594 + $0x10] sm:$0xf]
        %v7600 = vld [vmem:[%s7594 + $0x14] sm:$0xf]
        %v7601 = vld [vmem:[%s7594 + $0x18] sm:$0xf]
        %v7602 = vld [vmem:[%s7594 + $0x1c] sm:$0xf]
        %v7603 = vld [vmem:[%s7594 + $0x20] sm:$0xf]
        %v7604 = vld [vmem:[%s7594 + $0x24] sm:$0xf]
        %v7605 = vld [vmem:[%s7594 + $0x28] sm:$0xf]
        %v7606 = vld [vmem:[%s7594 + $0x2c] sm:$0xf]
        %v7607 = vld [vmem:[%s7594 + $0x30] sm:$0xf]
        %v7608 = vld [vmem:[%s7594 + $0x34] sm:$0xf]
        %v7609 = vld [vmem:[%s7594 + $0x38] sm:$0xf]
        %v7610 = vld [vmem:[%s7594 + $0x3c] sm:$0xf]
        %v7627 = vunpack.c.l.b16 %v7595
        %v7628 = vunpack.c.l.b16 %v7596
        %v7629 = vunpack.c.l.b16 %v7597
        %v7630 = vunpack.c.l.b16 %v7598
        %v7631 = vunpack.c.l.b16 %v7599
        %v7632 = vunpack.c.l.b16 %v7600
        %v7633 = vunpack.c.l.b16 %v7601
        %v7634 = vunpack.c.l.b16 %v7602
        %v7635 = vunpack.c.l.b16 %v7603
        %v7636 = vunpack.c.l.b16 %v7604
        %v7637 = vunpack.c.l.b16 %v7605
        %v7638 = vunpack.c.l.b16 %v7606
        %v7639 = vunpack.c.l.b16 %v7607
        %v7640 = vunpack.c.l.b16 %v7608
        %v7641 = vunpack.c.l.b16 %v7609
        %v7642 = vunpack.c.l.b16 %v7610
        %v7643 = vpack.c.b16 %v7628, %v7627
        %v7644 = vpack.c.b16 %v7630, %v7629
        %v7645 = vpack.c.b16 %v7632, %v7631
        %v7646 = vpack.c.b16 %v7634, %v7633
        %v7647 = vpack.c.b16 %v7636, %v7635
        %v7648 = vpack.c.b16 %v7638, %v7637
        %v7649 = vpack.c.b16 %v7640, %v7639
        %v7650 = vpack.c.b16 %v7642, %v7641
        %7659 = vmatpush.bf16.msra.mxu0 %v7650
        %7660 = vmatpush.bf16.msra.mxu0 %v7649
        %7661 = vmatpush.bf16.msra.mxu0 %v7648
        %7662 = vmatpush.bf16.msra.mxu0 %v7647
        %7663 = vmatpush.bf16.msra.mxu0 %v7646
        %7664 = vmatpush.bf16.msra.mxu0 %v7645
        %7665 = vmatpush.bf16.msra.mxu0 %v7644
        %7666 = vmatpush.bf16.msra.mxu0 %v7643
        %7667 = vmatmul.bf16.gmra.mxu0 %v7593
        %v7668 = vpop.f32.mrf.mxu0
        %v7669 = vadd.f32 0.0, %v7668
        %v7670 = vpop.f32.mrf.mxu0
        %7671 = vdwg.mxu0
        %v7672 = vadd.f32 %v7592, %v7669
        %v7673 = vpack.c.bf16 %v7262, %v7262
        %s7674 = scalar_lea.vmem %s5, 320
        %v7675 = vld [vmem:[%s7674] sm:$0xf]
        %v7676 = vld [vmem:[%s7674 + $0x4] sm:$0xf]
        %v7677 = vld [vmem:[%s7674 + $0x8] sm:$0xf]
        %v7678 = vld [vmem:[%s7674 + $0xc] sm:$0xf]
        %v7679 = vld [vmem:[%s7674 + $0x10] sm:$0xf]
        %v7680 = vld [vmem:[%s7674 + $0x14] sm:$0xf]
        %v7681 = vld [vmem:[%s7674 + $0x18] sm:$0xf]
        %v7682 = vld [vmem:[%s7674 + $0x1c] sm:$0xf]
        %v7683 = vld [vmem:[%s7674 + $0x20] sm:$0xf]
        %v7684 = vld [vmem:[%s7674 + $0x24] sm:$0xf]
        %v7685 = vld [vmem:[%s7674 + $0x28] sm:$0xf]
        %v7686 = vld [vmem:[%s7674 + $0x2c] sm:$0xf]
        %v7687 = vld [vmem:[%s7674 + $0x30] sm:$0xf]
        %v7688 = vld [vmem:[%s7674 + $0x34] sm:$0xf]
        %v7689 = vld [vmem:[%s7674 + $0x38] sm:$0xf]
        %v7690 = vld [vmem:[%s7674 + $0x3c] sm:$0xf]
        %v7707 = vunpack.c.l.b16 %v7675
        %v7708 = vunpack.c.l.b16 %v7676
        %v7709 = vunpack.c.l.b16 %v7677
        %v7710 = vunpack.c.l.b16 %v7678
        %v7711 = vunpack.c.l.b16 %v7679
        %v7712 = vunpack.c.l.b16 %v7680
        %v7713 = vunpack.c.l.b16 %v7681
        %v7714 = vunpack.c.l.b16 %v7682
        %v7715 = vunpack.c.l.b16 %v7683
        %v7716 = vunpack.c.l.b16 %v7684
        %v7717 = vunpack.c.l.b16 %v7685
        %v7718 = vunpack.c.l.b16 %v7686
        %v7719 = vunpack.c.l.b16 %v7687
        %v7720 = vunpack.c.l.b16 %v7688
        %v7721 = vunpack.c.l.b16 %v7689
        %v7722 = vunpack.c.l.b16 %v7690
        %v7723 = vpack.c.b16 %v7708, %v7707
        %v7724 = vpack.c.b16 %v7710, %v7709
        %v7725 = vpack.c.b16 %v7712, %v7711
        %v7726 = vpack.c.b16 %v7714, %v7713
        %v7727 = vpack.c.b16 %v7716, %v7715
        %v7728 = vpack.c.b16 %v7718, %v7717
        %v7729 = vpack.c.b16 %v7720, %v7719
        %v7730 = vpack.c.b16 %v7722, %v7721
        %7739 = vmatpush.bf16.msra.mxu0 %v7730
        %7740 = vmatpush.bf16.msra.mxu0 %v7729
        %7741 = vmatpush.bf16.msra.mxu0 %v7728
        %7742 = vmatpush.bf16.msra.mxu0 %v7727
        %7743 = vmatpush.bf16.msra.mxu0 %v7726
        %7744 = vmatpush.bf16.msra.mxu0 %v7725
        %7745 = vmatpush.bf16.msra.mxu0 %v7724
        %7746 = vmatpush.bf16.msra.mxu0 %v7723
        %7747 = vmatmul.bf16.gmra.mxu0 %v7673
        %v7748 = vpop.f32.mrf.mxu0
        %v7749 = vadd.f32 0.0, %v7748
        %v7750 = vpop.f32.mrf.mxu0
        %7751 = vdwg.mxu0
        %v7752 = vadd.f32 %v7672, %v7749
        %v7753 = vpack.c.bf16 %v7263, %v7263
        %s7754 = scalar_lea.vmem %s5, 384
        %v7755 = vld [vmem:[%s7754] sm:$0xf]
        %v7756 = vld [vmem:[%s7754 + $0x4] sm:$0xf]
        %v7757 = vld [vmem:[%s7754 + $0x8] sm:$0xf]
        %v7758 = vld [vmem:[%s7754 + $0xc] sm:$0xf]
        %v7759 = vld [vmem:[%s7754 + $0x10] sm:$0xf]
        %v7760 = vld [vmem:[%s7754 + $0x14] sm:$0xf]
        %v7761 = vld [vmem:[%s7754 + $0x18] sm:$0xf]
        %v7762 = vld [vmem:[%s7754 + $0x1c] sm:$0xf]
        %v7763 = vld [vmem:[%s7754 + $0x20] sm:$0xf]
        %v7764 = vld [vmem:[%s7754 + $0x24] sm:$0xf]
        %v7765 = vld [vmem:[%s7754 + $0x28] sm:$0xf]
        %v7766 = vld [vmem:[%s7754 + $0x2c] sm:$0xf]
        %v7767 = vld [vmem:[%s7754 + $0x30] sm:$0xf]
        %v7768 = vld [vmem:[%s7754 + $0x34] sm:$0xf]
        %v7769 = vld [vmem:[%s7754 + $0x38] sm:$0xf]
        %v7770 = vld [vmem:[%s7754 + $0x3c] sm:$0xf]
        %v7787 = vunpack.c.l.b16 %v7755
        %v7788 = vunpack.c.l.b16 %v7756
        %v7789 = vunpack.c.l.b16 %v7757
        %v7790 = vunpack.c.l.b16 %v7758
        %v7791 = vunpack.c.l.b16 %v7759
        %v7792 = vunpack.c.l.b16 %v7760
        %v7793 = vunpack.c.l.b16 %v7761
        %v7794 = vunpack.c.l.b16 %v7762
        %v7795 = vunpack.c.l.b16 %v7763
        %v7796 = vunpack.c.l.b16 %v7764
        %v7797 = vunpack.c.l.b16 %v7765
        %v7798 = vunpack.c.l.b16 %v7766
        %v7799 = vunpack.c.l.b16 %v7767
        %v7800 = vunpack.c.l.b16 %v7768
        %v7801 = vunpack.c.l.b16 %v7769
        %v7802 = vunpack.c.l.b16 %v7770
        %v7803 = vpack.c.b16 %v7788, %v7787
        %v7804 = vpack.c.b16 %v7790, %v7789
        %v7805 = vpack.c.b16 %v7792, %v7791
        %v7806 = vpack.c.b16 %v7794, %v7793
        %v7807 = vpack.c.b16 %v7796, %v7795
        %v7808 = vpack.c.b16 %v7798, %v7797
        %v7809 = vpack.c.b16 %v7800, %v7799
        %v7810 = vpack.c.b16 %v7802, %v7801
        %7819 = vmatpush.bf16.msra.mxu0 %v7810
        %7820 = vmatpush.bf16.msra.mxu0 %v7809
        %7821 = vmatpush.bf16.msra.mxu0 %v7808
        %7822 = vmatpush.bf16.msra.mxu0 %v7807
        %7823 = vmatpush.bf16.msra.mxu0 %v7806
        %7824 = vmatpush.bf16.msra.mxu0 %v7805
        %7825 = vmatpush.bf16.msra.mxu0 %v7804
        %7826 = vmatpush.bf16.msra.mxu0 %v7803
        %7827 = vmatmul.bf16.gmra.mxu0 %v7753
        %v7828 = vpop.f32.mrf.mxu0
        %v7829 = vadd.f32 0.0, %v7828
        %v7830 = vpop.f32.mrf.mxu0
        %7831 = vdwg.mxu0
        %v7832 = vadd.f32 %v7752, %v7829
        %v7833 = vpack.c.bf16 %v7264, %v7264
        %s7834 = scalar_lea.vmem %s5, 448
        %v7835 = vld [vmem:[%s7834] sm:$0xf]
        %v7836 = vld [vmem:[%s7834 + $0x4] sm:$0xf]
        %v7837 = vld [vmem:[%s7834 + $0x8] sm:$0xf]
        %v7838 = vld [vmem:[%s7834 + $0xc] sm:$0xf]
        %v7839 = vld [vmem:[%s7834 + $0x10] sm:$0xf]
        %v7840 = vld [vmem:[%s7834 + $0x14] sm:$0xf]
        %v7841 = vld [vmem:[%s7834 + $0x18] sm:$0xf]
        %v7842 = vld [vmem:[%s7834 + $0x1c] sm:$0xf]
        %v7843 = vld [vmem:[%s7834 + $0x20] sm:$0xf]
        %v7844 = vld [vmem:[%s7834 + $0x24] sm:$0xf]
        %v7845 = vld [vmem:[%s7834 + $0x28] sm:$0xf]
        %v7846 = vld [vmem:[%s7834 + $0x2c] sm:$0xf]
        %v7847 = vld [vmem:[%s7834 + $0x30] sm:$0xf]
        %v7848 = vld [vmem:[%s7834 + $0x34] sm:$0xf]
        %v7849 = vld [vmem:[%s7834 + $0x38] sm:$0xf]
        %v7850 = vld [vmem:[%s7834 + $0x3c] sm:$0xf]
        %v7867 = vunpack.c.l.b16 %v7835
        %v7868 = vunpack.c.l.b16 %v7836
        %v7869 = vunpack.c.l.b16 %v7837
        %v7870 = vunpack.c.l.b16 %v7838
        %v7871 = vunpack.c.l.b16 %v7839
        %v7872 = vunpack.c.l.b16 %v7840
        %v7873 = vunpack.c.l.b16 %v7841
        %v7874 = vunpack.c.l.b16 %v7842
        %v7875 = vunpack.c.l.b16 %v7843
        %v7876 = vunpack.c.l.b16 %v7844
        %v7877 = vunpack.c.l.b16 %v7845
        %v7878 = vunpack.c.l.b16 %v7846
        %v7879 = vunpack.c.l.b16 %v7847
        %v7880 = vunpack.c.l.b16 %v7848
        %v7881 = vunpack.c.l.b16 %v7849
        %v7882 = vunpack.c.l.b16 %v7850
        %v7883 = vpack.c.b16 %v7868, %v7867
        %v7884 = vpack.c.b16 %v7870, %v7869
        %v7885 = vpack.c.b16 %v7872, %v7871
        %v7886 = vpack.c.b16 %v7874, %v7873
        %v7887 = vpack.c.b16 %v7876, %v7875
        %v7888 = vpack.c.b16 %v7878, %v7877
        %v7889 = vpack.c.b16 %v7880, %v7879
        %v7890 = vpack.c.b16 %v7882, %v7881
        %7899 = vmatpush.bf16.msra.mxu0 %v7890
        %7900 = vmatpush.bf16.msra.mxu0 %v7889
        %7901 = vmatpush.bf16.msra.mxu0 %v7888
        %7902 = vmatpush.bf16.msra.mxu0 %v7887
        %7903 = vmatpush.bf16.msra.mxu0 %v7886
        %7904 = vmatpush.bf16.msra.mxu0 %v7885
        %7905 = vmatpush.bf16.msra.mxu0 %v7884
        %7906 = vmatpush.bf16.msra.mxu0 %v7883
        %7907 = vmatmul.bf16.gmra.mxu0 %v7833
        %v7908 = vpop.f32.mrf.mxu0
        %v7909 = vadd.f32 0.0, %v7908
        %v7910 = vpop.f32.mrf.mxu0
        %7911 = vdwg.mxu0
        %v7912 = vadd.f32 %v7832, %v7909
        %v7913 = vpack.c.bf16 %v7265, %v7265
        %s7914 = scalar_lea.vmem %s5, 512
        %v7915 = vld [vmem:[%s7914] sm:$0xf]
        %v7916 = vld [vmem:[%s7914 + $0x4] sm:$0xf]
        %v7917 = vld [vmem:[%s7914 + $0x8] sm:$0xf]
        %v7918 = vld [vmem:[%s7914 + $0xc] sm:$0xf]
        %v7919 = vld [vmem:[%s7914 + $0x10] sm:$0xf]
        %v7920 = vld [vmem:[%s7914 + $0x14] sm:$0xf]
        %v7921 = vld [vmem:[%s7914 + $0x18] sm:$0xf]
        %v7922 = vld [vmem:[%s7914 + $0x1c] sm:$0xf]
        %v7923 = vld [vmem:[%s7914 + $0x20] sm:$0xf]
        %v7924 = vld [vmem:[%s7914 + $0x24] sm:$0xf]
        %v7925 = vld [vmem:[%s7914 + $0x28] sm:$0xf]
        %v7926 = vld [vmem:[%s7914 + $0x2c] sm:$0xf]
        %v7927 = vld [vmem:[%s7914 + $0x30] sm:$0xf]
        %v7928 = vld [vmem:[%s7914 + $0x34] sm:$0xf]
        %v7929 = vld [vmem:[%s7914 + $0x38] sm:$0xf]
        %v7930 = vld [vmem:[%s7914 + $0x3c] sm:$0xf]
        %v7947 = vunpack.c.l.b16 %v7915
        %v7948 = vunpack.c.l.b16 %v7916
        %v7949 = vunpack.c.l.b16 %v7917
        %v7950 = vunpack.c.l.b16 %v7918
        %v7951 = vunpack.c.l.b16 %v7919
        %v7952 = vunpack.c.l.b16 %v7920
        %v7953 = vunpack.c.l.b16 %v7921
        %v7954 = vunpack.c.l.b16 %v7922
        %v7955 = vunpack.c.l.b16 %v7923
        %v7956 = vunpack.c.l.b16 %v7924
        %v7957 = vunpack.c.l.b16 %v7925
        %v7958 = vunpack.c.l.b16 %v7926
        %v7959 = vunpack.c.l.b16 %v7927
        %v7960 = vunpack.c.l.b16 %v7928
        %v7961 = vunpack.c.l.b16 %v7929
        %v7962 = vunpack.c.l.b16 %v7930
        %v7963 = vpack.c.b16 %v7948, %v7947
        %v7964 = vpack.c.b16 %v7950, %v7949
        %v7965 = vpack.c.b16 %v7952, %v7951
        %v7966 = vpack.c.b16 %v7954, %v7953
        %v7967 = vpack.c.b16 %v7956, %v7955
        %v7968 = vpack.c.b16 %v7958, %v7957
        %v7969 = vpack.c.b16 %v7960, %v7959
        %v7970 = vpack.c.b16 %v7962, %v7961
        %7979 = vmatpush.bf16.msra.mxu0 %v7970
        %7980 = vmatpush.bf16.msra.mxu0 %v7969
        %7981 = vmatpush.bf16.msra.mxu0 %v7968
        %7982 = vmatpush.bf16.msra.mxu0 %v7967
        %7983 = vmatpush.bf16.msra.mxu0 %v7966
        %7984 = vmatpush.bf16.msra.mxu0 %v7965
        %7985 = vmatpush.bf16.msra.mxu0 %v7964
        %7986 = vmatpush.bf16.msra.mxu0 %v7963
        %7987 = vmatmul.bf16.gmra.mxu0 %v7913
        %v7988 = vpop.f32.mrf.mxu0
        %v7989 = vadd.f32 0.0, %v7988
        %v7990 = vpop.f32.mrf.mxu0
        %7991 = vdwg.mxu0
        %v7992 = vadd.f32 %v7912, %v7989
        %v7993 = vpack.c.bf16 %v7266, %v7266
        %s7994 = scalar_lea.vmem %s5, 576
        %v7995 = vld [vmem:[%s7994] sm:$0xf]
        %v7996 = vld [vmem:[%s7994 + $0x4] sm:$0xf]
        %v7997 = vld [vmem:[%s7994 + $0x8] sm:$0xf]
        %v7998 = vld [vmem:[%s7994 + $0xc] sm:$0xf]
        %v7999 = vld [vmem:[%s7994 + $0x10] sm:$0xf]
        %v8000 = vld [vmem:[%s7994 + $0x14] sm:$0xf]
        %v8001 = vld [vmem:[%s7994 + $0x18] sm:$0xf]
        %v8002 = vld [vmem:[%s7994 + $0x1c] sm:$0xf]
        %v8003 = vld [vmem:[%s7994 + $0x20] sm:$0xf]
        %v8004 = vld [vmem:[%s7994 + $0x24] sm:$0xf]
        %v8005 = vld [vmem:[%s7994 + $0x28] sm:$0xf]
        %v8006 = vld [vmem:[%s7994 + $0x2c] sm:$0xf]
        %v8007 = vld [vmem:[%s7994 + $0x30] sm:$0xf]
        %v8008 = vld [vmem:[%s7994 + $0x34] sm:$0xf]
        %v8009 = vld [vmem:[%s7994 + $0x38] sm:$0xf]
        %v8010 = vld [vmem:[%s7994 + $0x3c] sm:$0xf]
        %v8027 = vunpack.c.l.b16 %v7995
        %v8028 = vunpack.c.l.b16 %v7996
        %v8029 = vunpack.c.l.b16 %v7997
        %v8030 = vunpack.c.l.b16 %v7998
        %v8031 = vunpack.c.l.b16 %v7999
        %v8032 = vunpack.c.l.b16 %v8000
        %v8033 = vunpack.c.l.b16 %v8001
        %v8034 = vunpack.c.l.b16 %v8002
        %v8035 = vunpack.c.l.b16 %v8003
        %v8036 = vunpack.c.l.b16 %v8004
        %v8037 = vunpack.c.l.b16 %v8005
        %v8038 = vunpack.c.l.b16 %v8006
        %v8039 = vunpack.c.l.b16 %v8007
        %v8040 = vunpack.c.l.b16 %v8008
        %v8041 = vunpack.c.l.b16 %v8009
        %v8042 = vunpack.c.l.b16 %v8010
        %v8043 = vpack.c.b16 %v8028, %v8027
        %v8044 = vpack.c.b16 %v8030, %v8029
        %v8045 = vpack.c.b16 %v8032, %v8031
        %v8046 = vpack.c.b16 %v8034, %v8033
        %v8047 = vpack.c.b16 %v8036, %v8035
        %v8048 = vpack.c.b16 %v8038, %v8037
        %v8049 = vpack.c.b16 %v8040, %v8039
        %v8050 = vpack.c.b16 %v8042, %v8041
        %8059 = vmatpush.bf16.msra.mxu0 %v8050
        %8060 = vmatpush.bf16.msra.mxu0 %v8049
        %8061 = vmatpush.bf16.msra.mxu0 %v8048
        %8062 = vmatpush.bf16.msra.mxu0 %v8047
        %8063 = vmatpush.bf16.msra.mxu0 %v8046
        %8064 = vmatpush.bf16.msra.mxu0 %v8045
        %8065 = vmatpush.bf16.msra.mxu0 %v8044
        %8066 = vmatpush.bf16.msra.mxu0 %v8043
        %8067 = vmatmul.bf16.gmra.mxu0 %v7993
        %v8068 = vpop.f32.mrf.mxu0
        %v8069 = vadd.f32 0.0, %v8068
        %v8070 = vpop.f32.mrf.mxu0
        %8071 = vdwg.mxu0
        %v8072 = vadd.f32 %v7992, %v8069
        %v8073 = vpack.c.bf16 %v7267, %v7267
        %s8074 = scalar_lea.vmem %s5, 640
        %v8075 = vld [vmem:[%s8074] sm:$0xf]
        %v8076 = vld [vmem:[%s8074 + $0x4] sm:$0xf]
        %v8077 = vld [vmem:[%s8074 + $0x8] sm:$0xf]
        %v8078 = vld [vmem:[%s8074 + $0xc] sm:$0xf]
        %v8079 = vld [vmem:[%s8074 + $0x10] sm:$0xf]
        %v8080 = vld [vmem:[%s8074 + $0x14] sm:$0xf]
        %v8081 = vld [vmem:[%s8074 + $0x18] sm:$0xf]
        %v8082 = vld [vmem:[%s8074 + $0x1c] sm:$0xf]
        %v8083 = vld [vmem:[%s8074 + $0x20] sm:$0xf]
        %v8084 = vld [vmem:[%s8074 + $0x24] sm:$0xf]
        %v8085 = vld [vmem:[%s8074 + $0x28] sm:$0xf]
        %v8086 = vld [vmem:[%s8074 + $0x2c] sm:$0xf]
        %v8087 = vld [vmem:[%s8074 + $0x30] sm:$0xf]
        %v8088 = vld [vmem:[%s8074 + $0x34] sm:$0xf]
        %v8089 = vld [vmem:[%s8074 + $0x38] sm:$0xf]
        %v8090 = vld [vmem:[%s8074 + $0x3c] sm:$0xf]
        %v8107 = vunpack.c.l.b16 %v8075
        %v8108 = vunpack.c.l.b16 %v8076
        %v8109 = vunpack.c.l.b16 %v8077
        %v8110 = vunpack.c.l.b16 %v8078
        %v8111 = vunpack.c.l.b16 %v8079
        %v8112 = vunpack.c.l.b16 %v8080
        %v8113 = vunpack.c.l.b16 %v8081
        %v8114 = vunpack.c.l.b16 %v8082
        %v8115 = vunpack.c.l.b16 %v8083
        %v8116 = vunpack.c.l.b16 %v8084
        %v8117 = vunpack.c.l.b16 %v8085
        %v8118 = vunpack.c.l.b16 %v8086
        %v8119 = vunpack.c.l.b16 %v8087
        %v8120 = vunpack.c.l.b16 %v8088
        %v8121 = vunpack.c.l.b16 %v8089
        %v8122 = vunpack.c.l.b16 %v8090
        %v8123 = vpack.c.b16 %v8108, %v8107
        %v8124 = vpack.c.b16 %v8110, %v8109
        %v8125 = vpack.c.b16 %v8112, %v8111
        %v8126 = vpack.c.b16 %v8114, %v8113
        %v8127 = vpack.c.b16 %v8116, %v8115
        %v8128 = vpack.c.b16 %v8118, %v8117
        %v8129 = vpack.c.b16 %v8120, %v8119
        %v8130 = vpack.c.b16 %v8122, %v8121
        %8139 = vmatpush.bf16.msra.mxu0 %v8130
        %8140 = vmatpush.bf16.msra.mxu0 %v8129
        %8141 = vmatpush.bf16.msra.mxu0 %v8128
        %8142 = vmatpush.bf16.msra.mxu0 %v8127
        %8143 = vmatpush.bf16.msra.mxu0 %v8126
        %8144 = vmatpush.bf16.msra.mxu0 %v8125
        %8145 = vmatpush.bf16.msra.mxu0 %v8124
        %8146 = vmatpush.bf16.msra.mxu0 %v8123
        %8147 = vmatmul.bf16.gmra.mxu0 %v8073
        %v8148 = vpop.f32.mrf.mxu0
        %v8149 = vadd.f32 0.0, %v8148
        %v8150 = vpop.f32.mrf.mxu0
        %8151 = vdwg.mxu0
        %v8152 = vadd.f32 %v8072, %v8149
        %v8153 = vpack.c.bf16 %v7268, %v7268
        %s8154 = scalar_lea.vmem %s5, 704
        %v8155 = vld [vmem:[%s8154] sm:$0xf]
        %v8156 = vld [vmem:[%s8154 + $0x4] sm:$0xf]
        %v8157 = vld [vmem:[%s8154 + $0x8] sm:$0xf]
        %v8158 = vld [vmem:[%s8154 + $0xc] sm:$0xf]
        %v8159 = vld [vmem:[%s8154 + $0x10] sm:$0xf]
        %v8160 = vld [vmem:[%s8154 + $0x14] sm:$0xf]
        %v8161 = vld [vmem:[%s8154 + $0x18] sm:$0xf]
        %v8162 = vld [vmem:[%s8154 + $0x1c] sm:$0xf]
        %v8163 = vld [vmem:[%s8154 + $0x20] sm:$0xf]
        %v8164 = vld [vmem:[%s8154 + $0x24] sm:$0xf]
        %v8165 = vld [vmem:[%s8154 + $0x28] sm:$0xf]
        %v8166 = vld [vmem:[%s8154 + $0x2c] sm:$0xf]
        %v8167 = vld [vmem:[%s8154 + $0x30] sm:$0xf]
        %v8168 = vld [vmem:[%s8154 + $0x34] sm:$0xf]
        %v8169 = vld [vmem:[%s8154 + $0x38] sm:$0xf]
        %v8170 = vld [vmem:[%s8154 + $0x3c] sm:$0xf]
        %v8187 = vunpack.c.l.b16 %v8155
        %v8188 = vunpack.c.l.b16 %v8156
        %v8189 = vunpack.c.l.b16 %v8157
        %v8190 = vunpack.c.l.b16 %v8158
        %v8191 = vunpack.c.l.b16 %v8159
        %v8192 = vunpack.c.l.b16 %v8160
        %v8193 = vunpack.c.l.b16 %v8161
        %v8194 = vunpack.c.l.b16 %v8162
        %v8195 = vunpack.c.l.b16 %v8163
        %v8196 = vunpack.c.l.b16 %v8164
        %v8197 = vunpack.c.l.b16 %v8165
        %v8198 = vunpack.c.l.b16 %v8166
        %v8199 = vunpack.c.l.b16 %v8167
        %v8200 = vunpack.c.l.b16 %v8168
        %v8201 = vunpack.c.l.b16 %v8169
        %v8202 = vunpack.c.l.b16 %v8170
        %v8203 = vpack.c.b16 %v8188, %v8187
        %v8204 = vpack.c.b16 %v8190, %v8189
        %v8205 = vpack.c.b16 %v8192, %v8191
        %v8206 = vpack.c.b16 %v8194, %v8193
        %v8207 = vpack.c.b16 %v8196, %v8195
        %v8208 = vpack.c.b16 %v8198, %v8197
        %v8209 = vpack.c.b16 %v8200, %v8199
        %v8210 = vpack.c.b16 %v8202, %v8201
        %8219 = vmatpush.bf16.msra.mxu0 %v8210
        %8220 = vmatpush.bf16.msra.mxu0 %v8209
        %8221 = vmatpush.bf16.msra.mxu0 %v8208
        %8222 = vmatpush.bf16.msra.mxu0 %v8207
        %8223 = vmatpush.bf16.msra.mxu0 %v8206
        %8224 = vmatpush.bf16.msra.mxu0 %v8205
        %8225 = vmatpush.bf16.msra.mxu0 %v8204
        %8226 = vmatpush.bf16.msra.mxu0 %v8203
        %8227 = vmatmul.bf16.gmra.mxu0 %v8153
        %v8228 = vpop.f32.mrf.mxu0
        %v8229 = vadd.f32 0.0, %v8228
        %v8230 = vpop.f32.mrf.mxu0
        %8231 = vdwg.mxu0
        %v8232 = vadd.f32 %v8152, %v8229
        %v8233 = vpack.c.bf16 %v7269, %v7269
        %s8234 = scalar_lea.vmem %s5, 768
        %v8235 = vld [vmem:[%s8234] sm:$0xf]
        %v8236 = vld [vmem:[%s8234 + $0x4] sm:$0xf]
        %v8237 = vld [vmem:[%s8234 + $0x8] sm:$0xf]
        %v8238 = vld [vmem:[%s8234 + $0xc] sm:$0xf]
        %v8239 = vld [vmem:[%s8234 + $0x10] sm:$0xf]
        %v8240 = vld [vmem:[%s8234 + $0x14] sm:$0xf]
        %v8241 = vld [vmem:[%s8234 + $0x18] sm:$0xf]
        %v8242 = vld [vmem:[%s8234 + $0x1c] sm:$0xf]
        %v8243 = vld [vmem:[%s8234 + $0x20] sm:$0xf]
        %v8244 = vld [vmem:[%s8234 + $0x24] sm:$0xf]
        %v8245 = vld [vmem:[%s8234 + $0x28] sm:$0xf]
        %v8246 = vld [vmem:[%s8234 + $0x2c] sm:$0xf]
        %v8247 = vld [vmem:[%s8234 + $0x30] sm:$0xf]
        %v8248 = vld [vmem:[%s8234 + $0x34] sm:$0xf]
        %v8249 = vld [vmem:[%s8234 + $0x38] sm:$0xf]
        %v8250 = vld [vmem:[%s8234 + $0x3c] sm:$0xf]
        %v8267 = vunpack.c.l.b16 %v8235
        %v8268 = vunpack.c.l.b16 %v8236
        %v8269 = vunpack.c.l.b16 %v8237
        %v8270 = vunpack.c.l.b16 %v8238
        %v8271 = vunpack.c.l.b16 %v8239
        %v8272 = vunpack.c.l.b16 %v8240
        %v8273 = vunpack.c.l.b16 %v8241
        %v8274 = vunpack.c.l.b16 %v8242
        %v8275 = vunpack.c.l.b16 %v8243
        %v8276 = vunpack.c.l.b16 %v8244
        %v8277 = vunpack.c.l.b16 %v8245
        %v8278 = vunpack.c.l.b16 %v8246
        %v8279 = vunpack.c.l.b16 %v8247
        %v8280 = vunpack.c.l.b16 %v8248
        %v8281 = vunpack.c.l.b16 %v8249
        %v8282 = vunpack.c.l.b16 %v8250
        %v8283 = vpack.c.b16 %v8268, %v8267
        %v8284 = vpack.c.b16 %v8270, %v8269
        %v8285 = vpack.c.b16 %v8272, %v8271
        %v8286 = vpack.c.b16 %v8274, %v8273
        %v8287 = vpack.c.b16 %v8276, %v8275
        %v8288 = vpack.c.b16 %v8278, %v8277
        %v8289 = vpack.c.b16 %v8280, %v8279
        %v8290 = vpack.c.b16 %v8282, %v8281
        %8299 = vmatpush.bf16.msra.mxu0 %v8290
        %8300 = vmatpush.bf16.msra.mxu0 %v8289
        %8301 = vmatpush.bf16.msra.mxu0 %v8288
        %8302 = vmatpush.bf16.msra.mxu0 %v8287
        %8303 = vmatpush.bf16.msra.mxu0 %v8286
        %8304 = vmatpush.bf16.msra.mxu0 %v8285
        %8305 = vmatpush.bf16.msra.mxu0 %v8284
        %8306 = vmatpush.bf16.msra.mxu0 %v8283
        %8307 = vmatmul.bf16.gmra.mxu0 %v8233
        %v8308 = vpop.f32.mrf.mxu0
        %v8309 = vadd.f32 0.0, %v8308
        %v8310 = vpop.f32.mrf.mxu0
        %8311 = vdwg.mxu0
        %v8312 = vadd.f32 %v8232, %v8309
        %v8313 = vpack.c.bf16 %v7270, %v7270
        %s8314 = scalar_lea.vmem %s5, 832
        %v8315 = vld [vmem:[%s8314] sm:$0xf]
        %v8316 = vld [vmem:[%s8314 + $0x4] sm:$0xf]
        %v8317 = vld [vmem:[%s8314 + $0x8] sm:$0xf]
        %v8318 = vld [vmem:[%s8314 + $0xc] sm:$0xf]
        %v8319 = vld [vmem:[%s8314 + $0x10] sm:$0xf]
        %v8320 = vld [vmem:[%s8314 + $0x14] sm:$0xf]
        %v8321 = vld [vmem:[%s8314 + $0x18] sm:$0xf]
        %v8322 = vld [vmem:[%s8314 + $0x1c] sm:$0xf]
        %v8323 = vld [vmem:[%s8314 + $0x20] sm:$0xf]
        %v8324 = vld [vmem:[%s8314 + $0x24] sm:$0xf]
        %v8325 = vld [vmem:[%s8314 + $0x28] sm:$0xf]
        %v8326 = vld [vmem:[%s8314 + $0x2c] sm:$0xf]
        %v8327 = vld [vmem:[%s8314 + $0x30] sm:$0xf]
        %v8328 = vld [vmem:[%s8314 + $0x34] sm:$0xf]
        %v8329 = vld [vmem:[%s8314 + $0x38] sm:$0xf]
        %v8330 = vld [vmem:[%s8314 + $0x3c] sm:$0xf]
        %v8347 = vunpack.c.l.b16 %v8315
        %v8348 = vunpack.c.l.b16 %v8316
        %v8349 = vunpack.c.l.b16 %v8317
        %v8350 = vunpack.c.l.b16 %v8318
        %v8351 = vunpack.c.l.b16 %v8319
        %v8352 = vunpack.c.l.b16 %v8320
        %v8353 = vunpack.c.l.b16 %v8321
        %v8354 = vunpack.c.l.b16 %v8322
        %v8355 = vunpack.c.l.b16 %v8323
        %v8356 = vunpack.c.l.b16 %v8324
        %v8357 = vunpack.c.l.b16 %v8325
        %v8358 = vunpack.c.l.b16 %v8326
        %v8359 = vunpack.c.l.b16 %v8327
        %v8360 = vunpack.c.l.b16 %v8328
        %v8361 = vunpack.c.l.b16 %v8329
        %v8362 = vunpack.c.l.b16 %v8330
        %v8363 = vpack.c.b16 %v8348, %v8347
        %v8364 = vpack.c.b16 %v8350, %v8349
        %v8365 = vpack.c.b16 %v8352, %v8351
        %v8366 = vpack.c.b16 %v8354, %v8353
        %v8367 = vpack.c.b16 %v8356, %v8355
        %v8368 = vpack.c.b16 %v8358, %v8357
        %v8369 = vpack.c.b16 %v8360, %v8359
        %v8370 = vpack.c.b16 %v8362, %v8361
        %8379 = vmatpush.bf16.msra.mxu0 %v8370
        %8380 = vmatpush.bf16.msra.mxu0 %v8369
        %8381 = vmatpush.bf16.msra.mxu0 %v8368
        %8382 = vmatpush.bf16.msra.mxu0 %v8367
        %8383 = vmatpush.bf16.msra.mxu0 %v8366
        %8384 = vmatpush.bf16.msra.mxu0 %v8365
        %8385 = vmatpush.bf16.msra.mxu0 %v8364
        %8386 = vmatpush.bf16.msra.mxu0 %v8363
        %8387 = vmatmul.bf16.gmra.mxu0 %v8313
        %v8388 = vpop.f32.mrf.mxu0
        %v8389 = vadd.f32 0.0, %v8388
        %v8390 = vpop.f32.mrf.mxu0
        %8391 = vdwg.mxu0
        %v8392 = vadd.f32 %v8312, %v8389
        %v8393 = vpack.c.bf16 %v7271, %v7271
        %s8394 = scalar_lea.vmem %s5, 896
        %v8395 = vld [vmem:[%s8394] sm:$0xf]
        %v8396 = vld [vmem:[%s8394 + $0x4] sm:$0xf]
        %v8397 = vld [vmem:[%s8394 + $0x8] sm:$0xf]
        %v8398 = vld [vmem:[%s8394 + $0xc] sm:$0xf]
        %v8399 = vld [vmem:[%s8394 + $0x10] sm:$0xf]
        %v8400 = vld [vmem:[%s8394 + $0x14] sm:$0xf]
        %v8401 = vld [vmem:[%s8394 + $0x18] sm:$0xf]
        %v8402 = vld [vmem:[%s8394 + $0x1c] sm:$0xf]
        %v8403 = vld [vmem:[%s8394 + $0x20] sm:$0xf]
        %v8404 = vld [vmem:[%s8394 + $0x24] sm:$0xf]
        %v8405 = vld [vmem:[%s8394 + $0x28] sm:$0xf]
        %v8406 = vld [vmem:[%s8394 + $0x2c] sm:$0xf]
        %v8407 = vld [vmem:[%s8394 + $0x30] sm:$0xf]
        %v8408 = vld [vmem:[%s8394 + $0x34] sm:$0xf]
        %v8409 = vld [vmem:[%s8394 + $0x38] sm:$0xf]
        %v8410 = vld [vmem:[%s8394 + $0x3c] sm:$0xf]
        %v8427 = vunpack.c.l.b16 %v8395
        %v8428 = vunpack.c.l.b16 %v8396
        %v8429 = vunpack.c.l.b16 %v8397
        %v8430 = vunpack.c.l.b16 %v8398
        %v8431 = vunpack.c.l.b16 %v8399
        %v8432 = vunpack.c.l.b16 %v8400
        %v8433 = vunpack.c.l.b16 %v8401
        %v8434 = vunpack.c.l.b16 %v8402
        %v8435 = vunpack.c.l.b16 %v8403
        %v8436 = vunpack.c.l.b16 %v8404
        %v8437 = vunpack.c.l.b16 %v8405
        %v8438 = vunpack.c.l.b16 %v8406
        %v8439 = vunpack.c.l.b16 %v8407
        %v8440 = vunpack.c.l.b16 %v8408
        %v8441 = vunpack.c.l.b16 %v8409
        %v8442 = vunpack.c.l.b16 %v8410
        %v8443 = vpack.c.b16 %v8428, %v8427
        %v8444 = vpack.c.b16 %v8430, %v8429
        %v8445 = vpack.c.b16 %v8432, %v8431
        %v8446 = vpack.c.b16 %v8434, %v8433
        %v8447 = vpack.c.b16 %v8436, %v8435
        %v8448 = vpack.c.b16 %v8438, %v8437
        %v8449 = vpack.c.b16 %v8440, %v8439
        %v8450 = vpack.c.b16 %v8442, %v8441
        %8459 = vmatpush.bf16.msra.mxu0 %v8450
        %8460 = vmatpush.bf16.msra.mxu0 %v8449
        %8461 = vmatpush.bf16.msra.mxu0 %v8448
        %8462 = vmatpush.bf16.msra.mxu0 %v8447
        %8463 = vmatpush.bf16.msra.mxu0 %v8446
        %8464 = vmatpush.bf16.msra.mxu0 %v8445
        %8465 = vmatpush.bf16.msra.mxu0 %v8444
        %8466 = vmatpush.bf16.msra.mxu0 %v8443
        %8467 = vmatmul.bf16.gmra.mxu0 %v8393
        %v8468 = vpop.f32.mrf.mxu0
        %v8469 = vadd.f32 0.0, %v8468
        %v8470 = vpop.f32.mrf.mxu0
        %8471 = vdwg.mxu0
        %v8472 = vadd.f32 %v8392, %v8469
        %v8473 = vpack.c.bf16 %v7272, %v7272
        %s8474 = scalar_lea.vmem %s5, 960
        %v8475 = vld [vmem:[%s8474] sm:$0xf]
        %v8476 = vld [vmem:[%s8474 + $0x4] sm:$0xf]
        %v8477 = vld [vmem:[%s8474 + $0x8] sm:$0xf]
        %v8478 = vld [vmem:[%s8474 + $0xc] sm:$0xf]
        %v8479 = vld [vmem:[%s8474 + $0x10] sm:$0xf]
        %v8480 = vld [vmem:[%s8474 + $0x14] sm:$0xf]
        %v8481 = vld [vmem:[%s8474 + $0x18] sm:$0xf]
        %v8482 = vld [vmem:[%s8474 + $0x1c] sm:$0xf]
        %v8483 = vld [vmem:[%s8474 + $0x20] sm:$0xf]
        %v8484 = vld [vmem:[%s8474 + $0x24] sm:$0xf]
        %v8485 = vld [vmem:[%s8474 + $0x28] sm:$0xf]
        %v8486 = vld [vmem:[%s8474 + $0x2c] sm:$0xf]
        %v8487 = vld [vmem:[%s8474 + $0x30] sm:$0xf]
        %v8488 = vld [vmem:[%s8474 + $0x34] sm:$0xf]
        %v8489 = vld [vmem:[%s8474 + $0x38] sm:$0xf]
        %v8490 = vld [vmem:[%s8474 + $0x3c] sm:$0xf]
        %v8507 = vunpack.c.l.b16 %v8475
        %v8508 = vunpack.c.l.b16 %v8476
        %v8509 = vunpack.c.l.b16 %v8477
        %v8510 = vunpack.c.l.b16 %v8478
        %v8511 = vunpack.c.l.b16 %v8479
        %v8512 = vunpack.c.l.b16 %v8480
        %v8513 = vunpack.c.l.b16 %v8481
        %v8514 = vunpack.c.l.b16 %v8482
        %v8515 = vunpack.c.l.b16 %v8483
        %v8516 = vunpack.c.l.b16 %v8484
        %v8517 = vunpack.c.l.b16 %v8485
        %v8518 = vunpack.c.l.b16 %v8486
        %v8519 = vunpack.c.l.b16 %v8487
        %v8520 = vunpack.c.l.b16 %v8488
        %v8521 = vunpack.c.l.b16 %v8489
        %v8522 = vunpack.c.l.b16 %v8490
        %v8523 = vpack.c.b16 %v8508, %v8507
        %v8524 = vpack.c.b16 %v8510, %v8509
        %v8525 = vpack.c.b16 %v8512, %v8511
        %v8526 = vpack.c.b16 %v8514, %v8513
        %v8527 = vpack.c.b16 %v8516, %v8515
        %v8528 = vpack.c.b16 %v8518, %v8517
        %v8529 = vpack.c.b16 %v8520, %v8519
        %v8530 = vpack.c.b16 %v8522, %v8521
        %8539 = vmatpush.bf16.msra.mxu0 %v8530
        %8540 = vmatpush.bf16.msra.mxu0 %v8529
        %8541 = vmatpush.bf16.msra.mxu0 %v8528
        %8542 = vmatpush.bf16.msra.mxu0 %v8527
        %8543 = vmatpush.bf16.msra.mxu0 %v8526
        %8544 = vmatpush.bf16.msra.mxu0 %v8525
        %8545 = vmatpush.bf16.msra.mxu0 %v8524
        %8546 = vmatpush.bf16.msra.mxu0 %v8523
        %8547 = vmatmul.bf16.gmra.mxu0 %v8473
        %v8548 = vpop.f32.mrf.mxu0
        %v8549 = vadd.f32 0.0, %v8548
        %v8550 = vpop.f32.mrf.mxu0
        %8551 = vdwg.mxu0
        %v8552 = vadd.f32 %v8472, %v8549
        %v8553 = vmax.f32 %v8552, 0.0
        %v8554 = vpack.c.bf16 %v8553, %v8553
        %v8555 = vld [vmem:[%s7] sm:$0xf]
        %v8556 = vld [vmem:[%s7 + $0x4] sm:$0xf]
        %v8557 = vld [vmem:[%s7 + $0x8] sm:$0xf]
        %v8558 = vld [vmem:[%s7 + $0xc] sm:$0xf]
        %v8559 = vld [vmem:[%s7 + $0x10] sm:$0xf]
        %v8560 = vld [vmem:[%s7 + $0x14] sm:$0xf]
        %v8561 = vld [vmem:[%s7 + $0x18] sm:$0xf]
        %v8562 = vld [vmem:[%s7 + $0x1c] sm:$0xf]
        %v8563 = vld [vmem:[%s7 + $0x20] sm:$0xf]
        %v8564 = vld [vmem:[%s7 + $0x24] sm:$0xf]
        %v8565 = vld [vmem:[%s7 + $0x28] sm:$0xf]
        %v8566 = vld [vmem:[%s7 + $0x2c] sm:$0xf]
        %v8567 = vld [vmem:[%s7 + $0x30] sm:$0xf]
        %v8568 = vld [vmem:[%s7 + $0x34] sm:$0xf]
        %v8569 = vld [vmem:[%s7 + $0x38] sm:$0xf]
        %v8570 = vld [vmem:[%s7 + $0x3c] sm:$0xf]
        %v8571 = vld [vmem:[%s8] sm:$0x1]
        %v8588 = vunpack.c.l.b16 %v8555
        %v8589 = vunpack.c.l.b16 %v8556
        %v8590 = vunpack.c.l.b16 %v8557
        %v8591 = vunpack.c.l.b16 %v8558
        %v8592 = vunpack.c.l.b16 %v8559
        %v8593 = vunpack.c.l.b16 %v8560
        %v8594 = vunpack.c.l.b16 %v8561
        %v8595 = vunpack.c.l.b16 %v8562
        %v8596 = vunpack.c.l.b16 %v8563
        %v8597 = vunpack.c.l.b16 %v8564
        %v8598 = vunpack.c.l.b16 %v8565
        %v8599 = vunpack.c.l.b16 %v8566
        %v8600 = vunpack.c.l.b16 %v8567
        %v8601 = vunpack.c.l.b16 %v8568
        %v8602 = vunpack.c.l.b16 %v8569
        %v8603 = vunpack.c.l.b16 %v8570
        %v8604 = vpack.c.b16 %v8589, %v8588
        %v8605 = vpack.c.b16 %v8591, %v8590
        %v8606 = vpack.c.b16 %v8593, %v8592
        %v8607 = vpack.c.b16 %v8595, %v8594
        %v8608 = vpack.c.b16 %v8597, %v8596
        %v8609 = vpack.c.b16 %v8599, %v8598
        %v8610 = vpack.c.b16 %v8601, %v8600
        %v8611 = vpack.c.b16 %v8603, %v8602
        %8620 = vmatpush.bf16.msra.mxu0 %v8611
        %8621 = vmatpush.bf16.msra.mxu0 %v8610
        %8622 = vmatpush.bf16.msra.mxu0 %v8609
        %8623 = vmatpush.bf16.msra.mxu0 %v8608
        %8624 = vmatpush.bf16.msra.mxu0 %v8607
        %8625 = vmatpush.bf16.msra.mxu0 %v8606
        %8626 = vmatpush.bf16.msra.mxu0 %v8605
        %8627 = vmatpush.bf16.msra.mxu0 %v8604
        %8628 = vmatmul.bf16.gmra.mxu0 %v8554
        %v8629 = vpop.f32.mrf.mxu0
        %v8630 = vadd.f32 %v8571, %v8629
        %v8631 = vpop.f32.mrf.mxu0
        %8632 = vdwg.mxu0
        %vm8633 = vcmask 1040384
        %v8634 = vsel %vm8633, %v8630, -inf
        %8635 = vmax.xlane.f32.xlu0 %v8634
        %v8636 = vpop.xlane.xlu0 %8635
        %v8637 = vsub.f32 %v8630, %v8636
        %v8638 = vmul.f32 %v8637, 1.442695
        %v8639 = vpow.pop %v8638
        %v8640 = vsel %vm8633, %v8639, 0.0
        %8641 = vadd.xlane.f32.xlu0 %v8640
        %v8642 = vpop.xlane.xlu0 %8641
        %v8643 = vrcp.pop %v8642
        %v8644 = vmul.f32 %v8642, %v8643
        %v8645 = vsub.f32 2.0, %v8644
        %v8646 = vmul.f32 %v8643, %v8645
        %v8647 = vmul.f32 %v8639, %v8646
        %8648 = vst [vmem:[%s341] sm:$0x1] %v8647
        %s8649 = sand.u32 %s226, 1
        %s8650 = scalar_lea.sflag [#allocation6], %s8649
        %s8651 = sand.u32 %s226, 1
        %s8652 = scalar_lea.vmem [#allocation7], %s8651
        // Predicated region
        $region61: #{yourcodenet_forward.1} parent=55 // pred_check
          %p8653 = pneg %p236
        $region62: #{yourcodenet_forward.1} parent=55 // pred_check_branch
          %8655 = sbr.rel (%p8653) target = $region64
        $region63: #{yourcodenet_forward.1} parent=55 // pred_region
          %8657 = vsyncadd %s8650, 0
          %s8658 = scalar_lea.hbm %s9, %s24
          %s8660 = sshll.u32 %s8652, 4
          %s8661 = int_to_ptr.vmem [resolvable:$true] %s8660
          %s8662 = sshll.u32 %s8658, 4
          %s8663 = int_to_ptr.hbm [resolvable:$true] %s8662
          %8665 = dma.vmem_to_hbm [thread:$0]  %s8661, 16, %s8663, %s8650
        $region64: #{yourcodenet_forward.1} parent=55 // pred_fallthru
          _
      $region56: #{yourcodenet_forward.1} parent=5 // pred_fallthru
        _
      %p8666 = scmp.le.s32.totalorder 2, %s19
      // Predicated region
      $region65: #{yourcodenet_forward.1} parent=5 // pred_check
        %p8667 = pneg %p8666
      $region66: #{yourcodenet_forward.1} parent=5 // pred_check_branch
        %8669 = sbr.rel (%p8667) target = $region68
      $region67: #{yourcodenet_forward.1} parent=5 // pred_region
        %s8670 = ssub.s32 %s19, 2
        // Predicated region
        $region69: #{yourcodenet_forward.1} parent=67 // pred_check
          %p8671 = pneg %p242
        $region70: #{yourcodenet_forward.1} parent=67 // pred_check_branch
          %8673 = sbr.rel (%p8671) target = $region72
        $region71: #{yourcodenet_forward.1} parent=67 // pred_region
          %s8674 = sand.u32 %s227, 1
          %s8675 = scalar_lea.sflag [#allocation6], %s8674
          %s8676 = sand.u32 %s227, 1
          %s8677 = scalar_lea.vmem [#allocation7], %s8676
          %8679 = dma.done %s8675, 16
        $region72: #{yourcodenet_forward.1} parent=67 // pred_fallthru
          _
      $region68: #{yourcodenet_forward.1} parent=5 // pred_fallthru
        _
    $region6: #{yourcodenet_forward.1} parent=1 // loop_footer
      %s23 = sadd.s32 1, %s19
    $region7: #{yourcodenet_forward.1} parent=1 // loop_footer_branch
      %18 = sbr.rel target = $region3
    $region8: #{yourcodenet_forward.1} parent=1 // loop_exit
      _
    %8680 = vsyncpa [#allocation5], 1
    %s8681 = scalar_lea.sflag [#allocation5], 1
    %8682 = vsyncpa %s8681, 1
    %8683 = vsyncpa [#allocation6], 1
    %s8684 = scalar_lea.sflag [#allocation6], 1
    %8685 = vsyncpa %s8684, 1

</llo_original>
